<compile_context>
chip_gen: v7x
topology: tpu7x:2x2x1
jax: 0.10.0
libtpu: 0.0.40
codegen_flags: <defaults>
</compile_context>

<pallas_src>
import numpy as np
import jax
import jax.numpy as jnp
from jax.experimental import pallas as pl
from jax.experimental.pallas import tpu as pltpu

# Model constants (fixed by the PyTorch module).
K = 5                    # conv kernel size
C1, C2 = 16, 32          # conv output channels
NCLS = 37
IMG = 28                 # input spatial size
POOL1 = IMG // 2         # 14
POOL2 = POOL1 // 2       # 7
CANV1 = IMG + K - 1      # 32: zero-padded canvas for conv1 (pad=2 each side)
CANV2 = POOL1 + K - 1    # 18: zero-padded canvas for conv2


# ---------------------------------------------------------------------------
# Fused Pallas kernel: conv1 -> relu -> pool -> conv2 -> relu -> pool -> fc
# ---------------------------------------------------------------------------
def _net_kernel(x_ref, w1_ref, b1_ref, sr1_ref, sc1_ref,
                w2_ref, b2_ref, sr2_ref, sc2_ref,
                wout_ref, bout_ref,
                out_ref, cv2_ref, p2_ref):
    f32, bf16 = jnp.float32, jnp.bfloat16

    # ----- conv1 + ReLU:  rows r = b*CANV1 + h,  lanes = w*C1 + co -----------
    r1 = x_ref.shape[0] - (K - 1)                       # B*32 - 4
    acc = jnp.zeros((r1, w1_ref.shape[2]), f32)
    for kh in range(K):                                 # static unroll, 5 MXU matmuls
        acc = acc + jnp.dot(x_ref[kh:kh + r1, :], w1_ref[kh],
                            preferred_element_type=f32)
    a1 = jnp.maximum(acc + b1_ref[...], 0.0).astype(bf16)

    # ----- maxpool1 + repack into zero-padded conv2 canvas (selection matmuls)
    hm = jnp.maximum(jnp.dot(sr1_ref[0], a1, preferred_element_type=f32),
                     jnp.dot(sr1_ref[1], a1, preferred_element_type=f32)).astype(bf16)
    cv2_ref[...] = jnp.maximum(
        jnp.dot(hm, sc1_ref[0], preferred_element_type=f32),
        jnp.dot(hm, sc1_ref[1], preferred_element_type=f32)).astype(bf16)

    # ----- conv2 + ReLU:  rows r = b*CANV2 + h,  lanes = w*C2 + co -----------
    r2 = cv2_ref.shape[0] - (K - 1)                     # B*18 - 4
    acc = jnp.zeros((r2, w2_ref.shape[2]), f32)
    for kh in range(K):
        acc = acc + jnp.dot(cv2_ref[kh:kh + r2, :], w2_ref[kh],
                            preferred_element_type=f32)
    a2 = jnp.maximum(acc + b2_ref[...], 0.0).astype(bf16)

    # ----- maxpool2 into FC feature blocks: rows = ho*B + b, lanes = wo*C2 + c
    hm2 = jnp.maximum(jnp.dot(sr2_ref[0], a2, preferred_element_type=f32),
                      jnp.dot(sr2_ref[1], a2, preferred_element_type=f32)).astype(bf16)
    p2_ref[...] = jnp.maximum(
        jnp.dot(hm2, sc2_ref[0], preferred_element_type=f32),
        jnp.dot(hm2, sc2_ref[1], preferred_element_type=f32)).astype(bf16)

    # ----- fully connected, accumulated over the 7 pooled rows ---------------
    batch = out_ref.shape[0]
    blk = sc2_ref.shape[2]                              # POOL2 * C2 = 224
    acc = jnp.zeros(out_ref.shape, f32)
    for ho in range(POOL2):
        acc = acc + jnp.dot(p2_ref[ho * batch:(ho + 1) * batch, :],
                            wout_ref[ho * blk:(ho + 1) * blk, :],
                            preferred_element_type=f32)
    out_ref[...] = acc + bout_ref[...]


# ---------------------------------------------------------------------------
# One-time parameter re-layout (done at init, not per call)
# ---------------------------------------------------------------------------
def _banded_conv_weight(w_oihw, out_w, canv_w):
    """torch (Cout,Cin,K,K) -> (K, canv_w*Cin, out_w*Cout) banded slabs so that
    conv(h, w, co) = sum_kh  canvas_row(h+kh) @ slab[kh]   at lane w*Cout + co."""
    w_np = np.asarray(w_oihw, np.float32)
    cout, cin, k, _ = w_np.shape
    slab = np.zeros((k, canv_w * cin, out_w * cout), np.float32)
    for kh in range(k):
        for kw in range(k):
            blk = w_np[:, :, kh, kw].T                     # (Cin, Cout)
            for w in range(out_w):
                slab[kh, (w + kw) * cin:(w + kw + 1) * cin,
                     w * cout:(w + 1) * cout] = blk
    return slab


def prepare_kernel_params(params, batch):
    """Torch-layout params -> kernel-ready operands (banded conv slabs, pooling
    selection matrices, lane-tiled biases, permuted FC weight)."""
    w1 = _banded_conv_weight(params["w1"], IMG, CANV1)        # (5, 32, 448)
    w2 = _banded_conv_weight(params["w2"], POOL1, CANV2)      # (5, 288, 448)
    b1 = np.tile(np.asarray(params["b1"], np.float32), IMG)[None, :]    # (1, 448)
    b2 = np.tile(np.asarray(params["b2"], np.float32), POOL1)[None, :]  # (1, 448)

    # pool1 selectors: source row b*CANV1 + 2*ho + p -> canvas row b*CANV2 + ho + 2
    #                  source lane (2*wo+p)*C1 + c   -> canvas lane (wo+2)*C1 + c
    rows1 = batch * CANV1 - (K - 1)
    sr1 = np.zeros((2, batch * CANV2, rows1), np.float32)
    sc1 = np.zeros((2, IMG * C1, CANV2 * C1), np.float32)
    for p in range(2):
        for b in range(batch):
            for ho in range(POOL1):
                sr1[p, b * CANV2 + ho + 2, b * CANV1 + 2 * ho + p] = 1.0
        for wo in range(POOL1):
            for c in range(C1):
                sc1[p, (2 * wo + p) * C1 + c, (wo + 2) * C1 + c] = 1.0

    # pool2 selectors: source row b*CANV2 + 2*ho + p -> FC-block row ho*batch + b
    #                  source lane (2*wo+p)*C2 + c   -> lane wo*C2 + c
    rows2 = batch * CANV2 - (K - 1)
    sr2 = np.zeros((2, POOL2 * batch, rows2), np.float32)
    sc2 = np.zeros((2, POOL1 * C2, POOL2 * C2), np.float32)
    for p in range(2):
        for b in range(batch):
            for ho in range(POOL2):
                sr2[p, ho * batch + b, b * CANV2 + 2 * ho + p] = 1.0
        for wo in range(POOL2):
            for c in range(C2):
                sc2[p, (2 * wo + p) * C2 + c, wo * C2 + c] = 1.0

    # FC weight: torch is (NCLS, C2*7*7) with NCHW flatten (c*49 + ho*7 + wo).
    # Permute rows once so they match our (ho, wo, c) order -> flatten is free.
    wfc = np.asarray(params["w_fc"], np.float32).reshape(NCLS, C2, POOL2, POOL2)
    wout = np.transpose(wfc, (2, 3, 1, 0)).reshape(POOL2 * POOL2 * C2, NCLS)
    bout = np.asarray(params["b_fc"], np.float32)[None, :]

    bf16, f32 = jnp.bfloat16, jnp.float32
    return {
        "w1": jnp.asarray(w1, bf16), "b1": jnp.asarray(b1, f32),
        "sr1": jnp.asarray(sr1, bf16), "sc1": jnp.asarray(sc1, bf16),
        "w2": jnp.asarray(w2, bf16), "b2": jnp.asarray(b2, f32),
        "sr2": jnp.asarray(sr2, bf16), "sc2": jnp.asarray(sc2, bf16),
        "wout": jnp.asarray(wout, bf16), "bout": jnp.asarray(bout, f32),
    }


# ---------------------------------------------------------------------------
# Wrapper: one pallas_call, full-array VMEM blocks
# ---------------------------------------------------------------------------
def _full_spec(shape):
    ndim = len(shape)
    return pl.BlockSpec(shape, lambda *_: (0,) * ndim)


def net_forward(x_nchw, kp):
    batch = x_nchw.shape[0]
    # Cin == 1, so no NCHW->NHWC transpose is needed at all; just embed the 28x28
    # image at offset (2,2) of a 32x32 zero canvas (this IS conv1's SAME padding),
    # in bf16 so the kernel feeds the MXU directly with no in-loop casts.
    x = jnp.pad(x_nchw[:, 0, :, :].astype(jnp.bfloat16), ((0, 0), (2, 2), (2, 2)))
    x = x.reshape(batch * CANV1, CANV1)

    args = (x, kp["w1"], kp["b1"], kp["sr1"], kp["sc1"],
            kp["w2"], kp["b2"], kp["sr2"], kp["sc2"], kp["wout"], kp["bout"])

    return pl.pallas_call(
        _net_kernel,
        out_shape=jax.ShapeDtypeStruct((batch, NCLS), jnp.float32),
        grid=(1,),
        in_specs=[_full_spec(a.shape) for a in args],
        out_specs=pl.BlockSpec((batch, NCLS), lambda i: (0, 0)),
        scratch_shapes=[
            pltpu.VMEM((batch * CANV2, CANV2 * C1), jnp.bfloat16),  # conv2 input canvas
            pltpu.VMEM((POOL2 * batch, POOL2 * C2), jnp.bfloat16),  # pooled FC features
        ],
        compiler_params=pltpu.CompilerParams(
            dimension_semantics=("arbitrary",)),
    )(*args)


# ---------------------------------------------------------------------------
# Pure-JAX reference (matches torch Net.forward) and init
# ---------------------------------------------------------------------------
def net_reference(x_nchw, params):
    dn = ("NCHW", "OIHW", "NCHW")
    y = jax.lax.conv_general_dilated(x_nchw, params["w1"], (1, 1), ((2, 2), (2, 2)),
                                     dimension_numbers=dn)
    y = jax.nn.relu(y + params["b1"][None, :, None, None])
    y = jax.lax.reduce_window(y, -jnp.inf, jax.lax.max, (1, 1, 2, 2), (1, 1, 2, 2), "VALID")
    y = jax.lax.conv_general_dilated(y, params["w2"], (1, 1), ((2, 2), (2, 2)),
                                     dimension_numbers=dn)
    y = jax.nn.relu(y + params["b2"][None, :, None, None])
    y = jax.lax.reduce_window(y, -jnp.inf, jax.lax.max, (1, 1, 2, 2), (1, 1, 2, 2), "VALID")
    feat = y.reshape(y.shape[0], -1)                 # torch x.view(B, -1) (NCHW order)
    return feat @ params["w_fc"].T + params["b_fc"]


def init_params(key):
    k1, k2, k3, k4, k5, k6 = jax.random.split(key, 6)
    return {
        "w1": jax.random.normal(k1, (C1, 1, K, K), jnp.float32) * 0.1,     # torch OIHW
        "b1": jax.random.normal(k2, (C1,), jnp.float32) * 0.01,
        "w2": jax.random.normal(k3, (C2, C1, K, K), jnp.float32) * 0.05,
        "b2": jax.random.normal(k4, (C2,), jnp.float32) * 0.01,
        "w_fc": jax.random.normal(k5, (NCLS, C2 * POOL2 * POOL2), jnp.float32) * 0.02,
        "b_fc": jax.random.normal(k6, (NCLS,), jnp.float32) * 0.01,
    }


if __name__ == "__main__":
    key = jax.random.PRNGKey(0)
    pkey, xkey = jax.random.split(key)
    params = init_params(pkey)

    # EMNIST-style input: batch=2, 1 channel, 28x28 (NCHW like PyTorch).
    x = jax.random.normal(xkey, (2, 1, 28, 28), jnp.float32)

    kp = prepare_kernel_params(params, batch=x.shape[0])
    out = jax.block_until_ready(jax.jit(net_forward)(x, kp))

    assert out.shape == (2, NCLS), out.shape
    assert bool(jnp.all(jnp.isfinite(out)))

    # Numerical check against the pure-JAX reference (kernel uses bf16 matmul inputs).
    ref = net_reference(x, params)
    max_err = float(jnp.max(jnp.abs(out - ref)))
    assert max_err < 0.2, f"kernel vs reference max abs err = {max_err}"
    print("KERNEL_OK")
</pallas_src>

<mosaic_0001>
module attributes {stable_mosaic.version = 11 : i64} {
  func.func @_net_kernel(%arg0: i32, %arg1: memref<64x32xbf16, #tpu.memory_space<vmem>>, %arg2: memref<5x32x448xbf16, #tpu.memory_space<vmem>>, %arg3: memref<1x448xf32, #tpu.memory_space<vmem>>, %arg4: memref<2x36x60xbf16, #tpu.memory_space<vmem>>, %arg5: memref<2x448x288xbf16, #tpu.memory_space<vmem>>, %arg6: memref<5x288x448xbf16, #tpu.memory_space<vmem>>, %arg7: memref<1x448xf32, #tpu.memory_space<vmem>>, %arg8: memref<2x14x32xbf16, #tpu.memory_space<vmem>>, %arg9: memref<2x448x224xbf16, #tpu.memory_space<vmem>>, %arg10: memref<1568x37xbf16, #tpu.memory_space<vmem>>, %arg11: memref<1x37xf32, #tpu.memory_space<vmem>>, %arg12: memref<2x37xf32, #tpu.memory_space<vmem>>, %arg13: memref<36x288xbf16, #tpu.memory_space<vmem>>, %arg14: memref<14x224xbf16, #tpu.memory_space<vmem>>) attributes {dimension_semantics = [#tpu.dimension_semantics<arbitrary>], iteration_bounds = array<i64: 1>, scalar_prefetch = 0 : i64, scratch_operands = 2 : i64, tpu.core_type = #tpu.core_type<tc>, window_params = [{pipeline_mode = #tpu.pipeline_mode<synchronous>, transform_indices = @transform_0, window_bounds = array<i64: 64, 32>}, {pipeline_mode = #tpu.pipeline_mode<synchronous>, transform_indices = @transform_1, window_bounds = array<i64: 5, 32, 448>}, {pipeline_mode = #tpu.pipeline_mode<synchronous>, transform_indices = @transform_2, window_bounds = array<i64: 1, 448>}, {pipeline_mode = #tpu.pipeline_mode<synchronous>, transform_indices = @transform_3, window_bounds = array<i64: 2, 36, 60>}, {pipeline_mode = #tpu.pipeline_mode<synchronous>, transform_indices = @transform_4, window_bounds = array<i64: 2, 448, 288>}, {pipeline_mode = #tpu.pipeline_mode<synchronous>, transform_indices = @transform_5, window_bounds = array<i64: 5, 288, 448>}, {pipeline_mode = #tpu.pipeline_mode<synchronous>, transform_indices = @transform_6, window_bounds = array<i64: 1, 448>}, {pipeline_mode = #tpu.pipeline_mode<synchronous>, transform_indices = @transform_7, window_bounds = array<i64: 2, 14, 32>}, {pipeline_mode = #tpu.pipeline_mode<synchronous>, transform_indices = @transform_8, window_bounds = array<i64: 2, 448, 224>}, {pipeline_mode = #tpu.pipeline_mode<synchronous>, transform_indices = @transform_9, window_bounds = array<i64: 1568, 37>}, {pipeline_mode = #tpu.pipeline_mode<synchronous>, transform_indices = @transform_10, window_bounds = array<i64: 1, 37>}, {pipeline_mode = #tpu.pipeline_mode<synchronous>, transform_indices = @transform_11, window_bounds = array<i64: 2, 37>}]} {
    %cst = arith.constant 0.000000e+00 : f32
    %0 = vector.broadcast %cst : f32 to vector<60x448xf32>
    %c0 = arith.constant 0 : index
    %c0_0 = arith.constant 0 : index
    %1 = vector.load %arg1[%c0, %c0_0] : memref<64x32xbf16, #tpu.memory_space<vmem>>, vector<60x32xbf16>
    %c0_1 = arith.constant 0 : index
    %c0_2 = arith.constant 0 : index
    %c0_3 = arith.constant 0 : index
    %2 = vector.load %arg2[%c0_1, %c0_2, %c0_3] : memref<5x32x448xbf16, #tpu.memory_space<vmem>>, vector<1x32x448xbf16>
    %3 = vector.shape_cast %2 : vector<1x32x448xbf16> to vector<32x448xbf16>
    %cst_4 = arith.constant dense<0.000000e+00> : vector<60x448xf32>
    %4 = tpu.matmul %1, %3, %cst_4 {dimension_numbers = #tpu.dot_dimension_numbers<[1], [0], [0], [1], [0, 0, 1, 1], [], []>} : vector<60x32xbf16>, vector<32x448xbf16>, vector<60x448xf32> -> vector<60x448xf32>
    %5 = arith.addf %0, %4 : vector<60x448xf32>
    %c1 = arith.constant 1 : index
    %c0_5 = arith.constant 0 : index
    %6 = vector.load %arg1[%c1, %c0_5] : memref<64x32xbf16, #tpu.memory_space<vmem>>, vector<60x32xbf16>
    %c1_6 = arith.constant 1 : index
    %c0_7 = arith.constant 0 : index
    %c0_8 = arith.constant 0 : index
    %7 = vector.load %arg2[%c1_6, %c0_7, %c0_8] : memref<5x32x448xbf16, #tpu.memory_space<vmem>>, vector<1x32x448xbf16>
    %8 = vector.shape_cast %7 : vector<1x32x448xbf16> to vector<32x448xbf16>
    %cst_9 = arith.constant dense<0.000000e+00> : vector<60x448xf32>
    %9 = tpu.matmul %6, %8, %cst_9 {dimension_numbers = #tpu.dot_dimension_numbers<[1], [0], [0], [1], [0, 0, 1, 1], [], []>} : vector<60x32xbf16>, vector<32x448xbf16>, vector<60x448xf32> -> vector<60x448xf32>
    %10 = arith.addf %5, %9 : vector<60x448xf32>
    %c2 = arith.constant 2 : index
    %c0_10 = arith.constant 0 : index
    %11 = vector.load %arg1[%c2, %c0_10] : memref<64x32xbf16, #tpu.memory_space<vmem>>, vector<60x32xbf16>
    %c2_11 = arith.constant 2 : index
    %c0_12 = arith.constant 0 : index
    %c0_13 = arith.constant 0 : index
    %12 = vector.load %arg2[%c2_11, %c0_12, %c0_13] : memref<5x32x448xbf16, #tpu.memory_space<vmem>>, vector<1x32x448xbf16>
    %13 = vector.shape_cast %12 : vector<1x32x448xbf16> to vector<32x448xbf16>
    %cst_14 = arith.constant dense<0.000000e+00> : vector<60x448xf32>
    %14 = tpu.matmul %11, %13, %cst_14 {dimension_numbers = #tpu.dot_dimension_numbers<[1], [0], [0], [1], [0, 0, 1, 1], [], []>} : vector<60x32xbf16>, vector<32x448xbf16>, vector<60x448xf32> -> vector<60x448xf32>
    %15 = arith.addf %10, %14 : vector<60x448xf32>
    %c3 = arith.constant 3 : index
    %c0_15 = arith.constant 0 : index
    %16 = vector.load %arg1[%c3, %c0_15] : memref<64x32xbf16, #tpu.memory_space<vmem>>, vector<60x32xbf16>
    %c3_16 = arith.constant 3 : index
    %c0_17 = arith.constant 0 : index
    %c0_18 = arith.constant 0 : index
    %17 = vector.load %arg2[%c3_16, %c0_17, %c0_18] : memref<5x32x448xbf16, #tpu.memory_space<vmem>>, vector<1x32x448xbf16>
    %18 = vector.shape_cast %17 : vector<1x32x448xbf16> to vector<32x448xbf16>
    %cst_19 = arith.constant dense<0.000000e+00> : vector<60x448xf32>
    %19 = tpu.matmul %16, %18, %cst_19 {dimension_numbers = #tpu.dot_dimension_numbers<[1], [0], [0], [1], [0, 0, 1, 1], [], []>} : vector<60x32xbf16>, vector<32x448xbf16>, vector<60x448xf32> -> vector<60x448xf32>
    %20 = arith.addf %15, %19 : vector<60x448xf32>
    %c4 = arith.constant 4 : index
    %c0_20 = arith.constant 0 : index
    %21 = vector.load %arg1[%c4, %c0_20] : memref<64x32xbf16, #tpu.memory_space<vmem>>, vector<60x32xbf16>
    %c4_21 = arith.constant 4 : index
    %c0_22 = arith.constant 0 : index
    %c0_23 = arith.constant 0 : index
    %22 = vector.load %arg2[%c4_21, %c0_22, %c0_23] : memref<5x32x448xbf16, #tpu.memory_space<vmem>>, vector<1x32x448xbf16>
    %23 = vector.shape_cast %22 : vector<1x32x448xbf16> to vector<32x448xbf16>
    %cst_24 = arith.constant dense<0.000000e+00> : vector<60x448xf32>
    %24 = tpu.matmul %21, %23, %cst_24 {dimension_numbers = #tpu.dot_dimension_numbers<[1], [0], [0], [1], [0, 0, 1, 1], [], []>} : vector<60x32xbf16>, vector<32x448xbf16>, vector<60x448xf32> -> vector<60x448xf32>
    %25 = arith.addf %20, %24 : vector<60x448xf32>
    %c0_25 = arith.constant 0 : index
    %c0_26 = arith.constant 0 : index
    %26 = vector.load %arg3[%c0_25, %c0_26] : memref<1x448xf32, #tpu.memory_space<vmem>>, vector<1x448xf32>
    %27 = vector.broadcast %26 : vector<1x448xf32> to vector<60x448xf32>
    %28 = arith.addf %25, %27 : vector<60x448xf32>
    %cst_27 = arith.constant 0.000000e+00 : f32
    %29 = vector.broadcast %cst_27 : f32 to vector<60x448xf32>
    %30 = arith.maximumf %28, %29 : vector<60x448xf32>
    %31 = arith.truncf %30 : vector<60x448xf32> to vector<60x448xbf16>
    %c0_28 = arith.constant 0 : index
    %c0_29 = arith.constant 0 : index
    %c0_30 = arith.constant 0 : index
    %32 = vector.load %arg4[%c0_28, %c0_29, %c0_30] : memref<2x36x60xbf16, #tpu.memory_space<vmem>>, vector<1x36x60xbf16>
    %33 = vector.shape_cast %32 : vector<1x36x60xbf16> to vector<36x60xbf16>
    %cst_31 = arith.constant dense<0.000000e+00> : vector<36x448xf32>
    %34 = tpu.matmul %33, %31, %cst_31 {dimension_numbers = #tpu.dot_dimension_numbers<[1], [0], [0], [1], [0, 0, 1, 1], [], []>} : vector<36x60xbf16>, vector<60x448xbf16>, vector<36x448xf32> -> vector<36x448xf32>
    %c1_32 = arith.constant 1 : index
    %c0_33 = arith.constant 0 : index
    %c0_34 = arith.constant 0 : index
    %35 = vector.load %arg4[%c1_32, %c0_33, %c0_34] : memref<2x36x60xbf16, #tpu.memory_space<vmem>>, vector<1x36x60xbf16>
    %36 = vector.shape_cast %35 : vector<1x36x60xbf16> to vector<36x60xbf16>
    %cst_35 = arith.constant dense<0.000000e+00> : vector<36x448xf32>
    %37 = tpu.matmul %36, %31, %cst_35 {dimension_numbers = #tpu.dot_dimension_numbers<[1], [0], [0], [1], [0, 0, 1, 1], [], []>} : vector<36x60xbf16>, vector<60x448xbf16>, vector<36x448xf32> -> vector<36x448xf32>
    %38 = arith.maximumf %34, %37 : vector<36x448xf32>
    %39 = arith.truncf %38 : vector<36x448xf32> to vector<36x448xbf16>
    %c0_36 = arith.constant 0 : index
    %c0_37 = arith.constant 0 : index
    %c0_38 = arith.constant 0 : index
    %40 = vector.load %arg5[%c0_36, %c0_37, %c0_38] : memref<2x448x288xbf16, #tpu.memory_space<vmem>>, vector<1x448x288xbf16>
    %41 = vector.shape_cast %40 : vector<1x448x288xbf16> to vector<448x288xbf16>
    %cst_39 = arith.constant dense<0.000000e+00> : vector<36x288xf32>
    %42 = tpu.matmul %39, %41, %cst_39 {dimension_numbers = #tpu.dot_dimension_numbers<[1], [0], [0], [1], [0, 0, 1, 1], [], []>} : vector<36x448xbf16>, vector<448x288xbf16>, vector<36x288xf32> -> vector<36x288xf32>
    %c1_40 = arith.constant 1 : index
    %c0_41 = arith.constant 0 : index
    %c0_42 = arith.constant 0 : index
    %43 = vector.load %arg5[%c1_40, %c0_41, %c0_42] : memref<2x448x288xbf16, #tpu.memory_space<vmem>>, vector<1x448x288xbf16>
    %44 = vector.shape_cast %43 : vector<1x448x288xbf16> to vector<448x288xbf16>
    %cst_43 = arith.constant dense<0.000000e+00> : vector<36x288xf32>
    %45 = tpu.matmul %39, %44, %cst_43 {dimension_numbers = #tpu.dot_dimension_numbers<[1], [0], [0], [1], [0, 0, 1, 1], [], []>} : vector<36x448xbf16>, vector<448x288xbf16>, vector<36x288xf32> -> vector<36x288xf32>
    %46 = arith.maximumf %42, %45 : vector<36x288xf32>
    %47 = arith.truncf %46 : vector<36x288xf32> to vector<36x288xbf16>
    %c0_44 = arith.constant 0 : index
    %c0_45 = arith.constant 0 : index
    %48 = vector.load %arg13[%c0_44, %c0_45] : memref<36x288xbf16, #tpu.memory_space<vmem>>, vector<36x288xbf16>
    tpu.vector_store %arg13[%c0_44, %c0_45], %47 {strides = array<i32>} : memref<36x288xbf16, #tpu.memory_space<vmem>>, vector<36x288xbf16>,
    %cst_46 = arith.constant 0.000000e+00 : f32
    %49 = vector.broadcast %cst_46 : f32 to vector<32x448xf32>
    %c0_47 = arith.constant 0 : index
    %c0_48 = arith.constant 0 : index
    %50 = vector.load %arg13[%c0_47, %c0_48] : memref<36x288xbf16, #tpu.memory_space<vmem>>, vector<32x288xbf16>
    %c0_49 = arith.constant 0 : index
    %c0_50 = arith.constant 0 : index
    %c0_51 = arith.constant 0 : index
    %51 = vector.load %arg6[%c0_49, %c0_50, %c0_51] : memref<5x288x448xbf16, #tpu.memory_space<vmem>>, vector<1x288x448xbf16>
    %52 = vector.shape_cast %51 : vector<1x288x448xbf16> to vector<288x448xbf16>
    %cst_52 = arith.constant dense<0.000000e+00> : vector<32x448xf32>
    %53 = tpu.matmul %50, %52, %cst_52 {dimension_numbers = #tpu.dot_dimension_numbers<[1], [0], [0], [1], [0, 0, 1, 1], [], []>} : vector<32x288xbf16>, vector<288x448xbf16>, vector<32x448xf32> -> vector<32x448xf32>
    %54 = arith.addf %49, %53 : vector<32x448xf32>
    %c1_53 = arith.constant 1 : index
    %c0_54 = arith.constant 0 : index
    %55 = vector.load %arg13[%c1_53, %c0_54] : memref<36x288xbf16, #tpu.memory_space<vmem>>, vector<32x288xbf16>
    %c1_55 = arith.constant 1 : index
    %c0_56 = arith.constant 0 : index
    %c0_57 = arith.constant 0 : index
    %56 = vector.load %arg6[%c1_55, %c0_56, %c0_57] : memref<5x288x448xbf16, #tpu.memory_space<vmem>>, vector<1x288x448xbf16>
    %57 = vector.shape_cast %56 : vector<1x288x448xbf16> to vector<288x448xbf16>
    %cst_58 = arith.constant dense<0.000000e+00> : vector<32x448xf32>
    %58 = tpu.matmul %55, %57, %cst_58 {dimension_numbers = #tpu.dot_dimension_numbers<[1], [0], [0], [1], [0, 0, 1, 1], [], []>} : vector<32x288xbf16>, vector<288x448xbf16>, vector<32x448xf32> -> vector<32x448xf32>
    %59 = arith.addf %54, %58 : vector<32x448xf32>
    %c2_59 = arith.constant 2 : index
    %c0_60 = arith.constant 0 : index
    %60 = vector.load %arg13[%c2_59, %c0_60] : memref<36x288xbf16, #tpu.memory_space<vmem>>, vector<32x288xbf16>
    %c2_61 = arith.constant 2 : index
    %c0_62 = arith.constant 0 : index
    %c0_63 = arith.constant 0 : index
    %61 = vector.load %arg6[%c2_61, %c0_62, %c0_63] : memref<5x288x448xbf16, #tpu.memory_space<vmem>>, vector<1x288x448xbf16>
    %62 = vector.shape_cast %61 : vector<1x288x448xbf16> to vector<288x448xbf16>
    %cst_64 = arith.constant dense<0.000000e+00> : vector<32x448xf32>
    %63 = tpu.matmul %60, %62, %cst_64 {dimension_numbers = #tpu.dot_dimension_numbers<[1], [0], [0], [1], [0, 0, 1, 1], [], []>} : vector<32x288xbf16>, vector<288x448xbf16>, vector<32x448xf32> -> vector<32x448xf32>
    %64 = arith.addf %59, %63 : vector<32x448xf32>
    %c3_65 = arith.constant 3 : index
    %c0_66 = arith.constant 0 : index
    %65 = vector.load %arg13[%c3_65, %c0_66] : memref<36x288xbf16, #tpu.memory_space<vmem>>, vector<32x288xbf16>
    %c3_67 = arith.constant 3 : index
    %c0_68 = arith.constant 0 : index
    %c0_69 = arith.constant 0 : index
    %66 = vector.load %arg6[%c3_67, %c0_68, %c0_69] : memref<5x288x448xbf16, #tpu.memory_space<vmem>>, vector<1x288x448xbf16>
    %67 = vector.shape_cast %66 : vector<1x288x448xbf16> to vector<288x448xbf16>
    %cst_70 = arith.constant dense<0.000000e+00> : vector<32x448xf32>
    %68 = tpu.matmul %65, %67, %cst_70 {dimension_numbers = #tpu.dot_dimension_numbers<[1], [0], [0], [1], [0, 0, 1, 1], [], []>} : vector<32x288xbf16>, vector<288x448xbf16>, vector<32x448xf32> -> vector<32x448xf32>
    %69 = arith.addf %64, %68 : vector<32x448xf32>
    %c4_71 = arith.constant 4 : index
    %c0_72 = arith.constant 0 : index
    %70 = vector.load %arg13[%c4_71, %c0_72] : memref<36x288xbf16, #tpu.memory_space<vmem>>, vector<32x288xbf16>
    %c4_73 = arith.constant 4 : index
    %c0_74 = arith.constant 0 : index
    %c0_75 = arith.constant 0 : index
    %71 = vector.load %arg6[%c4_73, %c0_74, %c0_75] : memref<5x288x448xbf16, #tpu.memory_space<vmem>>, vector<1x288x448xbf16>
    %72 = vector.shape_cast %71 : vector<1x288x448xbf16> to vector<288x448xbf16>
    %cst_76 = arith.constant dense<0.000000e+00> : vector<32x448xf32>
    %73 = tpu.matmul %70, %72, %cst_76 {dimension_numbers = #tpu.dot_dimension_numbers<[1], [0], [0], [1], [0, 0, 1, 1], [], []>} : vector<32x288xbf16>, vector<288x448xbf16>, vector<32x448xf32> -> vector<32x448xf32>
    %74 = arith.addf %69, %73 : vector<32x448xf32>
    %c0_77 = arith.constant 0 : index
    %c0_78 = arith.constant 0 : index
    %75 = vector.load %arg7[%c0_77, %c0_78] : memref<1x448xf32, #tpu.memory_space<vmem>>, vector<1x448xf32>
    %76 = vector.broadcast %75 : vector<1x448xf32> to vector<32x448xf32>
    %77 = arith.addf %74, %76 : vector<32x448xf32>
    %cst_79 = arith.constant 0.000000e+00 : f32
    %78 = vector.broadcast %cst_79 : f32 to vector<32x448xf32>
    %79 = arith.maximumf %77, %78 : vector<32x448xf32>
    %80 = arith.truncf %79 : vector<32x448xf32> to vector<32x448xbf16>
    %c0_80 = arith.constant 0 : index
    %c0_81 = arith.constant 0 : index
    %c0_82 = arith.constant 0 : index
    %81 = vector.load %arg8[%c0_80, %c0_81, %c0_82] : memref<2x14x32xbf16, #tpu.memory_space<vmem>>, vector<1x14x32xbf16>
    %82 = vector.shape_cast %81 : vector<1x14x32xbf16> to vector<14x32xbf16>
    %cst_83 = arith.constant dense<0.000000e+00> : vector<14x448xf32>
    %83 = tpu.matmul %82, %80, %cst_83 {dimension_numbers = #tpu.dot_dimension_numbers<[1], [0], [0], [1], [0, 0, 1, 1], [], []>} : vector<14x32xbf16>, vector<32x448xbf16>, vector<14x448xf32> -> vector<14x448xf32>
    %c1_84 = arith.constant 1 : index
    %c0_85 = arith.constant 0 : index
    %c0_86 = arith.constant 0 : index
    %84 = vector.load %arg8[%c1_84, %c0_85, %c0_86] : memref<2x14x32xbf16, #tpu.memory_space<vmem>>, vector<1x14x32xbf16>
    %85 = vector.shape_cast %84 : vector<1x14x32xbf16> to vector<14x32xbf16>
    %cst_87 = arith.constant dense<0.000000e+00> : vector<14x448xf32>
    %86 = tpu.matmul %85, %80, %cst_87 {dimension_numbers = #tpu.dot_dimension_numbers<[1], [0], [0], [1], [0, 0, 1, 1], [], []>} : vector<14x32xbf16>, vector<32x448xbf16>, vector<14x448xf32> -> vector<14x448xf32>
    %87 = arith.maximumf %83, %86 : vector<14x448xf32>
    %88 = arith.truncf %87 : vector<14x448xf32> to vector<14x448xbf16>
    %c0_88 = arith.constant 0 : index
    %c0_89 = arith.constant 0 : index
    %c0_90 = arith.constant 0 : index
    %89 = vector.load %arg9[%c0_88, %c0_89, %c0_90] : memref<2x448x224xbf16, #tpu.memory_space<vmem>>, vector<1x448x224xbf16>
    %90 = vector.shape_cast %89 : vector<1x448x224xbf16> to vector<448x224xbf16>
    %cst_91 = arith.constant dense<0.000000e+00> : vector<14x224xf32>
    %91 = tpu.matmul %88, %90, %cst_91 {dimension_numbers = #tpu.dot_dimension_numbers<[1], [0], [0], [1], [0, 0, 1, 1], [], []>} : vector<14x448xbf16>, vector<448x224xbf16>, vector<14x224xf32> -> vector<14x224xf32>
    %c1_92 = arith.constant 1 : index
    %c0_93 = arith.constant 0 : index
    %c0_94 = arith.constant 0 : index
    %92 = vector.load %arg9[%c1_92, %c0_93, %c0_94] : memref<2x448x224xbf16, #tpu.memory_space<vmem>>, vector<1x448x224xbf16>
    %93 = vector.shape_cast %92 : vector<1x448x224xbf16> to vector<448x224xbf16>
    %cst_95 = arith.constant dense<0.000000e+00> : vector<14x224xf32>
    %94 = tpu.matmul %88, %93, %cst_95 {dimension_numbers = #tpu.dot_dimension_numbers<[1], [0], [0], [1], [0, 0, 1, 1], [], []>} : vector<14x448xbf16>, vector<448x224xbf16>, vector<14x224xf32> -> vector<14x224xf32>
    %95 = arith.maximumf %91, %94 : vector<14x224xf32>
    %96 = arith.truncf %95 : vector<14x224xf32> to vector<14x224xbf16>
    %c0_96 = arith.constant 0 : index
    %c0_97 = arith.constant 0 : index
    %97 = vector.load %arg14[%c0_96, %c0_97] : memref<14x224xbf16, #tpu.memory_space<vmem>>, vector<14x224xbf16>
    tpu.vector_store %arg14[%c0_96, %c0_97], %96 {strides = array<i32>} : memref<14x224xbf16, #tpu.memory_space<vmem>>, vector<14x224xbf16>,
    %cst_98 = arith.constant 0.000000e+00 : f32
    %98 = vector.broadcast %cst_98 : f32 to vector<2x37xf32>
    %c0_99 = arith.constant 0 : index
    %c0_100 = arith.constant 0 : index
    %99 = vector.load %arg14[%c0_99, %c0_100] : memref<14x224xbf16, #tpu.memory_space<vmem>>, vector<2x224xbf16>
    %c0_101 = arith.constant 0 : index
    %c0_102 = arith.constant 0 : index
    %100 = vector.load %arg10[%c0_101, %c0_102] : memref<1568x37xbf16, #tpu.memory_space<vmem>>, vector<224x37xbf16>
    %cst_103 = arith.constant dense<0.000000e+00> : vector<2x37xf32>
    %101 = tpu.matmul %99, %100, %cst_103 {dimension_numbers = #tpu.dot_dimension_numbers<[1], [0], [0], [1], [0, 0, 1, 1], [], []>} : vector<2x224xbf16>, vector<224x37xbf16>, vector<2x37xf32> -> vector<2x37xf32>
    %102 = arith.addf %98, %101 : vector<2x37xf32>
    %c2_104 = arith.constant 2 : index
    %c0_105 = arith.constant 0 : index
    %103 = vector.load %arg14[%c2_104, %c0_105] : memref<14x224xbf16, #tpu.memory_space<vmem>>, vector<2x224xbf16>
    %c224 = arith.constant 224 : index
    %c0_106 = arith.constant 0 : index
    %104 = vector.load %arg10[%c224, %c0_106] : memref<1568x37xbf16, #tpu.memory_space<vmem>>, vector<224x37xbf16>
    %cst_107 = arith.constant dense<0.000000e+00> : vector<2x37xf32>
    %105 = tpu.matmul %103, %104, %cst_107 {dimension_numbers = #tpu.dot_dimension_numbers<[1], [0], [0], [1], [0, 0, 1, 1], [], []>} : vector<2x224xbf16>, vector<224x37xbf16>, vector<2x37xf32> -> vector<2x37xf32>
    %106 = arith.addf %102, %105 : vector<2x37xf32>
    %c4_108 = arith.constant 4 : index
    %c0_109 = arith.constant 0 : index
    %107 = vector.load %arg14[%c4_108, %c0_109] : memref<14x224xbf16, #tpu.memory_space<vmem>>, vector<2x224xbf16>
    %c448 = arith.constant 448 : index
    %c0_110 = arith.constant 0 : index
    %108 = vector.load %arg10[%c448, %c0_110] : memref<1568x37xbf16, #tpu.memory_space<vmem>>, vector<224x37xbf16>
    %cst_111 = arith.constant dense<0.000000e+00> : vector<2x37xf32>
    %109 = tpu.matmul %107, %108, %cst_111 {dimension_numbers = #tpu.dot_dimension_numbers<[1], [0], [0], [1], [0, 0, 1, 1], [], []>} : vector<2x224xbf16>, vector<224x37xbf16>, vector<2x37xf32> -> vector<2x37xf32>
    %110 = arith.addf %106, %109 : vector<2x37xf32>
    %c6 = arith.constant 6 : index
    %c0_112 = arith.constant 0 : index
    %111 = vector.load %arg14[%c6, %c0_112] : memref<14x224xbf16, #tpu.memory_space<vmem>>, vector<2x224xbf16>
    %c672 = arith.constant 672 : index
    %c0_113 = arith.constant 0 : index
    %112 = vector.load %arg10[%c672, %c0_113] : memref<1568x37xbf16, #tpu.memory_space<vmem>>, vector<224x37xbf16>
    %cst_114 = arith.constant dense<0.000000e+00> : vector<2x37xf32>
    %113 = tpu.matmul %111, %112, %cst_114 {dimension_numbers = #tpu.dot_dimension_numbers<[1], [0], [0], [1], [0, 0, 1, 1], [], []>} : vector<2x224xbf16>, vector<224x37xbf16>, vector<2x37xf32> -> vector<2x37xf32>
    %114 = arith.addf %110, %113 : vector<2x37xf32>
    %c8 = arith.constant 8 : index
    %c0_115 = arith.constant 0 : index
    %115 = vector.load %arg14[%c8, %c0_115] : memref<14x224xbf16, #tpu.memory_space<vmem>>, vector<2x224xbf16>
    %c896 = arith.constant 896 : index
    %c0_116 = arith.constant 0 : index
    %116 = vector.load %arg10[%c896, %c0_116] : memref<1568x37xbf16, #tpu.memory_space<vmem>>, vector<224x37xbf16>
    %cst_117 = arith.constant dense<0.000000e+00> : vector<2x37xf32>
    %117 = tpu.matmul %115, %116, %cst_117 {dimension_numbers = #tpu.dot_dimension_numbers<[1], [0], [0], [1], [0, 0, 1, 1], [], []>} : vector<2x224xbf16>, vector<224x37xbf16>, vector<2x37xf32> -> vector<2x37xf32>
    %118 = arith.addf %114, %117 : vector<2x37xf32>
    %c10 = arith.constant 10 : index
    %c0_118 = arith.constant 0 : index
    %119 = vector.load %arg14[%c10, %c0_118] : memref<14x224xbf16, #tpu.memory_space<vmem>>, vector<2x224xbf16>
    %c1120 = arith.constant 1120 : index
    %c0_119 = arith.constant 0 : index
    %120 = vector.load %arg10[%c1120, %c0_119] : memref<1568x37xbf16, #tpu.memory_space<vmem>>, vector<224x37xbf16>
    %cst_120 = arith.constant dense<0.000000e+00> : vector<2x37xf32>
    %121 = tpu.matmul %119, %120, %cst_120 {dimension_numbers = #tpu.dot_dimension_numbers<[1], [0], [0], [1], [0, 0, 1, 1], [], []>} : vector<2x224xbf16>, vector<224x37xbf16>, vector<2x37xf32> -> vector<2x37xf32>
    %122 = arith.addf %118, %121 : vector<2x37xf32>
    %c12 = arith.constant 12 : index
    %c0_121 = arith.constant 0 : index
    %123 = vector.load %arg14[%c12, %c0_121] : memref<14x224xbf16, #tpu.memory_space<vmem>>, vector<2x224xbf16>
    %c1344 = arith.constant 1344 : index
    %c0_122 = arith.constant 0 : index
    %124 = vector.load %arg10[%c1344, %c0_122] : memref<1568x37xbf16, #tpu.memory_space<vmem>>, vector<224x37xbf16>
    %cst_123 = arith.constant dense<0.000000e+00> : vector<2x37xf32>
    %125 = tpu.matmul %123, %124, %cst_123 {dimension_numbers = #tpu.dot_dimension_numbers<[1], [0], [0], [1], [0, 0, 1, 1], [], []>} : vector<2x224xbf16>, vector<224x37xbf16>, vector<2x37xf32> -> vector<2x37xf32>
    %126 = arith.addf %122, %125 : vector<2x37xf32>
    %c0_124 = arith.constant 0 : index
    %c0_125 = arith.constant 0 : index
    %127 = vector.load %arg11[%c0_124, %c0_125] : memref<1x37xf32, #tpu.memory_space<vmem>>, vector<1x37xf32>
    %128 = vector.broadcast %127 : vector<1x37xf32> to vector<2x37xf32>
    %129 = arith.addf %126, %128 : vector<2x37xf32>
    %c0_126 = arith.constant 0 : index
    %c0_127 = arith.constant 0 : index
    %130 = vector.load %arg12[%c0_126, %c0_127] : memref<2x37xf32, #tpu.memory_space<vmem>>, vector<2x37xf32>
    tpu.vector_store %arg12[%c0_126, %c0_127], %129 {strides = array<i32>} : memref<2x37xf32, #tpu.memory_space<vmem>>, vector<2x37xf32>,
    return
  }
  func.func @transform_0(%arg0: i32) -> (i32, i32) {
    %c0_i32 = arith.constant 0 : i32
    %c0_i32_0 = arith.constant 0 : i32
    %c0_i32_1 = arith.constant 0 : i32
    return %c0_i32, %c0_i32_0 : i32, i32
  }
  func.func @transform_1(%arg0: i32) -> (i32, i32, i32) {
    %c0_i32 = arith.constant 0 : i32
    %c0_i32_0 = arith.constant 0 : i32
    %c0_i32_1 = arith.constant 0 : i32
    %c0_i32_2 = arith.constant 0 : i32
    return %c0_i32, %c0_i32_0, %c0_i32_1 : i32, i32, i32
  }
  func.func @transform_2(%arg0: i32) -> (i32, i32) {
    %c0_i32 = arith.constant 0 : i32
    %c0_i32_0 = arith.constant 0 : i32
    %c0_i32_1 = arith.constant 0 : i32
    return %c0_i32, %c0_i32_0 : i32, i32
  }
  func.func @transform_3(%arg0: i32) -> (i32, i32, i32) {
    %c0_i32 = arith.constant 0 : i32
    %c0_i32_0 = arith.constant 0 : i32
    %c0_i32_1 = arith.constant 0 : i32
    %c0_i32_2 = arith.constant 0 : i32
    return %c0_i32, %c0_i32_0, %c0_i32_1 : i32, i32, i32
  }
  func.func @transform_4(%arg0: i32) -> (i32, i32, i32) {
    %c0_i32 = arith.constant 0 : i32
    %c0_i32_0 = arith.constant 0 : i32
    %c0_i32_1 = arith.constant 0 : i32
    %c0_i32_2 = arith.constant 0 : i32
    return %c0_i32, %c0_i32_0, %c0_i32_1 : i32, i32, i32
  }
  func.func @transform_5(%arg0: i32) -> (i32, i32, i32) {
    %c0_i32 = arith.constant 0 : i32
    %c0_i32_0 = arith.constant 0 : i32
    %c0_i32_1 = arith.constant 0 : i32
    %c0_i32_2 = arith.constant 0 : i32
    return %c0_i32, %c0_i32_0, %c0_i32_1 : i32, i32, i32
  }
  func.func @transform_6(%arg0: i32) -> (i32, i32) {
    %c0_i32 = arith.constant 0 : i32
    %c0_i32_0 = arith.constant 0 : i32
    %c0_i32_1 = arith.constant 0 : i32
    return %c0_i32, %c0_i32_0 : i32, i32
  }
  func.func @transform_7(%arg0: i32) -> (i32, i32, i32) {
    %c0_i32 = arith.constant 0 : i32
    %c0_i32_0 = arith.constant 0 : i32
    %c0_i32_1 = arith.constant 0 : i32
    %c0_i32_2 = arith.constant 0 : i32
    return %c0_i32, %c0_i32_0, %c0_i32_1 : i32, i32, i32
  }
  func.func @transform_8(%arg0: i32) -> (i32, i32, i32) {
    %c0_i32 = arith.constant 0 : i32
    %c0_i32_0 = arith.constant 0 : i32
    %c0_i32_1 = arith.constant 0 : i32
    %c0_i32_2 = arith.constant 0 : i32
    return %c0_i32, %c0_i32_0, %c0_i32_1 : i32, i32, i32
  }
  func.func @transform_9(%arg0: i32) -> (i32, i32) {
    %c0_i32 = arith.constant 0 : i32
    %c0_i32_0 = arith.constant 0 : i32
    %c0_i32_1 = arith.constant 0 : i32
    return %c0_i32, %c0_i32_0 : i32, i32
  }
  func.func @transform_10(%arg0: i32) -> (i32, i32) {
    %c0_i32 = arith.constant 0 : i32
    %c0_i32_0 = arith.constant 0 : i32
    %c0_i32_1 = arith.constant 0 : i32
    return %c0_i32, %c0_i32_0 : i32, i32
  }
  func.func @transform_11(%arg0: i32) -> (i32, i32) {
    %c0_i32 = arith.constant 0 : i32
    %c0_i32_0 = arith.constant 0 : i32
    %c0_i32_1 = arith.constant 0 : i32
    return %c0_i32, %c0_i32_0 : i32, i32
  }
}

</mosaic_0001>

<llo_original>
// kernel: net_forward.1
$region0: #{net_forward.1}
  #allocation0 [shape = 'u32[]', space=smem, size = 0x4, offset = 0x4, fixed_abs, tag = 'smem constant byte address 0x4 - core index']
  #allocation1 [shape = 'u32[144,128]{1,0:T(1,128)}', space=vmem, size = 0x12000, scoped, tag = 'internal scratch']
  #allocation2 [shape = 'bf16[36,288]{1,0:T(8,128)(2,1)}', space=vmem, size = 0x7800, scoped, tag = 'scratch operand']
  #allocation3 [shape = 'bf16[14,224]{1,0:T(8,128)(2,1)}', space=vmem, size = 0x2000, scoped, tag = 'scratch operand']
  %s0 = inlined_call_operand.vmem [shape: bf16[64,32], index: 0, kind: input, shape index: {}]
  %s1 = inlined_call_operand.hbm [shape: bf16[5,32,448], index: 1, kind: input, shape index: {}]
  %s2 = inlined_call_operand.vmem [shape: f32[1,448], index: 2, kind: input, shape index: {}]
  %s3 = inlined_call_operand.vmem [shape: bf16[2,36,60], index: 3, kind: input, shape index: {}]
  %s4 = inlined_call_operand.vmem [shape: bf16[2,448,288], index: 4, kind: input, shape index: {}]
  %s5 = inlined_call_operand.vmem [shape: bf16[5,288,448], index: 5, kind: input, shape index: {}]
  %s6 = inlined_call_operand.vmem [shape: f32[1,448], index: 6, kind: input, shape index: {}]
  %s7 = inlined_call_operand.vmem [shape: bf16[2,14,32], index: 7, kind: input, shape index: {}]
  %s8 = inlined_call_operand.vmem [shape: bf16[2,448,224], index: 8, kind: input, shape index: {}]
  %s9 = inlined_call_operand.vmem [shape: bf16[1568,37], index: 9, kind: input, shape index: {}]
  %s10 = inlined_call_operand.vmem [shape: f32[1,37], index: 10, kind: input, shape index: {}]
  %s11 = inlined_call_operand.hbm [shape: f32[2,37], index: 11, kind: output, shape index: {}]
  %s12 = sld [smem:[#allocation0]]
  $region58: #{net_forward.1} parent=0
    _
  %s14 = ssub.s32 1, %s12
  %s15 = scalar_select 0, %s14, %s12
  $region1: #{net_forward.1} parent=0
    #allocation4 [shape = 'u8[163840]{0}', space=vmem, size = 0x28000, scoped, tag = 'input window, operand 1, single buffered']
    #allocation5 [shape = 's32[1]{0}', space=sflag, size = 0x4, scoped, tag = 'scoped memory for net_forward.1']
    #allocation6 [shape = 's32[1]{0}', space=sflag, size = 0x4, scoped, tag = 'scoped memory for net_forward.1']
    #allocation7 [shape = 'u8[1024]{0}', space=vmem, size = 0x400, scoped, tag = 'output window, operand 0, single buffered']
    %16 = vsyncpa [#allocation5], 0
    %17 = vsyncpa [#allocation6], 0
    // Predicated region
    $region2: #{net_forward.1} parent=1 // pred_check
      _
    $region3: #{net_forward.1} parent=1 // pred_check_branch
      %19 = sbr.rel (0) target = $region5
    $region4: #{net_forward.1} parent=1 // pred_region
      _
    $region5: #{net_forward.1} parent=1 // pred_fallthru
      _
    // Predicated region
    $region6: #{net_forward.1} parent=1 // pred_check
      _
    $region7: #{net_forward.1} parent=1 // pred_check_branch
      %21 = sbr.rel (0) target = $region9
    $region8: #{net_forward.1} parent=1 // pred_region
      %s23 = ssub.s32 5120, 5120
      %24 = vsyncadd [#allocation5], %s23
      %s25 = sshll.u32 [#allocation4], 4
      %s26 = int_to_ptr.vmem [resolvable:$true] %s25
      %31 = dma.hbm_to_vmem [thread:$0]  %s1, 5120, %s26, [#allocation5], 256, 256, 16
    $region9: #{net_forward.1} parent=1 // pred_fallthru
      _
    // Predicated region
    $region10: #{net_forward.1} parent=1 // pred_check
      _
    $region11: #{net_forward.1} parent=1 // pred_check_branch
      %33 = sbr.rel (0) target = $region13
    $region12: #{net_forward.1} parent=1 // pred_region
      _
    $region13: #{net_forward.1} parent=1 // pred_fallthru
      _
    // Predicated region
    $region14: #{net_forward.1} parent=1 // pred_check
      _
    $region15: #{net_forward.1} parent=1 // pred_check_branch
      %35 = sbr.rel (0) target = $region17
    $region16: #{net_forward.1} parent=1 // pred_region
      _
    $region17: #{net_forward.1} parent=1 // pred_fallthru
      _
    // Predicated region
    $region18: #{net_forward.1} parent=1 // pred_check
      _
    $region19: #{net_forward.1} parent=1 // pred_check_branch
      %37 = sbr.rel (0) target = $region21
    $region20: #{net_forward.1} parent=1 // pred_region
      _
    $region21: #{net_forward.1} parent=1 // pred_fallthru
      _
    // Predicated region
    $region22: #{net_forward.1} parent=1 // pred_check
      _
    $region23: #{net_forward.1} parent=1 // pred_check_branch
      %39 = sbr.rel (0) target = $region25
    $region24: #{net_forward.1} parent=1 // pred_region
      _
    $region25: #{net_forward.1} parent=1 // pred_fallthru
      _
    // Predicated region
    $region26: #{net_forward.1} parent=1 // pred_check
      _
    $region27: #{net_forward.1} parent=1 // pred_check_branch
      %41 = sbr.rel (0) target = $region29
    $region28: #{net_forward.1} parent=1 // pred_region
      _
    $region29: #{net_forward.1} parent=1 // pred_fallthru
      _
    // Predicated region
    $region30: #{net_forward.1} parent=1 // pred_check
      _
    $region31: #{net_forward.1} parent=1 // pred_check_branch
      %43 = sbr.rel (0) target = $region33
    $region32: #{net_forward.1} parent=1 // pred_region
      _
    $region33: #{net_forward.1} parent=1 // pred_fallthru
      _
    // Predicated region
    $region34: #{net_forward.1} parent=1 // pred_check
      _
    $region35: #{net_forward.1} parent=1 // pred_check_branch
      %45 = sbr.rel (0) target = $region37
    $region36: #{net_forward.1} parent=1 // pred_region
      _
    $region37: #{net_forward.1} parent=1 // pred_fallthru
      _
    // Predicated region
    $region38: #{net_forward.1} parent=1 // pred_check
      _
    $region39: #{net_forward.1} parent=1 // pred_check_branch
      %47 = sbr.rel (0) target = $region41
    $region40: #{net_forward.1} parent=1 // pred_region
      _
    $region41: #{net_forward.1} parent=1 // pred_fallthru
      _
    // Predicated region
    $region42: #{net_forward.1} parent=1 // pred_check
      _
    $region43: #{net_forward.1} parent=1 // pred_check_branch
      %49 = sbr.rel (0) target = $region45
    $region44: #{net_forward.1} parent=1 // pred_region
      _
    $region45: #{net_forward.1} parent=1 // pred_fallthru
      _
    // Predicated region
    $region46: #{net_forward.1} parent=1 // pred_check
      _
    $region47: #{net_forward.1} parent=1 // pred_check_branch
      %51 = sbr.rel (0) target = $region49
    $region48: #{net_forward.1} parent=1 // pred_region
      %52 = dma.done [#allocation5], 5120
    $region49: #{net_forward.1} parent=1 // pred_fallthru
      _
    %v54 = vld [vmem:[%s0] sm:$0xf]
    %v55 = vld [vmem:[%s0 + $0x4] sm:$0xf]
    %v56 = vld [vmem:[%s0 + $0x8] sm:$0xf]
    %v57 = vld [vmem:[%s0 + $0xc] sm:$0xf]
    %v58 = vld [vmem:[%s0 + $0x10] sm:$0xf]
    %v59 = vld [vmem:[%s0 + $0x14] sm:$0xf]
    %v60 = vld [vmem:[%s0 + $0x18] sm:$0xf]
    %v61 = vld [vmem:[%s0 + $0x1c] sm:$0x3]
    %v62 = vld [vmem:[#allocation4] sm:$0xff]
    %v63 = vld [vmem:[#allocation4 + $0x8] sm:$0xff]
    %v64 = vld [vmem:[#allocation4 + $0x10] sm:$0xff]
    %v65 = vld [vmem:[#allocation4 + $0x18] sm:$0xff]
    %v66 = vld [vmem:[#allocation4 + $0x20] sm:$0xff]
    %v67 = vld [vmem:[#allocation4 + $0x28] sm:$0xff]
    %v68 = vld [vmem:[#allocation4 + $0x30] sm:$0xff]
    %v69 = vld [vmem:[#allocation4 + $0x38] sm:$0xff]
    %v70 = vld [vmem:[%s0 + $0x1c] sm:$0x7]
    %s71 = scalar_lea.vmem [#allocation4], 64
    %v72 = vld [vmem:[%s71] sm:$0xff]
    %v73 = vld [vmem:[%s71 + $0x8] sm:$0xff]
    %v74 = vld [vmem:[%s71 + $0x10] sm:$0xff]
    %v75 = vld [vmem:[%s71 + $0x18] sm:$0xff]
    %v76 = vld [vmem:[%s71 + $0x20] sm:$0xff]
    %v77 = vld [vmem:[%s71 + $0x28] sm:$0xff]
    %v78 = vld [vmem:[%s71 + $0x30] sm:$0xff]
    %v79 = vld [vmem:[%s71 + $0x38] sm:$0xff]
    %v88 = vunpack.c.l.b16 %v54
    %v89 = vunpack.c.l.b16 %v55
    %v90 = vunpack.c.l.b16 %v56
    %v91 = vunpack.c.l.b16 %v57
    %v92 = vunpack.c.l.b16 %v58
    %v93 = vunpack.c.l.b16 %v59
    %v94 = vunpack.c.l.b16 %v60
    %v95 = vunpack.c.l.b16 %v70
    %v96 = vpack.c.b16 %v89, %v88
    %v97 = vpack.c.b16 %v91, %v90
    %v98 = vpack.c.b16 %v93, %v92
    %v99 = vpack.c.b16 %v95, %v94
    %vm100 = vsmask.f32 7424
    %v102 = vshrl.u32 %v96, 16
    %v104 = vshll.u32 %v96, 16
    %v106 = vrot.slane %v104, 1
    %v107 = vor.u32 %v102, %v106
    %v109 = vshll.u32 %v97, 16
    %v111 = vrot.slane %v109, 1
    %v112 = vsel %vm100, %v107, %v111
    %v113 = vshrl.u32 %v97, 16
    %v115 = vor.u32 %v113, %v111
    %v117 = vshll.u32 %v98, 16
    %v119 = vrot.slane %v117, 1
    %v120 = vsel %vm100, %v115, %v119
    %v121 = vshrl.u32 %v98, 16
    %v123 = vor.u32 %v121, %v119
    %v125 = vshll.u32 %v99, 16
    %v127 = vrot.slane %v125, 1
    %v128 = vsel %vm100, %v123, %v127
    %v129 = vshrl.u32 %v99, 16
    %v131 = vor.u32 %v129, %v127
    %v140 = vunpack.c.l.b16 %v72
    %v141 = vunpack.c.h.b16 %v72
    %v142 = vunpack.c.l.b16 %v73
    %v143 = vunpack.c.h.b16 %v73
    %v144 = vunpack.c.l.b16 %v74
    %v145 = vunpack.c.h.b16 %v74
    %v146 = vunpack.c.l.b16 %v75
    %v147 = vunpack.c.h.b16 %v75
    %v148 = vunpack.c.l.b16 %v76
    %v149 = vunpack.c.h.b16 %v76
    %v150 = vunpack.c.l.b16 %v77
    %v151 = vunpack.c.h.b16 %v77
    %v152 = vunpack.c.l.b16 %v78
    %v153 = vunpack.c.h.b16 %v78
    %v154 = vunpack.c.l.b16 %v79
    %v155 = vunpack.c.h.b16 %v79
    %v156 = vpack.c.b16 %v144, %v140
    %v157 = vpack.c.b16 %v145, %v141
    %v158 = vpack.c.b16 %v146, %v142
    %v159 = vpack.c.b16 %v147, %v143
    %v160 = vpack.c.b16 %v152, %v148
    %v161 = vpack.c.b16 %v153, %v149
    %v162 = vpack.c.b16 %v154, %v150
    %v163 = vpack.c.b16 %v155, %v151
    %vm172 = vcmask 261120
    %v174 = vsel %vm172, %v112, 0
    %v177 = vsel %vm172, %v120, 0
    %v180 = vsel %vm172, %v128, 0
    %v183 = vsel %vm172, %v131, 0
    %185 = vmatprep.subr.bf16.mxu0 %v157
    %186 = vmatpush1.bf16.msra.mxu0 %v156
    %187 = vmatprep.subr.bf16.mxu0 %v161
    %188 = vmatpush1.bf16.msra.mxu0 %v160
    %189 = vmatprep.subr.bf16.mxu0 0
    %190 = vmatpush1.bf16.msra.mxu0 0
    %191 = vmatprep.subr.bf16.mxu0 0
    %192 = vmatpush1.bf16.msra.mxu0 0
    %193 = vmatprep.subr.bf16.mxu0 0
    %194 = vmatpush1.bf16.msra.mxu0 0
    %195 = vmatprep.subr.bf16.mxu0 0
    %196 = vmatpush1.bf16.msra.mxu0 0
    %197 = vmatprep.subr.bf16.mxu0 0
    %198 = vmatpush1.bf16.msra.mxu0 0
    %199 = vmatprep.subr.bf16.mxu0 0
    %200 = vmatpush1.bf16.msra.mxu0 0
    %201 = vmatprep.subr.bf16.mxu0 0
    %202 = vmatpush1.bf16.msra.mxu0 0
    %203 = vmatprep.subr.bf16.mxu0 0
    %204 = vmatpush1.bf16.msra.mxu0 0
    %205 = vmatprep.subr.bf16.mxu0 0
    %206 = vmatpush1.bf16.msra.mxu0 0
    %207 = vmatprep.subr.bf16.mxu0 0
    %208 = vmatpush1.bf16.msra.mxu0 0
    %209 = vmatprep.subr.bf16.mxu0 0
    %210 = vmatpush1.bf16.msra.mxu0 0
    %211 = vmatprep.subr.bf16.mxu0 0
    %212 = vmatpush1.bf16.msra.mxu0 0
    %213 = vmatprep.subr.bf16.mxu0 0
    %214 = vmatpush1.bf16.msra.mxu0 0
    %215 = vmatprep.subr.bf16.mxu0 0
    %216 = vmatpush1.bf16.msra.mxu0 0
    %217 = vmatprep.mubr.bf16.mxu0 0
    %218 = vmatmul.mubr.bf16.gmra.mrb[0].mxu0 %v174
    %v219 = vpop.f32.mrb[0].mxu0
    %v220 = vadd.f32 0.0, %v219
    %v221 = vpop.f32.mrb[0].mxu0
    %v222 = vadd.f32 0.0, %v221
    %v223 = vpop.f32.mrb[0].mxu0
    %v224 = vadd.f32 0.0, %v223
    %v225 = vpop.f32.mrb[0].mxu0
    %v226 = vadd.f32 0.0, %v225
    %227 = vmatprep.mubr.bf16.mxu0 0
    %228 = vmatmul.mubr.bf16.gmra.mrb[0].mxu0 %v177
    %v229 = vpop.f32.mrb[0].mxu0
    %v230 = vadd.f32 0.0, %v229
    %v231 = vpop.f32.mrb[0].mxu0
    %v232 = vadd.f32 0.0, %v231
    %v233 = vpop.f32.mrb[0].mxu0
    %v234 = vadd.f32 0.0, %v233
    %v235 = vpop.f32.mrb[0].mxu0
    %v236 = vadd.f32 0.0, %v235
    %237 = vmatprep.mubr.bf16.mxu0 0
    %238 = vmatmul.mubr.bf16.gmra.mrb[0].mxu0 %v180
    %v239 = vpop.f32.mrb[0].mxu0
    %v240 = vadd.f32 0.0, %v239
    %v241 = vpop.f32.mrb[0].mxu0
    %v242 = vadd.f32 0.0, %v241
    %v243 = vpop.f32.mrb[0].mxu0
    %v244 = vadd.f32 0.0, %v243
    %v245 = vpop.f32.mrb[0].mxu0
    %v246 = vadd.f32 0.0, %v245
    %247 = vmatprep.mubr.bf16.mxu0 0
    %248 = vmatmul.mubr.bf16.gmra.mrb[0].mxu0 %v183
    %v249 = vpop.f32.mrb[0].mxu0
    %v250 = vadd.f32 0.0, %v249
    %v251 = vpop.f32.mrb[0].mxu0
    %v252 = vadd.f32 0.0, %v251
    %v253 = vpop.f32.mrb[0].mxu0
    %v254 = vadd.f32 0.0, %v253
    %v255 = vpop.f32.mrb[0].mxu0
    %v256 = vadd.f32 0.0, %v255
    %257 = vdwg.mxu0
    %258 = vmatprep.subr.bf16.mxu0 %v159
    %259 = vmatpush1.bf16.msra.mxu0 %v158
    %260 = vmatprep.subr.bf16.mxu0 %v163
    %261 = vmatpush1.bf16.msra.mxu0 %v162
    %262 = vmatprep.subr.bf16.mxu0 0
    %263 = vmatpush1.bf16.msra.mxu0 0
    %264 = vmatprep.subr.bf16.mxu0 0
    %265 = vmatpush1.bf16.msra.mxu0 0
    %266 = vmatprep.subr.bf16.mxu0 0
    %267 = vmatpush1.bf16.msra.mxu0 0
    %268 = vmatprep.subr.bf16.mxu0 0
    %269 = vmatpush1.bf16.msra.mxu0 0
    %270 = vmatprep.subr.bf16.mxu0 0
    %271 = vmatpush1.bf16.msra.mxu0 0
    %272 = vmatprep.subr.bf16.mxu0 0
    %273 = vmatpush1.bf16.msra.mxu0 0
    %274 = vmatprep.subr.bf16.mxu0 0
    %275 = vmatpush1.bf16.msra.mxu0 0
    %276 = vmatprep.subr.bf16.mxu0 0
    %277 = vmatpush1.bf16.msra.mxu0 0
    %278 = vmatprep.subr.bf16.mxu0 0
    %279 = vmatpush1.bf16.msra.mxu0 0
    %280 = vmatprep.subr.bf16.mxu0 0
    %281 = vmatpush1.bf16.msra.mxu0 0
    %282 = vmatprep.subr.bf16.mxu0 0
    %283 = vmatpush1.bf16.msra.mxu0 0
    %284 = vmatprep.subr.bf16.mxu0 0
    %285 = vmatpush1.bf16.msra.mxu0 0
    %286 = vmatprep.subr.bf16.mxu0 0
    %287 = vmatpush1.bf16.msra.mxu0 0
    %288 = vmatprep.subr.bf16.mxu0 0
    %289 = vmatpush1.bf16.msra.mxu0 0
    %290 = vmatprep.mubr.bf16.mxu0 0
    %291 = vmatmul.mubr.bf16.gmra.mrb[0].mxu0 %v174
    %v292 = vpop.f32.mrb[0].mxu0
    %v293 = vadd.f32 0.0, %v292
    %v294 = vpop.f32.mrb[0].mxu0
    %v295 = vadd.f32 0.0, %v294
    %v296 = vpop.f32.mrb[0].mxu0
    %v297 = vadd.f32 0.0, %v296
    %v298 = vpop.f32.mrb[0].mxu0
    %v299 = vadd.f32 0.0, %v298
    %300 = vmatprep.mubr.bf16.mxu0 0
    %301 = vmatmul.mubr.bf16.gmra.mrb[0].mxu0 %v177
    %v302 = vpop.f32.mrb[0].mxu0
    %v303 = vadd.f32 0.0, %v302
    %v304 = vpop.f32.mrb[0].mxu0
    %v305 = vadd.f32 0.0, %v304
    %v306 = vpop.f32.mrb[0].mxu0
    %v307 = vadd.f32 0.0, %v306
    %v308 = vpop.f32.mrb[0].mxu0
    %v309 = vadd.f32 0.0, %v308
    %310 = vmatprep.mubr.bf16.mxu0 0
    %311 = vmatmul.mubr.bf16.gmra.mrb[0].mxu0 %v180
    %v312 = vpop.f32.mrb[0].mxu0
    %v313 = vadd.f32 0.0, %v312
    %v314 = vpop.f32.mrb[0].mxu0
    %v315 = vadd.f32 0.0, %v314
    %v316 = vpop.f32.mrb[0].mxu0
    %v317 = vadd.f32 0.0, %v316
    %v318 = vpop.f32.mrb[0].mxu0
    %v319 = vadd.f32 0.0, %v318
    %320 = vmatprep.mubr.bf16.mxu0 0
    %321 = vmatmul.mubr.bf16.gmra.mrb[0].mxu0 %v183
    %v322 = vpop.f32.mrb[0].mxu0
    %v323 = vadd.f32 0.0, %v322
    %v324 = vpop.f32.mrb[0].mxu0
    %v325 = vadd.f32 0.0, %v324
    %v326 = vpop.f32.mrb[0].mxu0
    %v327 = vadd.f32 0.0, %v326
    %v328 = vpop.f32.mrb[0].mxu0
    %v329 = vadd.f32 0.0, %v328
    %330 = vdwg.mxu0
    %v332 = vunpack.c.l.b16 %v61
    %v333 = vpack.c.b16 %v332, %v94
    %v342 = vunpack.c.l.b16 %v62
    %v343 = vunpack.c.h.b16 %v62
    %v344 = vunpack.c.l.b16 %v63
    %v345 = vunpack.c.h.b16 %v63
    %v346 = vunpack.c.l.b16 %v64
    %v347 = vunpack.c.h.b16 %v64
    %v348 = vunpack.c.l.b16 %v65
    %v349 = vunpack.c.h.b16 %v65
    %v350 = vunpack.c.l.b16 %v66
    %v351 = vunpack.c.h.b16 %v66
    %v352 = vunpack.c.l.b16 %v67
    %v353 = vunpack.c.h.b16 %v67
    %v354 = vunpack.c.l.b16 %v68
    %v355 = vunpack.c.h.b16 %v68
    %v356 = vunpack.c.l.b16 %v69
    %v357 = vunpack.c.h.b16 %v69
    %v358 = vpack.c.b16 %v346, %v342
    %v359 = vpack.c.b16 %v347, %v343
    %v360 = vpack.c.b16 %v348, %v344
    %v361 = vpack.c.b16 %v349, %v345
    %v362 = vpack.c.b16 %v354, %v350
    %v363 = vpack.c.b16 %v355, %v351
    %v364 = vpack.c.b16 %v356, %v352
    %v365 = vpack.c.b16 %v357, %v353
    %v374 = vsel %vm172, %v96, 0
    %v376 = vsel %vm172, %v97, 0
    %v378 = vsel %vm172, %v98, 0
    %v381 = vsel %vm172, %v333, 0
    %383 = vmatprep.subr.bf16.mxu0 %v359
    %384 = vmatpush1.bf16.msra.mxu0 %v358
    %385 = vmatprep.subr.bf16.mxu0 %v363
    %386 = vmatpush1.bf16.msra.mxu0 %v362
    %387 = vmatprep.subr.bf16.mxu0 0
    %388 = vmatpush1.bf16.msra.mxu0 0
    %389 = vmatprep.subr.bf16.mxu0 0
    %390 = vmatpush1.bf16.msra.mxu0 0
    %391 = vmatprep.subr.bf16.mxu0 0
    %392 = vmatpush1.bf16.msra.mxu0 0
    %393 = vmatprep.subr.bf16.mxu0 0
    %394 = vmatpush1.bf16.msra.mxu0 0
    %395 = vmatprep.subr.bf16.mxu0 0
    %396 = vmatpush1.bf16.msra.mxu0 0
    %397 = vmatprep.subr.bf16.mxu0 0
    %398 = vmatpush1.bf16.msra.mxu0 0
    %399 = vmatprep.subr.bf16.mxu0 0
    %400 = vmatpush1.bf16.msra.mxu0 0
    %401 = vmatprep.subr.bf16.mxu0 0
    %402 = vmatpush1.bf16.msra.mxu0 0
    %403 = vmatprep.subr.bf16.mxu0 0
    %404 = vmatpush1.bf16.msra.mxu0 0
    %405 = vmatprep.subr.bf16.mxu0 0
    %406 = vmatpush1.bf16.msra.mxu0 0
    %407 = vmatprep.subr.bf16.mxu0 0
    %408 = vmatpush1.bf16.msra.mxu0 0
    %409 = vmatprep.subr.bf16.mxu0 0
    %410 = vmatpush1.bf16.msra.mxu0 0
    %411 = vmatprep.subr.bf16.mxu0 0
    %412 = vmatpush1.bf16.msra.mxu0 0
    %413 = vmatprep.subr.bf16.mxu0 0
    %414 = vmatpush1.bf16.msra.mxu0 0
    %415 = vmatprep.mubr.bf16.mxu0 0
    %416 = vmatmul.mubr.bf16.gmra.mrb[0].mxu0 %v374
    %v417 = vpop.f32.mrb[0].mxu0
    %v418 = vadd.f32 %v220, %v417
    %v419 = vpop.f32.mrb[0].mxu0
    %v420 = vadd.f32 %v222, %v419
    %v421 = vpop.f32.mrb[0].mxu0
    %v422 = vadd.f32 %v224, %v421
    %v423 = vpop.f32.mrb[0].mxu0
    %v424 = vadd.f32 %v226, %v423
    %425 = vmatprep.mubr.bf16.mxu0 0
    %426 = vmatmul.mubr.bf16.gmra.mrb[0].mxu0 %v376
    %v427 = vpop.f32.mrb[0].mxu0
    %v428 = vadd.f32 %v230, %v427
    %v429 = vpop.f32.mrb[0].mxu0
    %v430 = vadd.f32 %v232, %v429
    %v431 = vpop.f32.mrb[0].mxu0
    %v432 = vadd.f32 %v234, %v431
    %v433 = vpop.f32.mrb[0].mxu0
    %v434 = vadd.f32 %v236, %v433
    %435 = vmatprep.mubr.bf16.mxu0 0
    %436 = vmatmul.mubr.bf16.gmra.mrb[0].mxu0 %v378
    %v437 = vpop.f32.mrb[0].mxu0
    %v438 = vadd.f32 %v240, %v437
    %v439 = vpop.f32.mrb[0].mxu0
    %v440 = vadd.f32 %v242, %v439
    %v441 = vpop.f32.mrb[0].mxu0
    %v442 = vadd.f32 %v244, %v441
    %v443 = vpop.f32.mrb[0].mxu0
    %v444 = vadd.f32 %v246, %v443
    %445 = vmatprep.mubr.bf16.mxu0 0
    %446 = vmatmul.mubr.bf16.gmra.mrb[0].mxu0 %v381
    %v447 = vpop.f32.mrb[0].mxu0
    %v448 = vadd.f32 %v250, %v447
    %v449 = vpop.f32.mrb[0].mxu0
    %v450 = vadd.f32 %v252, %v449
    %v451 = vpop.f32.mrb[0].mxu0
    %v452 = vadd.f32 %v254, %v451
    %v453 = vpop.f32.mrb[0].mxu0
    %v454 = vadd.f32 %v256, %v453
    %455 = vdwg.mxu0
    %456 = vmatprep.subr.bf16.mxu0 %v361
    %457 = vmatpush1.bf16.msra.mxu0 %v360
    %458 = vmatprep.subr.bf16.mxu0 %v365
    %459 = vmatpush1.bf16.msra.mxu0 %v364
    %460 = vmatprep.subr.bf16.mxu0 0
    %461 = vmatpush1.bf16.msra.mxu0 0
    %462 = vmatprep.subr.bf16.mxu0 0
    %463 = vmatpush1.bf16.msra.mxu0 0
    %464 = vmatprep.subr.bf16.mxu0 0
    %465 = vmatpush1.bf16.msra.mxu0 0
    %466 = vmatprep.subr.bf16.mxu0 0
    %467 = vmatpush1.bf16.msra.mxu0 0
    %468 = vmatprep.subr.bf16.mxu0 0
    %469 = vmatpush1.bf16.msra.mxu0 0
    %470 = vmatprep.subr.bf16.mxu0 0
    %471 = vmatpush1.bf16.msra.mxu0 0
    %472 = vmatprep.subr.bf16.mxu0 0
    %473 = vmatpush1.bf16.msra.mxu0 0
    %474 = vmatprep.subr.bf16.mxu0 0
    %475 = vmatpush1.bf16.msra.mxu0 0
    %476 = vmatprep.subr.bf16.mxu0 0
    %477 = vmatpush1.bf16.msra.mxu0 0
    %478 = vmatprep.subr.bf16.mxu0 0
    %479 = vmatpush1.bf16.msra.mxu0 0
    %480 = vmatprep.subr.bf16.mxu0 0
    %481 = vmatpush1.bf16.msra.mxu0 0
    %482 = vmatprep.subr.bf16.mxu0 0
    %483 = vmatpush1.bf16.msra.mxu0 0
    %484 = vmatprep.subr.bf16.mxu0 0
    %485 = vmatpush1.bf16.msra.mxu0 0
    %486 = vmatprep.subr.bf16.mxu0 0
    %487 = vmatpush1.bf16.msra.mxu0 0
    %488 = vmatprep.mubr.bf16.mxu0 0
    %489 = vmatmul.mubr.bf16.gmra.mrb[0].mxu0 %v374
    %v490 = vpop.f32.mrb[0].mxu0
    %v491 = vadd.f32 %v293, %v490
    %v492 = vpop.f32.mrb[0].mxu0
    %v493 = vadd.f32 %v295, %v492
    %v494 = vpop.f32.mrb[0].mxu0
    %v495 = vadd.f32 %v297, %v494
    %v496 = vpop.f32.mrb[0].mxu0
    %v497 = vadd.f32 %v299, %v496
    %498 = vmatprep.mubr.bf16.mxu0 0
    %499 = vmatmul.mubr.bf16.gmra.mrb[0].mxu0 %v376
    %v500 = vpop.f32.mrb[0].mxu0
    %v501 = vadd.f32 %v303, %v500
    %v502 = vpop.f32.mrb[0].mxu0
    %v503 = vadd.f32 %v305, %v502
    %v504 = vpop.f32.mrb[0].mxu0
    %v505 = vadd.f32 %v307, %v504
    %v506 = vpop.f32.mrb[0].mxu0
    %v507 = vadd.f32 %v309, %v506
    %508 = vmatprep.mubr.bf16.mxu0 0
    %509 = vmatmul.mubr.bf16.gmra.mrb[0].mxu0 %v378
    %v510 = vpop.f32.mrb[0].mxu0
    %v511 = vadd.f32 %v313, %v510
    %v512 = vpop.f32.mrb[0].mxu0
    %v513 = vadd.f32 %v315, %v512
    %v514 = vpop.f32.mrb[0].mxu0
    %v515 = vadd.f32 %v317, %v514
    %v516 = vpop.f32.mrb[0].mxu0
    %v517 = vadd.f32 %v319, %v516
    %518 = vmatprep.mubr.bf16.mxu0 0
    %519 = vmatmul.mubr.bf16.gmra.mrb[0].mxu0 %v381
    %v520 = vpop.f32.mrb[0].mxu0
    %v521 = vadd.f32 %v323, %v520
    %v522 = vpop.f32.mrb[0].mxu0
    %v523 = vadd.f32 %v325, %v522
    %v524 = vpop.f32.mrb[0].mxu0
    %v525 = vadd.f32 %v327, %v524
    %v526 = vpop.f32.mrb[0].mxu0
    %v527 = vadd.f32 %v329, %v526
    %528 = vdwg.mxu0
    %v529 = vld [vmem:[%s0] sm:$0xe]
    %s530 = scalar_lea.vmem [#allocation4], 128
    %v531 = vld [vmem:[%s530] sm:$0xff]
    %v532 = vld [vmem:[%s530 + $0x8] sm:$0xff]
    %v533 = vld [vmem:[%s530 + $0x10] sm:$0xff]
    %v534 = vld [vmem:[%s530 + $0x18] sm:$0xff]
    %v535 = vld [vmem:[%s530 + $0x20] sm:$0xff]
    %v536 = vld [vmem:[%s530 + $0x28] sm:$0xff]
    %v537 = vld [vmem:[%s530 + $0x30] sm:$0xff]
    %v538 = vld [vmem:[%s530 + $0x38] sm:$0xff]
    %v540 = vunpack.c.l.b16 %v529
    %v541 = vpack.c.b16 %v89, %v540
    %vm542 = vcmask 1046528
    %v543 = vrot.slane %v541, 1
    %v544 = vrot.slane %v97, 1
    %v545 = vsel %vm542, %v543, %v544
    %v546 = vrot.slane %v98, 1
    %v547 = vsel %vm542, %v544, %v546
    %v548 = vrot.slane %v99, 1
    %v549 = vsel %vm542, %v546, %v548
    %v558 = vunpack.c.l.b16 %v531
    %v559 = vunpack.c.h.b16 %v531
    %v560 = vunpack.c.l.b16 %v532
    %v561 = vunpack.c.h.b16 %v532
    %v562 = vunpack.c.l.b16 %v533
    %v563 = vunpack.c.h.b16 %v533
    %v564 = vunpack.c.l.b16 %v534
    %v565 = vunpack.c.h.b16 %v534
    %v566 = vunpack.c.l.b16 %v535
    %v567 = vunpack.c.h.b16 %v535
    %v568 = vunpack.c.l.b16 %v536
    %v569 = vunpack.c.h.b16 %v536
    %v570 = vunpack.c.l.b16 %v537
    %v571 = vunpack.c.h.b16 %v537
    %v572 = vunpack.c.l.b16 %v538
    %v573 = vunpack.c.h.b16 %v538
    %v574 = vpack.c.b16 %v562, %v558
    %v575 = vpack.c.b16 %v563, %v559
    %v576 = vpack.c.b16 %v564, %v560
    %v577 = vpack.c.b16 %v565, %v561
    %v578 = vpack.c.b16 %v570, %v566
    %v579 = vpack.c.b16 %v571, %v567
    %v580 = vpack.c.b16 %v572, %v568
    %v581 = vpack.c.b16 %v573, %v569
    %v591 = vsel %vm172, %v545, 0
    %v594 = vsel %vm172, %v547, 0
    %v597 = vsel %vm172, %v549, 0
    %v600 = vsel %vm172, %v548, 0
    %602 = vmatprep.subr.bf16.mxu0 %v575
    %603 = vmatpush1.bf16.msra.mxu0 %v574
    %604 = vmatprep.subr.bf16.mxu0 %v579
    %605 = vmatpush1.bf16.msra.mxu0 %v578
    %606 = vmatprep.subr.bf16.mxu0 0
    %607 = vmatpush1.bf16.msra.mxu0 0
    %608 = vmatprep.subr.bf16.mxu0 0
    %609 = vmatpush1.bf16.msra.mxu0 0
    %610 = vmatprep.subr.bf16.mxu0 0
    %611 = vmatpush1.bf16.msra.mxu0 0
    %612 = vmatprep.subr.bf16.mxu0 0
    %613 = vmatpush1.bf16.msra.mxu0 0
    %614 = vmatprep.subr.bf16.mxu0 0
    %615 = vmatpush1.bf16.msra.mxu0 0
    %616 = vmatprep.subr.bf16.mxu0 0
    %617 = vmatpush1.bf16.msra.mxu0 0
    %618 = vmatprep.subr.bf16.mxu0 0
    %619 = vmatpush1.bf16.msra.mxu0 0
    %620 = vmatprep.subr.bf16.mxu0 0
    %621 = vmatpush1.bf16.msra.mxu0 0
    %622 = vmatprep.subr.bf16.mxu0 0
    %623 = vmatpush1.bf16.msra.mxu0 0
    %624 = vmatprep.subr.bf16.mxu0 0
    %625 = vmatpush1.bf16.msra.mxu0 0
    %626 = vmatprep.subr.bf16.mxu0 0
    %627 = vmatpush1.bf16.msra.mxu0 0
    %628 = vmatprep.subr.bf16.mxu0 0
    %629 = vmatpush1.bf16.msra.mxu0 0
    %630 = vmatprep.subr.bf16.mxu0 0
    %631 = vmatpush1.bf16.msra.mxu0 0
    %632 = vmatprep.subr.bf16.mxu0 0
    %633 = vmatpush1.bf16.msra.mxu0 0
    %634 = vmatprep.mubr.bf16.mxu0 0
    %635 = vmatmul.mubr.bf16.gmra.mrb[0].mxu0 %v591
    %v636 = vpop.f32.mrb[0].mxu0
    %v637 = vadd.f32 0.0, %v636
    %v638 = vpop.f32.mrb[0].mxu0
    %v639 = vadd.f32 0.0, %v638
    %v640 = vpop.f32.mrb[0].mxu0
    %v641 = vadd.f32 0.0, %v640
    %v642 = vpop.f32.mrb[0].mxu0
    %v643 = vadd.f32 0.0, %v642
    %644 = vmatprep.mubr.bf16.mxu0 0
    %645 = vmatmul.mubr.bf16.gmra.mrb[0].mxu0 %v594
    %v646 = vpop.f32.mrb[0].mxu0
    %v647 = vadd.f32 0.0, %v646
    %v648 = vpop.f32.mrb[0].mxu0
    %v649 = vadd.f32 0.0, %v648
    %v650 = vpop.f32.mrb[0].mxu0
    %v651 = vadd.f32 0.0, %v650
    %v652 = vpop.f32.mrb[0].mxu0
    %v653 = vadd.f32 0.0, %v652
    %654 = vmatprep.mubr.bf16.mxu0 0
    %655 = vmatmul.mubr.bf16.gmra.mrb[0].mxu0 %v597
    %v656 = vpop.f32.mrb[0].mxu0
    %v657 = vadd.f32 0.0, %v656
    %v658 = vpop.f32.mrb[0].mxu0
    %v659 = vadd.f32 0.0, %v658
    %v660 = vpop.f32.mrb[0].mxu0
    %v661 = vadd.f32 0.0, %v660
    %v662 = vpop.f32.mrb[0].mxu0
    %v663 = vadd.f32 0.0, %v662
    %664 = vmatprep.mubr.bf16.mxu0 0
    %665 = vmatmul.mubr.bf16.gmra.mrb[0].mxu0 %v600
    %v666 = vpop.f32.mrb[0].mxu0
    %v667 = vadd.f32 0.0, %v666
    %v668 = vpop.f32.mrb[0].mxu0
    %v669 = vadd.f32 0.0, %v668
    %v670 = vpop.f32.mrb[0].mxu0
    %v671 = vadd.f32 0.0, %v670
    %v672 = vpop.f32.mrb[0].mxu0
    %v673 = vadd.f32 0.0, %v672
    %674 = vdwg.mxu0
    %675 = vmatprep.subr.bf16.mxu0 %v577
    %676 = vmatpush1.bf16.msra.mxu0 %v576
    %677 = vmatprep.subr.bf16.mxu0 %v581
    %678 = vmatpush1.bf16.msra.mxu0 %v580
    %679 = vmatprep.subr.bf16.mxu0 0
    %680 = vmatpush1.bf16.msra.mxu0 0
    %681 = vmatprep.subr.bf16.mxu0 0
    %682 = vmatpush1.bf16.msra.mxu0 0
    %683 = vmatprep.subr.bf16.mxu0 0
    %684 = vmatpush1.bf16.msra.mxu0 0
    %685 = vmatprep.subr.bf16.mxu0 0
    %686 = vmatpush1.bf16.msra.mxu0 0
    %687 = vmatprep.subr.bf16.mxu0 0
    %688 = vmatpush1.bf16.msra.mxu0 0
    %689 = vmatprep.subr.bf16.mxu0 0
    %690 = vmatpush1.bf16.msra.mxu0 0
    %691 = vmatprep.subr.bf16.mxu0 0
    %692 = vmatpush1.bf16.msra.mxu0 0
    %693 = vmatprep.subr.bf16.mxu0 0
    %694 = vmatpush1.bf16.msra.mxu0 0
    %695 = vmatprep.subr.bf16.mxu0 0
    %696 = vmatpush1.bf16.msra.mxu0 0
    %697 = vmatprep.subr.bf16.mxu0 0
    %698 = vmatpush1.bf16.msra.mxu0 0
    %699 = vmatprep.subr.bf16.mxu0 0
    %700 = vmatpush1.bf16.msra.mxu0 0
    %701 = vmatprep.subr.bf16.mxu0 0
    %702 = vmatpush1.bf16.msra.mxu0 0
    %703 = vmatprep.subr.bf16.mxu0 0
    %704 = vmatpush1.bf16.msra.mxu0 0
    %705 = vmatprep.subr.bf16.mxu0 0
    %706 = vmatpush1.bf16.msra.mxu0 0
    %707 = vmatprep.mubr.bf16.mxu0 0
    %708 = vmatmul.mubr.bf16.gmra.mrb[0].mxu0 %v591
    %v709 = vpop.f32.mrb[0].mxu0
    %v710 = vadd.f32 0.0, %v709
    %v711 = vpop.f32.mrb[0].mxu0
    %v712 = vadd.f32 0.0, %v711
    %v713 = vpop.f32.mrb[0].mxu0
    %v714 = vadd.f32 0.0, %v713
    %v715 = vpop.f32.mrb[0].mxu0
    %v716 = vadd.f32 0.0, %v715
    %717 = vmatprep.mubr.bf16.mxu0 0
    %718 = vmatmul.mubr.bf16.gmra.mrb[0].mxu0 %v594
    %v719 = vpop.f32.mrb[0].mxu0
    %v720 = vadd.f32 0.0, %v719
    %v721 = vpop.f32.mrb[0].mxu0
    %v722 = vadd.f32 0.0, %v721
    %v723 = vpop.f32.mrb[0].mxu0
    %v724 = vadd.f32 0.0, %v723
    %v725 = vpop.f32.mrb[0].mxu0
    %v726 = vadd.f32 0.0, %v725
    %727 = vmatprep.mubr.bf16.mxu0 0
    %728 = vmatmul.mubr.bf16.gmra.mrb[0].mxu0 %v597
    %v729 = vpop.f32.mrb[0].mxu0
    %v730 = vadd.f32 0.0, %v729
    %v731 = vpop.f32.mrb[0].mxu0
    %v732 = vadd.f32 0.0, %v731
    %v733 = vpop.f32.mrb[0].mxu0
    %v734 = vadd.f32 0.0, %v733
    %v735 = vpop.f32.mrb[0].mxu0
    %v736 = vadd.f32 0.0, %v735
    %737 = vmatprep.mubr.bf16.mxu0 0
    %738 = vmatmul.mubr.bf16.gmra.mrb[0].mxu0 %v600
    %v739 = vpop.f32.mrb[0].mxu0
    %v740 = vadd.f32 0.0, %v739
    %v741 = vpop.f32.mrb[0].mxu0
    %v742 = vadd.f32 0.0, %v741
    %v743 = vpop.f32.mrb[0].mxu0
    %v744 = vadd.f32 0.0, %v743
    %v745 = vpop.f32.mrb[0].mxu0
    %v746 = vadd.f32 0.0, %v745
    %747 = vdwg.mxu0
    %v748 = vadd.f32 %v418, %v637
    %v749 = vadd.f32 %v420, %v639
    %v750 = vadd.f32 %v491, %v710
    %v751 = vadd.f32 %v493, %v712
    %v752 = vadd.f32 %v422, %v641
    %v753 = vadd.f32 %v424, %v643
    %v754 = vadd.f32 %v495, %v714
    %v755 = vadd.f32 %v497, %v716
    %v756 = vadd.f32 %v428, %v647
    %v757 = vadd.f32 %v430, %v649
    %v758 = vadd.f32 %v501, %v720
    %v759 = vadd.f32 %v503, %v722
    %v760 = vadd.f32 %v432, %v651
    %v761 = vadd.f32 %v434, %v653
    %v762 = vadd.f32 %v505, %v724
    %v763 = vadd.f32 %v507, %v726
    %v764 = vadd.f32 %v438, %v657
    %v765 = vadd.f32 %v440, %v659
    %v766 = vadd.f32 %v511, %v730
    %v767 = vadd.f32 %v513, %v732
    %v768 = vadd.f32 %v442, %v661
    %v769 = vadd.f32 %v444, %v663
    %v770 = vadd.f32 %v515, %v734
    %v771 = vadd.f32 %v517, %v736
    %v772 = vadd.f32 %v448, %v667
    %v773 = vadd.f32 %v450, %v669
    %v774 = vadd.f32 %v521, %v740
    %v775 = vadd.f32 %v523, %v742
    %v776 = vadd.f32 %v452, %v671
    %v777 = vadd.f32 %v454, %v673
    %v778 = vadd.f32 %v525, %v744
    %v779 = vadd.f32 %v527, %v746
    %v780 = vld [vmem:[%s0 + $0x1c] sm:$0xf]
    %s781 = scalar_lea.vmem [#allocation4], 192
    %v782 = vld [vmem:[%s781] sm:$0xff]
    %v783 = vld [vmem:[%s781 + $0x8] sm:$0xff]
    %v784 = vld [vmem:[%s781 + $0x10] sm:$0xff]
    %v785 = vld [vmem:[%s781 + $0x18] sm:$0xff]
    %v786 = vld [vmem:[%s781 + $0x20] sm:$0xff]
    %v787 = vld [vmem:[%s781 + $0x28] sm:$0xff]
    %v788 = vld [vmem:[%s781 + $0x30] sm:$0xff]
    %v789 = vld [vmem:[%s781 + $0x38] sm:$0xff]
    %v791 = vunpack.c.l.b16 %v780
    %v792 = vpack.c.b16 %v791, %v94
    %vm793 = vsmask.f32 6400
    %v795 = vshrl.u32 %v541, 16
    %v797 = vrot.slane %v795, 1
    %v798 = vshll.u32 %v541, 16
    %v800 = vrot.slane %v798, 2
    %v801 = vor.u32 %v797, %v800
    %v802 = vrot.slane %v113, 1
    %v803 = vrot.slane %v109, 2
    %v804 = vor.u32 %v802, %v803
    %v805 = vsel %vm793, %v801, %v804
    %v806 = vrot.slane %v121, 1
    %v807 = vrot.slane %v117, 2
    %v808 = vor.u32 %v806, %v807
    %v809 = vsel %vm793, %v804, %v808
    %v811 = vshrl.u32 %v792, 16
    %v813 = vrot.slane %v811, 1
    %v814 = vshll.u32 %v792, 16
    %v816 = vrot.slane %v814, 2
    %v817 = vor.u32 %v813, %v816
    %v818 = vsel %vm793, %v808, %v817
    %v827 = vunpack.c.l.b16 %v782
    %v828 = vunpack.c.h.b16 %v782
    %v829 = vunpack.c.l.b16 %v783
    %v830 = vunpack.c.h.b16 %v783
    %v831 = vunpack.c.l.b16 %v784
    %v832 = vunpack.c.h.b16 %v784
    %v833 = vunpack.c.l.b16 %v785
    %v834 = vunpack.c.h.b16 %v785
    %v835 = vunpack.c.l.b16 %v786
    %v836 = vunpack.c.h.b16 %v786
    %v837 = vunpack.c.l.b16 %v787
    %v838 = vunpack.c.h.b16 %v787
    %v839 = vunpack.c.l.b16 %v788
    %v840 = vunpack.c.h.b16 %v788
    %v841 = vunpack.c.l.b16 %v789
    %v842 = vunpack.c.h.b16 %v789
    %v843 = vpack.c.b16 %v831, %v827
    %v844 = vpack.c.b16 %v832, %v828
    %v845 = vpack.c.b16 %v833, %v829
    %v846 = vpack.c.b16 %v834, %v830
    %v847 = vpack.c.b16 %v839, %v835
    %v848 = vpack.c.b16 %v840, %v836
    %v849 = vpack.c.b16 %v841, %v837
    %v850 = vpack.c.b16 %v842, %v838
    %v860 = vsel %vm172, %v805, 0
    %v863 = vsel %vm172, %v809, 0
    %v866 = vsel %vm172, %v818, 0
    %v869 = vsel %vm172, %v817, 0
    %871 = vmatprep.subr.bf16.mxu0 %v844
    %872 = vmatpush1.bf16.msra.mxu0 %v843
    %873 = vmatprep.subr.bf16.mxu0 %v848
    %874 = vmatpush1.bf16.msra.mxu0 %v847
    %875 = vmatprep.subr.bf16.mxu0 0
    %876 = vmatpush1.bf16.msra.mxu0 0
    %877 = vmatprep.subr.bf16.mxu0 0
    %878 = vmatpush1.bf16.msra.mxu0 0
    %879 = vmatprep.subr.bf16.mxu0 0
    %880 = vmatpush1.bf16.msra.mxu0 0
    %881 = vmatprep.subr.bf16.mxu0 0
    %882 = vmatpush1.bf16.msra.mxu0 0
    %883 = vmatprep.subr.bf16.mxu0 0
    %884 = vmatpush1.bf16.msra.mxu0 0
    %885 = vmatprep.subr.bf16.mxu0 0
    %886 = vmatpush1.bf16.msra.mxu0 0
    %887 = vmatprep.subr.bf16.mxu0 0
    %888 = vmatpush1.bf16.msra.mxu0 0
    %889 = vmatprep.subr.bf16.mxu0 0
    %890 = vmatpush1.bf16.msra.mxu0 0
    %891 = vmatprep.subr.bf16.mxu0 0
    %892 = vmatpush1.bf16.msra.mxu0 0
    %893 = vmatprep.subr.bf16.mxu0 0
    %894 = vmatpush1.bf16.msra.mxu0 0
    %895 = vmatprep.subr.bf16.mxu0 0
    %896 = vmatpush1.bf16.msra.mxu0 0
    %897 = vmatprep.subr.bf16.mxu0 0
    %898 = vmatpush1.bf16.msra.mxu0 0
    %899 = vmatprep.subr.bf16.mxu0 0
    %900 = vmatpush1.bf16.msra.mxu0 0
    %901 = vmatprep.subr.bf16.mxu0 0
    %902 = vmatpush1.bf16.msra.mxu0 0
    %903 = vmatprep.mubr.bf16.mxu0 0
    %904 = vmatmul.mubr.bf16.gmra.mrb[0].mxu0 %v860
    %v905 = vpop.f32.mrb[0].mxu0
    %v906 = vadd.f32 0.0, %v905
    %v907 = vpop.f32.mrb[0].mxu0
    %v908 = vadd.f32 0.0, %v907
    %v909 = vpop.f32.mrb[0].mxu0
    %v910 = vadd.f32 0.0, %v909
    %v911 = vpop.f32.mrb[0].mxu0
    %v912 = vadd.f32 0.0, %v911
    %913 = vmatprep.mubr.bf16.mxu0 0
    %914 = vmatmul.mubr.bf16.gmra.mrb[0].mxu0 %v863
    %v915 = vpop.f32.mrb[0].mxu0
    %v916 = vadd.f32 0.0, %v915
    %v917 = vpop.f32.mrb[0].mxu0
    %v918 = vadd.f32 0.0, %v917
    %v919 = vpop.f32.mrb[0].mxu0
    %v920 = vadd.f32 0.0, %v919
    %v921 = vpop.f32.mrb[0].mxu0
    %v922 = vadd.f32 0.0, %v921
    %923 = vmatprep.mubr.bf16.mxu0 0
    %924 = vmatmul.mubr.bf16.gmra.mrb[0].mxu0 %v866
    %v925 = vpop.f32.mrb[0].mxu0
    %v926 = vadd.f32 0.0, %v925
    %v927 = vpop.f32.mrb[0].mxu0
    %v928 = vadd.f32 0.0, %v927
    %v929 = vpop.f32.mrb[0].mxu0
    %v930 = vadd.f32 0.0, %v929
    %v931 = vpop.f32.mrb[0].mxu0
    %v932 = vadd.f32 0.0, %v931
    %933 = vmatprep.mubr.bf16.mxu0 0
    %934 = vmatmul.mubr.bf16.gmra.mrb[0].mxu0 %v869
    %v935 = vpop.f32.mrb[0].mxu0
    %v936 = vadd.f32 0.0, %v935
    %v937 = vpop.f32.mrb[0].mxu0
    %v938 = vadd.f32 0.0, %v937
    %v939 = vpop.f32.mrb[0].mxu0
    %v940 = vadd.f32 0.0, %v939
    %v941 = vpop.f32.mrb[0].mxu0
    %v942 = vadd.f32 0.0, %v941
    %943 = vdwg.mxu0
    %944 = vmatprep.subr.bf16.mxu0 %v846
    %945 = vmatpush1.bf16.msra.mxu0 %v845
    %946 = vmatprep.subr.bf16.mxu0 %v850
    %947 = vmatpush1.bf16.msra.mxu0 %v849
    %948 = vmatprep.subr.bf16.mxu0 0
    %949 = vmatpush1.bf16.msra.mxu0 0
    %950 = vmatprep.subr.bf16.mxu0 0
    %951 = vmatpush1.bf16.msra.mxu0 0
    %952 = vmatprep.subr.bf16.mxu0 0
    %953 = vmatpush1.bf16.msra.mxu0 0
    %954 = vmatprep.subr.bf16.mxu0 0
    %955 = vmatpush1.bf16.msra.mxu0 0
    %956 = vmatprep.subr.bf16.mxu0 0
    %957 = vmatpush1.bf16.msra.mxu0 0
    %958 = vmatprep.subr.bf16.mxu0 0
    %959 = vmatpush1.bf16.msra.mxu0 0
    %960 = vmatprep.subr.bf16.mxu0 0
    %961 = vmatpush1.bf16.msra.mxu0 0
    %962 = vmatprep.subr.bf16.mxu0 0
    %963 = vmatpush1.bf16.msra.mxu0 0
    %964 = vmatprep.subr.bf16.mxu0 0
    %965 = vmatpush1.bf16.msra.mxu0 0
    %966 = vmatprep.subr.bf16.mxu0 0
    %967 = vmatpush1.bf16.msra.mxu0 0
    %968 = vmatprep.subr.bf16.mxu0 0
    %969 = vmatpush1.bf16.msra.mxu0 0
    %970 = vmatprep.subr.bf16.mxu0 0
    %971 = vmatpush1.bf16.msra.mxu0 0
    %972 = vmatprep.subr.bf16.mxu0 0
    %973 = vmatpush1.bf16.msra.mxu0 0
    %974 = vmatprep.subr.bf16.mxu0 0
    %975 = vmatpush1.bf16.msra.mxu0 0
    %976 = vmatprep.mubr.bf16.mxu0 0
    %977 = vmatmul.mubr.bf16.gmra.mrb[0].mxu0 %v860
    %v978 = vpop.f32.mrb[0].mxu0
    %v979 = vadd.f32 0.0, %v978
    %v980 = vpop.f32.mrb[0].mxu0
    %v981 = vadd.f32 0.0, %v980
    %v982 = vpop.f32.mrb[0].mxu0
    %v983 = vadd.f32 0.0, %v982
    %v984 = vpop.f32.mrb[0].mxu0
    %v985 = vadd.f32 0.0, %v984
    %986 = vmatprep.mubr.bf16.mxu0 0
    %987 = vmatmul.mubr.bf16.gmra.mrb[0].mxu0 %v863
    %v988 = vpop.f32.mrb[0].mxu0
    %v989 = vadd.f32 0.0, %v988
    %v990 = vpop.f32.mrb[0].mxu0
    %v991 = vadd.f32 0.0, %v990
    %v992 = vpop.f32.mrb[0].mxu0
    %v993 = vadd.f32 0.0, %v992
    %v994 = vpop.f32.mrb[0].mxu0
    %v995 = vadd.f32 0.0, %v994
    %996 = vmatprep.mubr.bf16.mxu0 0
    %997 = vmatmul.mubr.bf16.gmra.mrb[0].mxu0 %v866
    %v998 = vpop.f32.mrb[0].mxu0
    %v999 = vadd.f32 0.0, %v998
    %v1000 = vpop.f32.mrb[0].mxu0
    %v1001 = vadd.f32 0.0, %v1000
    %v1002 = vpop.f32.mrb[0].mxu0
    %v1003 = vadd.f32 0.0, %v1002
    %v1004 = vpop.f32.mrb[0].mxu0
    %v1005 = vadd.f32 0.0, %v1004
    %1006 = vmatprep.mubr.bf16.mxu0 0
    %1007 = vmatmul.mubr.bf16.gmra.mrb[0].mxu0 %v869
    %v1008 = vpop.f32.mrb[0].mxu0
    %v1009 = vadd.f32 0.0, %v1008
    %v1010 = vpop.f32.mrb[0].mxu0
    %v1011 = vadd.f32 0.0, %v1010
    %v1012 = vpop.f32.mrb[0].mxu0
    %v1013 = vadd.f32 0.0, %v1012
    %v1014 = vpop.f32.mrb[0].mxu0
    %v1015 = vadd.f32 0.0, %v1014
    %1016 = vdwg.mxu0
    %v1017 = vadd.f32 %v748, %v906
    %v1018 = vadd.f32 %v749, %v908
    %v1019 = vadd.f32 %v750, %v979
    %v1020 = vadd.f32 %v751, %v981
    %v1021 = vadd.f32 %v752, %v910
    %v1022 = vadd.f32 %v753, %v912
    %v1023 = vadd.f32 %v754, %v983
    %v1024 = vadd.f32 %v755, %v985
    %v1025 = vadd.f32 %v756, %v916
    %v1026 = vadd.f32 %v757, %v918
    %v1027 = vadd.f32 %v758, %v989
    %v1028 = vadd.f32 %v759, %v991
    %v1029 = vadd.f32 %v760, %v920
    %v1030 = vadd.f32 %v761, %v922
    %v1031 = vadd.f32 %v762, %v993
    %v1032 = vadd.f32 %v763, %v995
    %v1033 = vadd.f32 %v764, %v926
    %v1034 = vadd.f32 %v765, %v928
    %v1035 = vadd.f32 %v766, %v999
    %v1036 = vadd.f32 %v767, %v1001
    %v1037 = vadd.f32 %v768, %v930
    %v1038 = vadd.f32 %v769, %v932
    %v1039 = vadd.f32 %v770, %v1003
    %v1040 = vadd.f32 %v771, %v1005
    %v1041 = vadd.f32 %v772, %v936
    %v1042 = vadd.f32 %v773, %v938
    %v1043 = vadd.f32 %v774, %v1009
    %v1044 = vadd.f32 %v775, %v1011
    %v1045 = vadd.f32 %v776, %v940
    %v1046 = vadd.f32 %v777, %v942
    %v1047 = vadd.f32 %v778, %v1013
    %v1048 = vadd.f32 %v779, %v1015
    %v1049 = vld [vmem:[%s0] sm:$0xc]
    %s1050 = scalar_lea.vmem [#allocation4], 256
    %v1051 = vld [vmem:[%s1050] sm:$0xff]
    %v1052 = vld [vmem:[%s1050 + $0x8] sm:$0xff]
    %v1053 = vld [vmem:[%s1050 + $0x10] sm:$0xff]
    %v1054 = vld [vmem:[%s1050 + $0x18] sm:$0xff]
    %v1055 = vld [vmem:[%s1050 + $0x20] sm:$0xff]
    %v1056 = vld [vmem:[%s1050 + $0x28] sm:$0xff]
    %v1057 = vld [vmem:[%s1050 + $0x30] sm:$0xff]
    %v1058 = vld [vmem:[%s1050 + $0x38] sm:$0xff]
    %v1060 = vunpack.c.l.b16 %v1049
    %v1061 = vpack.c.b16 %v89, %v1060
    %vm1062 = vcmask 1045504
    %v1063 = vrot.slane %v1061, 2
    %v1064 = vrot.slane %v97, 2
    %v1065 = vsel %vm1062, %v1063, %v1064
    %v1066 = vrot.slane %v98, 2
    %v1067 = vsel %vm1062, %v1064, %v1066
    %v1068 = vrot.slane %v792, 2
    %v1069 = vsel %vm1062, %v1066, %v1068
    %v1078 = vunpack.c.l.b16 %v1051
    %v1079 = vunpack.c.h.b16 %v1051
    %v1080 = vunpack.c.l.b16 %v1052
    %v1081 = vunpack.c.h.b16 %v1052
    %v1082 = vunpack.c.l.b16 %v1053
    %v1083 = vunpack.c.h.b16 %v1053
    %v1084 = vunpack.c.l.b16 %v1054
    %v1085 = vunpack.c.h.b16 %v1054
    %v1086 = vunpack.c.l.b16 %v1055
    %v1087 = vunpack.c.h.b16 %v1055
    %v1088 = vunpack.c.l.b16 %v1056
    %v1089 = vunpack.c.h.b16 %v1056
    %v1090 = vunpack.c.l.b16 %v1057
    %v1091 = vunpack.c.h.b16 %v1057
    %v1092 = vunpack.c.l.b16 %v1058
    %v1093 = vunpack.c.h.b16 %v1058
    %v1094 = vpack.c.b16 %v1082, %v1078
    %v1095 = vpack.c.b16 %v1083, %v1079
    %v1096 = vpack.c.b16 %v1084, %v1080
    %v1097 = vpack.c.b16 %v1085, %v1081
    %v1098 = vpack.c.b16 %v1090, %v1086
    %v1099 = vpack.c.b16 %v1091, %v1087
    %v1100 = vpack.c.b16 %v1092, %v1088
    %v1101 = vpack.c.b16 %v1093, %v1089
    %v1111 = vsel %vm172, %v1065, 0
    %v1114 = vsel %vm172, %v1067, 0
    %v1117 = vsel %vm172, %v1069, 0
    %v1120 = vsel %vm172, %v1068, 0
    %1122 = vmatprep.subr.bf16.mxu0 %v1095
    %1123 = vmatpush1.bf16.msra.mxu0 %v1094
    %1124 = vmatprep.subr.bf16.mxu0 %v1099
    %1125 = vmatpush1.bf16.msra.mxu0 %v1098
    %1126 = vmatprep.subr.bf16.mxu0 0
    %1127 = vmatpush1.bf16.msra.mxu0 0
    %1128 = vmatprep.subr.bf16.mxu0 0
    %1129 = vmatpush1.bf16.msra.mxu0 0
    %1130 = vmatprep.subr.bf16.mxu0 0
    %1131 = vmatpush1.bf16.msra.mxu0 0
    %1132 = vmatprep.subr.bf16.mxu0 0
    %1133 = vmatpush1.bf16.msra.mxu0 0
    %1134 = vmatprep.subr.bf16.mxu0 0
    %1135 = vmatpush1.bf16.msra.mxu0 0
    %1136 = vmatprep.subr.bf16.mxu0 0
    %1137 = vmatpush1.bf16.msra.mxu0 0
    %1138 = vmatprep.subr.bf16.mxu0 0
    %1139 = vmatpush1.bf16.msra.mxu0 0
    %1140 = vmatprep.subr.bf16.mxu0 0
    %1141 = vmatpush1.bf16.msra.mxu0 0
    %1142 = vmatprep.subr.bf16.mxu0 0
    %1143 = vmatpush1.bf16.msra.mxu0 0
    %1144 = vmatprep.subr.bf16.mxu0 0
    %1145 = vmatpush1.bf16.msra.mxu0 0
    %1146 = vmatprep.subr.bf16.mxu0 0
    %1147 = vmatpush1.bf16.msra.mxu0 0
    %1148 = vmatprep.subr.bf16.mxu0 0
    %1149 = vmatpush1.bf16.msra.mxu0 0
    %1150 = vmatprep.subr.bf16.mxu0 0
    %1151 = vmatpush1.bf16.msra.mxu0 0
    %1152 = vmatprep.subr.bf16.mxu0 0
    %1153 = vmatpush1.bf16.msra.mxu0 0
    %1154 = vmatprep.mubr.bf16.mxu0 0
    %1155 = vmatmul.mubr.bf16.gmra.mrb[0].mxu0 %v1111
    %v1156 = vpop.f32.mrb[0].mxu0
    %v1157 = vadd.f32 0.0, %v1156
    %v1158 = vpop.f32.mrb[0].mxu0
    %v1159 = vadd.f32 0.0, %v1158
    %v1160 = vpop.f32.mrb[0].mxu0
    %v1161 = vadd.f32 0.0, %v1160
    %v1162 = vpop.f32.mrb[0].mxu0
    %v1163 = vadd.f32 0.0, %v1162
    %1164 = vmatprep.mubr.bf16.mxu0 0
    %1165 = vmatmul.mubr.bf16.gmra.mrb[0].mxu0 %v1114
    %v1166 = vpop.f32.mrb[0].mxu0
    %v1167 = vadd.f32 0.0, %v1166
    %v1168 = vpop.f32.mrb[0].mxu0
    %v1169 = vadd.f32 0.0, %v1168
    %v1170 = vpop.f32.mrb[0].mxu0
    %v1171 = vadd.f32 0.0, %v1170
    %v1172 = vpop.f32.mrb[0].mxu0
    %v1173 = vadd.f32 0.0, %v1172
    %1174 = vmatprep.mubr.bf16.mxu0 0
    %1175 = vmatmul.mubr.bf16.gmra.mrb[0].mxu0 %v1117
    %v1176 = vpop.f32.mrb[0].mxu0
    %v1177 = vadd.f32 0.0, %v1176
    %v1178 = vpop.f32.mrb[0].mxu0
    %v1179 = vadd.f32 0.0, %v1178
    %v1180 = vpop.f32.mrb[0].mxu0
    %v1181 = vadd.f32 0.0, %v1180
    %v1182 = vpop.f32.mrb[0].mxu0
    %v1183 = vadd.f32 0.0, %v1182
    %1184 = vmatprep.mubr.bf16.mxu0 0
    %1185 = vmatmul.mubr.bf16.gmra.mrb[0].mxu0 %v1120
    %v1186 = vpop.f32.mrb[0].mxu0
    %v1187 = vadd.f32 0.0, %v1186
    %v1188 = vpop.f32.mrb[0].mxu0
    %v1189 = vadd.f32 0.0, %v1188
    %v1190 = vpop.f32.mrb[0].mxu0
    %v1191 = vadd.f32 0.0, %v1190
    %v1192 = vpop.f32.mrb[0].mxu0
    %v1193 = vadd.f32 0.0, %v1192
    %1194 = vdwg.mxu0
    %1195 = vmatprep.subr.bf16.mxu0 %v1097
    %1196 = vmatpush1.bf16.msra.mxu0 %v1096
    %1197 = vmatprep.subr.bf16.mxu0 %v1101
    %1198 = vmatpush1.bf16.msra.mxu0 %v1100
    %1199 = vmatprep.subr.bf16.mxu0 0
    %1200 = vmatpush1.bf16.msra.mxu0 0
    %1201 = vmatprep.subr.bf16.mxu0 0
    %1202 = vmatpush1.bf16.msra.mxu0 0
    %1203 = vmatprep.subr.bf16.mxu0 0
    %1204 = vmatpush1.bf16.msra.mxu0 0
    %1205 = vmatprep.subr.bf16.mxu0 0
    %1206 = vmatpush1.bf16.msra.mxu0 0
    %1207 = vmatprep.subr.bf16.mxu0 0
    %1208 = vmatpush1.bf16.msra.mxu0 0
    %1209 = vmatprep.subr.bf16.mxu0 0
    %1210 = vmatpush1.bf16.msra.mxu0 0
    %1211 = vmatprep.subr.bf16.mxu0 0
    %1212 = vmatpush1.bf16.msra.mxu0 0
    %1213 = vmatprep.subr.bf16.mxu0 0
    %1214 = vmatpush1.bf16.msra.mxu0 0
    %1215 = vmatprep.subr.bf16.mxu0 0
    %1216 = vmatpush1.bf16.msra.mxu0 0
    %1217 = vmatprep.subr.bf16.mxu0 0
    %1218 = vmatpush1.bf16.msra.mxu0 0
    %1219 = vmatprep.subr.bf16.mxu0 0
    %1220 = vmatpush1.bf16.msra.mxu0 0
    %1221 = vmatprep.subr.bf16.mxu0 0
    %1222 = vmatpush1.bf16.msra.mxu0 0
    %1223 = vmatprep.subr.bf16.mxu0 0
    %1224 = vmatpush1.bf16.msra.mxu0 0
    %1225 = vmatprep.subr.bf16.mxu0 0
    %1226 = vmatpush1.bf16.msra.mxu0 0
    %1227 = vmatprep.mubr.bf16.mxu0 0
    %1228 = vmatmul.mubr.bf16.gmra.mrb[0].mxu0 %v1111
    %v1229 = vpop.f32.mrb[0].mxu0
    %v1230 = vadd.f32 0.0, %v1229
    %v1231 = vpop.f32.mrb[0].mxu0
    %v1232 = vadd.f32 0.0, %v1231
    %v1233 = vpop.f32.mrb[0].mxu0
    %v1234 = vadd.f32 0.0, %v1233
    %v1235 = vpop.f32.mrb[0].mxu0
    %v1236 = vadd.f32 0.0, %v1235
    %1237 = vmatprep.mubr.bf16.mxu0 0
    %1238 = vmatmul.mubr.bf16.gmra.mrb[0].mxu0 %v1114
    %v1239 = vpop.f32.mrb[0].mxu0
    %v1240 = vadd.f32 0.0, %v1239
    %v1241 = vpop.f32.mrb[0].mxu0
    %v1242 = vadd.f32 0.0, %v1241
    %v1243 = vpop.f32.mrb[0].mxu0
    %v1244 = vadd.f32 0.0, %v1243
    %v1245 = vpop.f32.mrb[0].mxu0
    %v1246 = vadd.f32 0.0, %v1245
    %1247 = vmatprep.mubr.bf16.mxu0 0
    %1248 = vmatmul.mubr.bf16.gmra.mrb[0].mxu0 %v1117
    %v1249 = vpop.f32.mrb[0].mxu0
    %v1250 = vadd.f32 0.0, %v1249
    %v1251 = vpop.f32.mrb[0].mxu0
    %v1252 = vadd.f32 0.0, %v1251
    %v1253 = vpop.f32.mrb[0].mxu0
    %v1254 = vadd.f32 0.0, %v1253
    %v1255 = vpop.f32.mrb[0].mxu0
    %v1256 = vadd.f32 0.0, %v1255
    %1257 = vmatprep.mubr.bf16.mxu0 0
    %1258 = vmatmul.mubr.bf16.gmra.mrb[0].mxu0 %v1120
    %v1259 = vpop.f32.mrb[0].mxu0
    %v1260 = vadd.f32 0.0, %v1259
    %v1261 = vpop.f32.mrb[0].mxu0
    %v1262 = vadd.f32 0.0, %v1261
    %v1263 = vpop.f32.mrb[0].mxu0
    %v1264 = vadd.f32 0.0, %v1263
    %v1265 = vpop.f32.mrb[0].mxu0
    %v1266 = vadd.f32 0.0, %v1265
    %1267 = vdwg.mxu0
    %v1268 = vadd.f32 %v1017, %v1157
    %v1269 = vadd.f32 %v1018, %v1159
    %v1270 = vadd.f32 %v1019, %v1230
    %v1271 = vadd.f32 %v1020, %v1232
    %v1272 = vadd.f32 %v1021, %v1161
    %v1273 = vadd.f32 %v1022, %v1163
    %v1274 = vadd.f32 %v1023, %v1234
    %v1275 = vadd.f32 %v1024, %v1236
    %v1276 = vadd.f32 %v1025, %v1167
    %v1277 = vadd.f32 %v1026, %v1169
    %v1278 = vadd.f32 %v1027, %v1240
    %v1279 = vadd.f32 %v1028, %v1242
    %v1280 = vadd.f32 %v1029, %v1171
    %v1281 = vadd.f32 %v1030, %v1173
    %v1282 = vadd.f32 %v1031, %v1244
    %v1283 = vadd.f32 %v1032, %v1246
    %v1284 = vadd.f32 %v1033, %v1177
    %v1285 = vadd.f32 %v1034, %v1179
    %v1286 = vadd.f32 %v1035, %v1250
    %v1287 = vadd.f32 %v1036, %v1252
    %v1288 = vadd.f32 %v1037, %v1181
    %v1289 = vadd.f32 %v1038, %v1183
    %v1290 = vadd.f32 %v1039, %v1254
    %v1291 = vadd.f32 %v1040, %v1256
    %v1292 = vadd.f32 %v1041, %v1187
    %v1293 = vadd.f32 %v1042, %v1189
    %v1294 = vadd.f32 %v1043, %v1260
    %v1295 = vadd.f32 %v1044, %v1262
    %v1296 = vadd.f32 %v1045, %v1191
    %v1297 = vadd.f32 %v1046, %v1193
    %v1298 = vadd.f32 %v1047, %v1264
    %v1299 = vadd.f32 %v1048, %v1266
    %v1300 = vld [vmem:[%s2] sm:$0xf]
    %v1302 = vlaneseq
    %v1303 = vshrl.u32 %v1302, 7
    %v1304 = vsub.s32 0, %v1303
    %v1305 = vrot.slane %v1300, %v1304
    %v1306 = vlaneseq
    %v1307 = vshrl.u32 %v1306, 7
    %v1308 = vsub.s32 1, %v1307
    %v1309 = vrot.slane %v1300, %v1308
    %v1310 = vlaneseq
    %v1311 = vshrl.u32 %v1310, 7
    %v1312 = vsub.s32 2, %v1311
    %v1313 = vrot.slane %v1300, %v1312
    %v1314 = vlaneseq
    %v1315 = vshrl.u32 %v1314, 7
    %v1316 = vsub.s32 3, %v1315
    %v1317 = vrot.slane %v1300, %v1316
    %v1322 = vadd.f32 %v1268, %v1305
    %v1323 = vadd.f32 %v1269, %v1309
    %v1324 = vadd.f32 %v1270, %v1313
    %v1325 = vadd.f32 %v1271, %v1317
    %v1326 = vadd.f32 %v1272, %v1305
    %v1327 = vadd.f32 %v1273, %v1309
    %v1328 = vadd.f32 %v1274, %v1313
    %v1329 = vadd.f32 %v1275, %v1317
    %v1330 = vadd.f32 %v1276, %v1305
    %v1331 = vadd.f32 %v1277, %v1309
    %v1332 = vadd.f32 %v1278, %v1313
    %v1333 = vadd.f32 %v1279, %v1317
    %v1334 = vadd.f32 %v1280, %v1305
    %v1335 = vadd.f32 %v1281, %v1309
    %v1336 = vadd.f32 %v1282, %v1313
    %v1337 = vadd.f32 %v1283, %v1317
    %v1338 = vadd.f32 %v1284, %v1305
    %v1339 = vadd.f32 %v1285, %v1309
    %v1340 = vadd.f32 %v1286, %v1313
    %v1341 = vadd.f32 %v1287, %v1317
    %v1342 = vadd.f32 %v1288, %v1305
    %v1343 = vadd.f32 %v1289, %v1309
    %v1344 = vadd.f32 %v1290, %v1313
    %v1345 = vadd.f32 %v1291, %v1317
    %v1346 = vadd.f32 %v1292, %v1305
    %v1347 = vadd.f32 %v1293, %v1309
    %v1348 = vadd.f32 %v1294, %v1313
    %v1349 = vadd.f32 %v1295, %v1317
    %v1350 = vadd.f32 %v1296, %v1305
    %v1351 = vadd.f32 %v1297, %v1309
    %v1352 = vadd.f32 %v1298, %v1313
    %v1353 = vadd.f32 %v1299, %v1317
    %v1354 = vmax.f32 %v1322, 0.0
    %v1355 = vmax.f32 %v1323, 0.0
    %v1356 = vmax.f32 %v1324, 0.0
    %v1357 = vmax.f32 %v1325, 0.0
    %v1358 = vmax.f32 %v1326, 0.0
    %v1359 = vmax.f32 %v1327, 0.0
    %v1360 = vmax.f32 %v1328, 0.0
    %v1361 = vmax.f32 %v1329, 0.0
    %v1362 = vmax.f32 %v1330, 0.0
    %v1363 = vmax.f32 %v1331, 0.0
    %v1364 = vmax.f32 %v1332, 0.0
    %v1365 = vmax.f32 %v1333, 0.0
    %v1366 = vmax.f32 %v1334, 0.0
    %v1367 = vmax.f32 %v1335, 0.0
    %v1368 = vmax.f32 %v1336, 0.0
    %v1369 = vmax.f32 %v1337, 0.0
    %v1370 = vmax.f32 %v1338, 0.0
    %v1371 = vmax.f32 %v1339, 0.0
    %v1372 = vmax.f32 %v1340, 0.0
    %v1373 = vmax.f32 %v1341, 0.0
    %v1374 = vmax.f32 %v1342, 0.0
    %v1375 = vmax.f32 %v1343, 0.0
    %v1376 = vmax.f32 %v1344, 0.0
    %v1377 = vmax.f32 %v1345, 0.0
    %v1378 = vmax.f32 %v1346, 0.0
    %v1379 = vmax.f32 %v1347, 0.0
    %v1380 = vmax.f32 %v1348, 0.0
    %v1381 = vmax.f32 %v1349, 0.0
    %v1382 = vmax.f32 %v1350, 0.0
    %v1383 = vmax.f32 %v1351, 0.0
    %v1384 = vmax.f32 %v1352, 0.0
    %v1385 = vmax.f32 %v1353, 0.0
    %v1386 = vpack.c.bf16 %v1358, %v1354
    %v1387 = vpack.c.bf16 %v1359, %v1355
    %v1388 = vpack.c.bf16 %v1360, %v1356
    %v1389 = vpack.c.bf16 %v1361, %v1357
    %v1390 = vpack.c.bf16 %v1366, %v1362
    %v1391 = vpack.c.bf16 %v1367, %v1363
    %v1392 = vpack.c.bf16 %v1368, %v1364
    %v1393 = vpack.c.bf16 %v1369, %v1365
    %v1394 = vpack.c.bf16 %v1374, %v1370
    %v1395 = vpack.c.bf16 %v1375, %v1371
    %v1396 = vpack.c.bf16 %v1376, %v1372
    %v1397 = vpack.c.bf16 %v1377, %v1373
    %v1398 = vpack.c.bf16 %v1382, %v1378
    %v1399 = vpack.c.bf16 %v1383, %v1379
    %v1400 = vpack.c.bf16 %v1384, %v1380
    %v1401 = vpack.c.bf16 %v1385, %v1381
    %v1402 = vld [vmem:[%s3] sm:$0xf]
    %v1403 = vld [vmem:[%s3 + $0x4] sm:$0xf]
    %v1404 = vld [vmem:[%s3 + $0x8] sm:$0xf]
    %v1405 = vld [vmem:[%s3 + $0xc] sm:$0xf]
    %v1406 = vld [vmem:[%s3 + $0x10] sm:$0x3]
    %v1412 = vunpack.c.l.b16 %v1402
    %v1413 = vunpack.c.l.b16 %v1403
    %v1414 = vunpack.c.l.b16 %v1404
    %v1415 = vunpack.c.l.b16 %v1405
    %v1416 = vunpack.c.l.b16 %v1406
    %v1417 = vpack.c.b16 %v1413, %v1412
    %v1418 = vpack.c.b16 %v1415, %v1414
    %v1419 = vpack.c.b16 %v1416, %v1416
    %vm1420 = vcmask 490496
    %v1422 = vsel %vm1420, %v1417, 0
    %v1425 = vsel %vm1420, %v1418, 0
    %v1428 = vsel %vm1420, %v1419, 0
    %vm1430 = vcmask 1045504
    %v1432 = vsel %vm1430, %v1398, 0
    %v1435 = vsel %vm1430, %v1399, 0
    %v1438 = vsel %vm1430, %v1400, 0
    %v1441 = vsel %vm1430, %v1401, 0
    %1443 = vmatprep.subr.bf16.mxu0 %v1387
    %1444 = vmatpush1.bf16.msra.mxu0 %v1386
    %1445 = vmatprep.subr.bf16.mxu0 %v1391
    %1446 = vmatpush1.bf16.msra.mxu0 %v1390
    %1447 = vmatprep.subr.bf16.mxu0 %v1395
    %1448 = vmatpush1.bf16.msra.mxu0 %v1394
    %1449 = vmatprep.subr.bf16.mxu0 %v1435
    %1450 = vmatpush1.bf16.msra.mxu0 %v1432
    %1451 = vmatprep.subr.bf16.mxu0 0
    %1452 = vmatpush1.bf16.msra.mxu0 0
    %1453 = vmatprep.subr.bf16.mxu0 0
    %1454 = vmatpush1.bf16.msra.mxu0 0
    %1455 = vmatprep.subr.bf16.mxu0 0
    %1456 = vmatpush1.bf16.msra.mxu0 0
    %1457 = vmatprep.subr.bf16.mxu0 0
    %1458 = vmatpush1.bf16.msra.mxu0 0
    %1459 = vmatprep.subr.bf16.mxu0 0
    %1460 = vmatpush1.bf16.msra.mxu0 0
    %1461 = vmatprep.subr.bf16.mxu0 0
    %1462 = vmatpush1.bf16.msra.mxu0 0
    %1463 = vmatprep.subr.bf16.mxu0 0
    %1464 = vmatpush1.bf16.msra.mxu0 0
    %1465 = vmatprep.subr.bf16.mxu0 0
    %1466 = vmatpush1.bf16.msra.mxu0 0
    %1467 = vmatprep.subr.bf16.mxu0 0
    %1468 = vmatpush1.bf16.msra.mxu0 0
    %1469 = vmatprep.subr.bf16.mxu0 0
    %1470 = vmatpush1.bf16.msra.mxu0 0
    %1471 = vmatprep.subr.bf16.mxu0 0
    %1472 = vmatpush1.bf16.msra.mxu0 0
    %1473 = vmatprep.subr.bf16.mxu0 0
    %1474 = vmatpush1.bf16.msra.mxu0 0
    %1475 = vmatprep.mubr.bf16.mxu0 0
    %1476 = vmatmul.mubr.bf16.gmra.mrb[0].mxu0 %v1422
    %v1477 = vpop.f32.mrb[0].mxu0
    %v1478 = vadd.f32 0.0, %v1477
    %v1479 = vpop.f32.mrb[0].mxu0
    %v1480 = vadd.f32 0.0, %v1479
    %v1481 = vpop.f32.mrb[0].mxu0
    %v1482 = vadd.f32 0.0, %v1481
    %v1483 = vpop.f32.mrb[0].mxu0
    %v1484 = vadd.f32 0.0, %v1483
    %1485 = vmatprep.mubr.bf16.mxu0 0
    %1486 = vmatmul.mubr.bf16.gmra.mrb[0].mxu0 %v1425
    %v1487 = vpop.f32.mrb[0].mxu0
    %v1488 = vadd.f32 0.0, %v1487
    %v1489 = vpop.f32.mrb[0].mxu0
    %v1490 = vadd.f32 0.0, %v1489
    %v1491 = vpop.f32.mrb[0].mxu0
    %v1492 = vadd.f32 0.0, %v1491
    %v1493 = vpop.f32.mrb[0].mxu0
    %v1494 = vadd.f32 0.0, %v1493
    %1495 = vmatprep.mubr.bf16.mxu0 0
    %1496 = vmatmul.mubr.bf16.gmra.mrb[0].mxu0 %v1428
    %v1497 = vpop.f32.mrb[0].mxu0
    %v1498 = vadd.f32 0.0, %v1497
    %v1499 = vpop.f32.mrb[0].mxu0
    %v1500 = vadd.f32 0.0, %v1499
    %v1501 = vpop.f32.mrb[0].mxu0
    %v1502 = vpop.f32.mrb[0].mxu0
    %1503 = vdwg.mxu0
    %1504 = vmatprep.subr.bf16.mxu0 %v1389
    %1505 = vmatpush1.bf16.msra.mxu0 %v1388
    %1506 = vmatprep.subr.bf16.mxu0 %v1393
    %1507 = vmatpush1.bf16.msra.mxu0 %v1392
    %1508 = vmatprep.subr.bf16.mxu0 %v1397
    %1509 = vmatpush1.bf16.msra.mxu0 %v1396
    %1510 = vmatprep.subr.bf16.mxu0 %v1441
    %1511 = vmatpush1.bf16.msra.mxu0 %v1438
    %1512 = vmatprep.subr.bf16.mxu0 0
    %1513 = vmatpush1.bf16.msra.mxu0 0
    %1514 = vmatprep.subr.bf16.mxu0 0
    %1515 = vmatpush1.bf16.msra.mxu0 0
    %1516 = vmatprep.subr.bf16.mxu0 0
    %1517 = vmatpush1.bf16.msra.mxu0 0
    %1518 = vmatprep.subr.bf16.mxu0 0
    %1519 = vmatpush1.bf16.msra.mxu0 0
    %1520 = vmatprep.subr.bf16.mxu0 0
    %1521 = vmatpush1.bf16.msra.mxu0 0
    %1522 = vmatprep.subr.bf16.mxu0 0
    %1523 = vmatpush1.bf16.msra.mxu0 0
    %1524 = vmatprep.subr.bf16.mxu0 0
    %1525 = vmatpush1.bf16.msra.mxu0 0
    %1526 = vmatprep.subr.bf16.mxu0 0
    %1527 = vmatpush1.bf16.msra.mxu0 0
    %1528 = vmatprep.subr.bf16.mxu0 0
    %1529 = vmatpush1.bf16.msra.mxu0 0
    %1530 = vmatprep.subr.bf16.mxu0 0
    %1531 = vmatpush1.bf16.msra.mxu0 0
    %1532 = vmatprep.subr.bf16.mxu0 0
    %1533 = vmatpush1.bf16.msra.mxu0 0
    %1534 = vmatprep.subr.bf16.mxu0 0
    %1535 = vmatpush1.bf16.msra.mxu0 0
    %1536 = vmatprep.mubr.bf16.mxu0 0
    %1537 = vmatmul.mubr.bf16.gmra.mrb[0].mxu0 %v1422
    %v1538 = vpop.f32.mrb[0].mxu0
    %v1539 = vadd.f32 0.0, %v1538
    %v1540 = vpop.f32.mrb[0].mxu0
    %v1541 = vadd.f32 0.0, %v1540
    %v1542 = vpop.f32.mrb[0].mxu0
    %v1543 = vadd.f32 0.0, %v1542
    %v1544 = vpop.f32.mrb[0].mxu0
    %v1545 = vadd.f32 0.0, %v1544
    %1546 = vmatprep.mubr.bf16.mxu0 0
    %1547 = vmatmul.mubr.bf16.gmra.mrb[0].mxu0 %v1425
    %v1548 = vpop.f32.mrb[0].mxu0
    %v1549 = vadd.f32 0.0, %v1548
    %v1550 = vpop.f32.mrb[0].mxu0
    %v1551 = vadd.f32 0.0, %v1550
    %v1552 = vpop.f32.mrb[0].mxu0
    %v1553 = vadd.f32 0.0, %v1552
    %v1554 = vpop.f32.mrb[0].mxu0
    %v1555 = vadd.f32 0.0, %v1554
    %1556 = vmatprep.mubr.bf16.mxu0 0
    %1557 = vmatmul.mubr.bf16.gmra.mrb[0].mxu0 %v1428
    %v1558 = vpop.f32.mrb[0].mxu0
    %v1559 = vadd.f32 0.0, %v1558
    %v1560 = vpop.f32.mrb[0].mxu0
    %v1561 = vadd.f32 0.0, %v1560
    %v1562 = vpop.f32.mrb[0].mxu0
    %v1563 = vpop.f32.mrb[0].mxu0
    %1564 = vdwg.mxu0
    %s1565 = scalar_lea.vmem %s3, 20
    %v1566 = vld [vmem:[%s1565] sm:$0xf]
    %v1567 = vld [vmem:[%s1565 + $0x4] sm:$0xf]
    %v1568 = vld [vmem:[%s1565 + $0x8] sm:$0xf]
    %v1569 = vld [vmem:[%s1565 + $0xc] sm:$0xf]
    %v1570 = vld [vmem:[%s1565 + $0x10] sm:$0x3]
    %v1576 = vunpack.c.l.b16 %v1566
    %v1577 = vunpack.c.l.b16 %v1567
    %v1578 = vunpack.c.l.b16 %v1568
    %v1579 = vunpack.c.l.b16 %v1569
    %v1580 = vunpack.c.l.b16 %v1570
    %v1581 = vpack.c.b16 %v1577, %v1576
    %v1582 = vpack.c.b16 %v1579, %v1578
    %v1583 = vpack.c.b16 %v1580, %v1580
    %v1585 = vsel %vm1420, %v1581, 0
    %v1588 = vsel %vm1420, %v1582, 0
    %v1591 = vsel %vm1420, %v1583, 0
    %1593 = vmatprep.subr.bf16.mxu0 %v1387
    %1594 = vmatpush1.bf16.msra.mxu0 %v1386
    %1595 = vmatprep.subr.bf16.mxu0 %v1391
    %1596 = vmatpush1.bf16.msra.mxu0 %v1390
    %1597 = vmatprep.subr.bf16.mxu0 %v1395
    %1598 = vmatpush1.bf16.msra.mxu0 %v1394
    %1599 = vmatprep.subr.bf16.mxu0 %v1435
    %1600 = vmatpush1.bf16.msra.mxu0 %v1432
    %1601 = vmatprep.subr.bf16.mxu0 0
    %1602 = vmatpush1.bf16.msra.mxu0 0
    %1603 = vmatprep.subr.bf16.mxu0 0
    %1604 = vmatpush1.bf16.msra.mxu0 0
    %1605 = vmatprep.subr.bf16.mxu0 0
    %1606 = vmatpush1.bf16.msra.mxu0 0
    %1607 = vmatprep.subr.bf16.mxu0 0
    %1608 = vmatpush1.bf16.msra.mxu0 0
    %1609 = vmatprep.subr.bf16.mxu0 0
    %1610 = vmatpush1.bf16.msra.mxu0 0
    %1611 = vmatprep.subr.bf16.mxu0 0
    %1612 = vmatpush1.bf16.msra.mxu0 0
    %1613 = vmatprep.subr.bf16.mxu0 0
    %1614 = vmatpush1.bf16.msra.mxu0 0
    %1615 = vmatprep.subr.bf16.mxu0 0
    %1616 = vmatpush1.bf16.msra.mxu0 0
    %1617 = vmatprep.subr.bf16.mxu0 0
    %1618 = vmatpush1.bf16.msra.mxu0 0
    %1619 = vmatprep.subr.bf16.mxu0 0
    %1620 = vmatpush1.bf16.msra.mxu0 0
    %1621 = vmatprep.subr.bf16.mxu0 0
    %1622 = vmatpush1.bf16.msra.mxu0 0
    %1623 = vmatprep.subr.bf16.mxu0 0
    %1624 = vmatpush1.bf16.msra.mxu0 0
    %1625 = vmatprep.mubr.bf16.mxu0 0
    %1626 = vmatmul.mubr.bf16.gmra.mrb[0].mxu0 %v1585
    %v1627 = vpop.f32.mrb[0].mxu0
    %v1628 = vadd.f32 0.0, %v1627
    %v1629 = vpop.f32.mrb[0].mxu0
    %v1630 = vadd.f32 0.0, %v1629
    %v1631 = vpop.f32.mrb[0].mxu0
    %v1632 = vadd.f32 0.0, %v1631
    %v1633 = vpop.f32.mrb[0].mxu0
    %v1634 = vadd.f32 0.0, %v1633
    %1635 = vmatprep.mubr.bf16.mxu0 0
    %1636 = vmatmul.mubr.bf16.gmra.mrb[0].mxu0 %v1588
    %v1637 = vpop.f32.mrb[0].mxu0
    %v1638 = vadd.f32 0.0, %v1637
    %v1639 = vpop.f32.mrb[0].mxu0
    %v1640 = vadd.f32 0.0, %v1639
    %v1641 = vpop.f32.mrb[0].mxu0
    %v1642 = vadd.f32 0.0, %v1641
    %v1643 = vpop.f32.mrb[0].mxu0
    %v1644 = vadd.f32 0.0, %v1643
    %1645 = vmatprep.mubr.bf16.mxu0 0
    %1646 = vmatmul.mubr.bf16.gmra.mrb[0].mxu0 %v1591
    %v1647 = vpop.f32.mrb[0].mxu0
    %v1648 = vadd.f32 0.0, %v1647
    %v1649 = vpop.f32.mrb[0].mxu0
    %v1650 = vadd.f32 0.0, %v1649
    %v1651 = vpop.f32.mrb[0].mxu0
    %v1652 = vpop.f32.mrb[0].mxu0
    %1653 = vdwg.mxu0
    %1654 = vmatprep.subr.bf16.mxu0 %v1389
    %1655 = vmatpush1.bf16.msra.mxu0 %v1388
    %1656 = vmatprep.subr.bf16.mxu0 %v1393
    %1657 = vmatpush1.bf16.msra.mxu0 %v1392
    %1658 = vmatprep.subr.bf16.mxu0 %v1397
    %1659 = vmatpush1.bf16.msra.mxu0 %v1396
    %1660 = vmatprep.subr.bf16.mxu0 %v1441
    %1661 = vmatpush1.bf16.msra.mxu0 %v1438
    %1662 = vmatprep.subr.bf16.mxu0 0
    %1663 = vmatpush1.bf16.msra.mxu0 0
    %1664 = vmatprep.subr.bf16.mxu0 0
    %1665 = vmatpush1.bf16.msra.mxu0 0
    %1666 = vmatprep.subr.bf16.mxu0 0
    %1667 = vmatpush1.bf16.msra.mxu0 0
    %1668 = vmatprep.subr.bf16.mxu0 0
    %1669 = vmatpush1.bf16.msra.mxu0 0
    %1670 = vmatprep.subr.bf16.mxu0 0
    %1671 = vmatpush1.bf16.msra.mxu0 0
    %1672 = vmatprep.subr.bf16.mxu0 0
    %1673 = vmatpush1.bf16.msra.mxu0 0
    %1674 = vmatprep.subr.bf16.mxu0 0
    %1675 = vmatpush1.bf16.msra.mxu0 0
    %1676 = vmatprep.subr.bf16.mxu0 0
    %1677 = vmatpush1.bf16.msra.mxu0 0
    %1678 = vmatprep.subr.bf16.mxu0 0
    %1679 = vmatpush1.bf16.msra.mxu0 0
    %1680 = vmatprep.subr.bf16.mxu0 0
    %1681 = vmatpush1.bf16.msra.mxu0 0
    %1682 = vmatprep.subr.bf16.mxu0 0
    %1683 = vmatpush1.bf16.msra.mxu0 0
    %1684 = vmatprep.subr.bf16.mxu0 0
    %1685 = vmatpush1.bf16.msra.mxu0 0
    %1686 = vmatprep.mubr.bf16.mxu0 0
    %1687 = vmatmul.mubr.bf16.gmra.mrb[0].mxu0 %v1585
    %v1688 = vpop.f32.mrb[0].mxu0
    %v1689 = vadd.f32 0.0, %v1688
    %v1690 = vpop.f32.mrb[0].mxu0
    %v1691 = vadd.f32 0.0, %v1690
    %v1692 = vpop.f32.mrb[0].mxu0
    %v1693 = vadd.f32 0.0, %v1692
    %v1694 = vpop.f32.mrb[0].mxu0
    %v1695 = vadd.f32 0.0, %v1694
    %1696 = vmatprep.mubr.bf16.mxu0 0
    %1697 = vmatmul.mubr.bf16.gmra.mrb[0].mxu0 %v1588
    %v1698 = vpop.f32.mrb[0].mxu0
    %v1699 = vadd.f32 0.0, %v1698
    %v1700 = vpop.f32.mrb[0].mxu0
    %v1701 = vadd.f32 0.0, %v1700
    %v1702 = vpop.f32.mrb[0].mxu0
    %v1703 = vadd.f32 0.0, %v1702
    %v1704 = vpop.f32.mrb[0].mxu0
    %v1705 = vadd.f32 0.0, %v1704
    %1706 = vmatprep.mubr.bf16.mxu0 0
    %1707 = vmatmul.mubr.bf16.gmra.mrb[0].mxu0 %v1591
    %v1708 = vpop.f32.mrb[0].mxu0
    %v1709 = vadd.f32 0.0, %v1708
    %v1710 = vpop.f32.mrb[0].mxu0
    %v1711 = vadd.f32 0.0, %v1710
    %v1712 = vpop.f32.mrb[0].mxu0
    %v1713 = vpop.f32.mrb[0].mxu0
    %1714 = vdwg.mxu0
    %v1715 = vmax.f32 %v1478, %v1628
    %v1716 = vmax.f32 %v1480, %v1630
    %v1717 = vmax.f32 %v1539, %v1689
    %v1718 = vmax.f32 %v1541, %v1691
    %v1719 = vmax.f32 %v1482, %v1632
    %v1720 = vmax.f32 %v1484, %v1634
    %v1721 = vmax.f32 %v1543, %v1693
    %v1722 = vmax.f32 %v1545, %v1695
    %v1723 = vmax.f32 %v1488, %v1638
    %v1724 = vmax.f32 %v1490, %v1640
    %v1725 = vmax.f32 %v1549, %v1699
    %v1726 = vmax.f32 %v1551, %v1701
    %v1727 = vmax.f32 %v1492, %v1642
    %v1728 = vmax.f32 %v1494, %v1644
    %v1729 = vmax.f32 %v1553, %v1703
    %v1730 = vmax.f32 %v1555, %v1705
    %v1731 = vmax.f32 %v1498, %v1648
    %v1732 = vmax.f32 %v1500, %v1650
    %v1733 = vmax.f32 %v1559, %v1709
    %v1734 = vmax.f32 %v1561, %v1711
    %v1735 = vpack.c.bf16 %v1719, %v1715
    %v1736 = vpack.c.bf16 %v1720, %v1716
    %v1737 = vpack.c.bf16 %v1721, %v1717
    %v1738 = vpack.c.bf16 %v1722, %v1718
    %v1739 = vpack.c.bf16 %v1727, %v1723
    %v1740 = vpack.c.bf16 %v1728, %v1724
    %v1741 = vpack.c.bf16 %v1729, %v1725
    %v1742 = vpack.c.bf16 %v1730, %v1726
    %v1743 = vpack.c.bf16 %v1731, %v1731
    %v1744 = vpack.c.bf16 %v1732, %v1732
    %v1745 = vpack.c.bf16 %v1733, %v1733
    %v1746 = vpack.c.bf16 %v1734, %v1734
    %v1747 = vld [vmem:[%s4] sm:$0xff]
    %v1748 = vld [vmem:[%s4 + $0x8] sm:$0xf]
    %v1749 = vld [vmem:[%s4 + $0xc] sm:$0xff]
    %v1750 = vld [vmem:[%s4 + $0x14] sm:$0xf]
    %v1751 = vld [vmem:[%s4 + $0x18] sm:$0xff]
    %v1752 = vld [vmem:[%s4 + $0x20] sm:$0xf]
    %v1753 = vld [vmem:[%s4 + $0x24] sm:$0xff]
    %v1754 = vld [vmem:[%s4 + $0x2c] sm:$0xf]
    %v1755 = vld [vmem:[%s4 + $0x30] sm:$0xff]
    %v1756 = vld [vmem:[%s4 + $0x38] sm:$0xf]
    %v1757 = vld [vmem:[%s4 + $0x3c] sm:$0xff]
    %v1758 = vld [vmem:[%s4 + $0x44] sm:$0xf]
    %v1759 = vld [vmem:[%s4 + $0x48] sm:$0xff]
    %v1760 = vld [vmem:[%s4 + $0x50] sm:$0xf]
    %v1761 = vld [vmem:[%s4 + $0x54] sm:$0xff]
    %v1762 = vld [vmem:[%s4 + $0x5c] sm:$0xf]
    %v1763 = vld [vmem:[%s4 + $0x60] sm:$0xff]
    %v1764 = vld [vmem:[%s4 + $0x68] sm:$0xf]
    %v1765 = vld [vmem:[%s4 + $0x6c] sm:$0xff]
    %v1766 = vld [vmem:[%s4 + $0x74] sm:$0xf]
    %v1767 = vld [vmem:[%s4 + $0x78] sm:$0xff]
    %v1768 = vld [vmem:[%s4 + $0x80] sm:$0xf]
    %v1769 = vld [vmem:[%s4 + $0x84] sm:$0xff]
    %v1770 = vld [vmem:[%s4 + $0x8c] sm:$0xf]
    %v1771 = vld [vmem:[%s4 + $0x90] sm:$0xff]
    %v1772 = vld [vmem:[%s4 + $0x98] sm:$0xf]
    %v1773 = vld [vmem:[%s4 + $0x9c] sm:$0xff]
    %v1774 = vld [vmem:[%s4 + $0xa4] sm:$0xf]
    %v1775 = vld [vmem:[%s4 + $0xa8] sm:$0xff]
    %v1776 = vld [vmem:[%s4 + $0xb0] sm:$0xf]
    %v1777 = vld [vmem:[%s4 + $0xb4] sm:$0xff]
    %v1778 = vld [vmem:[%s4 + $0xbc] sm:$0xf]
    %v1779 = vld [vmem:[%s4 + $0xc0] sm:$0xff]
    %v1780 = vld [vmem:[%s4 + $0xc8] sm:$0xf]
    %v1781 = vld [vmem:[%s4 + $0xcc] sm:$0xff]
    %v1782 = vld [vmem:[%s4 + $0xd4] sm:$0xf]
    %v1783 = vld [vmem:[%s4 + $0xd8] sm:$0xff]
    %v1784 = vld [vmem:[%s4 + $0xe0] sm:$0xf]
    %v1785 = vld [vmem:[%s4 + $0xe4] sm:$0xff]
    %v1786 = vld [vmem:[%s4 + $0xec] sm:$0xf]
    %v1787 = vld [vmem:[%s4 + $0xf0] sm:$0xff]
    %v1788 = vld [vmem:[%s4 + $0xf8] sm:$0xf]
    %v1789 = vld [vmem:[%s4 + $0xfc] sm:$0xff]
    %v1790 = vld [vmem:[%s4 + $0x104] sm:$0xf]
    %v1791 = vld [vmem:[%s4 + $0x108] sm:$0xff]
    %v1792 = vld [vmem:[%s4 + $0x110] sm:$0xf]
    %v1793 = vld [vmem:[%s4 + $0x114] sm:$0xff]
    %v1794 = vld [vmem:[%s4 + $0x11c] sm:$0xf]
    %v1795 = vld [vmem:[%s4 + $0x120] sm:$0xff]
    %v1796 = vld [vmem:[%s4 + $0x128] sm:$0xf]
    %v1797 = vld [vmem:[%s4 + $0x12c] sm:$0xff]
    %v1798 = vld [vmem:[%s4 + $0x134] sm:$0xf]
    %v1799 = vld [vmem:[%s4 + $0x138] sm:$0xff]
    %v1800 = vld [vmem:[%s4 + $0x140] sm:$0xf]
    %v1801 = vld [vmem:[%s4 + $0x144] sm:$0xff]
    %v1802 = vld [vmem:[%s4 + $0x14c] sm:$0xf]
    %v1803 = vld [vmem:[%s4 + $0x150] sm:$0xff]
    %v1804 = vld [vmem:[%s4 + $0x158] sm:$0xf]
    %v1805 = vld [vmem:[%s4 + $0x15c] sm:$0xff]
    %v1806 = vld [vmem:[%s4 + $0x164] sm:$0xf]
    %v1807 = vld [vmem:[%s4 + $0x168] sm:$0xff]
    %v1808 = vld [vmem:[%s4 + $0x170] sm:$0xf]
    %v1809 = vld [vmem:[%s4 + $0x174] sm:$0xff]
    %v1810 = vld [vmem:[%s4 + $0x17c] sm:$0xf]
    %v1811 = vld [vmem:[%s4 + $0x180] sm:$0xff]
    %v1812 = vld [vmem:[%s4 + $0x188] sm:$0xf]
    %v1813 = vld [vmem:[%s4 + $0x18c] sm:$0xff]
    %v1814 = vld [vmem:[%s4 + $0x194] sm:$0xf]
    %v1815 = vld [vmem:[%s4 + $0x198] sm:$0xff]
    %v1816 = vld [vmem:[%s4 + $0x1a0] sm:$0xf]
    %v1817 = vld [vmem:[%s4 + $0x1a4] sm:$0xff]
    %v1818 = vld [vmem:[%s4 + $0x1ac] sm:$0xf]
    %v1819 = vld [vmem:[%s4 + $0x1b0] sm:$0xff]
    %v1820 = vld [vmem:[%s4 + $0x1b8] sm:$0xf]
    %v1821 = vld [vmem:[%s4 + $0x1bc] sm:$0xff]
    %v1822 = vld [vmem:[%s4 + $0x1c4] sm:$0xf]
    %v1823 = vld [vmem:[%s4 + $0x1c8] sm:$0xff]
    %v1824 = vld [vmem:[%s4 + $0x1d0] sm:$0xf]
    %v1825 = vld [vmem:[%s4 + $0x1d4] sm:$0xff]
    %v1826 = vld [vmem:[%s4 + $0x1dc] sm:$0xf]
    %v1827 = vld [vmem:[%s4 + $0x1e0] sm:$0xff]
    %v1828 = vld [vmem:[%s4 + $0x1e8] sm:$0xf]
    %v1829 = vld [vmem:[%s4 + $0x1ec] sm:$0xff]
    %v1830 = vld [vmem:[%s4 + $0x1f4] sm:$0xf]
    %v1831 = vld [vmem:[%s4 + $0x1f8] sm:$0xff]
    %v1832 = vld [vmem:[%s4 + $0x200] sm:$0xf]
    %v1833 = vld [vmem:[%s4 + $0x204] sm:$0xff]
    %v1834 = vld [vmem:[%s4 + $0x20c] sm:$0xf]
    %v1835 = vld [vmem:[%s4 + $0x210] sm:$0xff]
    %v1836 = vld [vmem:[%s4 + $0x218] sm:$0xf]
    %v1837 = vld [vmem:[%s4 + $0x21c] sm:$0xff]
    %v1838 = vld [vmem:[%s4 + $0x224] sm:$0xf]
    %v1839 = vld [vmem:[%s4 + $0x228] sm:$0xff]
    %v1840 = vld [vmem:[%s4 + $0x230] sm:$0xf]
    %v1841 = vld [vmem:[%s4 + $0x234] sm:$0xff]
    %v1842 = vld [vmem:[%s4 + $0x23c] sm:$0xf]
    %v1843 = vld [vmem:[%s4 + $0x240] sm:$0xff]
    %v1844 = vld [vmem:[%s4 + $0x248] sm:$0xf]
    %v1845 = vld [vmem:[%s4 + $0x24c] sm:$0xff]
    %v1846 = vld [vmem:[%s4 + $0x254] sm:$0xf]
    %v1847 = vld [vmem:[%s4 + $0x258] sm:$0xff]
    %v1848 = vld [vmem:[%s4 + $0x260] sm:$0xf]
    %v1849 = vld [vmem:[%s4 + $0x264] sm:$0xff]
    %v1850 = vld [vmem:[%s4 + $0x26c] sm:$0xf]
    %v1851 = vld [vmem:[%s4 + $0x270] sm:$0xff]
    %v1852 = vld [vmem:[%s4 + $0x278] sm:$0xf]
    %v1853 = vld [vmem:[%s4 + $0x27c] sm:$0xff]
    %v1854 = vld [vmem:[%s4 + $0x284] sm:$0xf]
    %v1855 = vld [vmem:[%s4 + $0x288] sm:$0xff]
    %v1856 = vld [vmem:[%s4 + $0x290] sm:$0xf]
    %v1857 = vld [vmem:[%s4 + $0x294] sm:$0xff]
    %v1858 = vld [vmem:[%s4 + $0x29c] sm:$0xf]
    %v1971 = vunpack.c.l.b16 %v1747
    %v1972 = vunpack.c.h.b16 %v1747
    %v1973 = vunpack.c.l.b16 %v1748
    %v1974 = vunpack.c.l.b16 %v1749
    %v1975 = vunpack.c.h.b16 %v1749
    %v1976 = vunpack.c.l.b16 %v1750
    %v1977 = vunpack.c.l.b16 %v1751
    %v1978 = vunpack.c.h.b16 %v1751
    %v1979 = vunpack.c.l.b16 %v1752
    %v1980 = vunpack.c.l.b16 %v1753
    %v1981 = vunpack.c.h.b16 %v1753
    %v1982 = vunpack.c.l.b16 %v1754
    %v1983 = vunpack.c.l.b16 %v1755
    %v1984 = vunpack.c.h.b16 %v1755
    %v1985 = vunpack.c.l.b16 %v1756
    %v1986 = vunpack.c.l.b16 %v1757
    %v1987 = vunpack.c.h.b16 %v1757
    %v1988 = vunpack.c.l.b16 %v1758
    %v1989 = vunpack.c.l.b16 %v1759
    %v1990 = vunpack.c.h.b16 %v1759
    %v1991 = vunpack.c.l.b16 %v1760
    %v1992 = vunpack.c.l.b16 %v1761
    %v1993 = vunpack.c.h.b16 %v1761
    %v1994 = vunpack.c.l.b16 %v1762
    %v1995 = vunpack.c.l.b16 %v1763
    %v1996 = vunpack.c.h.b16 %v1763
    %v1997 = vunpack.c.l.b16 %v1764
    %v1998 = vunpack.c.l.b16 %v1765
    %v1999 = vunpack.c.h.b16 %v1765
    %v2000 = vunpack.c.l.b16 %v1766
    %v2001 = vunpack.c.l.b16 %v1767
    %v2002 = vunpack.c.h.b16 %v1767
    %v2003 = vunpack.c.l.b16 %v1768
    %v2004 = vunpack.c.l.b16 %v1769
    %v2005 = vunpack.c.h.b16 %v1769
    %v2006 = vunpack.c.l.b16 %v1770
    %v2007 = vunpack.c.l.b16 %v1771
    %v2008 = vunpack.c.h.b16 %v1771
    %v2009 = vunpack.c.l.b16 %v1772
    %v2010 = vunpack.c.l.b16 %v1773
    %v2011 = vunpack.c.h.b16 %v1773
    %v2012 = vunpack.c.l.b16 %v1774
    %v2013 = vunpack.c.l.b16 %v1775
    %v2014 = vunpack.c.h.b16 %v1775
    %v2015 = vunpack.c.l.b16 %v1776
    %v2016 = vunpack.c.l.b16 %v1777
    %v2017 = vunpack.c.h.b16 %v1777
    %v2018 = vunpack.c.l.b16 %v1778
    %v2019 = vunpack.c.l.b16 %v1779
    %v2020 = vunpack.c.h.b16 %v1779
    %v2021 = vunpack.c.l.b16 %v1780
    %v2022 = vunpack.c.l.b16 %v1781
    %v2023 = vunpack.c.h.b16 %v1781
    %v2024 = vunpack.c.l.b16 %v1782
    %v2025 = vunpack.c.l.b16 %v1783
    %v2026 = vunpack.c.h.b16 %v1783
    %v2027 = vunpack.c.l.b16 %v1784
    %v2028 = vunpack.c.l.b16 %v1785
    %v2029 = vunpack.c.h.b16 %v1785
    %v2030 = vunpack.c.l.b16 %v1786
    %v2031 = vunpack.c.l.b16 %v1787
    %v2032 = vunpack.c.h.b16 %v1787
    %v2033 = vunpack.c.l.b16 %v1788
    %v2034 = vunpack.c.l.b16 %v1789
    %v2035 = vunpack.c.h.b16 %v1789
    %v2036 = vunpack.c.l.b16 %v1790
    %v2037 = vunpack.c.l.b16 %v1791
    %v2038 = vunpack.c.h.b16 %v1791
    %v2039 = vunpack.c.l.b16 %v1792
    %v2040 = vunpack.c.l.b16 %v1793
    %v2041 = vunpack.c.h.b16 %v1793
    %v2042 = vunpack.c.l.b16 %v1794
    %v2043 = vunpack.c.l.b16 %v1795
    %v2044 = vunpack.c.h.b16 %v1795
    %v2045 = vunpack.c.l.b16 %v1796
    %v2046 = vunpack.c.l.b16 %v1797
    %v2047 = vunpack.c.h.b16 %v1797
    %v2048 = vunpack.c.l.b16 %v1798
    %v2049 = vunpack.c.l.b16 %v1799
    %v2050 = vunpack.c.h.b16 %v1799
    %v2051 = vunpack.c.l.b16 %v1800
    %v2052 = vunpack.c.l.b16 %v1801
    %v2053 = vunpack.c.h.b16 %v1801
    %v2054 = vunpack.c.l.b16 %v1802
    %v2055 = vunpack.c.l.b16 %v1803
    %v2056 = vunpack.c.h.b16 %v1803
    %v2057 = vunpack.c.l.b16 %v1804
    %v2058 = vunpack.c.l.b16 %v1805
    %v2059 = vunpack.c.h.b16 %v1805
    %v2060 = vunpack.c.l.b16 %v1806
    %v2061 = vunpack.c.l.b16 %v1807
    %v2062 = vunpack.c.h.b16 %v1807
    %v2063 = vunpack.c.l.b16 %v1808
    %v2064 = vunpack.c.l.b16 %v1809
    %v2065 = vunpack.c.h.b16 %v1809
    %v2066 = vunpack.c.l.b16 %v1810
    %v2067 = vunpack.c.l.b16 %v1811
    %v2068 = vunpack.c.h.b16 %v1811
    %v2069 = vunpack.c.l.b16 %v1812
    %v2070 = vunpack.c.l.b16 %v1813
    %v2071 = vunpack.c.h.b16 %v1813
    %v2072 = vunpack.c.l.b16 %v1814
    %v2073 = vunpack.c.l.b16 %v1815
    %v2074 = vunpack.c.h.b16 %v1815
    %v2075 = vunpack.c.l.b16 %v1816
    %v2076 = vunpack.c.l.b16 %v1817
    %v2077 = vunpack.c.h.b16 %v1817
    %v2078 = vunpack.c.l.b16 %v1818
    %v2079 = vunpack.c.l.b16 %v1819
    %v2080 = vunpack.c.h.b16 %v1819
    %v2081 = vunpack.c.l.b16 %v1820
    %v2082 = vunpack.c.l.b16 %v1821
    %v2083 = vunpack.c.h.b16 %v1821
    %v2084 = vunpack.c.l.b16 %v1822
    %v2085 = vunpack.c.l.b16 %v1823
    %v2086 = vunpack.c.h.b16 %v1823
    %v2087 = vunpack.c.l.b16 %v1824
    %v2088 = vunpack.c.l.b16 %v1825
    %v2089 = vunpack.c.h.b16 %v1825
    %v2090 = vunpack.c.l.b16 %v1826
    %v2091 = vunpack.c.l.b16 %v1827
    %v2092 = vunpack.c.h.b16 %v1827
    %v2093 = vunpack.c.l.b16 %v1828
    %v2094 = vunpack.c.l.b16 %v1829
    %v2095 = vunpack.c.h.b16 %v1829
    %v2096 = vunpack.c.l.b16 %v1830
    %v2097 = vunpack.c.l.b16 %v1831
    %v2098 = vunpack.c.h.b16 %v1831
    %v2099 = vunpack.c.l.b16 %v1832
    %v2100 = vunpack.c.l.b16 %v1833
    %v2101 = vunpack.c.h.b16 %v1833
    %v2102 = vunpack.c.l.b16 %v1834
    %v2103 = vunpack.c.l.b16 %v1835
    %v2104 = vunpack.c.h.b16 %v1835
    %v2105 = vunpack.c.l.b16 %v1836
    %v2106 = vunpack.c.l.b16 %v1837
    %v2107 = vunpack.c.h.b16 %v1837
    %v2108 = vunpack.c.l.b16 %v1838
    %v2109 = vunpack.c.l.b16 %v1839
    %v2110 = vunpack.c.h.b16 %v1839
    %v2111 = vunpack.c.l.b16 %v1840
    %v2112 = vunpack.c.l.b16 %v1841
    %v2113 = vunpack.c.h.b16 %v1841
    %v2114 = vunpack.c.l.b16 %v1842
    %v2115 = vunpack.c.l.b16 %v1843
    %v2116 = vunpack.c.h.b16 %v1843
    %v2117 = vunpack.c.l.b16 %v1844
    %v2118 = vunpack.c.l.b16 %v1845
    %v2119 = vunpack.c.h.b16 %v1845
    %v2120 = vunpack.c.l.b16 %v1846
    %v2121 = vunpack.c.l.b16 %v1847
    %v2122 = vunpack.c.h.b16 %v1847
    %v2123 = vunpack.c.l.b16 %v1848
    %v2124 = vunpack.c.l.b16 %v1849
    %v2125 = vunpack.c.h.b16 %v1849
    %v2126 = vunpack.c.l.b16 %v1850
    %v2127 = vunpack.c.l.b16 %v1851
    %v2128 = vunpack.c.h.b16 %v1851
    %v2129 = vunpack.c.l.b16 %v1852
    %v2130 = vunpack.c.l.b16 %v1853
    %v2131 = vunpack.c.h.b16 %v1853
    %v2132 = vunpack.c.l.b16 %v1854
    %v2133 = vunpack.c.l.b16 %v1855
    %v2134 = vunpack.c.h.b16 %v1855
    %v2135 = vunpack.c.l.b16 %v1856
    %v2136 = vunpack.c.l.b16 %v1857
    %v2137 = vunpack.c.h.b16 %v1857
    %v2138 = vunpack.c.l.b16 %v1858
    %v2139 = vpack.c.b16 %v1974, %v1971
    %v2140 = vpack.c.b16 %v1975, %v1972
    %v2141 = vpack.c.b16 %v1976, %v1973
    %v2142 = vpack.c.b16 %v1980, %v1977
    %v2143 = vpack.c.b16 %v1981, %v1978
    %v2144 = vpack.c.b16 %v1982, %v1979
    %v2145 = vpack.c.b16 %v1986, %v1983
    %v2146 = vpack.c.b16 %v1987, %v1984
    %v2147 = vpack.c.b16 %v1988, %v1985
    %v2148 = vpack.c.b16 %v1992, %v1989
    %v2149 = vpack.c.b16 %v1993, %v1990
    %v2150 = vpack.c.b16 %v1994, %v1991
    %v2151 = vpack.c.b16 %v1998, %v1995
    %v2152 = vpack.c.b16 %v1999, %v1996
    %v2153 = vpack.c.b16 %v2000, %v1997
    %v2154 = vpack.c.b16 %v2004, %v2001
    %v2155 = vpack.c.b16 %v2005, %v2002
    %v2156 = vpack.c.b16 %v2006, %v2003
    %v2157 = vpack.c.b16 %v2010, %v2007
    %v2158 = vpack.c.b16 %v2011, %v2008
    %v2159 = vpack.c.b16 %v2012, %v2009
    %v2160 = vpack.c.b16 %v2016, %v2013
    %v2161 = vpack.c.b16 %v2017, %v2014
    %v2162 = vpack.c.b16 %v2018, %v2015
    %v2163 = vpack.c.b16 %v2022, %v2019
    %v2164 = vpack.c.b16 %v2023, %v2020
    %v2165 = vpack.c.b16 %v2024, %v2021
    %v2166 = vpack.c.b16 %v2028, %v2025
    %v2167 = vpack.c.b16 %v2029, %v2026
    %v2168 = vpack.c.b16 %v2030, %v2027
    %v2169 = vpack.c.b16 %v2034, %v2031
    %v2170 = vpack.c.b16 %v2035, %v2032
    %v2171 = vpack.c.b16 %v2036, %v2033
    %v2172 = vpack.c.b16 %v2040, %v2037
    %v2173 = vpack.c.b16 %v2041, %v2038
    %v2174 = vpack.c.b16 %v2042, %v2039
    %v2175 = vpack.c.b16 %v2046, %v2043
    %v2176 = vpack.c.b16 %v2047, %v2044
    %v2177 = vpack.c.b16 %v2048, %v2045
    %v2178 = vpack.c.b16 %v2052, %v2049
    %v2179 = vpack.c.b16 %v2053, %v2050
    %v2180 = vpack.c.b16 %v2054, %v2051
    %v2181 = vpack.c.b16 %v2058, %v2055
    %v2182 = vpack.c.b16 %v2059, %v2056
    %v2183 = vpack.c.b16 %v2060, %v2057
    %v2184 = vpack.c.b16 %v2064, %v2061
    %v2185 = vpack.c.b16 %v2065, %v2062
    %v2186 = vpack.c.b16 %v2066, %v2063
    %v2187 = vpack.c.b16 %v2070, %v2067
    %v2188 = vpack.c.b16 %v2071, %v2068
    %v2189 = vpack.c.b16 %v2072, %v2069
    %v2190 = vpack.c.b16 %v2076, %v2073
    %v2191 = vpack.c.b16 %v2077, %v2074
    %v2192 = vpack.c.b16 %v2078, %v2075
    %v2193 = vpack.c.b16 %v2082, %v2079
    %v2194 = vpack.c.b16 %v2083, %v2080
    %v2195 = vpack.c.b16 %v2084, %v2081
    %v2196 = vpack.c.b16 %v2088, %v2085
    %v2197 = vpack.c.b16 %v2089, %v2086
    %v2198 = vpack.c.b16 %v2090, %v2087
    %v2199 = vpack.c.b16 %v2094, %v2091
    %v2200 = vpack.c.b16 %v2095, %v2092
    %v2201 = vpack.c.b16 %v2096, %v2093
    %v2202 = vpack.c.b16 %v2100, %v2097
    %v2203 = vpack.c.b16 %v2101, %v2098
    %v2204 = vpack.c.b16 %v2102, %v2099
    %v2205 = vpack.c.b16 %v2106, %v2103
    %v2206 = vpack.c.b16 %v2107, %v2104
    %v2207 = vpack.c.b16 %v2108, %v2105
    %v2208 = vpack.c.b16 %v2112, %v2109
    %v2209 = vpack.c.b16 %v2113, %v2110
    %v2210 = vpack.c.b16 %v2114, %v2111
    %v2211 = vpack.c.b16 %v2118, %v2115
    %v2212 = vpack.c.b16 %v2119, %v2116
    %v2213 = vpack.c.b16 %v2120, %v2117
    %v2214 = vpack.c.b16 %v2124, %v2121
    %v2215 = vpack.c.b16 %v2125, %v2122
    %v2216 = vpack.c.b16 %v2126, %v2123
    %v2217 = vpack.c.b16 %v2130, %v2127
    %v2218 = vpack.c.b16 %v2131, %v2128
    %v2219 = vpack.c.b16 %v2132, %v2129
    %v2220 = vpack.c.b16 %v2136, %v2133
    %v2221 = vpack.c.b16 %v2137, %v2134
    %v2222 = vpack.c.b16 %v2138, %v2135
    %vm2307 = vcmask 523264
    %v2309 = vsel %vm2307, %v1738, 0
    %v2312 = vsel %vm2307, %v1742, 0
    %v2315 = vsel %vm2307, %v1746, 0
    %2317 = vmatprep.subr.bf16.mxu0 %v2140
    %2318 = vmatpush1.bf16.msra.mxu0 %v2139
    %2319 = vmatprep.subr.bf16.mxu0 %v2143
    %2320 = vmatpush1.bf16.msra.mxu0 %v2142
    %2321 = vmatprep.subr.bf16.mxu0 %v2146
    %2322 = vmatpush1.bf16.msra.mxu0 %v2145
    %2323 = vmatprep.subr.bf16.mxu0 %v2149
    %2324 = vmatpush1.bf16.msra.mxu0 %v2148
    %2325 = vmatprep.subr.bf16.mxu0 %v2152
    %2326 = vmatpush1.bf16.msra.mxu0 %v2151
    %2327 = vmatprep.subr.bf16.mxu0 %v2155
    %2328 = vmatpush1.bf16.msra.mxu0 %v2154
    %2329 = vmatprep.subr.bf16.mxu0 %v2158
    %2330 = vmatpush1.bf16.msra.mxu0 %v2157
    %2331 = vmatprep.subr.bf16.mxu0 %v2161
    %2332 = vmatpush1.bf16.msra.mxu0 %v2160
    %2333 = vmatprep.subr.bf16.mxu0 %v2164
    %2334 = vmatpush1.bf16.msra.mxu0 %v2163
    %2335 = vmatprep.subr.bf16.mxu0 %v2167
    %2336 = vmatpush1.bf16.msra.mxu0 %v2166
    %2337 = vmatprep.subr.bf16.mxu0 %v2170
    %2338 = vmatpush1.bf16.msra.mxu0 %v2169
    %2339 = vmatprep.subr.bf16.mxu0 %v2173
    %2340 = vmatpush1.bf16.msra.mxu0 %v2172
    %2341 = vmatprep.subr.bf16.mxu0 %v2176
    %2342 = vmatpush1.bf16.msra.mxu0 %v2175
    %2343 = vmatprep.subr.bf16.mxu0 %v2179
    %2344 = vmatpush1.bf16.msra.mxu0 %v2178
    %2345 = vmatprep.subr.bf16.mxu0 %v2182
    %2346 = vmatpush1.bf16.msra.mxu0 %v2181
    %2347 = vmatprep.subr.bf16.mxu0 %v2185
    %2348 = vmatpush1.bf16.msra.mxu0 %v2184
    %2349 = vmatprep.mubr.bf16.mxu0 %v1736
    %2350 = vmatmul.mubr.bf16.gmra.mrb[0].mxu0 %v1735
    %v2351 = vpop.f32.mrb[0].mxu0
    %v2352 = vadd.f32 0.0, %v2351
    %v2353 = vpop.f32.mrb[0].mxu0
    %v2354 = vadd.f32 0.0, %v2353
    %v2355 = vpop.f32.mrb[0].mxu0
    %v2356 = vadd.f32 0.0, %v2355
    %v2357 = vpop.f32.mrb[0].mxu0
    %v2358 = vadd.f32 0.0, %v2357
    %2359 = vmatprep.mubr.bf16.mxu0 %v1740
    %2360 = vmatmul.mubr.bf16.gmra.mrb[0].mxu0 %v1739
    %v2361 = vpop.f32.mrb[0].mxu0
    %v2362 = vadd.f32 0.0, %v2361
    %v2363 = vpop.f32.mrb[0].mxu0
    %v2364 = vadd.f32 0.0, %v2363
    %v2365 = vpop.f32.mrb[0].mxu0
    %v2366 = vadd.f32 0.0, %v2365
    %v2367 = vpop.f32.mrb[0].mxu0
    %v2368 = vadd.f32 0.0, %v2367
    %2369 = vmatprep.mubr.bf16.mxu0 %v1744
    %2370 = vmatmul.mubr.bf16.gmra.mrb[0].mxu0 %v1743
    %v2371 = vpop.f32.mrb[0].mxu0
    %v2372 = vadd.f32 0.0, %v2371
    %v2373 = vpop.f32.mrb[0].mxu0
    %v2374 = vadd.f32 0.0, %v2373
    %v2375 = vpop.f32.mrb[0].mxu0
    %v2376 = vpop.f32.mrb[0].mxu0
    %2377 = vdwg.mxu0
    %2378 = vmatprep.subr.bf16.mxu0 %v2188
    %2379 = vmatpush1.bf16.msra.mxu0 %v2187
    %2380 = vmatprep.subr.bf16.mxu0 %v2191
    %2381 = vmatpush1.bf16.msra.mxu0 %v2190
    %2382 = vmatprep.subr.bf16.mxu0 %v2194
    %2383 = vmatpush1.bf16.msra.mxu0 %v2193
    %2384 = vmatprep.subr.bf16.mxu0 %v2197
    %2385 = vmatpush1.bf16.msra.mxu0 %v2196
    %2386 = vmatprep.subr.bf16.mxu0 %v2200
    %2387 = vmatpush1.bf16.msra.mxu0 %v2199
    %2388 = vmatprep.subr.bf16.mxu0 %v2203
    %2389 = vmatpush1.bf16.msra.mxu0 %v2202
    %2390 = vmatprep.subr.bf16.mxu0 %v2206
    %2391 = vmatpush1.bf16.msra.mxu0 %v2205
    %2392 = vmatprep.subr.bf16.mxu0 %v2209
    %2393 = vmatpush1.bf16.msra.mxu0 %v2208
    %2394 = vmatprep.subr.bf16.mxu0 %v2212
    %2395 = vmatpush1.bf16.msra.mxu0 %v2211
    %2396 = vmatprep.subr.bf16.mxu0 %v2215
    %2397 = vmatpush1.bf16.msra.mxu0 %v2214
    %2398 = vmatprep.subr.bf16.mxu0 %v2218
    %2399 = vmatpush1.bf16.msra.mxu0 %v2217
    %2400 = vmatprep.subr.bf16.mxu0 %v2221
    %2401 = vmatpush1.bf16.msra.mxu0 %v2220
    %2402 = vmatprep.subr.bf16.mxu0 0
    %2403 = vmatpush1.bf16.msra.mxu0 0
    %2404 = vmatprep.subr.bf16.mxu0 0
    %2405 = vmatpush1.bf16.msra.mxu0 0
    %2406 = vmatprep.subr.bf16.mxu0 0
    %2407 = vmatpush1.bf16.msra.mxu0 0
    %2408 = vmatprep.subr.bf16.mxu0 0
    %2409 = vmatpush1.bf16.msra.mxu0 0
    %2410 = vmatprep.mubr.bf16.mxu0 %v2309
    %2411 = vmatmul.mubr.bf16.gmra.mrb[0].mxu0 %v1737
    %v2412 = vpop.f32.mrb[0].mxu0
    %v2413 = vadd.f32 %v2352, %v2412
    %v2414 = vpop.f32.mrb[0].mxu0
    %v2415 = vadd.f32 %v2354, %v2414
    %v2416 = vpop.f32.mrb[0].mxu0
    %v2417 = vadd.f32 %v2356, %v2416
    %v2418 = vpop.f32.mrb[0].mxu0
    %v2419 = vadd.f32 %v2358, %v2418
    %2420 = vmatprep.mubr.bf16.mxu0 %v2312
    %2421 = vmatmul.mubr.bf16.gmra.mrb[0].mxu0 %v1741
    %v2422 = vpop.f32.mrb[0].mxu0
    %v2423 = vadd.f32 %v2362, %v2422
    %v2424 = vpop.f32.mrb[0].mxu0
    %v2425 = vadd.f32 %v2364, %v2424
    %v2426 = vpop.f32.mrb[0].mxu0
    %v2427 = vadd.f32 %v2366, %v2426
    %v2428 = vpop.f32.mrb[0].mxu0
    %v2429 = vadd.f32 %v2368, %v2428
    %2430 = vmatprep.mubr.bf16.mxu0 %v2315
    %2431 = vmatmul.mubr.bf16.gmra.mrb[0].mxu0 %v1745
    %v2432 = vpop.f32.mrb[0].mxu0
    %v2433 = vadd.f32 %v2372, %v2432
    %v2434 = vpop.f32.mrb[0].mxu0
    %v2435 = vadd.f32 %v2374, %v2434
    %v2436 = vpop.f32.mrb[0].mxu0
    %v2437 = vpop.f32.mrb[0].mxu0
    %2438 = vdwg.mxu0
    %2439 = vmatprep.subr.bf16.mxu0 0
    %2440 = vmatpush1.bf16.msra.mxu0 %v2141
    %2441 = vmatprep.subr.bf16.mxu0 0
    %2442 = vmatpush1.bf16.msra.mxu0 %v2144
    %2443 = vmatprep.subr.bf16.mxu0 0
    %2444 = vmatpush1.bf16.msra.mxu0 %v2147
    %2445 = vmatprep.subr.bf16.mxu0 0
    %2446 = vmatpush1.bf16.msra.mxu0 %v2150
    %2447 = vmatprep.subr.bf16.mxu0 0
    %2448 = vmatpush1.bf16.msra.mxu0 %v2153
    %2449 = vmatprep.subr.bf16.mxu0 0
    %2450 = vmatpush1.bf16.msra.mxu0 %v2156
    %2451 = vmatprep.subr.bf16.mxu0 0
    %2452 = vmatpush1.bf16.msra.mxu0 %v2159
    %2453 = vmatprep.subr.bf16.mxu0 0
    %2454 = vmatpush1.bf16.msra.mxu0 %v2162
    %2455 = vmatprep.subr.bf16.mxu0 0
    %2456 = vmatpush1.bf16.msra.mxu0 %v2165
    %2457 = vmatprep.subr.bf16.mxu0 0
    %2458 = vmatpush1.bf16.msra.mxu0 %v2168
    %2459 = vmatprep.subr.bf16.mxu0 0
    %2460 = vmatpush1.bf16.msra.mxu0 %v2171
    %2461 = vmatprep.subr.bf16.mxu0 0
    %2462 = vmatpush1.bf16.msra.mxu0 %v2174
    %2463 = vmatprep.subr.bf16.mxu0 0
    %2464 = vmatpush1.bf16.msra.mxu0 %v2177
    %2465 = vmatprep.subr.bf16.mxu0 0
    %2466 = vmatpush1.bf16.msra.mxu0 %v2180
    %2467 = vmatprep.subr.bf16.mxu0 0
    %2468 = vmatpush1.bf16.msra.mxu0 %v2183
    %2469 = vmatprep.subr.bf16.mxu0 0
    %2470 = vmatpush1.bf16.msra.mxu0 %v2186
    %2471 = vmatprep.mubr.bf16.mxu0 %v1736
    %2472 = vmatmul.mubr.bf16.gmra.mrb[0].mxu0 %v1735
    %v2473 = vpop.f32.mrb[0].mxu0
    %v2474 = vadd.f32 0.0, %v2473
    %v2475 = vpop.f32.mrb[0].mxu0
    %v2476 = vpop.f32.mrb[0].mxu0
    %v2477 = vadd.f32 0.0, %v2476
    %v2478 = vpop.f32.mrb[0].mxu0
    %2479 = vmatprep.mubr.bf16.mxu0 %v1740
    %2480 = vmatmul.mubr.bf16.gmra.mrb[0].mxu0 %v1739
    %v2481 = vpop.f32.mrb[0].mxu0
    %v2482 = vadd.f32 0.0, %v2481
    %v2483 = vpop.f32.mrb[0].mxu0
    %v2484 = vpop.f32.mrb[0].mxu0
    %v2485 = vadd.f32 0.0, %v2484
    %v2486 = vpop.f32.mrb[0].mxu0
    %2487 = vmatprep.mubr.bf16.mxu0 %v1744
    %2488 = vmatmul.mubr.bf16.gmra.mrb[0].mxu0 %v1743
    %v2489 = vpop.f32.mrb[0].mxu0
    %v2490 = vadd.f32 0.0, %v2489
    %v2491 = vpop.f32.mrb[0].mxu0
    %v2492 = vpop.f32.mrb[0].mxu0
    %v2493 = vpop.f32.mrb[0].mxu0
    %2494 = vdwg.mxu0
    %2495 = vmatprep.subr.bf16.mxu0 0
    %2496 = vmatpush1.bf16.msra.mxu0 %v2189
    %2497 = vmatprep.subr.bf16.mxu0 0
    %2498 = vmatpush1.bf16.msra.mxu0 %v2192
    %2499 = vmatprep.subr.bf16.mxu0 0
    %2500 = vmatpush1.bf16.msra.mxu0 %v2195
    %2501 = vmatprep.subr.bf16.mxu0 0
    %2502 = vmatpush1.bf16.msra.mxu0 %v2198
    %2503 = vmatprep.subr.bf16.mxu0 0
    %2504 = vmatpush1.bf16.msra.mxu0 %v2201
    %2505 = vmatprep.subr.bf16.mxu0 0
    %2506 = vmatpush1.bf16.msra.mxu0 %v2204
    %2507 = vmatprep.subr.bf16.mxu0 0
    %2508 = vmatpush1.bf16.msra.mxu0 %v2207
    %2509 = vmatprep.subr.bf16.mxu0 0
    %2510 = vmatpush1.bf16.msra.mxu0 %v2210
    %2511 = vmatprep.subr.bf16.mxu0 0
    %2512 = vmatpush1.bf16.msra.mxu0 %v2213
    %2513 = vmatprep.subr.bf16.mxu0 0
    %2514 = vmatpush1.bf16.msra.mxu0 %v2216
    %2515 = vmatprep.subr.bf16.mxu0 0
    %2516 = vmatpush1.bf16.msra.mxu0 %v2219
    %2517 = vmatprep.subr.bf16.mxu0 0
    %2518 = vmatpush1.bf16.msra.mxu0 %v2222
    %2519 = vmatprep.subr.bf16.mxu0 0
    %2520 = vmatpush1.bf16.msra.mxu0 0
    %2521 = vmatprep.subr.bf16.mxu0 0
    %2522 = vmatpush1.bf16.msra.mxu0 0
    %2523 = vmatprep.subr.bf16.mxu0 0
    %2524 = vmatpush1.bf16.msra.mxu0 0
    %2525 = vmatprep.subr.bf16.mxu0 0
    %2526 = vmatpush1.bf16.msra.mxu0 0
    %2527 = vmatprep.mubr.bf16.mxu0 %v2309
    %2528 = vmatmul.mubr.bf16.gmra.mrb[0].mxu0 %v1737
    %v2529 = vpop.f32.mrb[0].mxu0
    %v2530 = vadd.f32 %v2474, %v2529
    %v2531 = vpop.f32.mrb[0].mxu0
    %v2532 = vpop.f32.mrb[0].mxu0
    %v2533 = vadd.f32 %v2477, %v2532
    %v2534 = vpop.f32.mrb[0].mxu0
    %2535 = vmatprep.mubr.bf16.mxu0 %v2312
    %2536 = vmatmul.mubr.bf16.gmra.mrb[0].mxu0 %v1741
    %v2537 = vpop.f32.mrb[0].mxu0
    %v2538 = vadd.f32 %v2482, %v2537
    %v2539 = vpop.f32.mrb[0].mxu0
    %v2540 = vpop.f32.mrb[0].mxu0
    %v2541 = vadd.f32 %v2485, %v2540
    %v2542 = vpop.f32.mrb[0].mxu0
    %2543 = vmatprep.mubr.bf16.mxu0 %v2315
    %2544 = vmatmul.mubr.bf16.gmra.mrb[0].mxu0 %v1745
    %v2545 = vpop.f32.mrb[0].mxu0
    %v2546 = vadd.f32 %v2490, %v2545
    %v2547 = vpop.f32.mrb[0].mxu0
    %v2548 = vpop.f32.mrb[0].mxu0
    %v2549 = vpop.f32.mrb[0].mxu0
    %2550 = vdwg.mxu0
    %s2551 = scalar_lea.vmem %s4, 672
    %v2552 = vld [vmem:[%s2551] sm:$0xff]
    %v2553 = vld [vmem:[%s2551 + $0x8] sm:$0xf]
    %v2554 = vld [vmem:[%s2551 + $0xc] sm:$0xff]
    %v2555 = vld [vmem:[%s2551 + $0x14] sm:$0xf]
    %v2556 = vld [vmem:[%s2551 + $0x18] sm:$0xff]
    %v2557 = vld [vmem:[%s2551 + $0x20] sm:$0xf]
    %v2558 = vld [vmem:[%s2551 + $0x24] sm:$0xff]
    %v2559 = vld [vmem:[%s2551 + $0x2c] sm:$0xf]
    %v2560 = vld [vmem:[%s2551 + $0x30] sm:$0xff]
    %v2561 = vld [vmem:[%s2551 + $0x38] sm:$0xf]
    %v2562 = vld [vmem:[%s2551 + $0x3c] sm:$0xff]
    %v2563 = vld [vmem:[%s2551 + $0x44] sm:$0xf]
    %v2564 = vld [vmem:[%s2551 + $0x48] sm:$0xff]
    %v2565 = vld [vmem:[%s2551 + $0x50] sm:$0xf]
    %v2566 = vld [vmem:[%s2551 + $0x54] sm:$0xff]
    %v2567 = vld [vmem:[%s2551 + $0x5c] sm:$0xf]
    %v2568 = vld [vmem:[%s2551 + $0x60] sm:$0xff]
    %v2569 = vld [vmem:[%s2551 + $0x68] sm:$0xf]
    %v2570 = vld [vmem:[%s2551 + $0x6c] sm:$0xff]
    %v2571 = vld [vmem:[%s2551 + $0x74] sm:$0xf]
    %v2572 = vld [vmem:[%s2551 + $0x78] sm:$0xff]
    %v2573 = vld [vmem:[%s2551 + $0x80] sm:$0xf]
    %v2574 = vld [vmem:[%s2551 + $0x84] sm:$0xff]
    %v2575 = vld [vmem:[%s2551 + $0x8c] sm:$0xf]
    %v2576 = vld [vmem:[%s2551 + $0x90] sm:$0xff]
    %v2577 = vld [vmem:[%s2551 + $0x98] sm:$0xf]
    %v2578 = vld [vmem:[%s2551 + $0x9c] sm:$0xff]
    %v2579 = vld [vmem:[%s2551 + $0xa4] sm:$0xf]
    %v2580 = vld [vmem:[%s2551 + $0xa8] sm:$0xff]
    %v2581 = vld [vmem:[%s2551 + $0xb0] sm:$0xf]
    %v2582 = vld [vmem:[%s2551 + $0xb4] sm:$0xff]
    %v2583 = vld [vmem:[%s2551 + $0xbc] sm:$0xf]
    %v2584 = vld [vmem:[%s2551 + $0xc0] sm:$0xff]
    %v2585 = vld [vmem:[%s2551 + $0xc8] sm:$0xf]
    %v2586 = vld [vmem:[%s2551 + $0xcc] sm:$0xff]
    %v2587 = vld [vmem:[%s2551 + $0xd4] sm:$0xf]
    %v2588 = vld [vmem:[%s2551 + $0xd8] sm:$0xff]
    %v2589 = vld [vmem:[%s2551 + $0xe0] sm:$0xf]
    %v2590 = vld [vmem:[%s2551 + $0xe4] sm:$0xff]
    %v2591 = vld [vmem:[%s2551 + $0xec] sm:$0xf]
    %v2592 = vld [vmem:[%s2551 + $0xf0] sm:$0xff]
    %v2593 = vld [vmem:[%s2551 + $0xf8] sm:$0xf]
    %v2594 = vld [vmem:[%s2551 + $0xfc] sm:$0xff]
    %v2595 = vld [vmem:[%s2551 + $0x104] sm:$0xf]
    %v2596 = vld [vmem:[%s2551 + $0x108] sm:$0xff]
    %v2597 = vld [vmem:[%s2551 + $0x110] sm:$0xf]
    %v2598 = vld [vmem:[%s2551 + $0x114] sm:$0xff]
    %v2599 = vld [vmem:[%s2551 + $0x11c] sm:$0xf]
    %v2600 = vld [vmem:[%s2551 + $0x120] sm:$0xff]
    %v2601 = vld [vmem:[%s2551 + $0x128] sm:$0xf]
    %v2602 = vld [vmem:[%s2551 + $0x12c] sm:$0xff]
    %v2603 = vld [vmem:[%s2551 + $0x134] sm:$0xf]
    %v2604 = vld [vmem:[%s2551 + $0x138] sm:$0xff]
    %v2605 = vld [vmem:[%s2551 + $0x140] sm:$0xf]
    %v2606 = vld [vmem:[%s2551 + $0x144] sm:$0xff]
    %v2607 = vld [vmem:[%s2551 + $0x14c] sm:$0xf]
    %v2608 = vld [vmem:[%s2551 + $0x150] sm:$0xff]
    %v2609 = vld [vmem:[%s2551 + $0x158] sm:$0xf]
    %v2610 = vld [vmem:[%s2551 + $0x15c] sm:$0xff]
    %v2611 = vld [vmem:[%s2551 + $0x164] sm:$0xf]
    %v2612 = vld [vmem:[%s2551 + $0x168] sm:$0xff]
    %v2613 = vld [vmem:[%s2551 + $0x170] sm:$0xf]
    %v2614 = vld [vmem:[%s2551 + $0x174] sm:$0xff]
    %v2615 = vld [vmem:[%s2551 + $0x17c] sm:$0xf]
    %v2616 = vld [vmem:[%s2551 + $0x180] sm:$0xff]
    %v2617 = vld [vmem:[%s2551 + $0x188] sm:$0xf]
    %v2618 = vld [vmem:[%s2551 + $0x18c] sm:$0xff]
    %v2619 = vld [vmem:[%s2551 + $0x194] sm:$0xf]
    %v2620 = vld [vmem:[%s2551 + $0x198] sm:$0xff]
    %v2621 = vld [vmem:[%s2551 + $0x1a0] sm:$0xf]
    %v2622 = vld [vmem:[%s2551 + $0x1a4] sm:$0xff]
    %v2623 = vld [vmem:[%s2551 + $0x1ac] sm:$0xf]
    %v2624 = vld [vmem:[%s2551 + $0x1b0] sm:$0xff]
    %v2625 = vld [vmem:[%s2551 + $0x1b8] sm:$0xf]
    %v2626 = vld [vmem:[%s2551 + $0x1bc] sm:$0xff]
    %v2627 = vld [vmem:[%s2551 + $0x1c4] sm:$0xf]
    %v2628 = vld [vmem:[%s2551 + $0x1c8] sm:$0xff]
    %v2629 = vld [vmem:[%s2551 + $0x1d0] sm:$0xf]
    %v2630 = vld [vmem:[%s2551 + $0x1d4] sm:$0xff]
    %v2631 = vld [vmem:[%s2551 + $0x1dc] sm:$0xf]
    %v2632 = vld [vmem:[%s2551 + $0x1e0] sm:$0xff]
    %v2633 = vld [vmem:[%s2551 + $0x1e8] sm:$0xf]
    %v2634 = vld [vmem:[%s2551 + $0x1ec] sm:$0xff]
    %v2635 = vld [vmem:[%s2551 + $0x1f4] sm:$0xf]
    %v2636 = vld [vmem:[%s2551 + $0x1f8] sm:$0xff]
    %v2637 = vld [vmem:[%s2551 + $0x200] sm:$0xf]
    %v2638 = vld [vmem:[%s2551 + $0x204] sm:$0xff]
    %v2639 = vld [vmem:[%s2551 + $0x20c] sm:$0xf]
    %v2640 = vld [vmem:[%s2551 + $0x210] sm:$0xff]
    %v2641 = vld [vmem:[%s2551 + $0x218] sm:$0xf]
    %v2642 = vld [vmem:[%s2551 + $0x21c] sm:$0xff]
    %v2643 = vld [vmem:[%s2551 + $0x224] sm:$0xf]
    %v2644 = vld [vmem:[%s2551 + $0x228] sm:$0xff]
    %v2645 = vld [vmem:[%s2551 + $0x230] sm:$0xf]
    %v2646 = vld [vmem:[%s2551 + $0x234] sm:$0xff]
    %v2647 = vld [vmem:[%s2551 + $0x23c] sm:$0xf]
    %v2648 = vld [vmem:[%s2551 + $0x240] sm:$0xff]
    %v2649 = vld [vmem:[%s2551 + $0x248] sm:$0xf]
    %v2650 = vld [vmem:[%s2551 + $0x24c] sm:$0xff]
    %v2651 = vld [vmem:[%s2551 + $0x254] sm:$0xf]
    %v2652 = vld [vmem:[%s2551 + $0x258] sm:$0xff]
    %v2653 = vld [vmem:[%s2551 + $0x260] sm:$0xf]
    %v2654 = vld [vmem:[%s2551 + $0x264] sm:$0xff]
    %v2655 = vld [vmem:[%s2551 + $0x26c] sm:$0xf]
    %v2656 = vld [vmem:[%s2551 + $0x270] sm:$0xff]
    %v2657 = vld [vmem:[%s2551 + $0x278] sm:$0xf]
    %v2658 = vld [vmem:[%s2551 + $0x27c] sm:$0xff]
    %v2659 = vld [vmem:[%s2551 + $0x284] sm:$0xf]
    %v2660 = vld [vmem:[%s2551 + $0x288] sm:$0xff]
    %v2661 = vld [vmem:[%s2551 + $0x290] sm:$0xf]
    %v2662 = vld [vmem:[%s2551 + $0x294] sm:$0xff]
    %v2663 = vld [vmem:[%s2551 + $0x29c] sm:$0xf]
    %v2776 = vunpack.c.l.b16 %v2552
    %v2777 = vunpack.c.h.b16 %v2552
    %v2778 = vunpack.c.l.b16 %v2553
    %v2779 = vunpack.c.l.b16 %v2554
    %v2780 = vunpack.c.h.b16 %v2554
    %v2781 = vunpack.c.l.b16 %v2555
    %v2782 = vunpack.c.l.b16 %v2556
    %v2783 = vunpack.c.h.b16 %v2556
    %v2784 = vunpack.c.l.b16 %v2557
    %v2785 = vunpack.c.l.b16 %v2558
    %v2786 = vunpack.c.h.b16 %v2558
    %v2787 = vunpack.c.l.b16 %v2559
    %v2788 = vunpack.c.l.b16 %v2560
    %v2789 = vunpack.c.h.b16 %v2560
    %v2790 = vunpack.c.l.b16 %v2561
    %v2791 = vunpack.c.l.b16 %v2562
    %v2792 = vunpack.c.h.b16 %v2562
    %v2793 = vunpack.c.l.b16 %v2563
    %v2794 = vunpack.c.l.b16 %v2564
    %v2795 = vunpack.c.h.b16 %v2564
    %v2796 = vunpack.c.l.b16 %v2565
    %v2797 = vunpack.c.l.b16 %v2566
    %v2798 = vunpack.c.h.b16 %v2566
    %v2799 = vunpack.c.l.b16 %v2567
    %v2800 = vunpack.c.l.b16 %v2568
    %v2801 = vunpack.c.h.b16 %v2568
    %v2802 = vunpack.c.l.b16 %v2569
    %v2803 = vunpack.c.l.b16 %v2570
    %v2804 = vunpack.c.h.b16 %v2570
    %v2805 = vunpack.c.l.b16 %v2571
    %v2806 = vunpack.c.l.b16 %v2572
    %v2807 = vunpack.c.h.b16 %v2572
    %v2808 = vunpack.c.l.b16 %v2573
    %v2809 = vunpack.c.l.b16 %v2574
    %v2810 = vunpack.c.h.b16 %v2574
    %v2811 = vunpack.c.l.b16 %v2575
    %v2812 = vunpack.c.l.b16 %v2576
    %v2813 = vunpack.c.h.b16 %v2576
    %v2814 = vunpack.c.l.b16 %v2577
    %v2815 = vunpack.c.l.b16 %v2578
    %v2816 = vunpack.c.h.b16 %v2578
    %v2817 = vunpack.c.l.b16 %v2579
    %v2818 = vunpack.c.l.b16 %v2580
    %v2819 = vunpack.c.h.b16 %v2580
    %v2820 = vunpack.c.l.b16 %v2581
    %v2821 = vunpack.c.l.b16 %v2582
    %v2822 = vunpack.c.h.b16 %v2582
    %v2823 = vunpack.c.l.b16 %v2583
    %v2824 = vunpack.c.l.b16 %v2584
    %v2825 = vunpack.c.h.b16 %v2584
    %v2826 = vunpack.c.l.b16 %v2585
    %v2827 = vunpack.c.l.b16 %v2586
    %v2828 = vunpack.c.h.b16 %v2586
    %v2829 = vunpack.c.l.b16 %v2587
    %v2830 = vunpack.c.l.b16 %v2588
    %v2831 = vunpack.c.h.b16 %v2588
    %v2832 = vunpack.c.l.b16 %v2589
    %v2833 = vunpack.c.l.b16 %v2590
    %v2834 = vunpack.c.h.b16 %v2590
    %v2835 = vunpack.c.l.b16 %v2591
    %v2836 = vunpack.c.l.b16 %v2592
    %v2837 = vunpack.c.h.b16 %v2592
    %v2838 = vunpack.c.l.b16 %v2593
    %v2839 = vunpack.c.l.b16 %v2594
    %v2840 = vunpack.c.h.b16 %v2594
    %v2841 = vunpack.c.l.b16 %v2595
    %v2842 = vunpack.c.l.b16 %v2596
    %v2843 = vunpack.c.h.b16 %v2596
    %v2844 = vunpack.c.l.b16 %v2597
    %v2845 = vunpack.c.l.b16 %v2598
    %v2846 = vunpack.c.h.b16 %v2598
    %v2847 = vunpack.c.l.b16 %v2599
    %v2848 = vunpack.c.l.b16 %v2600
    %v2849 = vunpack.c.h.b16 %v2600
    %v2850 = vunpack.c.l.b16 %v2601
    %v2851 = vunpack.c.l.b16 %v2602
    %v2852 = vunpack.c.h.b16 %v2602
    %v2853 = vunpack.c.l.b16 %v2603
    %v2854 = vunpack.c.l.b16 %v2604
    %v2855 = vunpack.c.h.b16 %v2604
    %v2856 = vunpack.c.l.b16 %v2605
    %v2857 = vunpack.c.l.b16 %v2606
    %v2858 = vunpack.c.h.b16 %v2606
    %v2859 = vunpack.c.l.b16 %v2607
    %v2860 = vunpack.c.l.b16 %v2608
    %v2861 = vunpack.c.h.b16 %v2608
    %v2862 = vunpack.c.l.b16 %v2609
    %v2863 = vunpack.c.l.b16 %v2610
    %v2864 = vunpack.c.h.b16 %v2610
    %v2865 = vunpack.c.l.b16 %v2611
    %v2866 = vunpack.c.l.b16 %v2612
    %v2867 = vunpack.c.h.b16 %v2612
    %v2868 = vunpack.c.l.b16 %v2613
    %v2869 = vunpack.c.l.b16 %v2614
    %v2870 = vunpack.c.h.b16 %v2614
    %v2871 = vunpack.c.l.b16 %v2615
    %v2872 = vunpack.c.l.b16 %v2616
    %v2873 = vunpack.c.h.b16 %v2616
    %v2874 = vunpack.c.l.b16 %v2617
    %v2875 = vunpack.c.l.b16 %v2618
    %v2876 = vunpack.c.h.b16 %v2618
    %v2877 = vunpack.c.l.b16 %v2619
    %v2878 = vunpack.c.l.b16 %v2620
    %v2879 = vunpack.c.h.b16 %v2620
    %v2880 = vunpack.c.l.b16 %v2621
    %v2881 = vunpack.c.l.b16 %v2622
    %v2882 = vunpack.c.h.b16 %v2622
    %v2883 = vunpack.c.l.b16 %v2623
    %v2884 = vunpack.c.l.b16 %v2624
    %v2885 = vunpack.c.h.b16 %v2624
    %v2886 = vunpack.c.l.b16 %v2625
    %v2887 = vunpack.c.l.b16 %v2626
    %v2888 = vunpack.c.h.b16 %v2626
    %v2889 = vunpack.c.l.b16 %v2627
    %v2890 = vunpack.c.l.b16 %v2628
    %v2891 = vunpack.c.h.b16 %v2628
    %v2892 = vunpack.c.l.b16 %v2629
    %v2893 = vunpack.c.l.b16 %v2630
    %v2894 = vunpack.c.h.b16 %v2630
    %v2895 = vunpack.c.l.b16 %v2631
    %v2896 = vunpack.c.l.b16 %v2632
    %v2897 = vunpack.c.h.b16 %v2632
    %v2898 = vunpack.c.l.b16 %v2633
    %v2899 = vunpack.c.l.b16 %v2634
    %v2900 = vunpack.c.h.b16 %v2634
    %v2901 = vunpack.c.l.b16 %v2635
    %v2902 = vunpack.c.l.b16 %v2636
    %v2903 = vunpack.c.h.b16 %v2636
    %v2904 = vunpack.c.l.b16 %v2637
    %v2905 = vunpack.c.l.b16 %v2638
    %v2906 = vunpack.c.h.b16 %v2638
    %v2907 = vunpack.c.l.b16 %v2639
    %v2908 = vunpack.c.l.b16 %v2640
    %v2909 = vunpack.c.h.b16 %v2640
    %v2910 = vunpack.c.l.b16 %v2641
    %v2911 = vunpack.c.l.b16 %v2642
    %v2912 = vunpack.c.h.b16 %v2642
    %v2913 = vunpack.c.l.b16 %v2643
    %v2914 = vunpack.c.l.b16 %v2644
    %v2915 = vunpack.c.h.b16 %v2644
    %v2916 = vunpack.c.l.b16 %v2645
    %v2917 = vunpack.c.l.b16 %v2646
    %v2918 = vunpack.c.h.b16 %v2646
    %v2919 = vunpack.c.l.b16 %v2647
    %v2920 = vunpack.c.l.b16 %v2648
    %v2921 = vunpack.c.h.b16 %v2648
    %v2922 = vunpack.c.l.b16 %v2649
    %v2923 = vunpack.c.l.b16 %v2650
    %v2924 = vunpack.c.h.b16 %v2650
    %v2925 = vunpack.c.l.b16 %v2651
    %v2926 = vunpack.c.l.b16 %v2652
    %v2927 = vunpack.c.h.b16 %v2652
    %v2928 = vunpack.c.l.b16 %v2653
    %v2929 = vunpack.c.l.b16 %v2654
    %v2930 = vunpack.c.h.b16 %v2654
    %v2931 = vunpack.c.l.b16 %v2655
    %v2932 = vunpack.c.l.b16 %v2656
    %v2933 = vunpack.c.h.b16 %v2656
    %v2934 = vunpack.c.l.b16 %v2657
    %v2935 = vunpack.c.l.b16 %v2658
    %v2936 = vunpack.c.h.b16 %v2658
    %v2937 = vunpack.c.l.b16 %v2659
    %v2938 = vunpack.c.l.b16 %v2660
    %v2939 = vunpack.c.h.b16 %v2660
    %v2940 = vunpack.c.l.b16 %v2661
    %v2941 = vunpack.c.l.b16 %v2662
    %v2942 = vunpack.c.h.b16 %v2662
    %v2943 = vunpack.c.l.b16 %v2663
    %v2944 = vpack.c.b16 %v2779, %v2776
    %v2945 = vpack.c.b16 %v2780, %v2777
    %v2946 = vpack.c.b16 %v2781, %v2778
    %v2947 = vpack.c.b16 %v2785, %v2782
    %v2948 = vpack.c.b16 %v2786, %v2783
    %v2949 = vpack.c.b16 %v2787, %v2784
    %v2950 = vpack.c.b16 %v2791, %v2788
    %v2951 = vpack.c.b16 %v2792, %v2789
    %v2952 = vpack.c.b16 %v2793, %v2790
    %v2953 = vpack.c.b16 %v2797, %v2794
    %v2954 = vpack.c.b16 %v2798, %v2795
    %v2955 = vpack.c.b16 %v2799, %v2796
    %v2956 = vpack.c.b16 %v2803, %v2800
    %v2957 = vpack.c.b16 %v2804, %v2801
    %v2958 = vpack.c.b16 %v2805, %v2802
    %v2959 = vpack.c.b16 %v2809, %v2806
    %v2960 = vpack.c.b16 %v2810, %v2807
    %v2961 = vpack.c.b16 %v2811, %v2808
    %v2962 = vpack.c.b16 %v2815, %v2812
    %v2963 = vpack.c.b16 %v2816, %v2813
    %v2964 = vpack.c.b16 %v2817, %v2814
    %v2965 = vpack.c.b16 %v2821, %v2818
    %v2966 = vpack.c.b16 %v2822, %v2819
    %v2967 = vpack.c.b16 %v2823, %v2820
    %v2968 = vpack.c.b16 %v2827, %v2824
    %v2969 = vpack.c.b16 %v2828, %v2825
    %v2970 = vpack.c.b16 %v2829, %v2826
    %v2971 = vpack.c.b16 %v2833, %v2830
    %v2972 = vpack.c.b16 %v2834, %v2831
    %v2973 = vpack.c.b16 %v2835, %v2832
    %v2974 = vpack.c.b16 %v2839, %v2836
    %v2975 = vpack.c.b16 %v2840, %v2837
    %v2976 = vpack.c.b16 %v2841, %v2838
    %v2977 = vpack.c.b16 %v2845, %v2842
    %v2978 = vpack.c.b16 %v2846, %v2843
    %v2979 = vpack.c.b16 %v2847, %v2844
    %v2980 = vpack.c.b16 %v2851, %v2848
    %v2981 = vpack.c.b16 %v2852, %v2849
    %v2982 = vpack.c.b16 %v2853, %v2850
    %v2983 = vpack.c.b16 %v2857, %v2854
    %v2984 = vpack.c.b16 %v2858, %v2855
    %v2985 = vpack.c.b16 %v2859, %v2856
    %v2986 = vpack.c.b16 %v2863, %v2860
    %v2987 = vpack.c.b16 %v2864, %v2861
    %v2988 = vpack.c.b16 %v2865, %v2862
    %v2989 = vpack.c.b16 %v2869, %v2866
    %v2990 = vpack.c.b16 %v2870, %v2867
    %v2991 = vpack.c.b16 %v2871, %v2868
    %v2992 = vpack.c.b16 %v2875, %v2872
    %v2993 = vpack.c.b16 %v2876, %v2873
    %v2994 = vpack.c.b16 %v2877, %v2874
    %v2995 = vpack.c.b16 %v2881, %v2878
    %v2996 = vpack.c.b16 %v2882, %v2879
    %v2997 = vpack.c.b16 %v2883, %v2880
    %v2998 = vpack.c.b16 %v2887, %v2884
    %v2999 = vpack.c.b16 %v2888, %v2885
    %v3000 = vpack.c.b16 %v2889, %v2886
    %v3001 = vpack.c.b16 %v2893, %v2890
    %v3002 = vpack.c.b16 %v2894, %v2891
    %v3003 = vpack.c.b16 %v2895, %v2892
    %v3004 = vpack.c.b16 %v2899, %v2896
    %v3005 = vpack.c.b16 %v2900, %v2897
    %v3006 = vpack.c.b16 %v2901, %v2898
    %v3007 = vpack.c.b16 %v2905, %v2902
    %v3008 = vpack.c.b16 %v2906, %v2903
    %v3009 = vpack.c.b16 %v2907, %v2904
    %v3010 = vpack.c.b16 %v2911, %v2908
    %v3011 = vpack.c.b16 %v2912, %v2909
    %v3012 = vpack.c.b16 %v2913, %v2910
    %v3013 = vpack.c.b16 %v2917, %v2914
    %v3014 = vpack.c.b16 %v2918, %v2915
    %v3015 = vpack.c.b16 %v2919, %v2916
    %v3016 = vpack.c.b16 %v2923, %v2920
    %v3017 = vpack.c.b16 %v2924, %v2921
    %v3018 = vpack.c.b16 %v2925, %v2922
    %v3019 = vpack.c.b16 %v2929, %v2926
    %v3020 = vpack.c.b16 %v2930, %v2927
    %v3021 = vpack.c.b16 %v2931, %v2928
    %v3022 = vpack.c.b16 %v2935, %v2932
    %v3023 = vpack.c.b16 %v2936, %v2933
    %v3024 = vpack.c.b16 %v2937, %v2934
    %v3025 = vpack.c.b16 %v2941, %v2938
    %v3026 = vpack.c.b16 %v2942, %v2939
    %v3027 = vpack.c.b16 %v2943, %v2940
    %3112 = vmatprep.subr.bf16.mxu0 %v2945
    %3113 = vmatpush1.bf16.msra.mxu0 %v2944
    %3114 = vmatprep.subr.bf16.mxu0 %v2948
    %3115 = vmatpush1.bf16.msra.mxu0 %v2947
    %3116 = vmatprep.subr.bf16.mxu0 %v2951
    %3117 = vmatpush1.bf16.msra.mxu0 %v2950
    %3118 = vmatprep.subr.bf16.mxu0 %v2954
    %3119 = vmatpush1.bf16.msra.mxu0 %v2953
    %3120 = vmatprep.subr.bf16.mxu0 %v2957
    %3121 = vmatpush1.bf16.msra.mxu0 %v2956
    %3122 = vmatprep.subr.bf16.mxu0 %v2960
    %3123 = vmatpush1.bf16.msra.mxu0 %v2959
    %3124 = vmatprep.subr.bf16.mxu0 %v2963
    %3125 = vmatpush1.bf16.msra.mxu0 %v2962
    %3126 = vmatprep.subr.bf16.mxu0 %v2966
    %3127 = vmatpush1.bf16.msra.mxu0 %v2965
    %3128 = vmatprep.subr.bf16.mxu0 %v2969
    %3129 = vmatpush1.bf16.msra.mxu0 %v2968
    %3130 = vmatprep.subr.bf16.mxu0 %v2972
    %3131 = vmatpush1.bf16.msra.mxu0 %v2971
    %3132 = vmatprep.subr.bf16.mxu0 %v2975
    %3133 = vmatpush1.bf16.msra.mxu0 %v2974
    %3134 = vmatprep.subr.bf16.mxu0 %v2978
    %3135 = vmatpush1.bf16.msra.mxu0 %v2977
    %3136 = vmatprep.subr.bf16.mxu0 %v2981
    %3137 = vmatpush1.bf16.msra.mxu0 %v2980
    %3138 = vmatprep.subr.bf16.mxu0 %v2984
    %3139 = vmatpush1.bf16.msra.mxu0 %v2983
    %3140 = vmatprep.subr.bf16.mxu0 %v2987
    %3141 = vmatpush1.bf16.msra.mxu0 %v2986
    %3142 = vmatprep.subr.bf16.mxu0 %v2990
    %3143 = vmatpush1.bf16.msra.mxu0 %v2989
    %3144 = vmatprep.mubr.bf16.mxu0 %v1736
    %3145 = vmatmul.mubr.bf16.gmra.mrb[0].mxu0 %v1735
    %v3146 = vpop.f32.mrb[0].mxu0
    %v3147 = vadd.f32 0.0, %v3146
    %v3148 = vpop.f32.mrb[0].mxu0
    %v3149 = vadd.f32 0.0, %v3148
    %v3150 = vpop.f32.mrb[0].mxu0
    %v3151 = vadd.f32 0.0, %v3150
    %v3152 = vpop.f32.mrb[0].mxu0
    %v3153 = vadd.f32 0.0, %v3152
    %3154 = vmatprep.mubr.bf16.mxu0 %v1740
    %3155 = vmatmul.mubr.bf16.gmra.mrb[0].mxu0 %v1739
    %v3156 = vpop.f32.mrb[0].mxu0
    %v3157 = vadd.f32 0.0, %v3156
    %v3158 = vpop.f32.mrb[0].mxu0
    %v3159 = vadd.f32 0.0, %v3158
    %v3160 = vpop.f32.mrb[0].mxu0
    %v3161 = vadd.f32 0.0, %v3160
    %v3162 = vpop.f32.mrb[0].mxu0
    %v3163 = vadd.f32 0.0, %v3162
    %3164 = vmatprep.mubr.bf16.mxu0 %v1744
    %3165 = vmatmul.mubr.bf16.gmra.mrb[0].mxu0 %v1743
    %v3166 = vpop.f32.mrb[0].mxu0
    %v3167 = vadd.f32 0.0, %v3166
    %v3168 = vpop.f32.mrb[0].mxu0
    %v3169 = vadd.f32 0.0, %v3168
    %v3170 = vpop.f32.mrb[0].mxu0
    %v3171 = vpop.f32.mrb[0].mxu0
    %3172 = vdwg.mxu0
    %3173 = vmatprep.subr.bf16.mxu0 %v2993
    %3174 = vmatpush1.bf16.msra.mxu0 %v2992
    %3175 = vmatprep.subr.bf16.mxu0 %v2996
    %3176 = vmatpush1.bf16.msra.mxu0 %v2995
    %3177 = vmatprep.subr.bf16.mxu0 %v2999
    %3178 = vmatpush1.bf16.msra.mxu0 %v2998
    %3179 = vmatprep.subr.bf16.mxu0 %v3002
    %3180 = vmatpush1.bf16.msra.mxu0 %v3001
    %3181 = vmatprep.subr.bf16.mxu0 %v3005
    %3182 = vmatpush1.bf16.msra.mxu0 %v3004
    %3183 = vmatprep.subr.bf16.mxu0 %v3008
    %3184 = vmatpush1.bf16.msra.mxu0 %v3007
    %3185 = vmatprep.subr.bf16.mxu0 %v3011
    %3186 = vmatpush1.bf16.msra.mxu0 %v3010
    %3187 = vmatprep.subr.bf16.mxu0 %v3014
    %3188 = vmatpush1.bf16.msra.mxu0 %v3013
    %3189 = vmatprep.subr.bf16.mxu0 %v3017
    %3190 = vmatpush1.bf16.msra.mxu0 %v3016
    %3191 = vmatprep.subr.bf16.mxu0 %v3020
    %3192 = vmatpush1.bf16.msra.mxu0 %v3019
    %3193 = vmatprep.subr.bf16.mxu0 %v3023
    %3194 = vmatpush1.bf16.msra.mxu0 %v3022
    %3195 = vmatprep.subr.bf16.mxu0 %v3026
    %3196 = vmatpush1.bf16.msra.mxu0 %v3025
    %3197 = vmatprep.subr.bf16.mxu0 0
    %3198 = vmatpush1.bf16.msra.mxu0 0
    %3199 = vmatprep.subr.bf16.mxu0 0
    %3200 = vmatpush1.bf16.msra.mxu0 0
    %3201 = vmatprep.subr.bf16.mxu0 0
    %3202 = vmatpush1.bf16.msra.mxu0 0
    %3203 = vmatprep.subr.bf16.mxu0 0
    %3204 = vmatpush1.bf16.msra.mxu0 0
    %3205 = vmatprep.mubr.bf16.mxu0 %v2309
    %3206 = vmatmul.mubr.bf16.gmra.mrb[0].mxu0 %v1737
    %v3207 = vpop.f32.mrb[0].mxu0
    %v3208 = vadd.f32 %v3147, %v3207
    %v3209 = vpop.f32.mrb[0].mxu0
    %v3210 = vadd.f32 %v3149, %v3209
    %v3211 = vpop.f32.mrb[0].mxu0
    %v3212 = vadd.f32 %v3151, %v3211
    %v3213 = vpop.f32.mrb[0].mxu0
    %v3214 = vadd.f32 %v3153, %v3213
    %3215 = vmatprep.mubr.bf16.mxu0 %v2312
    %3216 = vmatmul.mubr.bf16.gmra.mrb[0].mxu0 %v1741
    %v3217 = vpop.f32.mrb[0].mxu0
    %v3218 = vadd.f32 %v3157, %v3217
    %v3219 = vpop.f32.mrb[0].mxu0
    %v3220 = vadd.f32 %v3159, %v3219
    %v3221 = vpop.f32.mrb[0].mxu0
    %v3222 = vadd.f32 %v3161, %v3221
    %v3223 = vpop.f32.mrb[0].mxu0
    %v3224 = vadd.f32 %v3163, %v3223
    %3225 = vmatprep.mubr.bf16.mxu0 %v2315
    %3226 = vmatmul.mubr.bf16.gmra.mrb[0].mxu0 %v1745
    %v3227 = vpop.f32.mrb[0].mxu0
    %v3228 = vadd.f32 %v3167, %v3227
    %v3229 = vpop.f32.mrb[0].mxu0
    %v3230 = vadd.f32 %v3169, %v3229
    %v3231 = vpop.f32.mrb[0].mxu0
    %v3232 = vpop.f32.mrb[0].mxu0
    %3233 = vdwg.mxu0
    %3234 = vmatprep.subr.bf16.mxu0 0
    %3235 = vmatpush1.bf16.msra.mxu0 %v2946
    %3236 = vmatprep.subr.bf16.mxu0 0
    %3237 = vmatpush1.bf16.msra.mxu0 %v2949
    %3238 = vmatprep.subr.bf16.mxu0 0
    %3239 = vmatpush1.bf16.msra.mxu0 %v2952
    %3240 = vmatprep.subr.bf16.mxu0 0
    %3241 = vmatpush1.bf16.msra.mxu0 %v2955
    %3242 = vmatprep.subr.bf16.mxu0 0
    %3243 = vmatpush1.bf16.msra.mxu0 %v2958
    %3244 = vmatprep.subr.bf16.mxu0 0
    %3245 = vmatpush1.bf16.msra.mxu0 %v2961
    %3246 = vmatprep.subr.bf16.mxu0 0
    %3247 = vmatpush1.bf16.msra.mxu0 %v2964
    %3248 = vmatprep.subr.bf16.mxu0 0
    %3249 = vmatpush1.bf16.msra.mxu0 %v2967
    %3250 = vmatprep.subr.bf16.mxu0 0
    %3251 = vmatpush1.bf16.msra.mxu0 %v2970
    %3252 = vmatprep.subr.bf16.mxu0 0
    %3253 = vmatpush1.bf16.msra.mxu0 %v2973
    %3254 = vmatprep.subr.bf16.mxu0 0
    %3255 = vmatpush1.bf16.msra.mxu0 %v2976
    %3256 = vmatprep.subr.bf16.mxu0 0
    %3257 = vmatpush1.bf16.msra.mxu0 %v2979
    %3258 = vmatprep.subr.bf16.mxu0 0
    %3259 = vmatpush1.bf16.msra.mxu0 %v2982
    %3260 = vmatprep.subr.bf16.mxu0 0
    %3261 = vmatpush1.bf16.msra.mxu0 %v2985
    %3262 = vmatprep.subr.bf16.mxu0 0
    %3263 = vmatpush1.bf16.msra.mxu0 %v2988
    %3264 = vmatprep.subr.bf16.mxu0 0
    %3265 = vmatpush1.bf16.msra.mxu0 %v2991
    %3266 = vmatprep.mubr.bf16.mxu0 %v1736
    %3267 = vmatmul.mubr.bf16.gmra.mrb[0].mxu0 %v1735
    %v3268 = vpop.f32.mrb[0].mxu0
    %v3269 = vadd.f32 0.0, %v3268
    %v3270 = vpop.f32.mrb[0].mxu0
    %v3271 = vpop.f32.mrb[0].mxu0
    %v3272 = vadd.f32 0.0, %v3271
    %v3273 = vpop.f32.mrb[0].mxu0
    %3274 = vmatprep.mubr.bf16.mxu0 %v1740
    %3275 = vmatmul.mubr.bf16.gmra.mrb[0].mxu0 %v1739
    %v3276 = vpop.f32.mrb[0].mxu0
    %v3277 = vadd.f32 0.0, %v3276
    %v3278 = vpop.f32.mrb[0].mxu0
    %v3279 = vpop.f32.mrb[0].mxu0
    %v3280 = vadd.f32 0.0, %v3279
    %v3281 = vpop.f32.mrb[0].mxu0
    %3282 = vmatprep.mubr.bf16.mxu0 %v1744
    %3283 = vmatmul.mubr.bf16.gmra.mrb[0].mxu0 %v1743
    %v3284 = vpop.f32.mrb[0].mxu0
    %v3285 = vadd.f32 0.0, %v3284
    %v3286 = vpop.f32.mrb[0].mxu0
    %v3287 = vpop.f32.mrb[0].mxu0
    %v3288 = vpop.f32.mrb[0].mxu0
    %3289 = vdwg.mxu0
    %3290 = vmatprep.subr.bf16.mxu0 0
    %3291 = vmatpush1.bf16.msra.mxu0 %v2994
    %3292 = vmatprep.subr.bf16.mxu0 0
    %3293 = vmatpush1.bf16.msra.mxu0 %v2997
    %3294 = vmatprep.subr.bf16.mxu0 0
    %3295 = vmatpush1.bf16.msra.mxu0 %v3000
    %3296 = vmatprep.subr.bf16.mxu0 0
    %3297 = vmatpush1.bf16.msra.mxu0 %v3003
    %3298 = vmatprep.subr.bf16.mxu0 0
    %3299 = vmatpush1.bf16.msra.mxu0 %v3006
    %3300 = vmatprep.subr.bf16.mxu0 0
    %3301 = vmatpush1.bf16.msra.mxu0 %v3009
    %3302 = vmatprep.subr.bf16.mxu0 0
    %3303 = vmatpush1.bf16.msra.mxu0 %v3012
    %3304 = vmatprep.subr.bf16.mxu0 0
    %3305 = vmatpush1.bf16.msra.mxu0 %v3015
    %3306 = vmatprep.subr.bf16.mxu0 0
    %3307 = vmatpush1.bf16.msra.mxu0 %v3018
    %3308 = vmatprep.subr.bf16.mxu0 0
    %3309 = vmatpush1.bf16.msra.mxu0 %v3021
    %3310 = vmatprep.subr.bf16.mxu0 0
    %3311 = vmatpush1.bf16.msra.mxu0 %v3024
    %3312 = vmatprep.subr.bf16.mxu0 0
    %3313 = vmatpush1.bf16.msra.mxu0 %v3027
    %3314 = vmatprep.subr.bf16.mxu0 0
    %3315 = vmatpush1.bf16.msra.mxu0 0
    %3316 = vmatprep.subr.bf16.mxu0 0
    %3317 = vmatpush1.bf16.msra.mxu0 0
    %3318 = vmatprep.subr.bf16.mxu0 0
    %3319 = vmatpush1.bf16.msra.mxu0 0
    %3320 = vmatprep.subr.bf16.mxu0 0
    %3321 = vmatpush1.bf16.msra.mxu0 0
    %3322 = vmatprep.mubr.bf16.mxu0 %v2309
    %3323 = vmatmul.mubr.bf16.gmra.mrb[0].mxu0 %v1737
    %v3324 = vpop.f32.mrb[0].mxu0
    %v3325 = vadd.f32 %v3269, %v3324
    %v3326 = vpop.f32.mrb[0].mxu0
    %v3327 = vpop.f32.mrb[0].mxu0
    %v3328 = vadd.f32 %v3272, %v3327
    %v3329 = vpop.f32.mrb[0].mxu0
    %3330 = vmatprep.mubr.bf16.mxu0 %v2312
    %3331 = vmatmul.mubr.bf16.gmra.mrb[0].mxu0 %v1741
    %v3332 = vpop.f32.mrb[0].mxu0
    %v3333 = vadd.f32 %v3277, %v3332
    %v3334 = vpop.f32.mrb[0].mxu0
    %v3335 = vpop.f32.mrb[0].mxu0
    %v3336 = vadd.f32 %v3280, %v3335
    %v3337 = vpop.f32.mrb[0].mxu0
    %3338 = vmatprep.mubr.bf16.mxu0 %v2315
    %3339 = vmatmul.mubr.bf16.gmra.mrb[0].mxu0 %v1745
    %v3340 = vpop.f32.mrb[0].mxu0
    %v3341 = vadd.f32 %v3285, %v3340
    %v3342 = vpop.f32.mrb[0].mxu0
    %v3343 = vpop.f32.mrb[0].mxu0
    %v3344 = vpop.f32.mrb[0].mxu0
    %3345 = vdwg.mxu0
    %v3346 = vmax.f32 %v2413, %v3208
    %v3347 = vmax.f32 %v2415, %v3210
    %v3348 = vmax.f32 %v2530, %v3325
    %v3349 = vmax.f32 %v2417, %v3212
    %v3350 = vmax.f32 %v2419, %v3214
    %v3351 = vmax.f32 %v2533, %v3328
    %v3352 = vmax.f32 %v2423, %v3218
    %v3353 = vmax.f32 %v2425, %v3220
    %v3354 = vmax.f32 %v2538, %v3333
    %v3355 = vmax.f32 %v2427, %v3222
    %v3356 = vmax.f32 %v2429, %v3224
    %v3357 = vmax.f32 %v2541, %v3336
    %v3358 = vmax.f32 %v2433, %v3228
    %v3359 = vmax.f32 %v2435, %v3230
    %v3360 = vmax.f32 %v2546, %v3341
    %v3361 = vpack.c.bf16 %v3349, %v3346
    %v3362 = vpack.c.bf16 %v3350, %v3347
    %v3363 = vpack.c.bf16 %v3351, %v3348
    %v3364 = vpack.c.bf16 %v3355, %v3352
    %v3365 = vpack.c.bf16 %v3356, %v3353
    %v3366 = vpack.c.bf16 %v3357, %v3354
    %v3367 = vpack.c.bf16 %v3358, %v3358
    %v3368 = vpack.c.bf16 %v3359, %v3359
    %v3369 = vpack.c.bf16 %v3360, %v3360
    %v3379 = vunpack.c.l.b16 %v3361
    %v3380 = vunpack.c.l.b16 %v3362
    %v3381 = vunpack.c.l.b16 %v3363
    %v3382 = vunpack.c.h.b16 %v3361
    %v3383 = vunpack.c.h.b16 %v3362
    %v3384 = vunpack.c.h.b16 %v3363
    %v3385 = vunpack.c.l.b16 %v3364
    %v3386 = vunpack.c.l.b16 %v3365
    %v3387 = vunpack.c.l.b16 %v3366
    %v3388 = vunpack.c.h.b16 %v3364
    %v3389 = vunpack.c.h.b16 %v3365
    %v3390 = vunpack.c.h.b16 %v3366
    %v3391 = vunpack.c.l.b16 %v3367
    %v3392 = vunpack.c.l.b16 %v3368
    %v3393 = vunpack.c.l.b16 %v3369
    %v3394 = vpack.c.b16 %v3380, %v3379
    %v3395 = vpack.c.b16 %v3381, %v3381
    %v3396 = vpack.c.b16 %v3383, %v3382
    %v3397 = vpack.c.b16 %v3384, %v3384
    %v3398 = vpack.c.b16 %v3386, %v3385
    %v3399 = vpack.c.b16 %v3387, %v3387
    %v3400 = vpack.c.b16 %v3389, %v3388
    %v3401 = vpack.c.b16 %v3390, %v3390
    %v3402 = vpack.c.b16 %v3392, %v3391
    %v3403 = vpack.c.b16 %v3393, %v3393
    %3414 = vst [vmem:[#allocation2] sm:$0xff] %v3394
    %vm3415 = vcmask 257024
    %3416 = vst.msk [vmem:[#allocation2 + $0x8] sm:$0xf] %vm3415, %v3395
    %3417 = vst [vmem:[#allocation2 + $0xc] sm:$0xff] %v3396
    %3418 = vst.msk [vmem:[#allocation2 + $0x14] sm:$0xf] %vm3415, %v3397
    %3419 = vst [vmem:[#allocation2 + $0x18] sm:$0xff] %v3398
    %3420 = vst.msk [vmem:[#allocation2 + $0x20] sm:$0xf] %vm3415, %v3399
    %3421 = vst [vmem:[#allocation2 + $0x24] sm:$0xff] %v3400
    %3422 = vst.msk [vmem:[#allocation2 + $0x2c] sm:$0xf] %vm3415, %v3401
    %3423 = vst [vmem:[#allocation2 + $0x30] sm:$0x33] %v3402
    %vm3424 = vcmask 254976
    %3425 = vst.msk [vmem:[#allocation2 + $0x38] sm:$0x3] %vm3424, %v3403
    %v3426 = vld [vmem:[#allocation2] sm:$0xff]
    %v3427 = vld [vmem:[#allocation2 + $0x8] sm:$0xf]
    %v3428 = vld [vmem:[#allocation2 + $0xc] sm:$0xff]
    %v3429 = vld [vmem:[#allocation2 + $0x14] sm:$0xf]
    %v3430 = vld [vmem:[#allocation2 + $0x18] sm:$0xff]
    %v3431 = vld [vmem:[#allocation2 + $0x20] sm:$0xf]
    %v3432 = vld [vmem:[#allocation2 + $0x24] sm:$0xff]
    %v3433 = vld [vmem:[#allocation2 + $0x2c] sm:$0xf]
    %v3434 = vld [vmem:[%s5] sm:$0xff]
    %v3435 = vld [vmem:[%s5 + $0x8] sm:$0xff]
    %v3436 = vld [vmem:[%s5 + $0x10] sm:$0xff]
    %v3437 = vld [vmem:[%s5 + $0x18] sm:$0xff]
    %v3438 = vld [vmem:[%s5 + $0x20] sm:$0xff]
    %v3439 = vld [vmem:[%s5 + $0x28] sm:$0xff]
    %v3440 = vld [vmem:[%s5 + $0x30] sm:$0xff]
    %v3441 = vld [vmem:[%s5 + $0x38] sm:$0xff]
    %v3442 = vld [vmem:[%s5 + $0x40] sm:$0xff]
    %v3443 = vld [vmem:[%s5 + $0x48] sm:$0xff]
    %v3444 = vld [vmem:[%s5 + $0x50] sm:$0xff]
    %v3445 = vld [vmem:[%s5 + $0x58] sm:$0xff]
    %v3446 = vld [vmem:[%s5 + $0x60] sm:$0xff]
    %v3447 = vld [vmem:[%s5 + $0x68] sm:$0xff]
    %v3448 = vld [vmem:[%s5 + $0x70] sm:$0xff]
    %v3449 = vld [vmem:[%s5 + $0x78] sm:$0xff]
    %v3450 = vld [vmem:[%s5 + $0x80] sm:$0xff]
    %v3451 = vld [vmem:[%s5 + $0x88] sm:$0xff]
    %v3452 = vld [vmem:[%s5 + $0x90] sm:$0xff]
    %v3453 = vld [vmem:[%s5 + $0x98] sm:$0xff]
    %v3454 = vld [vmem:[%s5 + $0xa0] sm:$0xff]
    %v3455 = vld [vmem:[%s5 + $0xa8] sm:$0xff]
    %v3456 = vld [vmem:[%s5 + $0xb0] sm:$0xff]
    %v3457 = vld [vmem:[%s5 + $0xb8] sm:$0xff]
    %v3458 = vld [vmem:[%s5 + $0xc0] sm:$0xff]
    %v3459 = vld [vmem:[%s5 + $0xc8] sm:$0xff]
    %v3460 = vld [vmem:[%s5 + $0xd0] sm:$0xff]
    %v3461 = vld [vmem:[%s5 + $0xd8] sm:$0xff]
    %v3462 = vld [vmem:[%s5 + $0xe0] sm:$0xff]
    %v3463 = vld [vmem:[%s5 + $0xe8] sm:$0xff]
    %v3464 = vld [vmem:[%s5 + $0xf0] sm:$0xff]
    %v3465 = vld [vmem:[%s5 + $0xf8] sm:$0xff]
    %v3466 = vld [vmem:[%s5 + $0x100] sm:$0xff]
    %v3467 = vld [vmem:[%s5 + $0x108] sm:$0xff]
    %v3468 = vld [vmem:[%s5 + $0x110] sm:$0xff]
    %v3469 = vld [vmem:[%s5 + $0x118] sm:$0xff]
    %v3470 = vld [vmem:[%s5 + $0x120] sm:$0xff]
    %v3471 = vld [vmem:[%s5 + $0x128] sm:$0xff]
    %v3472 = vld [vmem:[%s5 + $0x130] sm:$0xff]
    %v3473 = vld [vmem:[%s5 + $0x138] sm:$0xff]
    %v3474 = vld [vmem:[%s5 + $0x140] sm:$0xff]
    %v3475 = vld [vmem:[%s5 + $0x148] sm:$0xff]
    %v3476 = vld [vmem:[%s5 + $0x150] sm:$0xff]
    %v3477 = vld [vmem:[%s5 + $0x158] sm:$0xff]
    %v3478 = vld [vmem:[%s5 + $0x160] sm:$0xff]
    %v3479 = vld [vmem:[%s5 + $0x168] sm:$0xff]
    %v3480 = vld [vmem:[%s5 + $0x170] sm:$0xff]
    %v3481 = vld [vmem:[%s5 + $0x178] sm:$0xff]
    %v3482 = vld [vmem:[%s5 + $0x180] sm:$0xff]
    %v3483 = vld [vmem:[%s5 + $0x188] sm:$0xff]
    %v3484 = vld [vmem:[%s5 + $0x190] sm:$0xff]
    %v3485 = vld [vmem:[%s5 + $0x198] sm:$0xff]
    %v3486 = vld [vmem:[%s5 + $0x1a0] sm:$0xff]
    %v3487 = vld [vmem:[%s5 + $0x1a8] sm:$0xff]
    %v3488 = vld [vmem:[%s5 + $0x1b0] sm:$0xff]
    %v3489 = vld [vmem:[%s5 + $0x1b8] sm:$0xff]
    %v3490 = vld [vmem:[%s5 + $0x1c0] sm:$0xff]
    %v3491 = vld [vmem:[%s5 + $0x1c8] sm:$0xff]
    %v3492 = vld [vmem:[%s5 + $0x1d0] sm:$0xff]
    %v3493 = vld [vmem:[%s5 + $0x1d8] sm:$0xff]
    %v3494 = vld [vmem:[%s5 + $0x1e0] sm:$0xff]
    %v3495 = vld [vmem:[%s5 + $0x1e8] sm:$0xff]
    %v3496 = vld [vmem:[%s5 + $0x1f0] sm:$0xff]
    %v3497 = vld [vmem:[%s5 + $0x1f8] sm:$0xff]
    %v3498 = vld [vmem:[%s5 + $0x200] sm:$0xff]
    %v3499 = vld [vmem:[%s5 + $0x208] sm:$0xff]
    %v3500 = vld [vmem:[%s5 + $0x210] sm:$0xff]
    %v3501 = vld [vmem:[%s5 + $0x218] sm:$0xff]
    %v3502 = vld [vmem:[%s5 + $0x220] sm:$0xff]
    %v3503 = vld [vmem:[%s5 + $0x228] sm:$0xff]
    %v3504 = vld [vmem:[%s5 + $0x230] sm:$0xff]
    %v3505 = vld [vmem:[%s5 + $0x238] sm:$0xff]
    %v3506 = vld [vmem:[#allocation2 + $0x30] sm:$0x11]
    %v3507 = vld [vmem:[#allocation2 + $0x38] sm:$0x1]
    %s3508 = scalar_lea.vmem %s5, 576
    %v3509 = vld [vmem:[%s3508] sm:$0xff]
    %v3510 = vld [vmem:[%s3508 + $0x8] sm:$0xff]
    %v3511 = vld [vmem:[%s3508 + $0x10] sm:$0xff]
    %v3512 = vld [vmem:[%s3508 + $0x18] sm:$0xff]
    %v3513 = vld [vmem:[%s3508 + $0x20] sm:$0xff]
    %v3514 = vld [vmem:[%s3508 + $0x28] sm:$0xff]
    %v3515 = vld [vmem:[%s3508 + $0x30] sm:$0xff]
    %v3516 = vld [vmem:[%s3508 + $0x38] sm:$0xff]
    %v3517 = vld [vmem:[%s3508 + $0x40] sm:$0xff]
    %v3518 = vld [vmem:[%s3508 + $0x48] sm:$0xff]
    %v3519 = vld [vmem:[%s3508 + $0x50] sm:$0xff]
    %v3520 = vld [vmem:[%s3508 + $0x58] sm:$0xff]
    %v3521 = vld [vmem:[%s3508 + $0x60] sm:$0xff]
    %v3522 = vld [vmem:[%s3508 + $0x68] sm:$0xff]
    %v3523 = vld [vmem:[%s3508 + $0x70] sm:$0xff]
    %v3524 = vld [vmem:[%s3508 + $0x78] sm:$0xff]
    %v3525 = vld [vmem:[%s3508 + $0x80] sm:$0xff]
    %v3526 = vld [vmem:[%s3508 + $0x88] sm:$0xff]
    %v3527 = vld [vmem:[%s3508 + $0x90] sm:$0xff]
    %v3528 = vld [vmem:[%s3508 + $0x98] sm:$0xff]
    %v3529 = vld [vmem:[%s3508 + $0xa0] sm:$0xff]
    %v3530 = vld [vmem:[%s3508 + $0xa8] sm:$0xff]
    %v3531 = vld [vmem:[%s3508 + $0xb0] sm:$0xff]
    %v3532 = vld [vmem:[%s3508 + $0xb8] sm:$0xff]
    %v3533 = vld [vmem:[%s3508 + $0xc0] sm:$0xff]
    %v3534 = vld [vmem:[%s3508 + $0xc8] sm:$0xff]
    %v3535 = vld [vmem:[%s3508 + $0xd0] sm:$0xff]
    %v3536 = vld [vmem:[%s3508 + $0xd8] sm:$0xff]
    %v3537 = vld [vmem:[%s3508 + $0xe0] sm:$0xff]
    %v3538 = vld [vmem:[%s3508 + $0xe8] sm:$0xff]
    %v3539 = vld [vmem:[%s3508 + $0xf0] sm:$0xff]
    %v3540 = vld [vmem:[%s3508 + $0xf8] sm:$0xff]
    %v3541 = vld [vmem:[%s3508 + $0x100] sm:$0xff]
    %v3542 = vld [vmem:[%s3508 + $0x108] sm:$0xff]
    %v3543 = vld [vmem:[%s3508 + $0x110] sm:$0xff]
    %v3544 = vld [vmem:[%s3508 + $0x118] sm:$0xff]
    %v3545 = vld [vmem:[%s3508 + $0x120] sm:$0xff]
    %v3546 = vld [vmem:[%s3508 + $0x128] sm:$0xff]
    %v3547 = vld [vmem:[%s3508 + $0x130] sm:$0xff]
    %v3548 = vld [vmem:[%s3508 + $0x138] sm:$0xff]
    %v3549 = vld [vmem:[%s3508 + $0x140] sm:$0xff]
    %v3550 = vld [vmem:[%s3508 + $0x148] sm:$0xff]
    %v3551 = vld [vmem:[%s3508 + $0x150] sm:$0xff]
    %v3552 = vld [vmem:[%s3508 + $0x158] sm:$0xff]
    %v3553 = vld [vmem:[%s3508 + $0x160] sm:$0xff]
    %v3554 = vld [vmem:[%s3508 + $0x168] sm:$0xff]
    %v3555 = vld [vmem:[%s3508 + $0x170] sm:$0xff]
    %v3556 = vld [vmem:[%s3508 + $0x178] sm:$0xff]
    %v3557 = vld [vmem:[%s3508 + $0x180] sm:$0xff]
    %v3558 = vld [vmem:[%s3508 + $0x188] sm:$0xff]
    %v3559 = vld [vmem:[%s3508 + $0x190] sm:$0xff]
    %v3560 = vld [vmem:[%s3508 + $0x198] sm:$0xff]
    %v3561 = vld [vmem:[%s3508 + $0x1a0] sm:$0xff]
    %v3562 = vld [vmem:[%s3508 + $0x1a8] sm:$0xff]
    %v3563 = vld [vmem:[%s3508 + $0x1b0] sm:$0xff]
    %v3564 = vld [vmem:[%s3508 + $0x1b8] sm:$0xff]
    %v3565 = vld [vmem:[%s3508 + $0x1c0] sm:$0xff]
    %v3566 = vld [vmem:[%s3508 + $0x1c8] sm:$0xff]
    %v3567 = vld [vmem:[%s3508 + $0x1d0] sm:$0xff]
    %v3568 = vld [vmem:[%s3508 + $0x1d8] sm:$0xff]
    %v3569 = vld [vmem:[%s3508 + $0x1e0] sm:$0xff]
    %v3570 = vld [vmem:[%s3508 + $0x1e8] sm:$0xff]
    %v3571 = vld [vmem:[%s3508 + $0x1f0] sm:$0xff]
    %v3572 = vld [vmem:[%s3508 + $0x1f8] sm:$0xff]
    %v3573 = vld [vmem:[%s3508 + $0x200] sm:$0xff]
    %v3574 = vld [vmem:[%s3508 + $0x208] sm:$0xff]
    %v3575 = vld [vmem:[%s3508 + $0x210] sm:$0xff]
    %v3576 = vld [vmem:[%s3508 + $0x218] sm:$0xff]
    %v3577 = vld [vmem:[%s3508 + $0x220] sm:$0xff]
    %v3578 = vld [vmem:[%s3508 + $0x228] sm:$0xff]
    %v3579 = vld [vmem:[%s3508 + $0x230] sm:$0xff]
    %v3580 = vld [vmem:[%s3508 + $0x238] sm:$0xff]
    %v3591 = vunpack.c.l.b16 %v3426
    %v3592 = vunpack.c.h.b16 %v3426
    %v3593 = vunpack.c.l.b16 %v3427
    %v3594 = vunpack.c.l.b16 %v3428
    %v3595 = vunpack.c.h.b16 %v3428
    %v3596 = vunpack.c.l.b16 %v3429
    %v3597 = vunpack.c.l.b16 %v3430
    %v3598 = vunpack.c.h.b16 %v3430
    %v3599 = vunpack.c.l.b16 %v3431
    %v3600 = vunpack.c.l.b16 %v3432
    %v3601 = vunpack.c.h.b16 %v3432
    %v3602 = vunpack.c.l.b16 %v3433
    %v3603 = vunpack.c.l.b16 %v3506
    %v3604 = vunpack.c.h.b16 %v3506
    %v3605 = vunpack.c.l.b16 %v3507
    %v3606 = vpack.c.b16 %v3594, %v3591
    %v3607 = vpack.c.b16 %v3595, %v3592
    %v3608 = vpack.c.b16 %v3596, %v3593
    %v3609 = vpack.c.b16 %v3600, %v3597
    %v3610 = vpack.c.b16 %v3601, %v3598
    %v3611 = vpack.c.b16 %v3602, %v3599
    %v3612 = vpack.c.b16 %v3603, %v3603
    %v3613 = vpack.c.b16 %v3604, %v3604
    %v3614 = vpack.c.b16 %v3605, %v3605
    %v3616 = vshrl.u32 %v3606, 16
    %v3618 = vshll.u32 %v3606, 16
    %v3620 = vrot.slane %v3618, 1
    %v3621 = vor.u32 %v3616, %v3620
    %v3623 = vshll.u32 %v3609, 16
    %v3625 = vrot.slane %v3623, 1
    %v3626 = vsel %vm100, %v3621, %v3625
    %v3628 = vshrl.u32 %v3607, 16
    %v3630 = vshll.u32 %v3607, 16
    %v3632 = vrot.slane %v3630, 1
    %v3633 = vor.u32 %v3628, %v3632
    %v3635 = vshll.u32 %v3610, 16
    %v3637 = vrot.slane %v3635, 1
    %v3638 = vsel %vm100, %v3633, %v3637
    %v3640 = vshrl.u32 %v3608, 16
    %v3642 = vshll.u32 %v3608, 16
    %v3644 = vrot.slane %v3642, 1
    %v3645 = vor.u32 %v3640, %v3644
    %v3647 = vshll.u32 %v3611, 16
    %v3649 = vrot.slane %v3647, 1
    %v3650 = vsel %vm100, %v3645, %v3649
    %v3651 = vshrl.u32 %v3609, 16
    %v3653 = vor.u32 %v3651, %v3625
    %v3655 = vshll.u32 %v3612, 16
    %v3657 = vrot.slane %v3655, 1
    %v3658 = vsel %vm100, %v3653, %v3657
    %v3659 = vshrl.u32 %v3610, 16
    %v3661 = vor.u32 %v3659, %v3637
    %v3663 = vshll.u32 %v3613, 16
    %v3665 = vrot.slane %v3663, 1
    %v3666 = vsel %vm100, %v3661, %v3665
    %v3667 = vshrl.u32 %v3611, 16
    %v3669 = vor.u32 %v3667, %v3649
    %v3671 = vshll.u32 %v3614, 16
    %v3673 = vrot.slane %v3671, 1
    %v3674 = vsel %vm100, %v3669, %v3673
    %v3751 = vunpack.c.l.b16 %v3509
    %v3752 = vunpack.c.h.b16 %v3509
    %v3753 = vunpack.c.l.b16 %v3510
    %v3754 = vunpack.c.h.b16 %v3510
    %v3755 = vunpack.c.l.b16 %v3511
    %v3756 = vunpack.c.h.b16 %v3511
    %v3757 = vunpack.c.l.b16 %v3512
    %v3758 = vunpack.c.h.b16 %v3512
    %v3759 = vunpack.c.l.b16 %v3513
    %v3760 = vunpack.c.h.b16 %v3513
    %v3761 = vunpack.c.l.b16 %v3514
    %v3762 = vunpack.c.h.b16 %v3514
    %v3763 = vunpack.c.l.b16 %v3515
    %v3764 = vunpack.c.h.b16 %v3515
    %v3765 = vunpack.c.l.b16 %v3516
    %v3766 = vunpack.c.h.b16 %v3516
    %v3767 = vunpack.c.l.b16 %v3517
    %v3768 = vunpack.c.h.b16 %v3517
    %v3769 = vunpack.c.l.b16 %v3518
    %v3770 = vunpack.c.h.b16 %v3518
    %v3771 = vunpack.c.l.b16 %v3519
    %v3772 = vunpack.c.h.b16 %v3519
    %v3773 = vunpack.c.l.b16 %v3520
    %v3774 = vunpack.c.h.b16 %v3520
    %v3775 = vunpack.c.l.b16 %v3521
    %v3776 = vunpack.c.h.b16 %v3521
    %v3777 = vunpack.c.l.b16 %v3522
    %v3778 = vunpack.c.h.b16 %v3522
    %v3779 = vunpack.c.l.b16 %v3523
    %v3780 = vunpack.c.h.b16 %v3523
    %v3781 = vunpack.c.l.b16 %v3524
    %v3782 = vunpack.c.h.b16 %v3524
    %v3783 = vunpack.c.l.b16 %v3525
    %v3784 = vunpack.c.h.b16 %v3525
    %v3785 = vunpack.c.l.b16 %v3526
    %v3786 = vunpack.c.h.b16 %v3526
    %v3787 = vunpack.c.l.b16 %v3527
    %v3788 = vunpack.c.h.b16 %v3527
    %v3789 = vunpack.c.l.b16 %v3528
    %v3790 = vunpack.c.h.b16 %v3528
    %v3791 = vunpack.c.l.b16 %v3529
    %v3792 = vunpack.c.h.b16 %v3529
    %v3793 = vunpack.c.l.b16 %v3530
    %v3794 = vunpack.c.h.b16 %v3530
    %v3795 = vunpack.c.l.b16 %v3531
    %v3796 = vunpack.c.h.b16 %v3531
    %v3797 = vunpack.c.l.b16 %v3532
    %v3798 = vunpack.c.h.b16 %v3532
    %v3799 = vunpack.c.l.b16 %v3533
    %v3800 = vunpack.c.h.b16 %v3533
    %v3801 = vunpack.c.l.b16 %v3534
    %v3802 = vunpack.c.h.b16 %v3534
    %v3803 = vunpack.c.l.b16 %v3535
    %v3804 = vunpack.c.h.b16 %v3535
    %v3805 = vunpack.c.l.b16 %v3536
    %v3806 = vunpack.c.h.b16 %v3536
    %v3807 = vunpack.c.l.b16 %v3537
    %v3808 = vunpack.c.h.b16 %v3537
    %v3809 = vunpack.c.l.b16 %v3538
    %v3810 = vunpack.c.h.b16 %v3538
    %v3811 = vunpack.c.l.b16 %v3539
    %v3812 = vunpack.c.h.b16 %v3539
    %v3813 = vunpack.c.l.b16 %v3540
    %v3814 = vunpack.c.h.b16 %v3540
    %v3815 = vunpack.c.l.b16 %v3541
    %v3816 = vunpack.c.h.b16 %v3541
    %v3817 = vunpack.c.l.b16 %v3542
    %v3818 = vunpack.c.h.b16 %v3542
    %v3819 = vunpack.c.l.b16 %v3543
    %v3820 = vunpack.c.h.b16 %v3543
    %v3821 = vunpack.c.l.b16 %v3544
    %v3822 = vunpack.c.h.b16 %v3544
    %v3823 = vunpack.c.l.b16 %v3545
    %v3824 = vunpack.c.h.b16 %v3545
    %v3825 = vunpack.c.l.b16 %v3546
    %v3826 = vunpack.c.h.b16 %v3546
    %v3827 = vunpack.c.l.b16 %v3547
    %v3828 = vunpack.c.h.b16 %v3547
    %v3829 = vunpack.c.l.b16 %v3548
    %v3830 = vunpack.c.h.b16 %v3548
    %v3831 = vunpack.c.l.b16 %v3549
    %v3832 = vunpack.c.h.b16 %v3549
    %v3833 = vunpack.c.l.b16 %v3550
    %v3834 = vunpack.c.h.b16 %v3550
    %v3835 = vunpack.c.l.b16 %v3551
    %v3836 = vunpack.c.h.b16 %v3551
    %v3837 = vunpack.c.l.b16 %v3552
    %v3838 = vunpack.c.h.b16 %v3552
    %v3839 = vunpack.c.l.b16 %v3553
    %v3840 = vunpack.c.h.b16 %v3553
    %v3841 = vunpack.c.l.b16 %v3554
    %v3842 = vunpack.c.h.b16 %v3554
    %v3843 = vunpack.c.l.b16 %v3555
    %v3844 = vunpack.c.h.b16 %v3555
    %v3845 = vunpack.c.l.b16 %v3556
    %v3846 = vunpack.c.h.b16 %v3556
    %v3847 = vunpack.c.l.b16 %v3557
    %v3848 = vunpack.c.h.b16 %v3557
    %v3849 = vunpack.c.l.b16 %v3558
    %v3850 = vunpack.c.h.b16 %v3558
    %v3851 = vunpack.c.l.b16 %v3559
    %v3852 = vunpack.c.h.b16 %v3559
    %v3853 = vunpack.c.l.b16 %v3560
    %v3854 = vunpack.c.h.b16 %v3560
    %v3855 = vunpack.c.l.b16 %v3561
    %v3856 = vunpack.c.h.b16 %v3561
    %v3857 = vunpack.c.l.b16 %v3562
    %v3858 = vunpack.c.h.b16 %v3562
    %v3859 = vunpack.c.l.b16 %v3563
    %v3860 = vunpack.c.h.b16 %v3563
    %v3861 = vunpack.c.l.b16 %v3564
    %v3862 = vunpack.c.h.b16 %v3564
    %v3863 = vunpack.c.l.b16 %v3565
    %v3864 = vunpack.c.h.b16 %v3565
    %v3865 = vunpack.c.l.b16 %v3566
    %v3866 = vunpack.c.h.b16 %v3566
    %v3867 = vunpack.c.l.b16 %v3567
    %v3868 = vunpack.c.h.b16 %v3567
    %v3869 = vunpack.c.l.b16 %v3568
    %v3870 = vunpack.c.h.b16 %v3568
    %v3871 = vunpack.c.l.b16 %v3569
    %v3872 = vunpack.c.h.b16 %v3569
    %v3873 = vunpack.c.l.b16 %v3570
    %v3874 = vunpack.c.h.b16 %v3570
    %v3875 = vunpack.c.l.b16 %v3571
    %v3876 = vunpack.c.h.b16 %v3571
    %v3877 = vunpack.c.l.b16 %v3572
    %v3878 = vunpack.c.h.b16 %v3572
    %v3879 = vunpack.c.l.b16 %v3573
    %v3880 = vunpack.c.h.b16 %v3573
    %v3881 = vunpack.c.l.b16 %v3574
    %v3882 = vunpack.c.h.b16 %v3574
    %v3883 = vunpack.c.l.b16 %v3575
    %v3884 = vunpack.c.h.b16 %v3575
    %v3885 = vunpack.c.l.b16 %v3576
    %v3886 = vunpack.c.h.b16 %v3576
    %v3887 = vunpack.c.l.b16 %v3577
    %v3888 = vunpack.c.h.b16 %v3577
    %v3889 = vunpack.c.l.b16 %v3578
    %v3890 = vunpack.c.h.b16 %v3578
    %v3891 = vunpack.c.l.b16 %v3579
    %v3892 = vunpack.c.h.b16 %v3579
    %v3893 = vunpack.c.l.b16 %v3580
    %v3894 = vunpack.c.h.b16 %v3580
    %v3895 = vpack.c.b16 %v3755, %v3751
    %v3896 = vpack.c.b16 %v3756, %v3752
    %v3897 = vpack.c.b16 %v3757, %v3753
    %v3898 = vpack.c.b16 %v3758, %v3754
    %v3899 = vpack.c.b16 %v3763, %v3759
    %v3900 = vpack.c.b16 %v3764, %v3760
    %v3901 = vpack.c.b16 %v3765, %v3761
    %v3902 = vpack.c.b16 %v3766, %v3762
    %v3903 = vpack.c.b16 %v3771, %v3767
    %v3904 = vpack.c.b16 %v3772, %v3768
    %v3905 = vpack.c.b16 %v3773, %v3769
    %v3906 = vpack.c.b16 %v3774, %v3770
    %v3907 = vpack.c.b16 %v3779, %v3775
    %v3908 = vpack.c.b16 %v3780, %v3776
    %v3909 = vpack.c.b16 %v3781, %v3777
    %v3910 = vpack.c.b16 %v3782, %v3778
    %v3911 = vpack.c.b16 %v3787, %v3783
    %v3912 = vpack.c.b16 %v3788, %v3784
    %v3913 = vpack.c.b16 %v3789, %v3785
    %v3914 = vpack.c.b16 %v3790, %v3786
    %v3915 = vpack.c.b16 %v3795, %v3791
    %v3916 = vpack.c.b16 %v3796, %v3792
    %v3917 = vpack.c.b16 %v3797, %v3793
    %v3918 = vpack.c.b16 %v3798, %v3794
    %v3919 = vpack.c.b16 %v3803, %v3799
    %v3920 = vpack.c.b16 %v3804, %v3800
    %v3921 = vpack.c.b16 %v3805, %v3801
    %v3922 = vpack.c.b16 %v3806, %v3802
    %v3923 = vpack.c.b16 %v3811, %v3807
    %v3924 = vpack.c.b16 %v3812, %v3808
    %v3925 = vpack.c.b16 %v3813, %v3809
    %v3926 = vpack.c.b16 %v3814, %v3810
    %v3927 = vpack.c.b16 %v3819, %v3815
    %v3928 = vpack.c.b16 %v3820, %v3816
    %v3929 = vpack.c.b16 %v3821, %v3817
    %v3930 = vpack.c.b16 %v3822, %v3818
    %v3931 = vpack.c.b16 %v3827, %v3823
    %v3932 = vpack.c.b16 %v3828, %v3824
    %v3933 = vpack.c.b16 %v3829, %v3825
    %v3934 = vpack.c.b16 %v3830, %v3826
    %v3935 = vpack.c.b16 %v3835, %v3831
    %v3936 = vpack.c.b16 %v3836, %v3832
    %v3937 = vpack.c.b16 %v3837, %v3833
    %v3938 = vpack.c.b16 %v3838, %v3834
    %v3939 = vpack.c.b16 %v3843, %v3839
    %v3940 = vpack.c.b16 %v3844, %v3840
    %v3941 = vpack.c.b16 %v3845, %v3841
    %v3942 = vpack.c.b16 %v3846, %v3842
    %v3943 = vpack.c.b16 %v3851, %v3847
    %v3944 = vpack.c.b16 %v3852, %v3848
    %v3945 = vpack.c.b16 %v3853, %v3849
    %v3946 = vpack.c.b16 %v3854, %v3850
    %v3947 = vpack.c.b16 %v3859, %v3855
    %v3948 = vpack.c.b16 %v3860, %v3856
    %v3949 = vpack.c.b16 %v3861, %v3857
    %v3950 = vpack.c.b16 %v3862, %v3858
    %v3951 = vpack.c.b16 %v3867, %v3863
    %v3952 = vpack.c.b16 %v3868, %v3864
    %v3953 = vpack.c.b16 %v3869, %v3865
    %v3954 = vpack.c.b16 %v3870, %v3866
    %v3955 = vpack.c.b16 %v3875, %v3871
    %v3956 = vpack.c.b16 %v3876, %v3872
    %v3957 = vpack.c.b16 %v3877, %v3873
    %v3958 = vpack.c.b16 %v3878, %v3874
    %v3959 = vpack.c.b16 %v3883, %v3879
    %v3960 = vpack.c.b16 %v3884, %v3880
    %v3961 = vpack.c.b16 %v3885, %v3881
    %v3962 = vpack.c.b16 %v3886, %v3882
    %v3963 = vpack.c.b16 %v3891, %v3887
    %v3964 = vpack.c.b16 %v3892, %v3888
    %v3965 = vpack.c.b16 %v3893, %v3889
    %v3966 = vpack.c.b16 %v3894, %v3890
    %v4040 = vsel %vm172, %v3650, 0
    %v4043 = vsel %vm172, %v3674, 0
    %4045 = vmatprep.subr.bf16.mxu0 %v3896
    %4046 = vmatpush1.bf16.msra.mxu0 %v3895
    %4047 = vmatprep.subr.bf16.mxu0 %v3900
    %4048 = vmatpush1.bf16.msra.mxu0 %v3899
    %4049 = vmatprep.subr.bf16.mxu0 %v3904
    %4050 = vmatpush1.bf16.msra.mxu0 %v3903
    %4051 = vmatprep.subr.bf16.mxu0 %v3908
    %4052 = vmatpush1.bf16.msra.mxu0 %v3907
    %4053 = vmatprep.subr.bf16.mxu0 %v3912
    %4054 = vmatpush1.bf16.msra.mxu0 %v3911
    %4055 = vmatprep.subr.bf16.mxu0 %v3916
    %4056 = vmatpush1.bf16.msra.mxu0 %v3915
    %4057 = vmatprep.subr.bf16.mxu0 %v3920
    %4058 = vmatpush1.bf16.msra.mxu0 %v3919
    %4059 = vmatprep.subr.bf16.mxu0 %v3924
    %4060 = vmatpush1.bf16.msra.mxu0 %v3923
    %4061 = vmatprep.subr.bf16.mxu0 %v3928
    %4062 = vmatpush1.bf16.msra.mxu0 %v3927
    %4063 = vmatprep.subr.bf16.mxu0 %v3932
    %4064 = vmatpush1.bf16.msra.mxu0 %v3931
    %4065 = vmatprep.subr.bf16.mxu0 %v3936
    %4066 = vmatpush1.bf16.msra.mxu0 %v3935
    %4067 = vmatprep.subr.bf16.mxu0 %v3940
    %4068 = vmatpush1.bf16.msra.mxu0 %v3939
    %4069 = vmatprep.subr.bf16.mxu0 %v3944
    %4070 = vmatpush1.bf16.msra.mxu0 %v3943
    %4071 = vmatprep.subr.bf16.mxu0 %v3948
    %4072 = vmatpush1.bf16.msra.mxu0 %v3947
    %4073 = vmatprep.subr.bf16.mxu0 %v3952
    %4074 = vmatpush1.bf16.msra.mxu0 %v3951
    %4075 = vmatprep.subr.bf16.mxu0 %v3956
    %4076 = vmatpush1.bf16.msra.mxu0 %v3955
    %4077 = vmatprep.mubr.bf16.mxu0 %v3638
    %4078 = vmatmul.mubr.bf16.gmra.mrb[0].mxu0 %v3626
    %v4079 = vpop.f32.mrb[0].mxu0
    %v4080 = vadd.f32 0.0, %v4079
    %v4081 = vpop.f32.mrb[0].mxu0
    %v4082 = vadd.f32 0.0, %v4081
    %v4083 = vpop.f32.mrb[0].mxu0
    %v4084 = vadd.f32 0.0, %v4083
    %v4085 = vpop.f32.mrb[0].mxu0
    %v4086 = vadd.f32 0.0, %v4085
    %4087 = vmatprep.mubr.bf16.mxu0 %v3666
    %4088 = vmatmul.mubr.bf16.gmra.mrb[0].mxu0 %v3658
    %v4089 = vpop.f32.mrb[0].mxu0
    %v4090 = vadd.f32 0.0, %v4089
    %v4091 = vpop.f32.mrb[0].mxu0
    %v4092 = vadd.f32 0.0, %v4091
    %v4093 = vpop.f32.mrb[0].mxu0
    %v4094 = vadd.f32 0.0, %v4093
    %v4095 = vpop.f32.mrb[0].mxu0
    %v4096 = vadd.f32 0.0, %v4095
    %4097 = vdwg.mxu0
    %4098 = vmatprep.subr.bf16.mxu0 %v3960
    %4099 = vmatpush1.bf16.msra.mxu0 %v3959
    %4100 = vmatprep.subr.bf16.mxu0 %v3964
    %4101 = vmatpush1.bf16.msra.mxu0 %v3963
    %4102 = vmatprep.subr.bf16.mxu0 0
    %4103 = vmatpush1.bf16.msra.mxu0 0
    %4104 = vmatprep.subr.bf16.mxu0 0
    %4105 = vmatpush1.bf16.msra.mxu0 0
    %4106 = vmatprep.subr.bf16.mxu0 0
    %4107 = vmatpush1.bf16.msra.mxu0 0
    %4108 = vmatprep.subr.bf16.mxu0 0
    %4109 = vmatpush1.bf16.msra.mxu0 0
    %4110 = vmatprep.subr.bf16.mxu0 0
    %4111 = vmatpush1.bf16.msra.mxu0 0
    %4112 = vmatprep.subr.bf16.mxu0 0
    %4113 = vmatpush1.bf16.msra.mxu0 0
    %4114 = vmatprep.subr.bf16.mxu0 0
    %4115 = vmatpush1.bf16.msra.mxu0 0
    %4116 = vmatprep.subr.bf16.mxu0 0
    %4117 = vmatpush1.bf16.msra.mxu0 0
    %4118 = vmatprep.subr.bf16.mxu0 0
    %4119 = vmatpush1.bf16.msra.mxu0 0
    %4120 = vmatprep.subr.bf16.mxu0 0
    %4121 = vmatpush1.bf16.msra.mxu0 0
    %4122 = vmatprep.subr.bf16.mxu0 0
    %4123 = vmatpush1.bf16.msra.mxu0 0
    %4124 = vmatprep.subr.bf16.mxu0 0
    %4125 = vmatpush1.bf16.msra.mxu0 0
    %4126 = vmatprep.subr.bf16.mxu0 0
    %4127 = vmatpush1.bf16.msra.mxu0 0
    %4128 = vmatprep.subr.bf16.mxu0 0
    %4129 = vmatpush1.bf16.msra.mxu0 0
    %4130 = vmatprep.mubr.bf16.mxu0 0
    %4131 = vmatmul.mubr.bf16.gmra.mrb[0].mxu0 %v4040
    %v4132 = vpop.f32.mrb[0].mxu0
    %v4133 = vadd.f32 %v4080, %v4132
    %v4134 = vpop.f32.mrb[0].mxu0
    %v4135 = vadd.f32 %v4082, %v4134
    %v4136 = vpop.f32.mrb[0].mxu0
    %v4137 = vadd.f32 %v4084, %v4136
    %v4138 = vpop.f32.mrb[0].mxu0
    %v4139 = vadd.f32 %v4086, %v4138
    %4140 = vmatprep.mubr.bf16.mxu0 0
    %4141 = vmatmul.mubr.bf16.gmra.mrb[0].mxu0 %v4043
    %v4142 = vpop.f32.mrb[0].mxu0
    %v4143 = vadd.f32 %v4090, %v4142
    %v4144 = vpop.f32.mrb[0].mxu0
    %v4145 = vadd.f32 %v4092, %v4144
    %v4146 = vpop.f32.mrb[0].mxu0
    %v4147 = vadd.f32 %v4094, %v4146
    %v4148 = vpop.f32.mrb[0].mxu0
    %v4149 = vadd.f32 %v4096, %v4148
    %4150 = vdwg.mxu0
    %4151 = vmatprep.subr.bf16.mxu0 %v3898
    %4152 = vmatpush1.bf16.msra.mxu0 %v3897
    %4153 = vmatprep.subr.bf16.mxu0 %v3902
    %4154 = vmatpush1.bf16.msra.mxu0 %v3901
    %4155 = vmatprep.subr.bf16.mxu0 %v3906
    %4156 = vmatpush1.bf16.msra.mxu0 %v3905
    %4157 = vmatprep.subr.bf16.mxu0 %v3910
    %4158 = vmatpush1.bf16.msra.mxu0 %v3909
    %4159 = vmatprep.subr.bf16.mxu0 %v3914
    %4160 = vmatpush1.bf16.msra.mxu0 %v3913
    %4161 = vmatprep.subr.bf16.mxu0 %v3918
    %4162 = vmatpush1.bf16.msra.mxu0 %v3917
    %4163 = vmatprep.subr.bf16.mxu0 %v3922
    %4164 = vmatpush1.bf16.msra.mxu0 %v3921
    %4165 = vmatprep.subr.bf16.mxu0 %v3926
    %4166 = vmatpush1.bf16.msra.mxu0 %v3925
    %4167 = vmatprep.subr.bf16.mxu0 %v3930
    %4168 = vmatpush1.bf16.msra.mxu0 %v3929
    %4169 = vmatprep.subr.bf16.mxu0 %v3934
    %4170 = vmatpush1.bf16.msra.mxu0 %v3933
    %4171 = vmatprep.subr.bf16.mxu0 %v3938
    %4172 = vmatpush1.bf16.msra.mxu0 %v3937
    %4173 = vmatprep.subr.bf16.mxu0 %v3942
    %4174 = vmatpush1.bf16.msra.mxu0 %v3941
    %4175 = vmatprep.subr.bf16.mxu0 %v3946
    %4176 = vmatpush1.bf16.msra.mxu0 %v3945
    %4177 = vmatprep.subr.bf16.mxu0 %v3950
    %4178 = vmatpush1.bf16.msra.mxu0 %v3949
    %4179 = vmatprep.subr.bf16.mxu0 %v3954
    %4180 = vmatpush1.bf16.msra.mxu0 %v3953
    %4181 = vmatprep.subr.bf16.mxu0 %v3958
    %4182 = vmatpush1.bf16.msra.mxu0 %v3957
    %4183 = vmatprep.mubr.bf16.mxu0 %v3638
    %4184 = vmatmul.mubr.bf16.gmra.mrb[0].mxu0 %v3626
    %v4185 = vpop.f32.mrb[0].mxu0
    %v4186 = vadd.f32 0.0, %v4185
    %v4187 = vpop.f32.mrb[0].mxu0
    %v4188 = vadd.f32 0.0, %v4187
    %v4189 = vpop.f32.mrb[0].mxu0
    %v4190 = vadd.f32 0.0, %v4189
    %v4191 = vpop.f32.mrb[0].mxu0
    %v4192 = vadd.f32 0.0, %v4191
    %4193 = vmatprep.mubr.bf16.mxu0 %v3666
    %4194 = vmatmul.mubr.bf16.gmra.mrb[0].mxu0 %v3658
    %v4195 = vpop.f32.mrb[0].mxu0
    %v4196 = vadd.f32 0.0, %v4195
    %v4197 = vpop.f32.mrb[0].mxu0
    %v4198 = vadd.f32 0.0, %v4197
    %v4199 = vpop.f32.mrb[0].mxu0
    %v4200 = vadd.f32 0.0, %v4199
    %v4201 = vpop.f32.mrb[0].mxu0
    %v4202 = vadd.f32 0.0, %v4201
    %4203 = vdwg.mxu0
    %4204 = vmatprep.subr.bf16.mxu0 %v3962
    %4205 = vmatpush1.bf16.msra.mxu0 %v3961
    %4206 = vmatprep.subr.bf16.mxu0 %v3966
    %4207 = vmatpush1.bf16.msra.mxu0 %v3965
    %4208 = vmatprep.subr.bf16.mxu0 0
    %4209 = vmatpush1.bf16.msra.mxu0 0
    %4210 = vmatprep.subr.bf16.mxu0 0
    %4211 = vmatpush1.bf16.msra.mxu0 0
    %4212 = vmatprep.subr.bf16.mxu0 0
    %4213 = vmatpush1.bf16.msra.mxu0 0
    %4214 = vmatprep.subr.bf16.mxu0 0
    %4215 = vmatpush1.bf16.msra.mxu0 0
    %4216 = vmatprep.subr.bf16.mxu0 0
    %4217 = vmatpush1.bf16.msra.mxu0 0
    %4218 = vmatprep.subr.bf16.mxu0 0
    %4219 = vmatpush1.bf16.msra.mxu0 0
    %4220 = vmatprep.subr.bf16.mxu0 0
    %4221 = vmatpush1.bf16.msra.mxu0 0
    %4222 = vmatprep.subr.bf16.mxu0 0
    %4223 = vmatpush1.bf16.msra.mxu0 0
    %4224 = vmatprep.subr.bf16.mxu0 0
    %4225 = vmatpush1.bf16.msra.mxu0 0
    %4226 = vmatprep.subr.bf16.mxu0 0
    %4227 = vmatpush1.bf16.msra.mxu0 0
    %4228 = vmatprep.subr.bf16.mxu0 0
    %4229 = vmatpush1.bf16.msra.mxu0 0
    %4230 = vmatprep.subr.bf16.mxu0 0
    %4231 = vmatpush1.bf16.msra.mxu0 0
    %4232 = vmatprep.subr.bf16.mxu0 0
    %4233 = vmatpush1.bf16.msra.mxu0 0
    %4234 = vmatprep.subr.bf16.mxu0 0
    %4235 = vmatpush1.bf16.msra.mxu0 0
    %4236 = vmatprep.mubr.bf16.mxu0 0
    %4237 = vmatmul.mubr.bf16.gmra.mrb[0].mxu0 %v4040
    %v4238 = vpop.f32.mrb[0].mxu0
    %v4239 = vadd.f32 %v4186, %v4238
    %v4240 = vpop.f32.mrb[0].mxu0
    %v4241 = vadd.f32 %v4188, %v4240
    %v4242 = vpop.f32.mrb[0].mxu0
    %v4243 = vadd.f32 %v4190, %v4242
    %v4244 = vpop.f32.mrb[0].mxu0
    %v4245 = vadd.f32 %v4192, %v4244
    %4246 = vmatprep.mubr.bf16.mxu0 0
    %4247 = vmatmul.mubr.bf16.gmra.mrb[0].mxu0 %v4043
    %v4248 = vpop.f32.mrb[0].mxu0
    %v4249 = vadd.f32 %v4196, %v4248
    %v4250 = vpop.f32.mrb[0].mxu0
    %v4251 = vadd.f32 %v4198, %v4250
    %v4252 = vpop.f32.mrb[0].mxu0
    %v4253 = vadd.f32 %v4200, %v4252
    %v4254 = vpop.f32.mrb[0].mxu0
    %v4255 = vadd.f32 %v4202, %v4254
    %4256 = vdwg.mxu0
    %v4333 = vunpack.c.l.b16 %v3434
    %v4334 = vunpack.c.h.b16 %v3434
    %v4335 = vunpack.c.l.b16 %v3435
    %v4336 = vunpack.c.h.b16 %v3435
    %v4337 = vunpack.c.l.b16 %v3436
    %v4338 = vunpack.c.h.b16 %v3436
    %v4339 = vunpack.c.l.b16 %v3437
    %v4340 = vunpack.c.h.b16 %v3437
    %v4341 = vunpack.c.l.b16 %v3438
    %v4342 = vunpack.c.h.b16 %v3438
    %v4343 = vunpack.c.l.b16 %v3439
    %v4344 = vunpack.c.h.b16 %v3439
    %v4345 = vunpack.c.l.b16 %v3440
    %v4346 = vunpack.c.h.b16 %v3440
    %v4347 = vunpack.c.l.b16 %v3441
    %v4348 = vunpack.c.h.b16 %v3441
    %v4349 = vunpack.c.l.b16 %v3442
    %v4350 = vunpack.c.h.b16 %v3442
    %v4351 = vunpack.c.l.b16 %v3443
    %v4352 = vunpack.c.h.b16 %v3443
    %v4353 = vunpack.c.l.b16 %v3444
    %v4354 = vunpack.c.h.b16 %v3444
    %v4355 = vunpack.c.l.b16 %v3445
    %v4356 = vunpack.c.h.b16 %v3445
    %v4357 = vunpack.c.l.b16 %v3446
    %v4358 = vunpack.c.h.b16 %v3446
    %v4359 = vunpack.c.l.b16 %v3447
    %v4360 = vunpack.c.h.b16 %v3447
    %v4361 = vunpack.c.l.b16 %v3448
    %v4362 = vunpack.c.h.b16 %v3448
    %v4363 = vunpack.c.l.b16 %v3449
    %v4364 = vunpack.c.h.b16 %v3449
    %v4365 = vunpack.c.l.b16 %v3450
    %v4366 = vunpack.c.h.b16 %v3450
    %v4367 = vunpack.c.l.b16 %v3451
    %v4368 = vunpack.c.h.b16 %v3451
    %v4369 = vunpack.c.l.b16 %v3452
    %v4370 = vunpack.c.h.b16 %v3452
    %v4371 = vunpack.c.l.b16 %v3453
    %v4372 = vunpack.c.h.b16 %v3453
    %v4373 = vunpack.c.l.b16 %v3454
    %v4374 = vunpack.c.h.b16 %v3454
    %v4375 = vunpack.c.l.b16 %v3455
    %v4376 = vunpack.c.h.b16 %v3455
    %v4377 = vunpack.c.l.b16 %v3456
    %v4378 = vunpack.c.h.b16 %v3456
    %v4379 = vunpack.c.l.b16 %v3457
    %v4380 = vunpack.c.h.b16 %v3457
    %v4381 = vunpack.c.l.b16 %v3458
    %v4382 = vunpack.c.h.b16 %v3458
    %v4383 = vunpack.c.l.b16 %v3459
    %v4384 = vunpack.c.h.b16 %v3459
    %v4385 = vunpack.c.l.b16 %v3460
    %v4386 = vunpack.c.h.b16 %v3460
    %v4387 = vunpack.c.l.b16 %v3461
    %v4388 = vunpack.c.h.b16 %v3461
    %v4389 = vunpack.c.l.b16 %v3462
    %v4390 = vunpack.c.h.b16 %v3462
    %v4391 = vunpack.c.l.b16 %v3463
    %v4392 = vunpack.c.h.b16 %v3463
    %v4393 = vunpack.c.l.b16 %v3464
    %v4394 = vunpack.c.h.b16 %v3464
    %v4395 = vunpack.c.l.b16 %v3465
    %v4396 = vunpack.c.h.b16 %v3465
    %v4397 = vunpack.c.l.b16 %v3466
    %v4398 = vunpack.c.h.b16 %v3466
    %v4399 = vunpack.c.l.b16 %v3467
    %v4400 = vunpack.c.h.b16 %v3467
    %v4401 = vunpack.c.l.b16 %v3468
    %v4402 = vunpack.c.h.b16 %v3468
    %v4403 = vunpack.c.l.b16 %v3469
    %v4404 = vunpack.c.h.b16 %v3469
    %v4405 = vunpack.c.l.b16 %v3470
    %v4406 = vunpack.c.h.b16 %v3470
    %v4407 = vunpack.c.l.b16 %v3471
    %v4408 = vunpack.c.h.b16 %v3471
    %v4409 = vunpack.c.l.b16 %v3472
    %v4410 = vunpack.c.h.b16 %v3472
    %v4411 = vunpack.c.l.b16 %v3473
    %v4412 = vunpack.c.h.b16 %v3473
    %v4413 = vunpack.c.l.b16 %v3474
    %v4414 = vunpack.c.h.b16 %v3474
    %v4415 = vunpack.c.l.b16 %v3475
    %v4416 = vunpack.c.h.b16 %v3475
    %v4417 = vunpack.c.l.b16 %v3476
    %v4418 = vunpack.c.h.b16 %v3476
    %v4419 = vunpack.c.l.b16 %v3477
    %v4420 = vunpack.c.h.b16 %v3477
    %v4421 = vunpack.c.l.b16 %v3478
    %v4422 = vunpack.c.h.b16 %v3478
    %v4423 = vunpack.c.l.b16 %v3479
    %v4424 = vunpack.c.h.b16 %v3479
    %v4425 = vunpack.c.l.b16 %v3480
    %v4426 = vunpack.c.h.b16 %v3480
    %v4427 = vunpack.c.l.b16 %v3481
    %v4428 = vunpack.c.h.b16 %v3481
    %v4429 = vunpack.c.l.b16 %v3482
    %v4430 = vunpack.c.h.b16 %v3482
    %v4431 = vunpack.c.l.b16 %v3483
    %v4432 = vunpack.c.h.b16 %v3483
    %v4433 = vunpack.c.l.b16 %v3484
    %v4434 = vunpack.c.h.b16 %v3484
    %v4435 = vunpack.c.l.b16 %v3485
    %v4436 = vunpack.c.h.b16 %v3485
    %v4437 = vunpack.c.l.b16 %v3486
    %v4438 = vunpack.c.h.b16 %v3486
    %v4439 = vunpack.c.l.b16 %v3487
    %v4440 = vunpack.c.h.b16 %v3487
    %v4441 = vunpack.c.l.b16 %v3488
    %v4442 = vunpack.c.h.b16 %v3488
    %v4443 = vunpack.c.l.b16 %v3489
    %v4444 = vunpack.c.h.b16 %v3489
    %v4445 = vunpack.c.l.b16 %v3490
    %v4446 = vunpack.c.h.b16 %v3490
    %v4447 = vunpack.c.l.b16 %v3491
    %v4448 = vunpack.c.h.b16 %v3491
    %v4449 = vunpack.c.l.b16 %v3492
    %v4450 = vunpack.c.h.b16 %v3492
    %v4451 = vunpack.c.l.b16 %v3493
    %v4452 = vunpack.c.h.b16 %v3493
    %v4453 = vunpack.c.l.b16 %v3494
    %v4454 = vunpack.c.h.b16 %v3494
    %v4455 = vunpack.c.l.b16 %v3495
    %v4456 = vunpack.c.h.b16 %v3495
    %v4457 = vunpack.c.l.b16 %v3496
    %v4458 = vunpack.c.h.b16 %v3496
    %v4459 = vunpack.c.l.b16 %v3497
    %v4460 = vunpack.c.h.b16 %v3497
    %v4461 = vunpack.c.l.b16 %v3498
    %v4462 = vunpack.c.h.b16 %v3498
    %v4463 = vunpack.c.l.b16 %v3499
    %v4464 = vunpack.c.h.b16 %v3499
    %v4465 = vunpack.c.l.b16 %v3500
    %v4466 = vunpack.c.h.b16 %v3500
    %v4467 = vunpack.c.l.b16 %v3501
    %v4468 = vunpack.c.h.b16 %v3501
    %v4469 = vunpack.c.l.b16 %v3502
    %v4470 = vunpack.c.h.b16 %v3502
    %v4471 = vunpack.c.l.b16 %v3503
    %v4472 = vunpack.c.h.b16 %v3503
    %v4473 = vunpack.c.l.b16 %v3504
    %v4474 = vunpack.c.h.b16 %v3504
    %v4475 = vunpack.c.l.b16 %v3505
    %v4476 = vunpack.c.h.b16 %v3505
    %v4477 = vpack.c.b16 %v4337, %v4333
    %v4478 = vpack.c.b16 %v4338, %v4334
    %v4479 = vpack.c.b16 %v4339, %v4335
    %v4480 = vpack.c.b16 %v4340, %v4336
    %v4481 = vpack.c.b16 %v4345, %v4341
    %v4482 = vpack.c.b16 %v4346, %v4342
    %v4483 = vpack.c.b16 %v4347, %v4343
    %v4484 = vpack.c.b16 %v4348, %v4344
    %v4485 = vpack.c.b16 %v4353, %v4349
    %v4486 = vpack.c.b16 %v4354, %v4350
    %v4487 = vpack.c.b16 %v4355, %v4351
    %v4488 = vpack.c.b16 %v4356, %v4352
    %v4489 = vpack.c.b16 %v4361, %v4357
    %v4490 = vpack.c.b16 %v4362, %v4358
    %v4491 = vpack.c.b16 %v4363, %v4359
    %v4492 = vpack.c.b16 %v4364, %v4360
    %v4493 = vpack.c.b16 %v4369, %v4365
    %v4494 = vpack.c.b16 %v4370, %v4366
    %v4495 = vpack.c.b16 %v4371, %v4367
    %v4496 = vpack.c.b16 %v4372, %v4368
    %v4497 = vpack.c.b16 %v4377, %v4373
    %v4498 = vpack.c.b16 %v4378, %v4374
    %v4499 = vpack.c.b16 %v4379, %v4375
    %v4500 = vpack.c.b16 %v4380, %v4376
    %v4501 = vpack.c.b16 %v4385, %v4381
    %v4502 = vpack.c.b16 %v4386, %v4382
    %v4503 = vpack.c.b16 %v4387, %v4383
    %v4504 = vpack.c.b16 %v4388, %v4384
    %v4505 = vpack.c.b16 %v4393, %v4389
    %v4506 = vpack.c.b16 %v4394, %v4390
    %v4507 = vpack.c.b16 %v4395, %v4391
    %v4508 = vpack.c.b16 %v4396, %v4392
    %v4509 = vpack.c.b16 %v4401, %v4397
    %v4510 = vpack.c.b16 %v4402, %v4398
    %v4511 = vpack.c.b16 %v4403, %v4399
    %v4512 = vpack.c.b16 %v4404, %v4400
    %v4513 = vpack.c.b16 %v4409, %v4405
    %v4514 = vpack.c.b16 %v4410, %v4406
    %v4515 = vpack.c.b16 %v4411, %v4407
    %v4516 = vpack.c.b16 %v4412, %v4408
    %v4517 = vpack.c.b16 %v4417, %v4413
    %v4518 = vpack.c.b16 %v4418, %v4414
    %v4519 = vpack.c.b16 %v4419, %v4415
    %v4520 = vpack.c.b16 %v4420, %v4416
    %v4521 = vpack.c.b16 %v4425, %v4421
    %v4522 = vpack.c.b16 %v4426, %v4422
    %v4523 = vpack.c.b16 %v4427, %v4423
    %v4524 = vpack.c.b16 %v4428, %v4424
    %v4525 = vpack.c.b16 %v4433, %v4429
    %v4526 = vpack.c.b16 %v4434, %v4430
    %v4527 = vpack.c.b16 %v4435, %v4431
    %v4528 = vpack.c.b16 %v4436, %v4432
    %v4529 = vpack.c.b16 %v4441, %v4437
    %v4530 = vpack.c.b16 %v4442, %v4438
    %v4531 = vpack.c.b16 %v4443, %v4439
    %v4532 = vpack.c.b16 %v4444, %v4440
    %v4533 = vpack.c.b16 %v4449, %v4445
    %v4534 = vpack.c.b16 %v4450, %v4446
    %v4535 = vpack.c.b16 %v4451, %v4447
    %v4536 = vpack.c.b16 %v4452, %v4448
    %v4537 = vpack.c.b16 %v4457, %v4453
    %v4538 = vpack.c.b16 %v4458, %v4454
    %v4539 = vpack.c.b16 %v4459, %v4455
    %v4540 = vpack.c.b16 %v4460, %v4456
    %v4541 = vpack.c.b16 %v4465, %v4461
    %v4542 = vpack.c.b16 %v4466, %v4462
    %v4543 = vpack.c.b16 %v4467, %v4463
    %v4544 = vpack.c.b16 %v4468, %v4464
    %v4545 = vpack.c.b16 %v4473, %v4469
    %v4546 = vpack.c.b16 %v4474, %v4470
    %v4547 = vpack.c.b16 %v4475, %v4471
    %v4548 = vpack.c.b16 %v4476, %v4472
    %v4621 = vsel %vm172, %v3608, 0
    %v4623 = vsel %vm172, %v3611, 0
    %4625 = vmatprep.subr.bf16.mxu0 %v4478
    %4626 = vmatpush1.bf16.msra.mxu0 %v4477
    %4627 = vmatprep.subr.bf16.mxu0 %v4482
    %4628 = vmatpush1.bf16.msra.mxu0 %v4481
    %4629 = vmatprep.subr.bf16.mxu0 %v4486
    %4630 = vmatpush1.bf16.msra.mxu0 %v4485
    %4631 = vmatprep.subr.bf16.mxu0 %v4490
    %4632 = vmatpush1.bf16.msra.mxu0 %v4489
    %4633 = vmatprep.subr.bf16.mxu0 %v4494
    %4634 = vmatpush1.bf16.msra.mxu0 %v4493
    %4635 = vmatprep.subr.bf16.mxu0 %v4498
    %4636 = vmatpush1.bf16.msra.mxu0 %v4497
    %4637 = vmatprep.subr.bf16.mxu0 %v4502
    %4638 = vmatpush1.bf16.msra.mxu0 %v4501
    %4639 = vmatprep.subr.bf16.mxu0 %v4506
    %4640 = vmatpush1.bf16.msra.mxu0 %v4505
    %4641 = vmatprep.subr.bf16.mxu0 %v4510
    %4642 = vmatpush1.bf16.msra.mxu0 %v4509
    %4643 = vmatprep.subr.bf16.mxu0 %v4514
    %4644 = vmatpush1.bf16.msra.mxu0 %v4513
    %4645 = vmatprep.subr.bf16.mxu0 %v4518
    %4646 = vmatpush1.bf16.msra.mxu0 %v4517
    %4647 = vmatprep.subr.bf16.mxu0 %v4522
    %4648 = vmatpush1.bf16.msra.mxu0 %v4521
    %4649 = vmatprep.subr.bf16.mxu0 %v4526
    %4650 = vmatpush1.bf16.msra.mxu0 %v4525
    %4651 = vmatprep.subr.bf16.mxu0 %v4530
    %4652 = vmatpush1.bf16.msra.mxu0 %v4529
    %4653 = vmatprep.subr.bf16.mxu0 %v4534
    %4654 = vmatpush1.bf16.msra.mxu0 %v4533
    %4655 = vmatprep.subr.bf16.mxu0 %v4538
    %4656 = vmatpush1.bf16.msra.mxu0 %v4537
    %4657 = vmatprep.mubr.bf16.mxu0 %v3607
    %4658 = vmatmul.mubr.bf16.gmra.mrb[0].mxu0 %v3606
    %v4659 = vpop.f32.mrb[0].mxu0
    %v4660 = vadd.f32 %v4133, %v4659
    %v4661 = vpop.f32.mrb[0].mxu0
    %v4662 = vadd.f32 %v4135, %v4661
    %v4663 = vpop.f32.mrb[0].mxu0
    %v4664 = vadd.f32 %v4137, %v4663
    %v4665 = vpop.f32.mrb[0].mxu0
    %v4666 = vadd.f32 %v4139, %v4665
    %4667 = vmatprep.mubr.bf16.mxu0 %v3610
    %4668 = vmatmul.mubr.bf16.gmra.mrb[0].mxu0 %v3609
    %v4669 = vpop.f32.mrb[0].mxu0
    %v4670 = vadd.f32 %v4143, %v4669
    %v4671 = vpop.f32.mrb[0].mxu0
    %v4672 = vadd.f32 %v4145, %v4671
    %v4673 = vpop.f32.mrb[0].mxu0
    %v4674 = vadd.f32 %v4147, %v4673
    %v4675 = vpop.f32.mrb[0].mxu0
    %v4676 = vadd.f32 %v4149, %v4675
    %4677 = vdwg.mxu0
    %4678 = vmatprep.subr.bf16.mxu0 %v4542
    %4679 = vmatpush1.bf16.msra.mxu0 %v4541
    %4680 = vmatprep.subr.bf16.mxu0 %v4546
    %4681 = vmatpush1.bf16.msra.mxu0 %v4545
    %4682 = vmatprep.subr.bf16.mxu0 0
    %4683 = vmatpush1.bf16.msra.mxu0 0
    %4684 = vmatprep.subr.bf16.mxu0 0
    %4685 = vmatpush1.bf16.msra.mxu0 0
    %4686 = vmatprep.subr.bf16.mxu0 0
    %4687 = vmatpush1.bf16.msra.mxu0 0
    %4688 = vmatprep.subr.bf16.mxu0 0
    %4689 = vmatpush1.bf16.msra.mxu0 0
    %4690 = vmatprep.subr.bf16.mxu0 0
    %4691 = vmatpush1.bf16.msra.mxu0 0
    %4692 = vmatprep.subr.bf16.mxu0 0
    %4693 = vmatpush1.bf16.msra.mxu0 0
    %4694 = vmatprep.subr.bf16.mxu0 0
    %4695 = vmatpush1.bf16.msra.mxu0 0
    %4696 = vmatprep.subr.bf16.mxu0 0
    %4697 = vmatpush1.bf16.msra.mxu0 0
    %4698 = vmatprep.subr.bf16.mxu0 0
    %4699 = vmatpush1.bf16.msra.mxu0 0
    %4700 = vmatprep.subr.bf16.mxu0 0
    %4701 = vmatpush1.bf16.msra.mxu0 0
    %4702 = vmatprep.subr.bf16.mxu0 0
    %4703 = vmatpush1.bf16.msra.mxu0 0
    %4704 = vmatprep.subr.bf16.mxu0 0
    %4705 = vmatpush1.bf16.msra.mxu0 0
    %4706 = vmatprep.subr.bf16.mxu0 0
    %4707 = vmatpush1.bf16.msra.mxu0 0
    %4708 = vmatprep.subr.bf16.mxu0 0
    %4709 = vmatpush1.bf16.msra.mxu0 0
    %4710 = vmatprep.mubr.bf16.mxu0 0
    %4711 = vmatmul.mubr.bf16.gmra.mrb[0].mxu0 %v4621
    %v4712 = vpop.f32.mrb[0].mxu0
    %v4713 = vadd.f32 %v4660, %v4712
    %v4714 = vpop.f32.mrb[0].mxu0
    %v4715 = vadd.f32 %v4662, %v4714
    %v4716 = vpop.f32.mrb[0].mxu0
    %v4717 = vadd.f32 %v4664, %v4716
    %v4718 = vpop.f32.mrb[0].mxu0
    %v4719 = vadd.f32 %v4666, %v4718
    %4720 = vmatprep.mubr.bf16.mxu0 0
    %4721 = vmatmul.mubr.bf16.gmra.mrb[0].mxu0 %v4623
    %v4722 = vpop.f32.mrb[0].mxu0
    %v4723 = vadd.f32 %v4670, %v4722
    %v4724 = vpop.f32.mrb[0].mxu0
    %v4725 = vadd.f32 %v4672, %v4724
    %v4726 = vpop.f32.mrb[0].mxu0
    %v4727 = vadd.f32 %v4674, %v4726
    %v4728 = vpop.f32.mrb[0].mxu0
    %v4729 = vadd.f32 %v4676, %v4728
    %4730 = vdwg.mxu0
    %4731 = vmatprep.subr.bf16.mxu0 %v4480
    %4732 = vmatpush1.bf16.msra.mxu0 %v4479
    %4733 = vmatprep.subr.bf16.mxu0 %v4484
    %4734 = vmatpush1.bf16.msra.mxu0 %v4483
    %4735 = vmatprep.subr.bf16.mxu0 %v4488
    %4736 = vmatpush1.bf16.msra.mxu0 %v4487
    %4737 = vmatprep.subr.bf16.mxu0 %v4492
    %4738 = vmatpush1.bf16.msra.mxu0 %v4491
    %4739 = vmatprep.subr.bf16.mxu0 %v4496
    %4740 = vmatpush1.bf16.msra.mxu0 %v4495
    %4741 = vmatprep.subr.bf16.mxu0 %v4500
    %4742 = vmatpush1.bf16.msra.mxu0 %v4499
    %4743 = vmatprep.subr.bf16.mxu0 %v4504
    %4744 = vmatpush1.bf16.msra.mxu0 %v4503
    %4745 = vmatprep.subr.bf16.mxu0 %v4508
    %4746 = vmatpush1.bf16.msra.mxu0 %v4507
    %4747 = vmatprep.subr.bf16.mxu0 %v4512
    %4748 = vmatpush1.bf16.msra.mxu0 %v4511
    %4749 = vmatprep.subr.bf16.mxu0 %v4516
    %4750 = vmatpush1.bf16.msra.mxu0 %v4515
    %4751 = vmatprep.subr.bf16.mxu0 %v4520
    %4752 = vmatpush1.bf16.msra.mxu0 %v4519
    %4753 = vmatprep.subr.bf16.mxu0 %v4524
    %4754 = vmatpush1.bf16.msra.mxu0 %v4523
    %4755 = vmatprep.subr.bf16.mxu0 %v4528
    %4756 = vmatpush1.bf16.msra.mxu0 %v4527
    %4757 = vmatprep.subr.bf16.mxu0 %v4532
    %4758 = vmatpush1.bf16.msra.mxu0 %v4531
    %4759 = vmatprep.subr.bf16.mxu0 %v4536
    %4760 = vmatpush1.bf16.msra.mxu0 %v4535
    %4761 = vmatprep.subr.bf16.mxu0 %v4540
    %4762 = vmatpush1.bf16.msra.mxu0 %v4539
    %4763 = vmatprep.mubr.bf16.mxu0 %v3607
    %4764 = vmatmul.mubr.bf16.gmra.mrb[0].mxu0 %v3606
    %v4765 = vpop.f32.mrb[0].mxu0
    %v4766 = vadd.f32 %v4239, %v4765
    %v4767 = vpop.f32.mrb[0].mxu0
    %v4768 = vadd.f32 %v4241, %v4767
    %v4769 = vpop.f32.mrb[0].mxu0
    %v4770 = vadd.f32 %v4243, %v4769
    %v4771 = vpop.f32.mrb[0].mxu0
    %v4772 = vadd.f32 %v4245, %v4771
    %4773 = vmatprep.mubr.bf16.mxu0 %v3610
    %4774 = vmatmul.mubr.bf16.gmra.mrb[0].mxu0 %v3609
    %v4775 = vpop.f32.mrb[0].mxu0
    %v4776 = vadd.f32 %v4249, %v4775
    %v4777 = vpop.f32.mrb[0].mxu0
    %v4778 = vadd.f32 %v4251, %v4777
    %v4779 = vpop.f32.mrb[0].mxu0
    %v4780 = vadd.f32 %v4253, %v4779
    %v4781 = vpop.f32.mrb[0].mxu0
    %v4782 = vadd.f32 %v4255, %v4781
    %4783 = vdwg.mxu0
    %4784 = vmatprep.subr.bf16.mxu0 %v4544
    %4785 = vmatpush1.bf16.msra.mxu0 %v4543
    %4786 = vmatprep.subr.bf16.mxu0 %v4548
    %4787 = vmatpush1.bf16.msra.mxu0 %v4547
    %4788 = vmatprep.subr.bf16.mxu0 0
    %4789 = vmatpush1.bf16.msra.mxu0 0
    %4790 = vmatprep.subr.bf16.mxu0 0
    %4791 = vmatpush1.bf16.msra.mxu0 0
    %4792 = vmatprep.subr.bf16.mxu0 0
    %4793 = vmatpush1.bf16.msra.mxu0 0
    %4794 = vmatprep.subr.bf16.mxu0 0
    %4795 = vmatpush1.bf16.msra.mxu0 0
    %4796 = vmatprep.subr.bf16.mxu0 0
    %4797 = vmatpush1.bf16.msra.mxu0 0
    %4798 = vmatprep.subr.bf16.mxu0 0
    %4799 = vmatpush1.bf16.msra.mxu0 0
    %4800 = vmatprep.subr.bf16.mxu0 0
    %4801 = vmatpush1.bf16.msra.mxu0 0
    %4802 = vmatprep.subr.bf16.mxu0 0
    %4803 = vmatpush1.bf16.msra.mxu0 0
    %4804 = vmatprep.subr.bf16.mxu0 0
    %4805 = vmatpush1.bf16.msra.mxu0 0
    %4806 = vmatprep.subr.bf16.mxu0 0
    %4807 = vmatpush1.bf16.msra.mxu0 0
    %4808 = vmatprep.subr.bf16.mxu0 0
    %4809 = vmatpush1.bf16.msra.mxu0 0
    %4810 = vmatprep.subr.bf16.mxu0 0
    %4811 = vmatpush1.bf16.msra.mxu0 0
    %4812 = vmatprep.subr.bf16.mxu0 0
    %4813 = vmatpush1.bf16.msra.mxu0 0
    %4814 = vmatprep.subr.bf16.mxu0 0
    %4815 = vmatpush1.bf16.msra.mxu0 0
    %4816 = vmatprep.mubr.bf16.mxu0 0
    %4817 = vmatmul.mubr.bf16.gmra.mrb[0].mxu0 %v4621
    %v4818 = vpop.f32.mrb[0].mxu0
    %v4819 = vadd.f32 %v4766, %v4818
    %v4820 = vpop.f32.mrb[0].mxu0
    %v4821 = vadd.f32 %v4768, %v4820
    %v4822 = vpop.f32.mrb[0].mxu0
    %v4823 = vadd.f32 %v4770, %v4822
    %v4824 = vpop.f32.mrb[0].mxu0
    %v4825 = vadd.f32 %v4772, %v4824
    %4826 = vmatprep.mubr.bf16.mxu0 0
    %4827 = vmatmul.mubr.bf16.gmra.mrb[0].mxu0 %v4623
    %v4828 = vpop.f32.mrb[0].mxu0
    %v4829 = vadd.f32 %v4776, %v4828
    %v4830 = vpop.f32.mrb[0].mxu0
    %v4831 = vadd.f32 %v4778, %v4830
    %v4832 = vpop.f32.mrb[0].mxu0
    %v4833 = vadd.f32 %v4780, %v4832
    %v4834 = vpop.f32.mrb[0].mxu0
    %v4835 = vadd.f32 %v4782, %v4834
    %4836 = vdwg.mxu0
    %v4837 = vld [vmem:[#allocation2] sm:$0xee]
    %v4838 = vld [vmem:[#allocation2 + $0x8] sm:$0xe]
    %s4839 = scalar_lea.vmem %s5, 1152
    %v4840 = vld [vmem:[%s4839] sm:$0xff]
    %v4841 = vld [vmem:[%s4839 + $0x8] sm:$0xff]
    %v4842 = vld [vmem:[%s4839 + $0x10] sm:$0xff]
    %v4843 = vld [vmem:[%s4839 + $0x18] sm:$0xff]
    %v4844 = vld [vmem:[%s4839 + $0x20] sm:$0xff]
    %v4845 = vld [vmem:[%s4839 + $0x28] sm:$0xff]
    %v4846 = vld [vmem:[%s4839 + $0x30] sm:$0xff]
    %v4847 = vld [vmem:[%s4839 + $0x38] sm:$0xff]
    %v4848 = vld [vmem:[%s4839 + $0x40] sm:$0xff]
    %v4849 = vld [vmem:[%s4839 + $0x48] sm:$0xff]
    %v4850 = vld [vmem:[%s4839 + $0x50] sm:$0xff]
    %v4851 = vld [vmem:[%s4839 + $0x58] sm:$0xff]
    %v4852 = vld [vmem:[%s4839 + $0x60] sm:$0xff]
    %v4853 = vld [vmem:[%s4839 + $0x68] sm:$0xff]
    %v4854 = vld [vmem:[%s4839 + $0x70] sm:$0xff]
    %v4855 = vld [vmem:[%s4839 + $0x78] sm:$0xff]
    %v4856 = vld [vmem:[%s4839 + $0x80] sm:$0xff]
    %v4857 = vld [vmem:[%s4839 + $0x88] sm:$0xff]
    %v4858 = vld [vmem:[%s4839 + $0x90] sm:$0xff]
    %v4859 = vld [vmem:[%s4839 + $0x98] sm:$0xff]
    %v4860 = vld [vmem:[%s4839 + $0xa0] sm:$0xff]
    %v4861 = vld [vmem:[%s4839 + $0xa8] sm:$0xff]
    %v4862 = vld [vmem:[%s4839 + $0xb0] sm:$0xff]
    %v4863 = vld [vmem:[%s4839 + $0xb8] sm:$0xff]
    %v4864 = vld [vmem:[%s4839 + $0xc0] sm:$0xff]
    %v4865 = vld [vmem:[%s4839 + $0xc8] sm:$0xff]
    %v4866 = vld [vmem:[%s4839 + $0xd0] sm:$0xff]
    %v4867 = vld [vmem:[%s4839 + $0xd8] sm:$0xff]
    %v4868 = vld [vmem:[%s4839 + $0xe0] sm:$0xff]
    %v4869 = vld [vmem:[%s4839 + $0xe8] sm:$0xff]
    %v4870 = vld [vmem:[%s4839 + $0xf0] sm:$0xff]
    %v4871 = vld [vmem:[%s4839 + $0xf8] sm:$0xff]
    %v4872 = vld [vmem:[%s4839 + $0x100] sm:$0xff]
    %v4873 = vld [vmem:[%s4839 + $0x108] sm:$0xff]
    %v4874 = vld [vmem:[%s4839 + $0x110] sm:$0xff]
    %v4875 = vld [vmem:[%s4839 + $0x118] sm:$0xff]
    %v4876 = vld [vmem:[%s4839 + $0x120] sm:$0xff]
    %v4877 = vld [vmem:[%s4839 + $0x128] sm:$0xff]
    %v4878 = vld [vmem:[%s4839 + $0x130] sm:$0xff]
    %v4879 = vld [vmem:[%s4839 + $0x138] sm:$0xff]
    %v4880 = vld [vmem:[%s4839 + $0x140] sm:$0xff]
    %v4881 = vld [vmem:[%s4839 + $0x148] sm:$0xff]
    %v4882 = vld [vmem:[%s4839 + $0x150] sm:$0xff]
    %v4883 = vld [vmem:[%s4839 + $0x158] sm:$0xff]
    %v4884 = vld [vmem:[%s4839 + $0x160] sm:$0xff]
    %v4885 = vld [vmem:[%s4839 + $0x168] sm:$0xff]
    %v4886 = vld [vmem:[%s4839 + $0x170] sm:$0xff]
    %v4887 = vld [vmem:[%s4839 + $0x178] sm:$0xff]
    %v4888 = vld [vmem:[%s4839 + $0x180] sm:$0xff]
    %v4889 = vld [vmem:[%s4839 + $0x188] sm:$0xff]
    %v4890 = vld [vmem:[%s4839 + $0x190] sm:$0xff]
    %v4891 = vld [vmem:[%s4839 + $0x198] sm:$0xff]
    %v4892 = vld [vmem:[%s4839 + $0x1a0] sm:$0xff]
    %v4893 = vld [vmem:[%s4839 + $0x1a8] sm:$0xff]
    %v4894 = vld [vmem:[%s4839 + $0x1b0] sm:$0xff]
    %v4895 = vld [vmem:[%s4839 + $0x1b8] sm:$0xff]
    %v4896 = vld [vmem:[%s4839 + $0x1c0] sm:$0xff]
    %v4897 = vld [vmem:[%s4839 + $0x1c8] sm:$0xff]
    %v4898 = vld [vmem:[%s4839 + $0x1d0] sm:$0xff]
    %v4899 = vld [vmem:[%s4839 + $0x1d8] sm:$0xff]
    %v4900 = vld [vmem:[%s4839 + $0x1e0] sm:$0xff]
    %v4901 = vld [vmem:[%s4839 + $0x1e8] sm:$0xff]
    %v4902 = vld [vmem:[%s4839 + $0x1f0] sm:$0xff]
    %v4903 = vld [vmem:[%s4839 + $0x1f8] sm:$0xff]
    %v4904 = vld [vmem:[%s4839 + $0x200] sm:$0xff]
    %v4905 = vld [vmem:[%s4839 + $0x208] sm:$0xff]
    %v4906 = vld [vmem:[%s4839 + $0x210] sm:$0xff]
    %v4907 = vld [vmem:[%s4839 + $0x218] sm:$0xff]
    %v4908 = vld [vmem:[%s4839 + $0x220] sm:$0xff]
    %v4909 = vld [vmem:[%s4839 + $0x228] sm:$0xff]
    %v4910 = vld [vmem:[%s4839 + $0x230] sm:$0xff]
    %v4911 = vld [vmem:[%s4839 + $0x238] sm:$0xff]
    %v4914 = vunpack.c.l.b16 %v4837
    %v4915 = vunpack.c.h.b16 %v4837
    %v4916 = vunpack.c.l.b16 %v4838
    %v4917 = vpack.c.b16 %v3594, %v4914
    %v4918 = vpack.c.b16 %v3595, %v4915
    %v4919 = vpack.c.b16 %v3596, %v4916
    %v4920 = vrot.slane %v4917, 1
    %v4921 = vrot.slane %v3609, 1
    %v4922 = vsel %vm542, %v4920, %v4921
    %v4923 = vrot.slane %v4918, 1
    %v4924 = vrot.slane %v3610, 1
    %v4925 = vsel %vm542, %v4923, %v4924
    %v4926 = vrot.slane %v4919, 1
    %v4927 = vrot.slane %v3611, 1
    %v4928 = vsel %vm542, %v4926, %v4927
    %v4929 = vrot.slane %v3612, 1
    %v4930 = vsel %vm542, %v4921, %v4929
    %v4931 = vrot.slane %v3613, 1
    %v4932 = vsel %vm542, %v4924, %v4931
    %v4933 = vrot.slane %v3614, 1
    %v4934 = vsel %vm542, %v4927, %v4933
    %v5011 = vunpack.c.l.b16 %v4840
    %v5012 = vunpack.c.h.b16 %v4840
    %v5013 = vunpack.c.l.b16 %v4841
    %v5014 = vunpack.c.h.b16 %v4841
    %v5015 = vunpack.c.l.b16 %v4842
    %v5016 = vunpack.c.h.b16 %v4842
    %v5017 = vunpack.c.l.b16 %v4843
    %v5018 = vunpack.c.h.b16 %v4843
    %v5019 = vunpack.c.l.b16 %v4844
    %v5020 = vunpack.c.h.b16 %v4844
    %v5021 = vunpack.c.l.b16 %v4845
    %v5022 = vunpack.c.h.b16 %v4845
    %v5023 = vunpack.c.l.b16 %v4846
    %v5024 = vunpack.c.h.b16 %v4846
    %v5025 = vunpack.c.l.b16 %v4847
    %v5026 = vunpack.c.h.b16 %v4847
    %v5027 = vunpack.c.l.b16 %v4848
    %v5028 = vunpack.c.h.b16 %v4848
    %v5029 = vunpack.c.l.b16 %v4849
    %v5030 = vunpack.c.h.b16 %v4849
    %v5031 = vunpack.c.l.b16 %v4850
    %v5032 = vunpack.c.h.b16 %v4850
    %v5033 = vunpack.c.l.b16 %v4851
    %v5034 = vunpack.c.h.b16 %v4851
    %v5035 = vunpack.c.l.b16 %v4852
    %v5036 = vunpack.c.h.b16 %v4852
    %v5037 = vunpack.c.l.b16 %v4853
    %v5038 = vunpack.c.h.b16 %v4853
    %v5039 = vunpack.c.l.b16 %v4854
    %v5040 = vunpack.c.h.b16 %v4854
    %v5041 = vunpack.c.l.b16 %v4855
    %v5042 = vunpack.c.h.b16 %v4855
    %v5043 = vunpack.c.l.b16 %v4856
    %v5044 = vunpack.c.h.b16 %v4856
    %v5045 = vunpack.c.l.b16 %v4857
    %v5046 = vunpack.c.h.b16 %v4857
    %v5047 = vunpack.c.l.b16 %v4858
    %v5048 = vunpack.c.h.b16 %v4858
    %v5049 = vunpack.c.l.b16 %v4859
    %v5050 = vunpack.c.h.b16 %v4859
    %v5051 = vunpack.c.l.b16 %v4860
    %v5052 = vunpack.c.h.b16 %v4860
    %v5053 = vunpack.c.l.b16 %v4861
    %v5054 = vunpack.c.h.b16 %v4861
    %v5055 = vunpack.c.l.b16 %v4862
    %v5056 = vunpack.c.h.b16 %v4862
    %v5057 = vunpack.c.l.b16 %v4863
    %v5058 = vunpack.c.h.b16 %v4863
    %v5059 = vunpack.c.l.b16 %v4864
    %v5060 = vunpack.c.h.b16 %v4864
    %v5061 = vunpack.c.l.b16 %v4865
    %v5062 = vunpack.c.h.b16 %v4865
    %v5063 = vunpack.c.l.b16 %v4866
    %v5064 = vunpack.c.h.b16 %v4866
    %v5065 = vunpack.c.l.b16 %v4867
    %v5066 = vunpack.c.h.b16 %v4867
    %v5067 = vunpack.c.l.b16 %v4868
    %v5068 = vunpack.c.h.b16 %v4868
    %v5069 = vunpack.c.l.b16 %v4869
    %v5070 = vunpack.c.h.b16 %v4869
    %v5071 = vunpack.c.l.b16 %v4870
    %v5072 = vunpack.c.h.b16 %v4870
    %v5073 = vunpack.c.l.b16 %v4871
    %v5074 = vunpack.c.h.b16 %v4871
    %v5075 = vunpack.c.l.b16 %v4872
    %v5076 = vunpack.c.h.b16 %v4872
    %v5077 = vunpack.c.l.b16 %v4873
    %v5078 = vunpack.c.h.b16 %v4873
    %v5079 = vunpack.c.l.b16 %v4874
    %v5080 = vunpack.c.h.b16 %v4874
    %v5081 = vunpack.c.l.b16 %v4875
    %v5082 = vunpack.c.h.b16 %v4875
    %v5083 = vunpack.c.l.b16 %v4876
    %v5084 = vunpack.c.h.b16 %v4876
    %v5085 = vunpack.c.l.b16 %v4877
    %v5086 = vunpack.c.h.b16 %v4877
    %v5087 = vunpack.c.l.b16 %v4878
    %v5088 = vunpack.c.h.b16 %v4878
    %v5089 = vunpack.c.l.b16 %v4879
    %v5090 = vunpack.c.h.b16 %v4879
    %v5091 = vunpack.c.l.b16 %v4880
    %v5092 = vunpack.c.h.b16 %v4880
    %v5093 = vunpack.c.l.b16 %v4881
    %v5094 = vunpack.c.h.b16 %v4881
    %v5095 = vunpack.c.l.b16 %v4882
    %v5096 = vunpack.c.h.b16 %v4882
    %v5097 = vunpack.c.l.b16 %v4883
    %v5098 = vunpack.c.h.b16 %v4883
    %v5099 = vunpack.c.l.b16 %v4884
    %v5100 = vunpack.c.h.b16 %v4884
    %v5101 = vunpack.c.l.b16 %v4885
    %v5102 = vunpack.c.h.b16 %v4885
    %v5103 = vunpack.c.l.b16 %v4886
    %v5104 = vunpack.c.h.b16 %v4886
    %v5105 = vunpack.c.l.b16 %v4887
    %v5106 = vunpack.c.h.b16 %v4887
    %v5107 = vunpack.c.l.b16 %v4888
    %v5108 = vunpack.c.h.b16 %v4888
    %v5109 = vunpack.c.l.b16 %v4889
    %v5110 = vunpack.c.h.b16 %v4889
    %v5111 = vunpack.c.l.b16 %v4890
    %v5112 = vunpack.c.h.b16 %v4890
    %v5113 = vunpack.c.l.b16 %v4891
    %v5114 = vunpack.c.h.b16 %v4891
    %v5115 = vunpack.c.l.b16 %v4892
    %v5116 = vunpack.c.h.b16 %v4892
    %v5117 = vunpack.c.l.b16 %v4893
    %v5118 = vunpack.c.h.b16 %v4893
    %v5119 = vunpack.c.l.b16 %v4894
    %v5120 = vunpack.c.h.b16 %v4894
    %v5121 = vunpack.c.l.b16 %v4895
    %v5122 = vunpack.c.h.b16 %v4895
    %v5123 = vunpack.c.l.b16 %v4896
    %v5124 = vunpack.c.h.b16 %v4896
    %v5125 = vunpack.c.l.b16 %v4897
    %v5126 = vunpack.c.h.b16 %v4897
    %v5127 = vunpack.c.l.b16 %v4898
    %v5128 = vunpack.c.h.b16 %v4898
    %v5129 = vunpack.c.l.b16 %v4899
    %v5130 = vunpack.c.h.b16 %v4899
    %v5131 = vunpack.c.l.b16 %v4900
    %v5132 = vunpack.c.h.b16 %v4900
    %v5133 = vunpack.c.l.b16 %v4901
    %v5134 = vunpack.c.h.b16 %v4901
    %v5135 = vunpack.c.l.b16 %v4902
    %v5136 = vunpack.c.h.b16 %v4902
    %v5137 = vunpack.c.l.b16 %v4903
    %v5138 = vunpack.c.h.b16 %v4903
    %v5139 = vunpack.c.l.b16 %v4904
    %v5140 = vunpack.c.h.b16 %v4904
    %v5141 = vunpack.c.l.b16 %v4905
    %v5142 = vunpack.c.h.b16 %v4905
    %v5143 = vunpack.c.l.b16 %v4906
    %v5144 = vunpack.c.h.b16 %v4906
    %v5145 = vunpack.c.l.b16 %v4907
    %v5146 = vunpack.c.h.b16 %v4907
    %v5147 = vunpack.c.l.b16 %v4908
    %v5148 = vunpack.c.h.b16 %v4908
    %v5149 = vunpack.c.l.b16 %v4909
    %v5150 = vunpack.c.h.b16 %v4909
    %v5151 = vunpack.c.l.b16 %v4910
    %v5152 = vunpack.c.h.b16 %v4910
    %v5153 = vunpack.c.l.b16 %v4911
    %v5154 = vunpack.c.h.b16 %v4911
    %v5155 = vpack.c.b16 %v5015, %v5011
    %v5156 = vpack.c.b16 %v5016, %v5012
    %v5157 = vpack.c.b16 %v5017, %v5013
    %v5158 = vpack.c.b16 %v5018, %v5014
    %v5159 = vpack.c.b16 %v5023, %v5019
    %v5160 = vpack.c.b16 %v5024, %v5020
    %v5161 = vpack.c.b16 %v5025, %v5021
    %v5162 = vpack.c.b16 %v5026, %v5022
    %v5163 = vpack.c.b16 %v5031, %v5027
    %v5164 = vpack.c.b16 %v5032, %v5028
    %v5165 = vpack.c.b16 %v5033, %v5029
    %v5166 = vpack.c.b16 %v5034, %v5030
    %v5167 = vpack.c.b16 %v5039, %v5035
    %v5168 = vpack.c.b16 %v5040, %v5036
    %v5169 = vpack.c.b16 %v5041, %v5037
    %v5170 = vpack.c.b16 %v5042, %v5038
    %v5171 = vpack.c.b16 %v5047, %v5043
    %v5172 = vpack.c.b16 %v5048, %v5044
    %v5173 = vpack.c.b16 %v5049, %v5045
    %v5174 = vpack.c.b16 %v5050, %v5046
    %v5175 = vpack.c.b16 %v5055, %v5051
    %v5176 = vpack.c.b16 %v5056, %v5052
    %v5177 = vpack.c.b16 %v5057, %v5053
    %v5178 = vpack.c.b16 %v5058, %v5054
    %v5179 = vpack.c.b16 %v5063, %v5059
    %v5180 = vpack.c.b16 %v5064, %v5060
    %v5181 = vpack.c.b16 %v5065, %v5061
    %v5182 = vpack.c.b16 %v5066, %v5062
    %v5183 = vpack.c.b16 %v5071, %v5067
    %v5184 = vpack.c.b16 %v5072, %v5068
    %v5185 = vpack.c.b16 %v5073, %v5069
    %v5186 = vpack.c.b16 %v5074, %v5070
    %v5187 = vpack.c.b16 %v5079, %v5075
    %v5188 = vpack.c.b16 %v5080, %v5076
    %v5189 = vpack.c.b16 %v5081, %v5077
    %v5190 = vpack.c.b16 %v5082, %v5078
    %v5191 = vpack.c.b16 %v5087, %v5083
    %v5192 = vpack.c.b16 %v5088, %v5084
    %v5193 = vpack.c.b16 %v5089, %v5085
    %v5194 = vpack.c.b16 %v5090, %v5086
    %v5195 = vpack.c.b16 %v5095, %v5091
    %v5196 = vpack.c.b16 %v5096, %v5092
    %v5197 = vpack.c.b16 %v5097, %v5093
    %v5198 = vpack.c.b16 %v5098, %v5094
    %v5199 = vpack.c.b16 %v5103, %v5099
    %v5200 = vpack.c.b16 %v5104, %v5100
    %v5201 = vpack.c.b16 %v5105, %v5101
    %v5202 = vpack.c.b16 %v5106, %v5102
    %v5203 = vpack.c.b16 %v5111, %v5107
    %v5204 = vpack.c.b16 %v5112, %v5108
    %v5205 = vpack.c.b16 %v5113, %v5109
    %v5206 = vpack.c.b16 %v5114, %v5110
    %v5207 = vpack.c.b16 %v5119, %v5115
    %v5208 = vpack.c.b16 %v5120, %v5116
    %v5209 = vpack.c.b16 %v5121, %v5117
    %v5210 = vpack.c.b16 %v5122, %v5118
    %v5211 = vpack.c.b16 %v5127, %v5123
    %v5212 = vpack.c.b16 %v5128, %v5124
    %v5213 = vpack.c.b16 %v5129, %v5125
    %v5214 = vpack.c.b16 %v5130, %v5126
    %v5215 = vpack.c.b16 %v5135, %v5131
    %v5216 = vpack.c.b16 %v5136, %v5132
    %v5217 = vpack.c.b16 %v5137, %v5133
    %v5218 = vpack.c.b16 %v5138, %v5134
    %v5219 = vpack.c.b16 %v5143, %v5139
    %v5220 = vpack.c.b16 %v5144, %v5140
    %v5221 = vpack.c.b16 %v5145, %v5141
    %v5222 = vpack.c.b16 %v5146, %v5142
    %v5223 = vpack.c.b16 %v5151, %v5147
    %v5224 = vpack.c.b16 %v5152, %v5148
    %v5225 = vpack.c.b16 %v5153, %v5149
    %v5226 = vpack.c.b16 %v5154, %v5150
    %v5300 = vsel %vm172, %v4928, 0
    %v5303 = vsel %vm172, %v4934, 0
    %5305 = vmatprep.subr.bf16.mxu0 %v5156
    %5306 = vmatpush1.bf16.msra.mxu0 %v5155
    %5307 = vmatprep.subr.bf16.mxu0 %v5160
    %5308 = vmatpush1.bf16.msra.mxu0 %v5159
    %5309 = vmatprep.subr.bf16.mxu0 %v5164
    %5310 = vmatpush1.bf16.msra.mxu0 %v5163
    %5311 = vmatprep.subr.bf16.mxu0 %v5168
    %5312 = vmatpush1.bf16.msra.mxu0 %v5167
    %5313 = vmatprep.subr.bf16.mxu0 %v5172
    %5314 = vmatpush1.bf16.msra.mxu0 %v5171
    %5315 = vmatprep.subr.bf16.mxu0 %v5176
    %5316 = vmatpush1.bf16.msra.mxu0 %v5175
    %5317 = vmatprep.subr.bf16.mxu0 %v5180
    %5318 = vmatpush1.bf16.msra.mxu0 %v5179
    %5319 = vmatprep.subr.bf16.mxu0 %v5184
    %5320 = vmatpush1.bf16.msra.mxu0 %v5183
    %5321 = vmatprep.subr.bf16.mxu0 %v5188
    %5322 = vmatpush1.bf16.msra.mxu0 %v5187
    %5323 = vmatprep.subr.bf16.mxu0 %v5192
    %5324 = vmatpush1.bf16.msra.mxu0 %v5191
    %5325 = vmatprep.subr.bf16.mxu0 %v5196
    %5326 = vmatpush1.bf16.msra.mxu0 %v5195
    %5327 = vmatprep.subr.bf16.mxu0 %v5200
    %5328 = vmatpush1.bf16.msra.mxu0 %v5199
    %5329 = vmatprep.subr.bf16.mxu0 %v5204
    %5330 = vmatpush1.bf16.msra.mxu0 %v5203
    %5331 = vmatprep.subr.bf16.mxu0 %v5208
    %5332 = vmatpush1.bf16.msra.mxu0 %v5207
    %5333 = vmatprep.subr.bf16.mxu0 %v5212
    %5334 = vmatpush1.bf16.msra.mxu0 %v5211
    %5335 = vmatprep.subr.bf16.mxu0 %v5216
    %5336 = vmatpush1.bf16.msra.mxu0 %v5215
    %5337 = vmatprep.mubr.bf16.mxu0 %v4925
    %5338 = vmatmul.mubr.bf16.gmra.mrb[0].mxu0 %v4922
    %v5339 = vpop.f32.mrb[0].mxu0
    %v5340 = vadd.f32 0.0, %v5339
    %v5341 = vpop.f32.mrb[0].mxu0
    %v5342 = vadd.f32 0.0, %v5341
    %v5343 = vpop.f32.mrb[0].mxu0
    %v5344 = vadd.f32 0.0, %v5343
    %v5345 = vpop.f32.mrb[0].mxu0
    %v5346 = vadd.f32 0.0, %v5345
    %5347 = vmatprep.mubr.bf16.mxu0 %v4932
    %5348 = vmatmul.mubr.bf16.gmra.mrb[0].mxu0 %v4930
    %v5349 = vpop.f32.mrb[0].mxu0
    %v5350 = vadd.f32 0.0, %v5349
    %v5351 = vpop.f32.mrb[0].mxu0
    %v5352 = vadd.f32 0.0, %v5351
    %v5353 = vpop.f32.mrb[0].mxu0
    %v5354 = vadd.f32 0.0, %v5353
    %v5355 = vpop.f32.mrb[0].mxu0
    %v5356 = vadd.f32 0.0, %v5355
    %5357 = vdwg.mxu0
    %5358 = vmatprep.subr.bf16.mxu0 %v5220
    %5359 = vmatpush1.bf16.msra.mxu0 %v5219
    %5360 = vmatprep.subr.bf16.mxu0 %v5224
    %5361 = vmatpush1.bf16.msra.mxu0 %v5223
    %5362 = vmatprep.subr.bf16.mxu0 0
    %5363 = vmatpush1.bf16.msra.mxu0 0
    %5364 = vmatprep.subr.bf16.mxu0 0
    %5365 = vmatpush1.bf16.msra.mxu0 0
    %5366 = vmatprep.subr.bf16.mxu0 0
    %5367 = vmatpush1.bf16.msra.mxu0 0
    %5368 = vmatprep.subr.bf16.mxu0 0
    %5369 = vmatpush1.bf16.msra.mxu0 0
    %5370 = vmatprep.subr.bf16.mxu0 0
    %5371 = vmatpush1.bf16.msra.mxu0 0
    %5372 = vmatprep.subr.bf16.mxu0 0
    %5373 = vmatpush1.bf16.msra.mxu0 0
    %5374 = vmatprep.subr.bf16.mxu0 0
    %5375 = vmatpush1.bf16.msra.mxu0 0
    %5376 = vmatprep.subr.bf16.mxu0 0
    %5377 = vmatpush1.bf16.msra.mxu0 0
    %5378 = vmatprep.subr.bf16.mxu0 0
    %5379 = vmatpush1.bf16.msra.mxu0 0
    %5380 = vmatprep.subr.bf16.mxu0 0
    %5381 = vmatpush1.bf16.msra.mxu0 0
    %5382 = vmatprep.subr.bf16.mxu0 0
    %5383 = vmatpush1.bf16.msra.mxu0 0
    %5384 = vmatprep.subr.bf16.mxu0 0
    %5385 = vmatpush1.bf16.msra.mxu0 0
    %5386 = vmatprep.subr.bf16.mxu0 0
    %5387 = vmatpush1.bf16.msra.mxu0 0
    %5388 = vmatprep.subr.bf16.mxu0 0
    %5389 = vmatpush1.bf16.msra.mxu0 0
    %5390 = vmatprep.mubr.bf16.mxu0 0
    %5391 = vmatmul.mubr.bf16.gmra.mrb[0].mxu0 %v5300
    %v5392 = vpop.f32.mrb[0].mxu0
    %v5393 = vadd.f32 %v5340, %v5392
    %v5394 = vpop.f32.mrb[0].mxu0
    %v5395 = vadd.f32 %v5342, %v5394
    %v5396 = vpop.f32.mrb[0].mxu0
    %v5397 = vadd.f32 %v5344, %v5396
    %v5398 = vpop.f32.mrb[0].mxu0
    %v5399 = vadd.f32 %v5346, %v5398
    %5400 = vmatprep.mubr.bf16.mxu0 0
    %5401 = vmatmul.mubr.bf16.gmra.mrb[0].mxu0 %v5303
    %v5402 = vpop.f32.mrb[0].mxu0
    %v5403 = vadd.f32 %v5350, %v5402
    %v5404 = vpop.f32.mrb[0].mxu0
    %v5405 = vadd.f32 %v5352, %v5404
    %v5406 = vpop.f32.mrb[0].mxu0
    %v5407 = vadd.f32 %v5354, %v5406
    %v5408 = vpop.f32.mrb[0].mxu0
    %v5409 = vadd.f32 %v5356, %v5408
    %5410 = vdwg.mxu0
    %5411 = vmatprep.subr.bf16.mxu0 %v5158
    %5412 = vmatpush1.bf16.msra.mxu0 %v5157
    %5413 = vmatprep.subr.bf16.mxu0 %v5162
    %5414 = vmatpush1.bf16.msra.mxu0 %v5161
    %5415 = vmatprep.subr.bf16.mxu0 %v5166
    %5416 = vmatpush1.bf16.msra.mxu0 %v5165
    %5417 = vmatprep.subr.bf16.mxu0 %v5170
    %5418 = vmatpush1.bf16.msra.mxu0 %v5169
    %5419 = vmatprep.subr.bf16.mxu0 %v5174
    %5420 = vmatpush1.bf16.msra.mxu0 %v5173
    %5421 = vmatprep.subr.bf16.mxu0 %v5178
    %5422 = vmatpush1.bf16.msra.mxu0 %v5177
    %5423 = vmatprep.subr.bf16.mxu0 %v5182
    %5424 = vmatpush1.bf16.msra.mxu0 %v5181
    %5425 = vmatprep.subr.bf16.mxu0 %v5186
    %5426 = vmatpush1.bf16.msra.mxu0 %v5185
    %5427 = vmatprep.subr.bf16.mxu0 %v5190
    %5428 = vmatpush1.bf16.msra.mxu0 %v5189
    %5429 = vmatprep.subr.bf16.mxu0 %v5194
    %5430 = vmatpush1.bf16.msra.mxu0 %v5193
    %5431 = vmatprep.subr.bf16.mxu0 %v5198
    %5432 = vmatpush1.bf16.msra.mxu0 %v5197
    %5433 = vmatprep.subr.bf16.mxu0 %v5202
    %5434 = vmatpush1.bf16.msra.mxu0 %v5201
    %5435 = vmatprep.subr.bf16.mxu0 %v5206
    %5436 = vmatpush1.bf16.msra.mxu0 %v5205
    %5437 = vmatprep.subr.bf16.mxu0 %v5210
    %5438 = vmatpush1.bf16.msra.mxu0 %v5209
    %5439 = vmatprep.subr.bf16.mxu0 %v5214
    %5440 = vmatpush1.bf16.msra.mxu0 %v5213
    %5441 = vmatprep.subr.bf16.mxu0 %v5218
    %5442 = vmatpush1.bf16.msra.mxu0 %v5217
    %5443 = vmatprep.mubr.bf16.mxu0 %v4925
    %5444 = vmatmul.mubr.bf16.gmra.mrb[0].mxu0 %v4922
    %v5445 = vpop.f32.mrb[0].mxu0
    %v5446 = vadd.f32 0.0, %v5445
    %v5447 = vpop.f32.mrb[0].mxu0
    %v5448 = vadd.f32 0.0, %v5447
    %v5449 = vpop.f32.mrb[0].mxu0
    %v5450 = vadd.f32 0.0, %v5449
    %v5451 = vpop.f32.mrb[0].mxu0
    %v5452 = vadd.f32 0.0, %v5451
    %5453 = vmatprep.mubr.bf16.mxu0 %v4932
    %5454 = vmatmul.mubr.bf16.gmra.mrb[0].mxu0 %v4930
    %v5455 = vpop.f32.mrb[0].mxu0
    %v5456 = vadd.f32 0.0, %v5455
    %v5457 = vpop.f32.mrb[0].mxu0
    %v5458 = vadd.f32 0.0, %v5457
    %v5459 = vpop.f32.mrb[0].mxu0
    %v5460 = vadd.f32 0.0, %v5459
    %v5461 = vpop.f32.mrb[0].mxu0
    %v5462 = vadd.f32 0.0, %v5461
    %5463 = vdwg.mxu0
    %5464 = vmatprep.subr.bf16.mxu0 %v5222
    %5465 = vmatpush1.bf16.msra.mxu0 %v5221
    %5466 = vmatprep.subr.bf16.mxu0 %v5226
    %5467 = vmatpush1.bf16.msra.mxu0 %v5225
    %5468 = vmatprep.subr.bf16.mxu0 0
    %5469 = vmatpush1.bf16.msra.mxu0 0
    %5470 = vmatprep.subr.bf16.mxu0 0
    %5471 = vmatpush1.bf16.msra.mxu0 0
    %5472 = vmatprep.subr.bf16.mxu0 0
    %5473 = vmatpush1.bf16.msra.mxu0 0
    %5474 = vmatprep.subr.bf16.mxu0 0
    %5475 = vmatpush1.bf16.msra.mxu0 0
    %5476 = vmatprep.subr.bf16.mxu0 0
    %5477 = vmatpush1.bf16.msra.mxu0 0
    %5478 = vmatprep.subr.bf16.mxu0 0
    %5479 = vmatpush1.bf16.msra.mxu0 0
    %5480 = vmatprep.subr.bf16.mxu0 0
    %5481 = vmatpush1.bf16.msra.mxu0 0
    %5482 = vmatprep.subr.bf16.mxu0 0
    %5483 = vmatpush1.bf16.msra.mxu0 0
    %5484 = vmatprep.subr.bf16.mxu0 0
    %5485 = vmatpush1.bf16.msra.mxu0 0
    %5486 = vmatprep.subr.bf16.mxu0 0
    %5487 = vmatpush1.bf16.msra.mxu0 0
    %5488 = vmatprep.subr.bf16.mxu0 0
    %5489 = vmatpush1.bf16.msra.mxu0 0
    %5490 = vmatprep.subr.bf16.mxu0 0
    %5491 = vmatpush1.bf16.msra.mxu0 0
    %5492 = vmatprep.subr.bf16.mxu0 0
    %5493 = vmatpush1.bf16.msra.mxu0 0
    %5494 = vmatprep.subr.bf16.mxu0 0
    %5495 = vmatpush1.bf16.msra.mxu0 0
    %5496 = vmatprep.mubr.bf16.mxu0 0
    %5497 = vmatmul.mubr.bf16.gmra.mrb[0].mxu0 %v5300
    %v5498 = vpop.f32.mrb[0].mxu0
    %v5499 = vadd.f32 %v5446, %v5498
    %v5500 = vpop.f32.mrb[0].mxu0
    %v5501 = vadd.f32 %v5448, %v5500
    %v5502 = vpop.f32.mrb[0].mxu0
    %v5503 = vadd.f32 %v5450, %v5502
    %v5504 = vpop.f32.mrb[0].mxu0
    %v5505 = vadd.f32 %v5452, %v5504
    %5506 = vmatprep.mubr.bf16.mxu0 0
    %5507 = vmatmul.mubr.bf16.gmra.mrb[0].mxu0 %v5303
    %v5508 = vpop.f32.mrb[0].mxu0
    %v5509 = vadd.f32 %v5456, %v5508
    %v5510 = vpop.f32.mrb[0].mxu0
    %v5511 = vadd.f32 %v5458, %v5510
    %v5512 = vpop.f32.mrb[0].mxu0
    %v5513 = vadd.f32 %v5460, %v5512
    %v5514 = vpop.f32.mrb[0].mxu0
    %v5515 = vadd.f32 %v5462, %v5514
    %5516 = vdwg.mxu0
    %v5517 = vadd.f32 %v4713, %v5393
    %v5518 = vadd.f32 %v4715, %v5395
    %v5519 = vadd.f32 %v4819, %v5499
    %v5520 = vadd.f32 %v4821, %v5501
    %v5521 = vadd.f32 %v4717, %v5397
    %v5522 = vadd.f32 %v4719, %v5399
    %v5523 = vadd.f32 %v4823, %v5503
    %v5524 = vadd.f32 %v4825, %v5505
    %v5525 = vadd.f32 %v4723, %v5403
    %v5526 = vadd.f32 %v4725, %v5405
    %v5527 = vadd.f32 %v4829, %v5509
    %v5528 = vadd.f32 %v4831, %v5511
    %v5529 = vadd.f32 %v4727, %v5407
    %v5530 = vadd.f32 %v4729, %v5409
    %v5531 = vadd.f32 %v4833, %v5513
    %v5532 = vadd.f32 %v4835, %v5515
    %v5533 = vld [vmem:[#allocation2 + $0x30] sm:$0x33]
    %v5534 = vld [vmem:[#allocation2 + $0x38] sm:$0x3]
    %s5535 = scalar_lea.vmem %s5, 1728
    %v5536 = vld [vmem:[%s5535] sm:$0xff]
    %v5537 = vld [vmem:[%s5535 + $0x8] sm:$0xff]
    %v5538 = vld [vmem:[%s5535 + $0x10] sm:$0xff]
    %v5539 = vld [vmem:[%s5535 + $0x18] sm:$0xff]
    %v5540 = vld [vmem:[%s5535 + $0x20] sm:$0xff]
    %v5541 = vld [vmem:[%s5535 + $0x28] sm:$0xff]
    %v5542 = vld [vmem:[%s5535 + $0x30] sm:$0xff]
    %v5543 = vld [vmem:[%s5535 + $0x38] sm:$0xff]
    %v5544 = vld [vmem:[%s5535 + $0x40] sm:$0xff]
    %v5545 = vld [vmem:[%s5535 + $0x48] sm:$0xff]
    %v5546 = vld [vmem:[%s5535 + $0x50] sm:$0xff]
    %v5547 = vld [vmem:[%s5535 + $0x58] sm:$0xff]
    %v5548 = vld [vmem:[%s5535 + $0x60] sm:$0xff]
    %v5549 = vld [vmem:[%s5535 + $0x68] sm:$0xff]
    %v5550 = vld [vmem:[%s5535 + $0x70] sm:$0xff]
    %v5551 = vld [vmem:[%s5535 + $0x78] sm:$0xff]
    %v5552 = vld [vmem:[%s5535 + $0x80] sm:$0xff]
    %v5553 = vld [vmem:[%s5535 + $0x88] sm:$0xff]
    %v5554 = vld [vmem:[%s5535 + $0x90] sm:$0xff]
    %v5555 = vld [vmem:[%s5535 + $0x98] sm:$0xff]
    %v5556 = vld [vmem:[%s5535 + $0xa0] sm:$0xff]
    %v5557 = vld [vmem:[%s5535 + $0xa8] sm:$0xff]
    %v5558 = vld [vmem:[%s5535 + $0xb0] sm:$0xff]
    %v5559 = vld [vmem:[%s5535 + $0xb8] sm:$0xff]
    %v5560 = vld [vmem:[%s5535 + $0xc0] sm:$0xff]
    %v5561 = vld [vmem:[%s5535 + $0xc8] sm:$0xff]
    %v5562 = vld [vmem:[%s5535 + $0xd0] sm:$0xff]
    %v5563 = vld [vmem:[%s5535 + $0xd8] sm:$0xff]
    %v5564 = vld [vmem:[%s5535 + $0xe0] sm:$0xff]
    %v5565 = vld [vmem:[%s5535 + $0xe8] sm:$0xff]
    %v5566 = vld [vmem:[%s5535 + $0xf0] sm:$0xff]
    %v5567 = vld [vmem:[%s5535 + $0xf8] sm:$0xff]
    %v5568 = vld [vmem:[%s5535 + $0x100] sm:$0xff]
    %v5569 = vld [vmem:[%s5535 + $0x108] sm:$0xff]
    %v5570 = vld [vmem:[%s5535 + $0x110] sm:$0xff]
    %v5571 = vld [vmem:[%s5535 + $0x118] sm:$0xff]
    %v5572 = vld [vmem:[%s5535 + $0x120] sm:$0xff]
    %v5573 = vld [vmem:[%s5535 + $0x128] sm:$0xff]
    %v5574 = vld [vmem:[%s5535 + $0x130] sm:$0xff]
    %v5575 = vld [vmem:[%s5535 + $0x138] sm:$0xff]
    %v5576 = vld [vmem:[%s5535 + $0x140] sm:$0xff]
    %v5577 = vld [vmem:[%s5535 + $0x148] sm:$0xff]
    %v5578 = vld [vmem:[%s5535 + $0x150] sm:$0xff]
    %v5579 = vld [vmem:[%s5535 + $0x158] sm:$0xff]
    %v5580 = vld [vmem:[%s5535 + $0x160] sm:$0xff]
    %v5581 = vld [vmem:[%s5535 + $0x168] sm:$0xff]
    %v5582 = vld [vmem:[%s5535 + $0x170] sm:$0xff]
    %v5583 = vld [vmem:[%s5535 + $0x178] sm:$0xff]
    %v5584 = vld [vmem:[%s5535 + $0x180] sm:$0xff]
    %v5585 = vld [vmem:[%s5535 + $0x188] sm:$0xff]
    %v5586 = vld [vmem:[%s5535 + $0x190] sm:$0xff]
    %v5587 = vld [vmem:[%s5535 + $0x198] sm:$0xff]
    %v5588 = vld [vmem:[%s5535 + $0x1a0] sm:$0xff]
    %v5589 = vld [vmem:[%s5535 + $0x1a8] sm:$0xff]
    %v5590 = vld [vmem:[%s5535 + $0x1b0] sm:$0xff]
    %v5591 = vld [vmem:[%s5535 + $0x1b8] sm:$0xff]
    %v5592 = vld [vmem:[%s5535 + $0x1c0] sm:$0xff]
    %v5593 = vld [vmem:[%s5535 + $0x1c8] sm:$0xff]
    %v5594 = vld [vmem:[%s5535 + $0x1d0] sm:$0xff]
    %v5595 = vld [vmem:[%s5535 + $0x1d8] sm:$0xff]
    %v5596 = vld [vmem:[%s5535 + $0x1e0] sm:$0xff]
    %v5597 = vld [vmem:[%s5535 + $0x1e8] sm:$0xff]
    %v5598 = vld [vmem:[%s5535 + $0x1f0] sm:$0xff]
    %v5599 = vld [vmem:[%s5535 + $0x1f8] sm:$0xff]
    %v5600 = vld [vmem:[%s5535 + $0x200] sm:$0xff]
    %v5601 = vld [vmem:[%s5535 + $0x208] sm:$0xff]
    %v5602 = vld [vmem:[%s5535 + $0x210] sm:$0xff]
    %v5603 = vld [vmem:[%s5535 + $0x218] sm:$0xff]
    %v5604 = vld [vmem:[%s5535 + $0x220] sm:$0xff]
    %v5605 = vld [vmem:[%s5535 + $0x228] sm:$0xff]
    %v5606 = vld [vmem:[%s5535 + $0x230] sm:$0xff]
    %v5607 = vld [vmem:[%s5535 + $0x238] sm:$0xff]
    %v5610 = vunpack.c.l.b16 %v5533
    %v5611 = vunpack.c.h.b16 %v5533
    %v5612 = vunpack.c.l.b16 %v5534
    %v5613 = vpack.c.b16 %v5610, %v5610
    %v5614 = vpack.c.b16 %v5611, %v5611
    %v5615 = vpack.c.b16 %v5612, %v5612
    %v5617 = vshrl.u32 %v4917, 16
    %v5619 = vrot.slane %v5617, 1
    %v5620 = vshll.u32 %v4917, 16
    %v5622 = vrot.slane %v5620, 2
    %v5623 = vor.u32 %v5619, %v5622
    %v5624 = vrot.slane %v3651, 1
    %v5625 = vrot.slane %v3623, 2
    %v5626 = vor.u32 %v5624, %v5625
    %v5627 = vsel %vm793, %v5623, %v5626
    %v5629 = vshrl.u32 %v4918, 16
    %v5631 = vrot.slane %v5629, 1
    %v5632 = vshll.u32 %v4918, 16
    %v5634 = vrot.slane %v5632, 2
    %v5635 = vor.u32 %v5631, %v5634
    %v5636 = vrot.slane %v3659, 1
    %v5637 = vrot.slane %v3635, 2
    %v5638 = vor.u32 %v5636, %v5637
    %v5639 = vsel %vm793, %v5635, %v5638
    %v5641 = vshrl.u32 %v4919, 16
    %v5643 = vrot.slane %v5641, 1
    %v5644 = vshll.u32 %v4919, 16
    %v5646 = vrot.slane %v5644, 2
    %v5647 = vor.u32 %v5643, %v5646
    %v5648 = vrot.slane %v3667, 1
    %v5649 = vrot.slane %v3647, 2
    %v5650 = vor.u32 %v5648, %v5649
    %v5651 = vsel %vm793, %v5647, %v5650
    %v5653 = vshrl.u32 %v5613, 16
    %v5655 = vrot.slane %v5653, 1
    %v5656 = vshll.u32 %v5613, 16
    %v5658 = vrot.slane %v5656, 2
    %v5659 = vor.u32 %v5655, %v5658
    %v5660 = vsel %vm793, %v5626, %v5659
    %v5662 = vshrl.u32 %v5614, 16
    %v5664 = vrot.slane %v5662, 1
    %v5665 = vshll.u32 %v5614, 16
    %v5667 = vrot.slane %v5665, 2
    %v5668 = vor.u32 %v5664, %v5667
    %v5669 = vsel %vm793, %v5638, %v5668
    %v5671 = vshrl.u32 %v5615, 16
    %v5673 = vrot.slane %v5671, 1
    %v5674 = vshll.u32 %v5615, 16
    %v5676 = vrot.slane %v5674, 2
    %v5677 = vor.u32 %v5673, %v5676
    %v5678 = vsel %vm793, %v5650, %v5677
    %v5755 = vunpack.c.l.b16 %v5536
    %v5756 = vunpack.c.h.b16 %v5536
    %v5757 = vunpack.c.l.b16 %v5537
    %v5758 = vunpack.c.h.b16 %v5537
    %v5759 = vunpack.c.l.b16 %v5538
    %v5760 = vunpack.c.h.b16 %v5538
    %v5761 = vunpack.c.l.b16 %v5539
    %v5762 = vunpack.c.h.b16 %v5539
    %v5763 = vunpack.c.l.b16 %v5540
    %v5764 = vunpack.c.h.b16 %v5540
    %v5765 = vunpack.c.l.b16 %v5541
    %v5766 = vunpack.c.h.b16 %v5541
    %v5767 = vunpack.c.l.b16 %v5542
    %v5768 = vunpack.c.h.b16 %v5542
    %v5769 = vunpack.c.l.b16 %v5543
    %v5770 = vunpack.c.h.b16 %v5543
    %v5771 = vunpack.c.l.b16 %v5544
    %v5772 = vunpack.c.h.b16 %v5544
    %v5773 = vunpack.c.l.b16 %v5545
    %v5774 = vunpack.c.h.b16 %v5545
    %v5775 = vunpack.c.l.b16 %v5546
    %v5776 = vunpack.c.h.b16 %v5546
    %v5777 = vunpack.c.l.b16 %v5547
    %v5778 = vunpack.c.h.b16 %v5547
    %v5779 = vunpack.c.l.b16 %v5548
    %v5780 = vunpack.c.h.b16 %v5548
    %v5781 = vunpack.c.l.b16 %v5549
    %v5782 = vunpack.c.h.b16 %v5549
    %v5783 = vunpack.c.l.b16 %v5550
    %v5784 = vunpack.c.h.b16 %v5550
    %v5785 = vunpack.c.l.b16 %v5551
    %v5786 = vunpack.c.h.b16 %v5551
    %v5787 = vunpack.c.l.b16 %v5552
    %v5788 = vunpack.c.h.b16 %v5552
    %v5789 = vunpack.c.l.b16 %v5553
    %v5790 = vunpack.c.h.b16 %v5553
    %v5791 = vunpack.c.l.b16 %v5554
    %v5792 = vunpack.c.h.b16 %v5554
    %v5793 = vunpack.c.l.b16 %v5555
    %v5794 = vunpack.c.h.b16 %v5555
    %v5795 = vunpack.c.l.b16 %v5556
    %v5796 = vunpack.c.h.b16 %v5556
    %v5797 = vunpack.c.l.b16 %v5557
    %v5798 = vunpack.c.h.b16 %v5557
    %v5799 = vunpack.c.l.b16 %v5558
    %v5800 = vunpack.c.h.b16 %v5558
    %v5801 = vunpack.c.l.b16 %v5559
    %v5802 = vunpack.c.h.b16 %v5559
    %v5803 = vunpack.c.l.b16 %v5560
    %v5804 = vunpack.c.h.b16 %v5560
    %v5805 = vunpack.c.l.b16 %v5561
    %v5806 = vunpack.c.h.b16 %v5561
    %v5807 = vunpack.c.l.b16 %v5562
    %v5808 = vunpack.c.h.b16 %v5562
    %v5809 = vunpack.c.l.b16 %v5563
    %v5810 = vunpack.c.h.b16 %v5563
    %v5811 = vunpack.c.l.b16 %v5564
    %v5812 = vunpack.c.h.b16 %v5564
    %v5813 = vunpack.c.l.b16 %v5565
    %v5814 = vunpack.c.h.b16 %v5565
    %v5815 = vunpack.c.l.b16 %v5566
    %v5816 = vunpack.c.h.b16 %v5566
    %v5817 = vunpack.c.l.b16 %v5567
    %v5818 = vunpack.c.h.b16 %v5567
    %v5819 = vunpack.c.l.b16 %v5568
    %v5820 = vunpack.c.h.b16 %v5568
    %v5821 = vunpack.c.l.b16 %v5569
    %v5822 = vunpack.c.h.b16 %v5569
    %v5823 = vunpack.c.l.b16 %v5570
    %v5824 = vunpack.c.h.b16 %v5570
    %v5825 = vunpack.c.l.b16 %v5571
    %v5826 = vunpack.c.h.b16 %v5571
    %v5827 = vunpack.c.l.b16 %v5572
    %v5828 = vunpack.c.h.b16 %v5572
    %v5829 = vunpack.c.l.b16 %v5573
    %v5830 = vunpack.c.h.b16 %v5573
    %v5831 = vunpack.c.l.b16 %v5574
    %v5832 = vunpack.c.h.b16 %v5574
    %v5833 = vunpack.c.l.b16 %v5575
    %v5834 = vunpack.c.h.b16 %v5575
    %v5835 = vunpack.c.l.b16 %v5576
    %v5836 = vunpack.c.h.b16 %v5576
    %v5837 = vunpack.c.l.b16 %v5577
    %v5838 = vunpack.c.h.b16 %v5577
    %v5839 = vunpack.c.l.b16 %v5578
    %v5840 = vunpack.c.h.b16 %v5578
    %v5841 = vunpack.c.l.b16 %v5579
    %v5842 = vunpack.c.h.b16 %v5579
    %v5843 = vunpack.c.l.b16 %v5580
    %v5844 = vunpack.c.h.b16 %v5580
    %v5845 = vunpack.c.l.b16 %v5581
    %v5846 = vunpack.c.h.b16 %v5581
    %v5847 = vunpack.c.l.b16 %v5582
    %v5848 = vunpack.c.h.b16 %v5582
    %v5849 = vunpack.c.l.b16 %v5583
    %v5850 = vunpack.c.h.b16 %v5583
    %v5851 = vunpack.c.l.b16 %v5584
    %v5852 = vunpack.c.h.b16 %v5584
    %v5853 = vunpack.c.l.b16 %v5585
    %v5854 = vunpack.c.h.b16 %v5585
    %v5855 = vunpack.c.l.b16 %v5586
    %v5856 = vunpack.c.h.b16 %v5586
    %v5857 = vunpack.c.l.b16 %v5587
    %v5858 = vunpack.c.h.b16 %v5587
    %v5859 = vunpack.c.l.b16 %v5588
    %v5860 = vunpack.c.h.b16 %v5588
    %v5861 = vunpack.c.l.b16 %v5589
    %v5862 = vunpack.c.h.b16 %v5589
    %v5863 = vunpack.c.l.b16 %v5590
    %v5864 = vunpack.c.h.b16 %v5590
    %v5865 = vunpack.c.l.b16 %v5591
    %v5866 = vunpack.c.h.b16 %v5591
    %v5867 = vunpack.c.l.b16 %v5592
    %v5868 = vunpack.c.h.b16 %v5592
    %v5869 = vunpack.c.l.b16 %v5593
    %v5870 = vunpack.c.h.b16 %v5593
    %v5871 = vunpack.c.l.b16 %v5594
    %v5872 = vunpack.c.h.b16 %v5594
    %v5873 = vunpack.c.l.b16 %v5595
    %v5874 = vunpack.c.h.b16 %v5595
    %v5875 = vunpack.c.l.b16 %v5596
    %v5876 = vunpack.c.h.b16 %v5596
    %v5877 = vunpack.c.l.b16 %v5597
    %v5878 = vunpack.c.h.b16 %v5597
    %v5879 = vunpack.c.l.b16 %v5598
    %v5880 = vunpack.c.h.b16 %v5598
    %v5881 = vunpack.c.l.b16 %v5599
    %v5882 = vunpack.c.h.b16 %v5599
    %v5883 = vunpack.c.l.b16 %v5600
    %v5884 = vunpack.c.h.b16 %v5600
    %v5885 = vunpack.c.l.b16 %v5601
    %v5886 = vunpack.c.h.b16 %v5601
    %v5887 = vunpack.c.l.b16 %v5602
    %v5888 = vunpack.c.h.b16 %v5602
    %v5889 = vunpack.c.l.b16 %v5603
    %v5890 = vunpack.c.h.b16 %v5603
    %v5891 = vunpack.c.l.b16 %v5604
    %v5892 = vunpack.c.h.b16 %v5604
    %v5893 = vunpack.c.l.b16 %v5605
    %v5894 = vunpack.c.h.b16 %v5605
    %v5895 = vunpack.c.l.b16 %v5606
    %v5896 = vunpack.c.h.b16 %v5606
    %v5897 = vunpack.c.l.b16 %v5607
    %v5898 = vunpack.c.h.b16 %v5607
    %v5899 = vpack.c.b16 %v5759, %v5755
    %v5900 = vpack.c.b16 %v5760, %v5756
    %v5901 = vpack.c.b16 %v5761, %v5757
    %v5902 = vpack.c.b16 %v5762, %v5758
    %v5903 = vpack.c.b16 %v5767, %v5763
    %v5904 = vpack.c.b16 %v5768, %v5764
    %v5905 = vpack.c.b16 %v5769, %v5765
    %v5906 = vpack.c.b16 %v5770, %v5766
    %v5907 = vpack.c.b16 %v5775, %v5771
    %v5908 = vpack.c.b16 %v5776, %v5772
    %v5909 = vpack.c.b16 %v5777, %v5773
    %v5910 = vpack.c.b16 %v5778, %v5774
    %v5911 = vpack.c.b16 %v5783, %v5779
    %v5912 = vpack.c.b16 %v5784, %v5780
    %v5913 = vpack.c.b16 %v5785, %v5781
    %v5914 = vpack.c.b16 %v5786, %v5782
    %v5915 = vpack.c.b16 %v5791, %v5787
    %v5916 = vpack.c.b16 %v5792, %v5788
    %v5917 = vpack.c.b16 %v5793, %v5789
    %v5918 = vpack.c.b16 %v5794, %v5790
    %v5919 = vpack.c.b16 %v5799, %v5795
    %v5920 = vpack.c.b16 %v5800, %v5796
    %v5921 = vpack.c.b16 %v5801, %v5797
    %v5922 = vpack.c.b16 %v5802, %v5798
    %v5923 = vpack.c.b16 %v5807, %v5803
    %v5924 = vpack.c.b16 %v5808, %v5804
    %v5925 = vpack.c.b16 %v5809, %v5805
    %v5926 = vpack.c.b16 %v5810, %v5806
    %v5927 = vpack.c.b16 %v5815, %v5811
    %v5928 = vpack.c.b16 %v5816, %v5812
    %v5929 = vpack.c.b16 %v5817, %v5813
    %v5930 = vpack.c.b16 %v5818, %v5814
    %v5931 = vpack.c.b16 %v5823, %v5819
    %v5932 = vpack.c.b16 %v5824, %v5820
    %v5933 = vpack.c.b16 %v5825, %v5821
    %v5934 = vpack.c.b16 %v5826, %v5822
    %v5935 = vpack.c.b16 %v5831, %v5827
    %v5936 = vpack.c.b16 %v5832, %v5828
    %v5937 = vpack.c.b16 %v5833, %v5829
    %v5938 = vpack.c.b16 %v5834, %v5830
    %v5939 = vpack.c.b16 %v5839, %v5835
    %v5940 = vpack.c.b16 %v5840, %v5836
    %v5941 = vpack.c.b16 %v5841, %v5837
    %v5942 = vpack.c.b16 %v5842, %v5838
    %v5943 = vpack.c.b16 %v5847, %v5843
    %v5944 = vpack.c.b16 %v5848, %v5844
    %v5945 = vpack.c.b16 %v5849, %v5845
    %v5946 = vpack.c.b16 %v5850, %v5846
    %v5947 = vpack.c.b16 %v5855, %v5851
    %v5948 = vpack.c.b16 %v5856, %v5852
    %v5949 = vpack.c.b16 %v5857, %v5853
    %v5950 = vpack.c.b16 %v5858, %v5854
    %v5951 = vpack.c.b16 %v5863, %v5859
    %v5952 = vpack.c.b16 %v5864, %v5860
    %v5953 = vpack.c.b16 %v5865, %v5861
    %v5954 = vpack.c.b16 %v5866, %v5862
    %v5955 = vpack.c.b16 %v5871, %v5867
    %v5956 = vpack.c.b16 %v5872, %v5868
    %v5957 = vpack.c.b16 %v5873, %v5869
    %v5958 = vpack.c.b16 %v5874, %v5870
    %v5959 = vpack.c.b16 %v5879, %v5875
    %v5960 = vpack.c.b16 %v5880, %v5876
    %v5961 = vpack.c.b16 %v5881, %v5877
    %v5962 = vpack.c.b16 %v5882, %v5878
    %v5963 = vpack.c.b16 %v5887, %v5883
    %v5964 = vpack.c.b16 %v5888, %v5884
    %v5965 = vpack.c.b16 %v5889, %v5885
    %v5966 = vpack.c.b16 %v5890, %v5886
    %v5967 = vpack.c.b16 %v5895, %v5891
    %v5968 = vpack.c.b16 %v5896, %v5892
    %v5969 = vpack.c.b16 %v5897, %v5893
    %v5970 = vpack.c.b16 %v5898, %v5894
    %v6044 = vsel %vm172, %v5651, 0
    %v6047 = vsel %vm172, %v5678, 0
    %6049 = vmatprep.subr.bf16.mxu0 %v5900
    %6050 = vmatpush1.bf16.msra.mxu0 %v5899
    %6051 = vmatprep.subr.bf16.mxu0 %v5904
    %6052 = vmatpush1.bf16.msra.mxu0 %v5903
    %6053 = vmatprep.subr.bf16.mxu0 %v5908
    %6054 = vmatpush1.bf16.msra.mxu0 %v5907
    %6055 = vmatprep.subr.bf16.mxu0 %v5912
    %6056 = vmatpush1.bf16.msra.mxu0 %v5911
    %6057 = vmatprep.subr.bf16.mxu0 %v5916
    %6058 = vmatpush1.bf16.msra.mxu0 %v5915
    %6059 = vmatprep.subr.bf16.mxu0 %v5920
    %6060 = vmatpush1.bf16.msra.mxu0 %v5919
    %6061 = vmatprep.subr.bf16.mxu0 %v5924
    %6062 = vmatpush1.bf16.msra.mxu0 %v5923
    %6063 = vmatprep.subr.bf16.mxu0 %v5928
    %6064 = vmatpush1.bf16.msra.mxu0 %v5927
    %6065 = vmatprep.subr.bf16.mxu0 %v5932
    %6066 = vmatpush1.bf16.msra.mxu0 %v5931
    %6067 = vmatprep.subr.bf16.mxu0 %v5936
    %6068 = vmatpush1.bf16.msra.mxu0 %v5935
    %6069 = vmatprep.subr.bf16.mxu0 %v5940
    %6070 = vmatpush1.bf16.msra.mxu0 %v5939
    %6071 = vmatprep.subr.bf16.mxu0 %v5944
    %6072 = vmatpush1.bf16.msra.mxu0 %v5943
    %6073 = vmatprep.subr.bf16.mxu0 %v5948
    %6074 = vmatpush1.bf16.msra.mxu0 %v5947
    %6075 = vmatprep.subr.bf16.mxu0 %v5952
    %6076 = vmatpush1.bf16.msra.mxu0 %v5951
    %6077 = vmatprep.subr.bf16.mxu0 %v5956
    %6078 = vmatpush1.bf16.msra.mxu0 %v5955
    %6079 = vmatprep.subr.bf16.mxu0 %v5960
    %6080 = vmatpush1.bf16.msra.mxu0 %v5959
    %6081 = vmatprep.mubr.bf16.mxu0 %v5639
    %6082 = vmatmul.mubr.bf16.gmra.mrb[0].mxu0 %v5627
    %v6083 = vpop.f32.mrb[0].mxu0
    %v6084 = vadd.f32 0.0, %v6083
    %v6085 = vpop.f32.mrb[0].mxu0
    %v6086 = vadd.f32 0.0, %v6085
    %v6087 = vpop.f32.mrb[0].mxu0
    %v6088 = vadd.f32 0.0, %v6087
    %v6089 = vpop.f32.mrb[0].mxu0
    %v6090 = vadd.f32 0.0, %v6089
    %6091 = vmatprep.mubr.bf16.mxu0 %v5669
    %6092 = vmatmul.mubr.bf16.gmra.mrb[0].mxu0 %v5660
    %v6093 = vpop.f32.mrb[0].mxu0
    %v6094 = vadd.f32 0.0, %v6093
    %v6095 = vpop.f32.mrb[0].mxu0
    %v6096 = vadd.f32 0.0, %v6095
    %v6097 = vpop.f32.mrb[0].mxu0
    %v6098 = vadd.f32 0.0, %v6097
    %v6099 = vpop.f32.mrb[0].mxu0
    %v6100 = vadd.f32 0.0, %v6099
    %6101 = vdwg.mxu0
    %6102 = vmatprep.subr.bf16.mxu0 %v5964
    %6103 = vmatpush1.bf16.msra.mxu0 %v5963
    %6104 = vmatprep.subr.bf16.mxu0 %v5968
    %6105 = vmatpush1.bf16.msra.mxu0 %v5967
    %6106 = vmatprep.subr.bf16.mxu0 0
    %6107 = vmatpush1.bf16.msra.mxu0 0
    %6108 = vmatprep.subr.bf16.mxu0 0
    %6109 = vmatpush1.bf16.msra.mxu0 0
    %6110 = vmatprep.subr.bf16.mxu0 0
    %6111 = vmatpush1.bf16.msra.mxu0 0
    %6112 = vmatprep.subr.bf16.mxu0 0
    %6113 = vmatpush1.bf16.msra.mxu0 0
    %6114 = vmatprep.subr.bf16.mxu0 0
    %6115 = vmatpush1.bf16.msra.mxu0 0
    %6116 = vmatprep.subr.bf16.mxu0 0
    %6117 = vmatpush1.bf16.msra.mxu0 0
    %6118 = vmatprep.subr.bf16.mxu0 0
    %6119 = vmatpush1.bf16.msra.mxu0 0
    %6120 = vmatprep.subr.bf16.mxu0 0
    %6121 = vmatpush1.bf16.msra.mxu0 0
    %6122 = vmatprep.subr.bf16.mxu0 0
    %6123 = vmatpush1.bf16.msra.mxu0 0
    %6124 = vmatprep.subr.bf16.mxu0 0
    %6125 = vmatpush1.bf16.msra.mxu0 0
    %6126 = vmatprep.subr.bf16.mxu0 0
    %6127 = vmatpush1.bf16.msra.mxu0 0
    %6128 = vmatprep.subr.bf16.mxu0 0
    %6129 = vmatpush1.bf16.msra.mxu0 0
    %6130 = vmatprep.subr.bf16.mxu0 0
    %6131 = vmatpush1.bf16.msra.mxu0 0
    %6132 = vmatprep.subr.bf16.mxu0 0
    %6133 = vmatpush1.bf16.msra.mxu0 0
    %6134 = vmatprep.mubr.bf16.mxu0 0
    %6135 = vmatmul.mubr.bf16.gmra.mrb[0].mxu0 %v6044
    %v6136 = vpop.f32.mrb[0].mxu0
    %v6137 = vadd.f32 %v6084, %v6136
    %v6138 = vpop.f32.mrb[0].mxu0
    %v6139 = vadd.f32 %v6086, %v6138
    %v6140 = vpop.f32.mrb[0].mxu0
    %v6141 = vadd.f32 %v6088, %v6140
    %v6142 = vpop.f32.mrb[0].mxu0
    %v6143 = vadd.f32 %v6090, %v6142
    %6144 = vmatprep.mubr.bf16.mxu0 0
    %6145 = vmatmul.mubr.bf16.gmra.mrb[0].mxu0 %v6047
    %v6146 = vpop.f32.mrb[0].mxu0
    %v6147 = vadd.f32 %v6094, %v6146
    %v6148 = vpop.f32.mrb[0].mxu0
    %v6149 = vadd.f32 %v6096, %v6148
    %v6150 = vpop.f32.mrb[0].mxu0
    %v6151 = vadd.f32 %v6098, %v6150
    %v6152 = vpop.f32.mrb[0].mxu0
    %v6153 = vadd.f32 %v6100, %v6152
    %6154 = vdwg.mxu0
    %6155 = vmatprep.subr.bf16.mxu0 %v5902
    %6156 = vmatpush1.bf16.msra.mxu0 %v5901
    %6157 = vmatprep.subr.bf16.mxu0 %v5906
    %6158 = vmatpush1.bf16.msra.mxu0 %v5905
    %6159 = vmatprep.subr.bf16.mxu0 %v5910
    %6160 = vmatpush1.bf16.msra.mxu0 %v5909
    %6161 = vmatprep.subr.bf16.mxu0 %v5914
    %6162 = vmatpush1.bf16.msra.mxu0 %v5913
    %6163 = vmatprep.subr.bf16.mxu0 %v5918
    %6164 = vmatpush1.bf16.msra.mxu0 %v5917
    %6165 = vmatprep.subr.bf16.mxu0 %v5922
    %6166 = vmatpush1.bf16.msra.mxu0 %v5921
    %6167 = vmatprep.subr.bf16.mxu0 %v5926
    %6168 = vmatpush1.bf16.msra.mxu0 %v5925
    %6169 = vmatprep.subr.bf16.mxu0 %v5930
    %6170 = vmatpush1.bf16.msra.mxu0 %v5929
    %6171 = vmatprep.subr.bf16.mxu0 %v5934
    %6172 = vmatpush1.bf16.msra.mxu0 %v5933
    %6173 = vmatprep.subr.bf16.mxu0 %v5938
    %6174 = vmatpush1.bf16.msra.mxu0 %v5937
    %6175 = vmatprep.subr.bf16.mxu0 %v5942
    %6176 = vmatpush1.bf16.msra.mxu0 %v5941
    %6177 = vmatprep.subr.bf16.mxu0 %v5946
    %6178 = vmatpush1.bf16.msra.mxu0 %v5945
    %6179 = vmatprep.subr.bf16.mxu0 %v5950
    %6180 = vmatpush1.bf16.msra.mxu0 %v5949
    %6181 = vmatprep.subr.bf16.mxu0 %v5954
    %6182 = vmatpush1.bf16.msra.mxu0 %v5953
    %6183 = vmatprep.subr.bf16.mxu0 %v5958
    %6184 = vmatpush1.bf16.msra.mxu0 %v5957
    %6185 = vmatprep.subr.bf16.mxu0 %v5962
    %6186 = vmatpush1.bf16.msra.mxu0 %v5961
    %6187 = vmatprep.mubr.bf16.mxu0 %v5639
    %6188 = vmatmul.mubr.bf16.gmra.mrb[0].mxu0 %v5627
    %v6189 = vpop.f32.mrb[0].mxu0
    %v6190 = vadd.f32 0.0, %v6189
    %v6191 = vpop.f32.mrb[0].mxu0
    %v6192 = vadd.f32 0.0, %v6191
    %v6193 = vpop.f32.mrb[0].mxu0
    %v6194 = vadd.f32 0.0, %v6193
    %v6195 = vpop.f32.mrb[0].mxu0
    %v6196 = vadd.f32 0.0, %v6195
    %6197 = vmatprep.mubr.bf16.mxu0 %v5669
    %6198 = vmatmul.mubr.bf16.gmra.mrb[0].mxu0 %v5660
    %v6199 = vpop.f32.mrb[0].mxu0
    %v6200 = vadd.f32 0.0, %v6199
    %v6201 = vpop.f32.mrb[0].mxu0
    %v6202 = vadd.f32 0.0, %v6201
    %v6203 = vpop.f32.mrb[0].mxu0
    %v6204 = vadd.f32 0.0, %v6203
    %v6205 = vpop.f32.mrb[0].mxu0
    %v6206 = vadd.f32 0.0, %v6205
    %6207 = vdwg.mxu0
    %6208 = vmatprep.subr.bf16.mxu0 %v5966
    %6209 = vmatpush1.bf16.msra.mxu0 %v5965
    %6210 = vmatprep.subr.bf16.mxu0 %v5970
    %6211 = vmatpush1.bf16.msra.mxu0 %v5969
    %6212 = vmatprep.subr.bf16.mxu0 0
    %6213 = vmatpush1.bf16.msra.mxu0 0
    %6214 = vmatprep.subr.bf16.mxu0 0
    %6215 = vmatpush1.bf16.msra.mxu0 0
    %6216 = vmatprep.subr.bf16.mxu0 0
    %6217 = vmatpush1.bf16.msra.mxu0 0
    %6218 = vmatprep.subr.bf16.mxu0 0
    %6219 = vmatpush1.bf16.msra.mxu0 0
    %6220 = vmatprep.subr.bf16.mxu0 0
    %6221 = vmatpush1.bf16.msra.mxu0 0
    %6222 = vmatprep.subr.bf16.mxu0 0
    %6223 = vmatpush1.bf16.msra.mxu0 0
    %6224 = vmatprep.subr.bf16.mxu0 0
    %6225 = vmatpush1.bf16.msra.mxu0 0
    %6226 = vmatprep.subr.bf16.mxu0 0
    %6227 = vmatpush1.bf16.msra.mxu0 0
    %6228 = vmatprep.subr.bf16.mxu0 0
    %6229 = vmatpush1.bf16.msra.mxu0 0
    %6230 = vmatprep.subr.bf16.mxu0 0
    %6231 = vmatpush1.bf16.msra.mxu0 0
    %6232 = vmatprep.subr.bf16.mxu0 0
    %6233 = vmatpush1.bf16.msra.mxu0 0
    %6234 = vmatprep.subr.bf16.mxu0 0
    %6235 = vmatpush1.bf16.msra.mxu0 0
    %6236 = vmatprep.subr.bf16.mxu0 0
    %6237 = vmatpush1.bf16.msra.mxu0 0
    %6238 = vmatprep.subr.bf16.mxu0 0
    %6239 = vmatpush1.bf16.msra.mxu0 0
    %6240 = vmatprep.mubr.bf16.mxu0 0
    %6241 = vmatmul.mubr.bf16.gmra.mrb[0].mxu0 %v6044
    %v6242 = vpop.f32.mrb[0].mxu0
    %v6243 = vadd.f32 %v6190, %v6242
    %v6244 = vpop.f32.mrb[0].mxu0
    %v6245 = vadd.f32 %v6192, %v6244
    %v6246 = vpop.f32.mrb[0].mxu0
    %v6247 = vadd.f32 %v6194, %v6246
    %v6248 = vpop.f32.mrb[0].mxu0
    %v6249 = vadd.f32 %v6196, %v6248
    %6250 = vmatprep.mubr.bf16.mxu0 0
    %6251 = vmatmul.mubr.bf16.gmra.mrb[0].mxu0 %v6047
    %v6252 = vpop.f32.mrb[0].mxu0
    %v6253 = vadd.f32 %v6200, %v6252
    %v6254 = vpop.f32.mrb[0].mxu0
    %v6255 = vadd.f32 %v6202, %v6254
    %v6256 = vpop.f32.mrb[0].mxu0
    %v6257 = vadd.f32 %v6204, %v6256
    %v6258 = vpop.f32.mrb[0].mxu0
    %v6259 = vadd.f32 %v6206, %v6258
    %6260 = vdwg.mxu0
    %v6261 = vadd.f32 %v5517, %v6137
    %v6262 = vadd.f32 %v5518, %v6139
    %v6263 = vadd.f32 %v5519, %v6243
    %v6264 = vadd.f32 %v5520, %v6245
    %v6265 = vadd.f32 %v5521, %v6141
    %v6266 = vadd.f32 %v5522, %v6143
    %v6267 = vadd.f32 %v5523, %v6247
    %v6268 = vadd.f32 %v5524, %v6249
    %v6269 = vadd.f32 %v5525, %v6147
    %v6270 = vadd.f32 %v5526, %v6149
    %v6271 = vadd.f32 %v5527, %v6253
    %v6272 = vadd.f32 %v5528, %v6255
    %v6273 = vadd.f32 %v5529, %v6151
    %v6274 = vadd.f32 %v5530, %v6153
    %v6275 = vadd.f32 %v5531, %v6257
    %v6276 = vadd.f32 %v5532, %v6259
    %v6277 = vld [vmem:[#allocation2] sm:$0xcc]
    %v6278 = vld [vmem:[#allocation2 + $0x8] sm:$0xc]
    %s6279 = scalar_lea.vmem %s5, 2304
    %v6280 = vld [vmem:[%s6279] sm:$0xff]
    %v6281 = vld [vmem:[%s6279 + $0x8] sm:$0xff]
    %v6282 = vld [vmem:[%s6279 + $0x10] sm:$0xff]
    %v6283 = vld [vmem:[%s6279 + $0x18] sm:$0xff]
    %v6284 = vld [vmem:[%s6279 + $0x20] sm:$0xff]
    %v6285 = vld [vmem:[%s6279 + $0x28] sm:$0xff]
    %v6286 = vld [vmem:[%s6279 + $0x30] sm:$0xff]
    %v6287 = vld [vmem:[%s6279 + $0x38] sm:$0xff]
    %v6288 = vld [vmem:[%s6279 + $0x40] sm:$0xff]
    %v6289 = vld [vmem:[%s6279 + $0x48] sm:$0xff]
    %v6290 = vld [vmem:[%s6279 + $0x50] sm:$0xff]
    %v6291 = vld [vmem:[%s6279 + $0x58] sm:$0xff]
    %v6292 = vld [vmem:[%s6279 + $0x60] sm:$0xff]
    %v6293 = vld [vmem:[%s6279 + $0x68] sm:$0xff]
    %v6294 = vld [vmem:[%s6279 + $0x70] sm:$0xff]
    %v6295 = vld [vmem:[%s6279 + $0x78] sm:$0xff]
    %v6296 = vld [vmem:[%s6279 + $0x80] sm:$0xff]
    %v6297 = vld [vmem:[%s6279 + $0x88] sm:$0xff]
    %v6298 = vld [vmem:[%s6279 + $0x90] sm:$0xff]
    %v6299 = vld [vmem:[%s6279 + $0x98] sm:$0xff]
    %v6300 = vld [vmem:[%s6279 + $0xa0] sm:$0xff]
    %v6301 = vld [vmem:[%s6279 + $0xa8] sm:$0xff]
    %v6302 = vld [vmem:[%s6279 + $0xb0] sm:$0xff]
    %v6303 = vld [vmem:[%s6279 + $0xb8] sm:$0xff]
    %v6304 = vld [vmem:[%s6279 + $0xc0] sm:$0xff]
    %v6305 = vld [vmem:[%s6279 + $0xc8] sm:$0xff]
    %v6306 = vld [vmem:[%s6279 + $0xd0] sm:$0xff]
    %v6307 = vld [vmem:[%s6279 + $0xd8] sm:$0xff]
    %v6308 = vld [vmem:[%s6279 + $0xe0] sm:$0xff]
    %v6309 = vld [vmem:[%s6279 + $0xe8] sm:$0xff]
    %v6310 = vld [vmem:[%s6279 + $0xf0] sm:$0xff]
    %v6311 = vld [vmem:[%s6279 + $0xf8] sm:$0xff]
    %v6312 = vld [vmem:[%s6279 + $0x100] sm:$0xff]
    %v6313 = vld [vmem:[%s6279 + $0x108] sm:$0xff]
    %v6314 = vld [vmem:[%s6279 + $0x110] sm:$0xff]
    %v6315 = vld [vmem:[%s6279 + $0x118] sm:$0xff]
    %v6316 = vld [vmem:[%s6279 + $0x120] sm:$0xff]
    %v6317 = vld [vmem:[%s6279 + $0x128] sm:$0xff]
    %v6318 = vld [vmem:[%s6279 + $0x130] sm:$0xff]
    %v6319 = vld [vmem:[%s6279 + $0x138] sm:$0xff]
    %v6320 = vld [vmem:[%s6279 + $0x140] sm:$0xff]
    %v6321 = vld [vmem:[%s6279 + $0x148] sm:$0xff]
    %v6322 = vld [vmem:[%s6279 + $0x150] sm:$0xff]
    %v6323 = vld [vmem:[%s6279 + $0x158] sm:$0xff]
    %v6324 = vld [vmem:[%s6279 + $0x160] sm:$0xff]
    %v6325 = vld [vmem:[%s6279 + $0x168] sm:$0xff]
    %v6326 = vld [vmem:[%s6279 + $0x170] sm:$0xff]
    %v6327 = vld [vmem:[%s6279 + $0x178] sm:$0xff]
    %v6328 = vld [vmem:[%s6279 + $0x180] sm:$0xff]
    %v6329 = vld [vmem:[%s6279 + $0x188] sm:$0xff]
    %v6330 = vld [vmem:[%s6279 + $0x190] sm:$0xff]
    %v6331 = vld [vmem:[%s6279 + $0x198] sm:$0xff]
    %v6332 = vld [vmem:[%s6279 + $0x1a0] sm:$0xff]
    %v6333 = vld [vmem:[%s6279 + $0x1a8] sm:$0xff]
    %v6334 = vld [vmem:[%s6279 + $0x1b0] sm:$0xff]
    %v6335 = vld [vmem:[%s6279 + $0x1b8] sm:$0xff]
    %v6336 = vld [vmem:[%s6279 + $0x1c0] sm:$0xff]
    %v6337 = vld [vmem:[%s6279 + $0x1c8] sm:$0xff]
    %v6338 = vld [vmem:[%s6279 + $0x1d0] sm:$0xff]
    %v6339 = vld [vmem:[%s6279 + $0x1d8] sm:$0xff]
    %v6340 = vld [vmem:[%s6279 + $0x1e0] sm:$0xff]
    %v6341 = vld [vmem:[%s6279 + $0x1e8] sm:$0xff]
    %v6342 = vld [vmem:[%s6279 + $0x1f0] sm:$0xff]
    %v6343 = vld [vmem:[%s6279 + $0x1f8] sm:$0xff]
    %v6344 = vld [vmem:[%s6279 + $0x200] sm:$0xff]
    %v6345 = vld [vmem:[%s6279 + $0x208] sm:$0xff]
    %v6346 = vld [vmem:[%s6279 + $0x210] sm:$0xff]
    %v6347 = vld [vmem:[%s6279 + $0x218] sm:$0xff]
    %v6348 = vld [vmem:[%s6279 + $0x220] sm:$0xff]
    %v6349 = vld [vmem:[%s6279 + $0x228] sm:$0xff]
    %v6350 = vld [vmem:[%s6279 + $0x230] sm:$0xff]
    %v6351 = vld [vmem:[%s6279 + $0x238] sm:$0xff]
    %v6354 = vunpack.c.l.b16 %v6277
    %v6355 = vunpack.c.h.b16 %v6277
    %v6356 = vunpack.c.l.b16 %v6278
    %v6357 = vpack.c.b16 %v3594, %v6354
    %v6358 = vpack.c.b16 %v3595, %v6355
    %v6359 = vpack.c.b16 %v3596, %v6356
    %v6360 = vrot.slane %v6357, 2
    %v6361 = vrot.slane %v3609, 2
    %v6362 = vsel %vm1062, %v6360, %v6361
    %v6363 = vrot.slane %v6358, 2
    %v6364 = vrot.slane %v3610, 2
    %v6365 = vsel %vm1062, %v6363, %v6364
    %v6366 = vrot.slane %v6359, 2
    %v6367 = vrot.slane %v3611, 2
    %v6368 = vsel %vm1062, %v6366, %v6367
    %v6369 = vrot.slane %v5613, 2
    %v6370 = vsel %vm1062, %v6361, %v6369
    %v6371 = vrot.slane %v5614, 2
    %v6372 = vsel %vm1062, %v6364, %v6371
    %v6373 = vrot.slane %v5615, 2
    %v6374 = vsel %vm1062, %v6367, %v6373
    %v6451 = vunpack.c.l.b16 %v6280
    %v6452 = vunpack.c.h.b16 %v6280
    %v6453 = vunpack.c.l.b16 %v6281
    %v6454 = vunpack.c.h.b16 %v6281
    %v6455 = vunpack.c.l.b16 %v6282
    %v6456 = vunpack.c.h.b16 %v6282
    %v6457 = vunpack.c.l.b16 %v6283
    %v6458 = vunpack.c.h.b16 %v6283
    %v6459 = vunpack.c.l.b16 %v6284
    %v6460 = vunpack.c.h.b16 %v6284
    %v6461 = vunpack.c.l.b16 %v6285
    %v6462 = vunpack.c.h.b16 %v6285
    %v6463 = vunpack.c.l.b16 %v6286
    %v6464 = vunpack.c.h.b16 %v6286
    %v6465 = vunpack.c.l.b16 %v6287
    %v6466 = vunpack.c.h.b16 %v6287
    %v6467 = vunpack.c.l.b16 %v6288
    %v6468 = vunpack.c.h.b16 %v6288
    %v6469 = vunpack.c.l.b16 %v6289
    %v6470 = vunpack.c.h.b16 %v6289
    %v6471 = vunpack.c.l.b16 %v6290
    %v6472 = vunpack.c.h.b16 %v6290
    %v6473 = vunpack.c.l.b16 %v6291
    %v6474 = vunpack.c.h.b16 %v6291
    %v6475 = vunpack.c.l.b16 %v6292
    %v6476 = vunpack.c.h.b16 %v6292
    %v6477 = vunpack.c.l.b16 %v6293
    %v6478 = vunpack.c.h.b16 %v6293
    %v6479 = vunpack.c.l.b16 %v6294
    %v6480 = vunpack.c.h.b16 %v6294
    %v6481 = vunpack.c.l.b16 %v6295
    %v6482 = vunpack.c.h.b16 %v6295
    %v6483 = vunpack.c.l.b16 %v6296
    %v6484 = vunpack.c.h.b16 %v6296
    %v6485 = vunpack.c.l.b16 %v6297
    %v6486 = vunpack.c.h.b16 %v6297
    %v6487 = vunpack.c.l.b16 %v6298
    %v6488 = vunpack.c.h.b16 %v6298
    %v6489 = vunpack.c.l.b16 %v6299
    %v6490 = vunpack.c.h.b16 %v6299
    %v6491 = vunpack.c.l.b16 %v6300
    %v6492 = vunpack.c.h.b16 %v6300
    %v6493 = vunpack.c.l.b16 %v6301
    %v6494 = vunpack.c.h.b16 %v6301
    %v6495 = vunpack.c.l.b16 %v6302
    %v6496 = vunpack.c.h.b16 %v6302
    %v6497 = vunpack.c.l.b16 %v6303
    %v6498 = vunpack.c.h.b16 %v6303
    %v6499 = vunpack.c.l.b16 %v6304
    %v6500 = vunpack.c.h.b16 %v6304
    %v6501 = vunpack.c.l.b16 %v6305
    %v6502 = vunpack.c.h.b16 %v6305
    %v6503 = vunpack.c.l.b16 %v6306
    %v6504 = vunpack.c.h.b16 %v6306
    %v6505 = vunpack.c.l.b16 %v6307
    %v6506 = vunpack.c.h.b16 %v6307
    %v6507 = vunpack.c.l.b16 %v6308
    %v6508 = vunpack.c.h.b16 %v6308
    %v6509 = vunpack.c.l.b16 %v6309
    %v6510 = vunpack.c.h.b16 %v6309
    %v6511 = vunpack.c.l.b16 %v6310
    %v6512 = vunpack.c.h.b16 %v6310
    %v6513 = vunpack.c.l.b16 %v6311
    %v6514 = vunpack.c.h.b16 %v6311
    %v6515 = vunpack.c.l.b16 %v6312
    %v6516 = vunpack.c.h.b16 %v6312
    %v6517 = vunpack.c.l.b16 %v6313
    %v6518 = vunpack.c.h.b16 %v6313
    %v6519 = vunpack.c.l.b16 %v6314
    %v6520 = vunpack.c.h.b16 %v6314
    %v6521 = vunpack.c.l.b16 %v6315
    %v6522 = vunpack.c.h.b16 %v6315
    %v6523 = vunpack.c.l.b16 %v6316
    %v6524 = vunpack.c.h.b16 %v6316
    %v6525 = vunpack.c.l.b16 %v6317
    %v6526 = vunpack.c.h.b16 %v6317
    %v6527 = vunpack.c.l.b16 %v6318
    %v6528 = vunpack.c.h.b16 %v6318
    %v6529 = vunpack.c.l.b16 %v6319
    %v6530 = vunpack.c.h.b16 %v6319
    %v6531 = vunpack.c.l.b16 %v6320
    %v6532 = vunpack.c.h.b16 %v6320
    %v6533 = vunpack.c.l.b16 %v6321
    %v6534 = vunpack.c.h.b16 %v6321
    %v6535 = vunpack.c.l.b16 %v6322
    %v6536 = vunpack.c.h.b16 %v6322
    %v6537 = vunpack.c.l.b16 %v6323
    %v6538 = vunpack.c.h.b16 %v6323
    %v6539 = vunpack.c.l.b16 %v6324
    %v6540 = vunpack.c.h.b16 %v6324
    %v6541 = vunpack.c.l.b16 %v6325
    %v6542 = vunpack.c.h.b16 %v6325
    %v6543 = vunpack.c.l.b16 %v6326
    %v6544 = vunpack.c.h.b16 %v6326
    %v6545 = vunpack.c.l.b16 %v6327
    %v6546 = vunpack.c.h.b16 %v6327
    %v6547 = vunpack.c.l.b16 %v6328
    %v6548 = vunpack.c.h.b16 %v6328
    %v6549 = vunpack.c.l.b16 %v6329
    %v6550 = vunpack.c.h.b16 %v6329
    %v6551 = vunpack.c.l.b16 %v6330
    %v6552 = vunpack.c.h.b16 %v6330
    %v6553 = vunpack.c.l.b16 %v6331
    %v6554 = vunpack.c.h.b16 %v6331
    %v6555 = vunpack.c.l.b16 %v6332
    %v6556 = vunpack.c.h.b16 %v6332
    %v6557 = vunpack.c.l.b16 %v6333
    %v6558 = vunpack.c.h.b16 %v6333
    %v6559 = vunpack.c.l.b16 %v6334
    %v6560 = vunpack.c.h.b16 %v6334
    %v6561 = vunpack.c.l.b16 %v6335
    %v6562 = vunpack.c.h.b16 %v6335
    %v6563 = vunpack.c.l.b16 %v6336
    %v6564 = vunpack.c.h.b16 %v6336
    %v6565 = vunpack.c.l.b16 %v6337
    %v6566 = vunpack.c.h.b16 %v6337
    %v6567 = vunpack.c.l.b16 %v6338
    %v6568 = vunpack.c.h.b16 %v6338
    %v6569 = vunpack.c.l.b16 %v6339
    %v6570 = vunpack.c.h.b16 %v6339
    %v6571 = vunpack.c.l.b16 %v6340
    %v6572 = vunpack.c.h.b16 %v6340
    %v6573 = vunpack.c.l.b16 %v6341
    %v6574 = vunpack.c.h.b16 %v6341
    %v6575 = vunpack.c.l.b16 %v6342
    %v6576 = vunpack.c.h.b16 %v6342
    %v6577 = vunpack.c.l.b16 %v6343
    %v6578 = vunpack.c.h.b16 %v6343
    %v6579 = vunpack.c.l.b16 %v6344
    %v6580 = vunpack.c.h.b16 %v6344
    %v6581 = vunpack.c.l.b16 %v6345
    %v6582 = vunpack.c.h.b16 %v6345
    %v6583 = vunpack.c.l.b16 %v6346
    %v6584 = vunpack.c.h.b16 %v6346
    %v6585 = vunpack.c.l.b16 %v6347
    %v6586 = vunpack.c.h.b16 %v6347
    %v6587 = vunpack.c.l.b16 %v6348
    %v6588 = vunpack.c.h.b16 %v6348
    %v6589 = vunpack.c.l.b16 %v6349
    %v6590 = vunpack.c.h.b16 %v6349
    %v6591 = vunpack.c.l.b16 %v6350
    %v6592 = vunpack.c.h.b16 %v6350
    %v6593 = vunpack.c.l.b16 %v6351
    %v6594 = vunpack.c.h.b16 %v6351
    %v6595 = vpack.c.b16 %v6455, %v6451
    %v6596 = vpack.c.b16 %v6456, %v6452
    %v6597 = vpack.c.b16 %v6457, %v6453
    %v6598 = vpack.c.b16 %v6458, %v6454
    %v6599 = vpack.c.b16 %v6463, %v6459
    %v6600 = vpack.c.b16 %v6464, %v6460
    %v6601 = vpack.c.b16 %v6465, %v6461
    %v6602 = vpack.c.b16 %v6466, %v6462
    %v6603 = vpack.c.b16 %v6471, %v6467
    %v6604 = vpack.c.b16 %v6472, %v6468
    %v6605 = vpack.c.b16 %v6473, %v6469
    %v6606 = vpack.c.b16 %v6474, %v6470
    %v6607 = vpack.c.b16 %v6479, %v6475
    %v6608 = vpack.c.b16 %v6480, %v6476
    %v6609 = vpack.c.b16 %v6481, %v6477
    %v6610 = vpack.c.b16 %v6482, %v6478
    %v6611 = vpack.c.b16 %v6487, %v6483
    %v6612 = vpack.c.b16 %v6488, %v6484
    %v6613 = vpack.c.b16 %v6489, %v6485
    %v6614 = vpack.c.b16 %v6490, %v6486
    %v6615 = vpack.c.b16 %v6495, %v6491
    %v6616 = vpack.c.b16 %v6496, %v6492
    %v6617 = vpack.c.b16 %v6497, %v6493
    %v6618 = vpack.c.b16 %v6498, %v6494
    %v6619 = vpack.c.b16 %v6503, %v6499
    %v6620 = vpack.c.b16 %v6504, %v6500
    %v6621 = vpack.c.b16 %v6505, %v6501
    %v6622 = vpack.c.b16 %v6506, %v6502
    %v6623 = vpack.c.b16 %v6511, %v6507
    %v6624 = vpack.c.b16 %v6512, %v6508
    %v6625 = vpack.c.b16 %v6513, %v6509
    %v6626 = vpack.c.b16 %v6514, %v6510
    %v6627 = vpack.c.b16 %v6519, %v6515
    %v6628 = vpack.c.b16 %v6520, %v6516
    %v6629 = vpack.c.b16 %v6521, %v6517
    %v6630 = vpack.c.b16 %v6522, %v6518
    %v6631 = vpack.c.b16 %v6527, %v6523
    %v6632 = vpack.c.b16 %v6528, %v6524
    %v6633 = vpack.c.b16 %v6529, %v6525
    %v6634 = vpack.c.b16 %v6530, %v6526
    %v6635 = vpack.c.b16 %v6535, %v6531
    %v6636 = vpack.c.b16 %v6536, %v6532
    %v6637 = vpack.c.b16 %v6537, %v6533
    %v6638 = vpack.c.b16 %v6538, %v6534
    %v6639 = vpack.c.b16 %v6543, %v6539
    %v6640 = vpack.c.b16 %v6544, %v6540
    %v6641 = vpack.c.b16 %v6545, %v6541
    %v6642 = vpack.c.b16 %v6546, %v6542
    %v6643 = vpack.c.b16 %v6551, %v6547
    %v6644 = vpack.c.b16 %v6552, %v6548
    %v6645 = vpack.c.b16 %v6553, %v6549
    %v6646 = vpack.c.b16 %v6554, %v6550
    %v6647 = vpack.c.b16 %v6559, %v6555
    %v6648 = vpack.c.b16 %v6560, %v6556
    %v6649 = vpack.c.b16 %v6561, %v6557
    %v6650 = vpack.c.b16 %v6562, %v6558
    %v6651 = vpack.c.b16 %v6567, %v6563
    %v6652 = vpack.c.b16 %v6568, %v6564
    %v6653 = vpack.c.b16 %v6569, %v6565
    %v6654 = vpack.c.b16 %v6570, %v6566
    %v6655 = vpack.c.b16 %v6575, %v6571
    %v6656 = vpack.c.b16 %v6576, %v6572
    %v6657 = vpack.c.b16 %v6577, %v6573
    %v6658 = vpack.c.b16 %v6578, %v6574
    %v6659 = vpack.c.b16 %v6583, %v6579
    %v6660 = vpack.c.b16 %v6584, %v6580
    %v6661 = vpack.c.b16 %v6585, %v6581
    %v6662 = vpack.c.b16 %v6586, %v6582
    %v6663 = vpack.c.b16 %v6591, %v6587
    %v6664 = vpack.c.b16 %v6592, %v6588
    %v6665 = vpack.c.b16 %v6593, %v6589
    %v6666 = vpack.c.b16 %v6594, %v6590
    %v6740 = vsel %vm172, %v6368, 0
    %v6743 = vsel %vm172, %v6374, 0
    %6745 = vmatprep.subr.bf16.mxu0 %v6596
    %6746 = vmatpush1.bf16.msra.mxu0 %v6595
    %6747 = vmatprep.subr.bf16.mxu0 %v6600
    %6748 = vmatpush1.bf16.msra.mxu0 %v6599
    %6749 = vmatprep.subr.bf16.mxu0 %v6604
    %6750 = vmatpush1.bf16.msra.mxu0 %v6603
    %6751 = vmatprep.subr.bf16.mxu0 %v6608
    %6752 = vmatpush1.bf16.msra.mxu0 %v6607
    %6753 = vmatprep.subr.bf16.mxu0 %v6612
    %6754 = vmatpush1.bf16.msra.mxu0 %v6611
    %6755 = vmatprep.subr.bf16.mxu0 %v6616
    %6756 = vmatpush1.bf16.msra.mxu0 %v6615
    %6757 = vmatprep.subr.bf16.mxu0 %v6620
    %6758 = vmatpush1.bf16.msra.mxu0 %v6619
    %6759 = vmatprep.subr.bf16.mxu0 %v6624
    %6760 = vmatpush1.bf16.msra.mxu0 %v6623
    %6761 = vmatprep.subr.bf16.mxu0 %v6628
    %6762 = vmatpush1.bf16.msra.mxu0 %v6627
    %6763 = vmatprep.subr.bf16.mxu0 %v6632
    %6764 = vmatpush1.bf16.msra.mxu0 %v6631
    %6765 = vmatprep.subr.bf16.mxu0 %v6636
    %6766 = vmatpush1.bf16.msra.mxu0 %v6635
    %6767 = vmatprep.subr.bf16.mxu0 %v6640
    %6768 = vmatpush1.bf16.msra.mxu0 %v6639
    %6769 = vmatprep.subr.bf16.mxu0 %v6644
    %6770 = vmatpush1.bf16.msra.mxu0 %v6643
    %6771 = vmatprep.subr.bf16.mxu0 %v6648
    %6772 = vmatpush1.bf16.msra.mxu0 %v6647
    %6773 = vmatprep.subr.bf16.mxu0 %v6652
    %6774 = vmatpush1.bf16.msra.mxu0 %v6651
    %6775 = vmatprep.subr.bf16.mxu0 %v6656
    %6776 = vmatpush1.bf16.msra.mxu0 %v6655
    %6777 = vmatprep.mubr.bf16.mxu0 %v6365
    %6778 = vmatmul.mubr.bf16.gmra.mrb[0].mxu0 %v6362
    %v6779 = vpop.f32.mrb[0].mxu0
    %v6780 = vadd.f32 0.0, %v6779
    %v6781 = vpop.f32.mrb[0].mxu0
    %v6782 = vadd.f32 0.0, %v6781
    %v6783 = vpop.f32.mrb[0].mxu0
    %v6784 = vadd.f32 0.0, %v6783
    %v6785 = vpop.f32.mrb[0].mxu0
    %v6786 = vadd.f32 0.0, %v6785
    %6787 = vmatprep.mubr.bf16.mxu0 %v6372
    %6788 = vmatmul.mubr.bf16.gmra.mrb[0].mxu0 %v6370
    %v6789 = vpop.f32.mrb[0].mxu0
    %v6790 = vadd.f32 0.0, %v6789
    %v6791 = vpop.f32.mrb[0].mxu0
    %v6792 = vadd.f32 0.0, %v6791
    %v6793 = vpop.f32.mrb[0].mxu0
    %v6794 = vadd.f32 0.0, %v6793
    %v6795 = vpop.f32.mrb[0].mxu0
    %v6796 = vadd.f32 0.0, %v6795
    %6797 = vdwg.mxu0
    %6798 = vmatprep.subr.bf16.mxu0 %v6660
    %6799 = vmatpush1.bf16.msra.mxu0 %v6659
    %6800 = vmatprep.subr.bf16.mxu0 %v6664
    %6801 = vmatpush1.bf16.msra.mxu0 %v6663
    %6802 = vmatprep.subr.bf16.mxu0 0
    %6803 = vmatpush1.bf16.msra.mxu0 0
    %6804 = vmatprep.subr.bf16.mxu0 0
    %6805 = vmatpush1.bf16.msra.mxu0 0
    %6806 = vmatprep.subr.bf16.mxu0 0
    %6807 = vmatpush1.bf16.msra.mxu0 0
    %6808 = vmatprep.subr.bf16.mxu0 0
    %6809 = vmatpush1.bf16.msra.mxu0 0
    %6810 = vmatprep.subr.bf16.mxu0 0
    %6811 = vmatpush1.bf16.msra.mxu0 0
    %6812 = vmatprep.subr.bf16.mxu0 0
    %6813 = vmatpush1.bf16.msra.mxu0 0
    %6814 = vmatprep.subr.bf16.mxu0 0
    %6815 = vmatpush1.bf16.msra.mxu0 0
    %6816 = vmatprep.subr.bf16.mxu0 0
    %6817 = vmatpush1.bf16.msra.mxu0 0
    %6818 = vmatprep.subr.bf16.mxu0 0
    %6819 = vmatpush1.bf16.msra.mxu0 0
    %6820 = vmatprep.subr.bf16.mxu0 0
    %6821 = vmatpush1.bf16.msra.mxu0 0
    %6822 = vmatprep.subr.bf16.mxu0 0
    %6823 = vmatpush1.bf16.msra.mxu0 0
    %6824 = vmatprep.subr.bf16.mxu0 0
    %6825 = vmatpush1.bf16.msra.mxu0 0
    %6826 = vmatprep.subr.bf16.mxu0 0
    %6827 = vmatpush1.bf16.msra.mxu0 0
    %6828 = vmatprep.subr.bf16.mxu0 0
    %6829 = vmatpush1.bf16.msra.mxu0 0
    %6830 = vmatprep.mubr.bf16.mxu0 0
    %6831 = vmatmul.mubr.bf16.gmra.mrb[0].mxu0 %v6740
    %v6832 = vpop.f32.mrb[0].mxu0
    %v6833 = vadd.f32 %v6780, %v6832
    %v6834 = vpop.f32.mrb[0].mxu0
    %v6835 = vadd.f32 %v6782, %v6834
    %v6836 = vpop.f32.mrb[0].mxu0
    %v6837 = vadd.f32 %v6784, %v6836
    %v6838 = vpop.f32.mrb[0].mxu0
    %v6839 = vadd.f32 %v6786, %v6838
    %6840 = vmatprep.mubr.bf16.mxu0 0
    %6841 = vmatmul.mubr.bf16.gmra.mrb[0].mxu0 %v6743
    %v6842 = vpop.f32.mrb[0].mxu0
    %v6843 = vadd.f32 %v6790, %v6842
    %v6844 = vpop.f32.mrb[0].mxu0
    %v6845 = vadd.f32 %v6792, %v6844
    %v6846 = vpop.f32.mrb[0].mxu0
    %v6847 = vadd.f32 %v6794, %v6846
    %v6848 = vpop.f32.mrb[0].mxu0
    %v6849 = vadd.f32 %v6796, %v6848
    %6850 = vdwg.mxu0
    %6851 = vmatprep.subr.bf16.mxu0 %v6598
    %6852 = vmatpush1.bf16.msra.mxu0 %v6597
    %6853 = vmatprep.subr.bf16.mxu0 %v6602
    %6854 = vmatpush1.bf16.msra.mxu0 %v6601
    %6855 = vmatprep.subr.bf16.mxu0 %v6606
    %6856 = vmatpush1.bf16.msra.mxu0 %v6605
    %6857 = vmatprep.subr.bf16.mxu0 %v6610
    %6858 = vmatpush1.bf16.msra.mxu0 %v6609
    %6859 = vmatprep.subr.bf16.mxu0 %v6614
    %6860 = vmatpush1.bf16.msra.mxu0 %v6613
    %6861 = vmatprep.subr.bf16.mxu0 %v6618
    %6862 = vmatpush1.bf16.msra.mxu0 %v6617
    %6863 = vmatprep.subr.bf16.mxu0 %v6622
    %6864 = vmatpush1.bf16.msra.mxu0 %v6621
    %6865 = vmatprep.subr.bf16.mxu0 %v6626
    %6866 = vmatpush1.bf16.msra.mxu0 %v6625
    %6867 = vmatprep.subr.bf16.mxu0 %v6630
    %6868 = vmatpush1.bf16.msra.mxu0 %v6629
    %6869 = vmatprep.subr.bf16.mxu0 %v6634
    %6870 = vmatpush1.bf16.msra.mxu0 %v6633
    %6871 = vmatprep.subr.bf16.mxu0 %v6638
    %6872 = vmatpush1.bf16.msra.mxu0 %v6637
    %6873 = vmatprep.subr.bf16.mxu0 %v6642
    %6874 = vmatpush1.bf16.msra.mxu0 %v6641
    %6875 = vmatprep.subr.bf16.mxu0 %v6646
    %6876 = vmatpush1.bf16.msra.mxu0 %v6645
    %6877 = vmatprep.subr.bf16.mxu0 %v6650
    %6878 = vmatpush1.bf16.msra.mxu0 %v6649
    %6879 = vmatprep.subr.bf16.mxu0 %v6654
    %6880 = vmatpush1.bf16.msra.mxu0 %v6653
    %6881 = vmatprep.subr.bf16.mxu0 %v6658
    %6882 = vmatpush1.bf16.msra.mxu0 %v6657
    %6883 = vmatprep.mubr.bf16.mxu0 %v6365
    %6884 = vmatmul.mubr.bf16.gmra.mrb[0].mxu0 %v6362
    %v6885 = vpop.f32.mrb[0].mxu0
    %v6886 = vadd.f32 0.0, %v6885
    %v6887 = vpop.f32.mrb[0].mxu0
    %v6888 = vadd.f32 0.0, %v6887
    %v6889 = vpop.f32.mrb[0].mxu0
    %v6890 = vadd.f32 0.0, %v6889
    %v6891 = vpop.f32.mrb[0].mxu0
    %v6892 = vadd.f32 0.0, %v6891
    %6893 = vmatprep.mubr.bf16.mxu0 %v6372
    %6894 = vmatmul.mubr.bf16.gmra.mrb[0].mxu0 %v6370
    %v6895 = vpop.f32.mrb[0].mxu0
    %v6896 = vadd.f32 0.0, %v6895
    %v6897 = vpop.f32.mrb[0].mxu0
    %v6898 = vadd.f32 0.0, %v6897
    %v6899 = vpop.f32.mrb[0].mxu0
    %v6900 = vadd.f32 0.0, %v6899
    %v6901 = vpop.f32.mrb[0].mxu0
    %v6902 = vadd.f32 0.0, %v6901
    %6903 = vdwg.mxu0
    %6904 = vmatprep.subr.bf16.mxu0 %v6662
    %6905 = vmatpush1.bf16.msra.mxu0 %v6661
    %6906 = vmatprep.subr.bf16.mxu0 %v6666
    %6907 = vmatpush1.bf16.msra.mxu0 %v6665
    %6908 = vmatprep.subr.bf16.mxu0 0
    %6909 = vmatpush1.bf16.msra.mxu0 0
    %6910 = vmatprep.subr.bf16.mxu0 0
    %6911 = vmatpush1.bf16.msra.mxu0 0
    %6912 = vmatprep.subr.bf16.mxu0 0
    %6913 = vmatpush1.bf16.msra.mxu0 0
    %6914 = vmatprep.subr.bf16.mxu0 0
    %6915 = vmatpush1.bf16.msra.mxu0 0
    %6916 = vmatprep.subr.bf16.mxu0 0
    %6917 = vmatpush1.bf16.msra.mxu0 0
    %6918 = vmatprep.subr.bf16.mxu0 0
    %6919 = vmatpush1.bf16.msra.mxu0 0
    %6920 = vmatprep.subr.bf16.mxu0 0
    %6921 = vmatpush1.bf16.msra.mxu0 0
    %6922 = vmatprep.subr.bf16.mxu0 0
    %6923 = vmatpush1.bf16.msra.mxu0 0
    %6924 = vmatprep.subr.bf16.mxu0 0
    %6925 = vmatpush1.bf16.msra.mxu0 0
    %6926 = vmatprep.subr.bf16.mxu0 0
    %6927 = vmatpush1.bf16.msra.mxu0 0
    %6928 = vmatprep.subr.bf16.mxu0 0
    %6929 = vmatpush1.bf16.msra.mxu0 0
    %6930 = vmatprep.subr.bf16.mxu0 0
    %6931 = vmatpush1.bf16.msra.mxu0 0
    %6932 = vmatprep.subr.bf16.mxu0 0
    %6933 = vmatpush1.bf16.msra.mxu0 0
    %6934 = vmatprep.subr.bf16.mxu0 0
    %6935 = vmatpush1.bf16.msra.mxu0 0
    %6936 = vmatprep.mubr.bf16.mxu0 0
    %6937 = vmatmul.mubr.bf16.gmra.mrb[0].mxu0 %v6740
    %v6938 = vpop.f32.mrb[0].mxu0
    %v6939 = vadd.f32 %v6886, %v6938
    %v6940 = vpop.f32.mrb[0].mxu0
    %v6941 = vadd.f32 %v6888, %v6940
    %v6942 = vpop.f32.mrb[0].mxu0
    %v6943 = vadd.f32 %v6890, %v6942
    %v6944 = vpop.f32.mrb[0].mxu0
    %v6945 = vadd.f32 %v6892, %v6944
    %6946 = vmatprep.mubr.bf16.mxu0 0
    %6947 = vmatmul.mubr.bf16.gmra.mrb[0].mxu0 %v6743
    %v6948 = vpop.f32.mrb[0].mxu0
    %v6949 = vadd.f32 %v6896, %v6948
    %v6950 = vpop.f32.mrb[0].mxu0
    %v6951 = vadd.f32 %v6898, %v6950
    %v6952 = vpop.f32.mrb[0].mxu0
    %v6953 = vadd.f32 %v6900, %v6952
    %v6954 = vpop.f32.mrb[0].mxu0
    %v6955 = vadd.f32 %v6902, %v6954
    %6956 = vdwg.mxu0
    %v6957 = vadd.f32 %v6261, %v6833
    %v6958 = vadd.f32 %v6262, %v6835
    %v6959 = vadd.f32 %v6263, %v6939
    %v6960 = vadd.f32 %v6264, %v6941
    %v6961 = vadd.f32 %v6265, %v6837
    %v6962 = vadd.f32 %v6266, %v6839
    %v6963 = vadd.f32 %v6267, %v6943
    %v6964 = vadd.f32 %v6268, %v6945
    %v6965 = vadd.f32 %v6269, %v6843
    %v6966 = vadd.f32 %v6270, %v6845
    %v6967 = vadd.f32 %v6271, %v6949
    %v6968 = vadd.f32 %v6272, %v6951
    %v6969 = vadd.f32 %v6273, %v6847
    %v6970 = vadd.f32 %v6274, %v6849
    %v6971 = vadd.f32 %v6275, %v6953
    %v6972 = vadd.f32 %v6276, %v6955
    %v6973 = vld [vmem:[%s6] sm:$0xf]
    %v6975 = vlaneseq
    %v6976 = vshrl.u32 %v6975, 7
    %v6977 = vsub.s32 0, %v6976
    %v6978 = vrot.slane %v6973, %v6977
    %v6979 = vlaneseq
    %v6980 = vshrl.u32 %v6979, 7
    %v6981 = vsub.s32 1, %v6980
    %v6982 = vrot.slane %v6973, %v6981
    %v6983 = vlaneseq
    %v6984 = vshrl.u32 %v6983, 7
    %v6985 = vsub.s32 2, %v6984
    %v6986 = vrot.slane %v6973, %v6985
    %v6987 = vlaneseq
    %v6988 = vshrl.u32 %v6987, 7
    %v6989 = vsub.s32 3, %v6988
    %v6990 = vrot.slane %v6973, %v6989
    %v6995 = vadd.f32 %v6957, %v6978
    %v6996 = vadd.f32 %v6958, %v6982
    %v6997 = vadd.f32 %v6959, %v6986
    %v6998 = vadd.f32 %v6960, %v6990
    %v6999 = vadd.f32 %v6961, %v6978
    %v7000 = vadd.f32 %v6962, %v6982
    %v7001 = vadd.f32 %v6963, %v6986
    %v7002 = vadd.f32 %v6964, %v6990
    %v7003 = vadd.f32 %v6965, %v6978
    %v7004 = vadd.f32 %v6966, %v6982
    %v7005 = vadd.f32 %v6967, %v6986
    %v7006 = vadd.f32 %v6968, %v6990
    %v7007 = vadd.f32 %v6969, %v6978
    %v7008 = vadd.f32 %v6970, %v6982
    %v7009 = vadd.f32 %v6971, %v6986
    %v7010 = vadd.f32 %v6972, %v6990
    %v7011 = vmax.f32 %v6995, 0.0
    %v7012 = vmax.f32 %v6996, 0.0
    %v7013 = vmax.f32 %v6997, 0.0
    %v7014 = vmax.f32 %v6998, 0.0
    %v7015 = vmax.f32 %v6999, 0.0
    %v7016 = vmax.f32 %v7000, 0.0
    %v7017 = vmax.f32 %v7001, 0.0
    %v7018 = vmax.f32 %v7002, 0.0
    %v7019 = vmax.f32 %v7003, 0.0
    %v7020 = vmax.f32 %v7004, 0.0
    %v7021 = vmax.f32 %v7005, 0.0
    %v7022 = vmax.f32 %v7006, 0.0
    %v7023 = vmax.f32 %v7007, 0.0
    %v7024 = vmax.f32 %v7008, 0.0
    %v7025 = vmax.f32 %v7009, 0.0
    %v7026 = vmax.f32 %v7010, 0.0
    %v7027 = vpack.c.bf16 %v7015, %v7011
    %v7028 = vpack.c.bf16 %v7016, %v7012
    %v7029 = vpack.c.bf16 %v7017, %v7013
    %v7030 = vpack.c.bf16 %v7018, %v7014
    %v7031 = vpack.c.bf16 %v7023, %v7019
    %v7032 = vpack.c.bf16 %v7024, %v7020
    %v7033 = vpack.c.bf16 %v7025, %v7021
    %v7034 = vpack.c.bf16 %v7026, %v7022
    %v7035 = vld [vmem:[%s7] sm:$0xf]
    %v7036 = vld [vmem:[%s7 + $0x4] sm:$0x7]
    %v7039 = vunpack.c.l.b16 %v7035
    %v7040 = vunpack.c.l.b16 %v7036
    %v7041 = vpack.c.b16 %v7040, %v7039
    %v7043 = vsel %vm172, %v7041, 0
    %7045 = vmatprep.subr.bf16.mxu0 %v7028
    %7046 = vmatpush1.bf16.msra.mxu0 %v7027
    %7047 = vmatprep.subr.bf16.mxu0 %v7032
    %7048 = vmatpush1.bf16.msra.mxu0 %v7031
    %7049 = vmatprep.subr.bf16.mxu0 0
    %7050 = vmatpush1.bf16.msra.mxu0 0
    %7051 = vmatprep.subr.bf16.mxu0 0
    %7052 = vmatpush1.bf16.msra.mxu0 0
    %7053 = vmatprep.subr.bf16.mxu0 0
    %7054 = vmatpush1.bf16.msra.mxu0 0
    %7055 = vmatprep.subr.bf16.mxu0 0
    %7056 = vmatpush1.bf16.msra.mxu0 0
    %7057 = vmatprep.subr.bf16.mxu0 0
    %7058 = vmatpush1.bf16.msra.mxu0 0
    %7059 = vmatprep.subr.bf16.mxu0 0
    %7060 = vmatpush1.bf16.msra.mxu0 0
    %7061 = vmatprep.subr.bf16.mxu0 0
    %7062 = vmatpush1.bf16.msra.mxu0 0
    %7063 = vmatprep.subr.bf16.mxu0 0
    %7064 = vmatpush1.bf16.msra.mxu0 0
    %7065 = vmatprep.subr.bf16.mxu0 0
    %7066 = vmatpush1.bf16.msra.mxu0 0
    %7067 = vmatprep.subr.bf16.mxu0 0
    %7068 = vmatpush1.bf16.msra.mxu0 0
    %7069 = vmatprep.subr.bf16.mxu0 0
    %7070 = vmatpush1.bf16.msra.mxu0 0
    %7071 = vmatprep.subr.bf16.mxu0 0
    %7072 = vmatpush1.bf16.msra.mxu0 0
    %7073 = vmatprep.subr.bf16.mxu0 0
    %7074 = vmatpush1.bf16.msra.mxu0 0
    %7075 = vmatprep.subr.bf16.mxu0 0
    %7076 = vmatpush1.bf16.msra.mxu0 0
    %7077 = vmatprep.mubr.bf16.mxu0 0
    %7078 = vmatmul.mubr.bf16.gmra.mrb[0].mxu0 %v7043
    %v7079 = vpop.f32.mrb[0].mxu0
    %v7080 = vadd.f32 0.0, %v7079
    %v7081 = vpop.f32.mrb[0].mxu0
    %v7082 = vadd.f32 0.0, %v7081
    %v7083 = vpop.f32.mrb[0].mxu0
    %v7084 = vadd.f32 0.0, %v7083
    %v7085 = vpop.f32.mrb[0].mxu0
    %v7086 = vadd.f32 0.0, %v7085
    %7087 = vdwg.mxu0
    %7088 = vmatprep.subr.bf16.mxu0 %v7030
    %7089 = vmatpush1.bf16.msra.mxu0 %v7029
    %7090 = vmatprep.subr.bf16.mxu0 %v7034
    %7091 = vmatpush1.bf16.msra.mxu0 %v7033
    %7092 = vmatprep.subr.bf16.mxu0 0
    %7093 = vmatpush1.bf16.msra.mxu0 0
    %7094 = vmatprep.subr.bf16.mxu0 0
    %7095 = vmatpush1.bf16.msra.mxu0 0
    %7096 = vmatprep.subr.bf16.mxu0 0
    %7097 = vmatpush1.bf16.msra.mxu0 0
    %7098 = vmatprep.subr.bf16.mxu0 0
    %7099 = vmatpush1.bf16.msra.mxu0 0
    %7100 = vmatprep.subr.bf16.mxu0 0
    %7101 = vmatpush1.bf16.msra.mxu0 0
    %7102 = vmatprep.subr.bf16.mxu0 0
    %7103 = vmatpush1.bf16.msra.mxu0 0
    %7104 = vmatprep.subr.bf16.mxu0 0
    %7105 = vmatpush1.bf16.msra.mxu0 0
    %7106 = vmatprep.subr.bf16.mxu0 0
    %7107 = vmatpush1.bf16.msra.mxu0 0
    %7108 = vmatprep.subr.bf16.mxu0 0
    %7109 = vmatpush1.bf16.msra.mxu0 0
    %7110 = vmatprep.subr.bf16.mxu0 0
    %7111 = vmatpush1.bf16.msra.mxu0 0
    %7112 = vmatprep.subr.bf16.mxu0 0
    %7113 = vmatpush1.bf16.msra.mxu0 0
    %7114 = vmatprep.subr.bf16.mxu0 0
    %7115 = vmatpush1.bf16.msra.mxu0 0
    %7116 = vmatprep.subr.bf16.mxu0 0
    %7117 = vmatpush1.bf16.msra.mxu0 0
    %7118 = vmatprep.subr.bf16.mxu0 0
    %7119 = vmatpush1.bf16.msra.mxu0 0
    %7120 = vmatprep.mubr.bf16.mxu0 0
    %7121 = vmatmul.mubr.bf16.gmra.mrb[0].mxu0 %v7043
    %v7122 = vpop.f32.mrb[0].mxu0
    %v7123 = vadd.f32 0.0, %v7122
    %v7124 = vpop.f32.mrb[0].mxu0
    %v7125 = vadd.f32 0.0, %v7124
    %v7126 = vpop.f32.mrb[0].mxu0
    %v7127 = vadd.f32 0.0, %v7126
    %v7128 = vpop.f32.mrb[0].mxu0
    %v7129 = vadd.f32 0.0, %v7128
    %7130 = vdwg.mxu0
    %s7131 = scalar_lea.vmem %s7, 8
    %v7132 = vld [vmem:[%s7131] sm:$0xf]
    %v7133 = vld [vmem:[%s7131 + $0x4] sm:$0x7]
    %v7136 = vunpack.c.l.b16 %v7132
    %v7137 = vunpack.c.l.b16 %v7133
    %v7138 = vpack.c.b16 %v7137, %v7136
    %v7140 = vsel %vm172, %v7138, 0
    %7142 = vmatprep.subr.bf16.mxu0 %v7028
    %7143 = vmatpush1.bf16.msra.mxu0 %v7027
    %7144 = vmatprep.subr.bf16.mxu0 %v7032
    %7145 = vmatpush1.bf16.msra.mxu0 %v7031
    %7146 = vmatprep.subr.bf16.mxu0 0
    %7147 = vmatpush1.bf16.msra.mxu0 0
    %7148 = vmatprep.subr.bf16.mxu0 0
    %7149 = vmatpush1.bf16.msra.mxu0 0
    %7150 = vmatprep.subr.bf16.mxu0 0
    %7151 = vmatpush1.bf16.msra.mxu0 0
    %7152 = vmatprep.subr.bf16.mxu0 0
    %7153 = vmatpush1.bf16.msra.mxu0 0
    %7154 = vmatprep.subr.bf16.mxu0 0
    %7155 = vmatpush1.bf16.msra.mxu0 0
    %7156 = vmatprep.subr.bf16.mxu0 0
    %7157 = vmatpush1.bf16.msra.mxu0 0
    %7158 = vmatprep.subr.bf16.mxu0 0
    %7159 = vmatpush1.bf16.msra.mxu0 0
    %7160 = vmatprep.subr.bf16.mxu0 0
    %7161 = vmatpush1.bf16.msra.mxu0 0
    %7162 = vmatprep.subr.bf16.mxu0 0
    %7163 = vmatpush1.bf16.msra.mxu0 0
    %7164 = vmatprep.subr.bf16.mxu0 0
    %7165 = vmatpush1.bf16.msra.mxu0 0
    %7166 = vmatprep.subr.bf16.mxu0 0
    %7167 = vmatpush1.bf16.msra.mxu0 0
    %7168 = vmatprep.subr.bf16.mxu0 0
    %7169 = vmatpush1.bf16.msra.mxu0 0
    %7170 = vmatprep.subr.bf16.mxu0 0
    %7171 = vmatpush1.bf16.msra.mxu0 0
    %7172 = vmatprep.subr.bf16.mxu0 0
    %7173 = vmatpush1.bf16.msra.mxu0 0
    %7174 = vmatprep.mubr.bf16.mxu0 0
    %7175 = vmatmul.mubr.bf16.gmra.mrb[0].mxu0 %v7140
    %v7176 = vpop.f32.mrb[0].mxu0
    %v7177 = vadd.f32 0.0, %v7176
    %v7178 = vpop.f32.mrb[0].mxu0
    %v7179 = vadd.f32 0.0, %v7178
    %v7180 = vpop.f32.mrb[0].mxu0
    %v7181 = vadd.f32 0.0, %v7180
    %v7182 = vpop.f32.mrb[0].mxu0
    %v7183 = vadd.f32 0.0, %v7182
    %7184 = vdwg.mxu0
    %7185 = vmatprep.subr.bf16.mxu0 %v7030
    %7186 = vmatpush1.bf16.msra.mxu0 %v7029
    %7187 = vmatprep.subr.bf16.mxu0 %v7034
    %7188 = vmatpush1.bf16.msra.mxu0 %v7033
    %7189 = vmatprep.subr.bf16.mxu0 0
    %7190 = vmatpush1.bf16.msra.mxu0 0
    %7191 = vmatprep.subr.bf16.mxu0 0
    %7192 = vmatpush1.bf16.msra.mxu0 0
    %7193 = vmatprep.subr.bf16.mxu0 0
    %7194 = vmatpush1.bf16.msra.mxu0 0
    %7195 = vmatprep.subr.bf16.mxu0 0
    %7196 = vmatpush1.bf16.msra.mxu0 0
    %7197 = vmatprep.subr.bf16.mxu0 0
    %7198 = vmatpush1.bf16.msra.mxu0 0
    %7199 = vmatprep.subr.bf16.mxu0 0
    %7200 = vmatpush1.bf16.msra.mxu0 0
    %7201 = vmatprep.subr.bf16.mxu0 0
    %7202 = vmatpush1.bf16.msra.mxu0 0
    %7203 = vmatprep.subr.bf16.mxu0 0
    %7204 = vmatpush1.bf16.msra.mxu0 0
    %7205 = vmatprep.subr.bf16.mxu0 0
    %7206 = vmatpush1.bf16.msra.mxu0 0
    %7207 = vmatprep.subr.bf16.mxu0 0
    %7208 = vmatpush1.bf16.msra.mxu0 0
    %7209 = vmatprep.subr.bf16.mxu0 0
    %7210 = vmatpush1.bf16.msra.mxu0 0
    %7211 = vmatprep.subr.bf16.mxu0 0
    %7212 = vmatpush1.bf16.msra.mxu0 0
    %7213 = vmatprep.subr.bf16.mxu0 0
    %7214 = vmatpush1.bf16.msra.mxu0 0
    %7215 = vmatprep.subr.bf16.mxu0 0
    %7216 = vmatpush1.bf16.msra.mxu0 0
    %7217 = vmatprep.mubr.bf16.mxu0 0
    %7218 = vmatmul.mubr.bf16.gmra.mrb[0].mxu0 %v7140
    %v7219 = vpop.f32.mrb[0].mxu0
    %v7220 = vadd.f32 0.0, %v7219
    %v7221 = vpop.f32.mrb[0].mxu0
    %v7222 = vadd.f32 0.0, %v7221
    %v7223 = vpop.f32.mrb[0].mxu0
    %v7224 = vadd.f32 0.0, %v7223
    %v7225 = vpop.f32.mrb[0].mxu0
    %v7226 = vadd.f32 0.0, %v7225
    %7227 = vdwg.mxu0
    %v7228 = vmax.f32 %v7080, %v7177
    %v7229 = vmax.f32 %v7082, %v7179
    %v7230 = vmax.f32 %v7123, %v7220
    %v7231 = vmax.f32 %v7125, %v7222
    %v7232 = vmax.f32 %v7084, %v7181
    %v7233 = vmax.f32 %v7086, %v7183
    %v7234 = vmax.f32 %v7127, %v7224
    %v7235 = vmax.f32 %v7129, %v7226
    %v7236 = vpack.c.bf16 %v7232, %v7228
    %v7237 = vpack.c.bf16 %v7233, %v7229
    %v7238 = vpack.c.bf16 %v7234, %v7230
    %v7239 = vpack.c.bf16 %v7235, %v7231
    %v7240 = vld [vmem:[%s8] sm:$0xff]
    %v7241 = vld [vmem:[%s8 + $0x8] sm:$0xff]
    %v7242 = vld [vmem:[%s8 + $0x10] sm:$0xff]
    %v7243 = vld [vmem:[%s8 + $0x18] sm:$0xff]
    %v7244 = vld [vmem:[%s8 + $0x20] sm:$0xff]
    %v7245 = vld [vmem:[%s8 + $0x28] sm:$0xff]
    %v7246 = vld [vmem:[%s8 + $0x30] sm:$0xff]
    %v7247 = vld [vmem:[%s8 + $0x38] sm:$0xff]
    %v7248 = vld [vmem:[%s8 + $0x40] sm:$0xff]
    %v7249 = vld [vmem:[%s8 + $0x48] sm:$0xff]
    %v7250 = vld [vmem:[%s8 + $0x50] sm:$0xff]
    %v7251 = vld [vmem:[%s8 + $0x58] sm:$0xff]
    %v7252 = vld [vmem:[%s8 + $0x60] sm:$0xff]
    %v7253 = vld [vmem:[%s8 + $0x68] sm:$0xff]
    %v7254 = vld [vmem:[%s8 + $0x70] sm:$0xff]
    %v7255 = vld [vmem:[%s8 + $0x78] sm:$0xff]
    %v7256 = vld [vmem:[%s8 + $0x80] sm:$0xff]
    %v7257 = vld [vmem:[%s8 + $0x88] sm:$0xff]
    %v7258 = vld [vmem:[%s8 + $0x90] sm:$0xff]
    %v7259 = vld [vmem:[%s8 + $0x98] sm:$0xff]
    %v7260 = vld [vmem:[%s8 + $0xa0] sm:$0xff]
    %v7261 = vld [vmem:[%s8 + $0xa8] sm:$0xff]
    %v7262 = vld [vmem:[%s8 + $0xb0] sm:$0xff]
    %v7263 = vld [vmem:[%s8 + $0xb8] sm:$0xff]
    %v7264 = vld [vmem:[%s8 + $0xc0] sm:$0xff]
    %v7265 = vld [vmem:[%s8 + $0xc8] sm:$0xff]
    %v7266 = vld [vmem:[%s8 + $0xd0] sm:$0xff]
    %v7267 = vld [vmem:[%s8 + $0xd8] sm:$0xff]
    %v7268 = vld [vmem:[%s8 + $0xe0] sm:$0xff]
    %v7269 = vld [vmem:[%s8 + $0xe8] sm:$0xff]
    %v7270 = vld [vmem:[%s8 + $0xf0] sm:$0xff]
    %v7271 = vld [vmem:[%s8 + $0xf8] sm:$0xff]
    %v7272 = vld [vmem:[%s8 + $0x100] sm:$0xff]
    %v7273 = vld [vmem:[%s8 + $0x108] sm:$0xff]
    %v7274 = vld [vmem:[%s8 + $0x110] sm:$0xff]
    %v7275 = vld [vmem:[%s8 + $0x118] sm:$0xff]
    %v7276 = vld [vmem:[%s8 + $0x120] sm:$0xff]
    %v7277 = vld [vmem:[%s8 + $0x128] sm:$0xff]
    %v7278 = vld [vmem:[%s8 + $0x130] sm:$0xff]
    %v7279 = vld [vmem:[%s8 + $0x138] sm:$0xff]
    %v7280 = vld [vmem:[%s8 + $0x140] sm:$0xff]
    %v7281 = vld [vmem:[%s8 + $0x148] sm:$0xff]
    %v7282 = vld [vmem:[%s8 + $0x150] sm:$0xff]
    %v7283 = vld [vmem:[%s8 + $0x158] sm:$0xff]
    %v7284 = vld [vmem:[%s8 + $0x160] sm:$0xff]
    %v7285 = vld [vmem:[%s8 + $0x168] sm:$0xff]
    %v7286 = vld [vmem:[%s8 + $0x170] sm:$0xff]
    %v7287 = vld [vmem:[%s8 + $0x178] sm:$0xff]
    %v7288 = vld [vmem:[%s8 + $0x180] sm:$0xff]
    %v7289 = vld [vmem:[%s8 + $0x188] sm:$0xff]
    %v7290 = vld [vmem:[%s8 + $0x190] sm:$0xff]
    %v7291 = vld [vmem:[%s8 + $0x198] sm:$0xff]
    %v7292 = vld [vmem:[%s8 + $0x1a0] sm:$0xff]
    %v7293 = vld [vmem:[%s8 + $0x1a8] sm:$0xff]
    %v7294 = vld [vmem:[%s8 + $0x1b0] sm:$0xff]
    %v7295 = vld [vmem:[%s8 + $0x1b8] sm:$0xff]
    %v7352 = vunpack.c.l.b16 %v7240
    %v7353 = vunpack.c.h.b16 %v7240
    %v7354 = vunpack.c.l.b16 %v7241
    %v7355 = vunpack.c.h.b16 %v7241
    %v7356 = vunpack.c.l.b16 %v7242
    %v7357 = vunpack.c.h.b16 %v7242
    %v7358 = vunpack.c.l.b16 %v7243
    %v7359 = vunpack.c.h.b16 %v7243
    %v7360 = vunpack.c.l.b16 %v7244
    %v7361 = vunpack.c.h.b16 %v7244
    %v7362 = vunpack.c.l.b16 %v7245
    %v7363 = vunpack.c.h.b16 %v7245
    %v7364 = vunpack.c.l.b16 %v7246
    %v7365 = vunpack.c.h.b16 %v7246
    %v7366 = vunpack.c.l.b16 %v7247
    %v7367 = vunpack.c.h.b16 %v7247
    %v7368 = vunpack.c.l.b16 %v7248
    %v7369 = vunpack.c.h.b16 %v7248
    %v7370 = vunpack.c.l.b16 %v7249
    %v7371 = vunpack.c.h.b16 %v7249
    %v7372 = vunpack.c.l.b16 %v7250
    %v7373 = vunpack.c.h.b16 %v7250
    %v7374 = vunpack.c.l.b16 %v7251
    %v7375 = vunpack.c.h.b16 %v7251
    %v7376 = vunpack.c.l.b16 %v7252
    %v7377 = vunpack.c.h.b16 %v7252
    %v7378 = vunpack.c.l.b16 %v7253
    %v7379 = vunpack.c.h.b16 %v7253
    %v7380 = vunpack.c.l.b16 %v7254
    %v7381 = vunpack.c.h.b16 %v7254
    %v7382 = vunpack.c.l.b16 %v7255
    %v7383 = vunpack.c.h.b16 %v7255
    %v7384 = vunpack.c.l.b16 %v7256
    %v7385 = vunpack.c.h.b16 %v7256
    %v7386 = vunpack.c.l.b16 %v7257
    %v7387 = vunpack.c.h.b16 %v7257
    %v7388 = vunpack.c.l.b16 %v7258
    %v7389 = vunpack.c.h.b16 %v7258
    %v7390 = vunpack.c.l.b16 %v7259
    %v7391 = vunpack.c.h.b16 %v7259
    %v7392 = vunpack.c.l.b16 %v7260
    %v7393 = vunpack.c.h.b16 %v7260
    %v7394 = vunpack.c.l.b16 %v7261
    %v7395 = vunpack.c.h.b16 %v7261
    %v7396 = vunpack.c.l.b16 %v7262
    %v7397 = vunpack.c.h.b16 %v7262
    %v7398 = vunpack.c.l.b16 %v7263
    %v7399 = vunpack.c.h.b16 %v7263
    %v7400 = vunpack.c.l.b16 %v7264
    %v7401 = vunpack.c.h.b16 %v7264
    %v7402 = vunpack.c.l.b16 %v7265
    %v7403 = vunpack.c.h.b16 %v7265
    %v7404 = vunpack.c.l.b16 %v7266
    %v7405 = vunpack.c.h.b16 %v7266
    %v7406 = vunpack.c.l.b16 %v7267
    %v7407 = vunpack.c.h.b16 %v7267
    %v7408 = vunpack.c.l.b16 %v7268
    %v7409 = vunpack.c.h.b16 %v7268
    %v7410 = vunpack.c.l.b16 %v7269
    %v7411 = vunpack.c.h.b16 %v7269
    %v7412 = vunpack.c.l.b16 %v7270
    %v7413 = vunpack.c.h.b16 %v7270
    %v7414 = vunpack.c.l.b16 %v7271
    %v7415 = vunpack.c.h.b16 %v7271
    %v7416 = vunpack.c.l.b16 %v7272
    %v7417 = vunpack.c.h.b16 %v7272
    %v7418 = vunpack.c.l.b16 %v7273
    %v7419 = vunpack.c.h.b16 %v7273
    %v7420 = vunpack.c.l.b16 %v7274
    %v7421 = vunpack.c.h.b16 %v7274
    %v7422 = vunpack.c.l.b16 %v7275
    %v7423 = vunpack.c.h.b16 %v7275
    %v7424 = vunpack.c.l.b16 %v7276
    %v7425 = vunpack.c.h.b16 %v7276
    %v7426 = vunpack.c.l.b16 %v7277
    %v7427 = vunpack.c.h.b16 %v7277
    %v7428 = vunpack.c.l.b16 %v7278
    %v7429 = vunpack.c.h.b16 %v7278
    %v7430 = vunpack.c.l.b16 %v7279
    %v7431 = vunpack.c.h.b16 %v7279
    %v7432 = vunpack.c.l.b16 %v7280
    %v7433 = vunpack.c.h.b16 %v7280
    %v7434 = vunpack.c.l.b16 %v7281
    %v7435 = vunpack.c.h.b16 %v7281
    %v7436 = vunpack.c.l.b16 %v7282
    %v7437 = vunpack.c.h.b16 %v7282
    %v7438 = vunpack.c.l.b16 %v7283
    %v7439 = vunpack.c.h.b16 %v7283
    %v7440 = vunpack.c.l.b16 %v7284
    %v7441 = vunpack.c.h.b16 %v7284
    %v7442 = vunpack.c.l.b16 %v7285
    %v7443 = vunpack.c.h.b16 %v7285
    %v7444 = vunpack.c.l.b16 %v7286
    %v7445 = vunpack.c.h.b16 %v7286
    %v7446 = vunpack.c.l.b16 %v7287
    %v7447 = vunpack.c.h.b16 %v7287
    %v7448 = vunpack.c.l.b16 %v7288
    %v7449 = vunpack.c.h.b16 %v7288
    %v7450 = vunpack.c.l.b16 %v7289
    %v7451 = vunpack.c.h.b16 %v7289
    %v7452 = vunpack.c.l.b16 %v7290
    %v7453 = vunpack.c.h.b16 %v7290
    %v7454 = vunpack.c.l.b16 %v7291
    %v7455 = vunpack.c.h.b16 %v7291
    %v7456 = vunpack.c.l.b16 %v7292
    %v7457 = vunpack.c.h.b16 %v7292
    %v7458 = vunpack.c.l.b16 %v7293
    %v7459 = vunpack.c.h.b16 %v7293
    %v7460 = vunpack.c.l.b16 %v7294
    %v7461 = vunpack.c.h.b16 %v7294
    %v7462 = vunpack.c.l.b16 %v7295
    %v7463 = vunpack.c.h.b16 %v7295
    %v7464 = vpack.c.b16 %v7354, %v7352
    %v7465 = vpack.c.b16 %v7355, %v7353
    %v7466 = vpack.c.b16 %v7358, %v7356
    %v7467 = vpack.c.b16 %v7359, %v7357
    %v7468 = vpack.c.b16 %v7362, %v7360
    %v7469 = vpack.c.b16 %v7363, %v7361
    %v7470 = vpack.c.b16 %v7366, %v7364
    %v7471 = vpack.c.b16 %v7367, %v7365
    %v7472 = vpack.c.b16 %v7370, %v7368
    %v7473 = vpack.c.b16 %v7371, %v7369
    %v7474 = vpack.c.b16 %v7374, %v7372
    %v7475 = vpack.c.b16 %v7375, %v7373
    %v7476 = vpack.c.b16 %v7378, %v7376
    %v7477 = vpack.c.b16 %v7379, %v7377
    %v7478 = vpack.c.b16 %v7382, %v7380
    %v7479 = vpack.c.b16 %v7383, %v7381
    %v7480 = vpack.c.b16 %v7386, %v7384
    %v7481 = vpack.c.b16 %v7387, %v7385
    %v7482 = vpack.c.b16 %v7390, %v7388
    %v7483 = vpack.c.b16 %v7391, %v7389
    %v7484 = vpack.c.b16 %v7394, %v7392
    %v7485 = vpack.c.b16 %v7395, %v7393
    %v7486 = vpack.c.b16 %v7398, %v7396
    %v7487 = vpack.c.b16 %v7399, %v7397
    %v7488 = vpack.c.b16 %v7402, %v7400
    %v7489 = vpack.c.b16 %v7403, %v7401
    %v7490 = vpack.c.b16 %v7406, %v7404
    %v7491 = vpack.c.b16 %v7407, %v7405
    %v7492 = vpack.c.b16 %v7410, %v7408
    %v7493 = vpack.c.b16 %v7411, %v7409
    %v7494 = vpack.c.b16 %v7414, %v7412
    %v7495 = vpack.c.b16 %v7415, %v7413
    %v7496 = vpack.c.b16 %v7418, %v7416
    %v7497 = vpack.c.b16 %v7419, %v7417
    %v7498 = vpack.c.b16 %v7422, %v7420
    %v7499 = vpack.c.b16 %v7423, %v7421
    %v7500 = vpack.c.b16 %v7426, %v7424
    %v7501 = vpack.c.b16 %v7427, %v7425
    %v7502 = vpack.c.b16 %v7430, %v7428
    %v7503 = vpack.c.b16 %v7431, %v7429
    %v7504 = vpack.c.b16 %v7434, %v7432
    %v7505 = vpack.c.b16 %v7435, %v7433
    %v7506 = vpack.c.b16 %v7438, %v7436
    %v7507 = vpack.c.b16 %v7439, %v7437
    %v7508 = vpack.c.b16 %v7442, %v7440
    %v7509 = vpack.c.b16 %v7443, %v7441
    %v7510 = vpack.c.b16 %v7446, %v7444
    %v7511 = vpack.c.b16 %v7447, %v7445
    %v7512 = vpack.c.b16 %v7450, %v7448
    %v7513 = vpack.c.b16 %v7451, %v7449
    %v7514 = vpack.c.b16 %v7454, %v7452
    %v7515 = vpack.c.b16 %v7455, %v7453
    %v7516 = vpack.c.b16 %v7458, %v7456
    %v7517 = vpack.c.b16 %v7459, %v7457
    %v7518 = vpack.c.b16 %v7462, %v7460
    %v7519 = vpack.c.b16 %v7463, %v7461
    %v7577 = vsel %vm2307, %v7239, 0
    %7579 = vmatprep.subr.bf16.mxu0 %v7465
    %7580 = vmatpush1.bf16.msra.mxu0 %v7464
    %7581 = vmatprep.subr.bf16.mxu0 %v7467
    %7582 = vmatpush1.bf16.msra.mxu0 %v7466
    %7583 = vmatprep.subr.bf16.mxu0 %v7469
    %7584 = vmatpush1.bf16.msra.mxu0 %v7468
    %7585 = vmatprep.subr.bf16.mxu0 %v7471
    %7586 = vmatpush1.bf16.msra.mxu0 %v7470
    %7587 = vmatprep.subr.bf16.mxu0 %v7473
    %7588 = vmatpush1.bf16.msra.mxu0 %v7472
    %7589 = vmatprep.subr.bf16.mxu0 %v7475
    %7590 = vmatpush1.bf16.msra.mxu0 %v7474
    %7591 = vmatprep.subr.bf16.mxu0 %v7477
    %7592 = vmatpush1.bf16.msra.mxu0 %v7476
    %7593 = vmatprep.subr.bf16.mxu0 %v7479
    %7594 = vmatpush1.bf16.msra.mxu0 %v7478
    %7595 = vmatprep.subr.bf16.mxu0 %v7481
    %7596 = vmatpush1.bf16.msra.mxu0 %v7480
    %7597 = vmatprep.subr.bf16.mxu0 %v7483
    %7598 = vmatpush1.bf16.msra.mxu0 %v7482
    %7599 = vmatprep.subr.bf16.mxu0 %v7485
    %7600 = vmatpush1.bf16.msra.mxu0 %v7484
    %7601 = vmatprep.subr.bf16.mxu0 %v7487
    %7602 = vmatpush1.bf16.msra.mxu0 %v7486
    %7603 = vmatprep.subr.bf16.mxu0 %v7489
    %7604 = vmatpush1.bf16.msra.mxu0 %v7488
    %7605 = vmatprep.subr.bf16.mxu0 %v7491
    %7606 = vmatpush1.bf16.msra.mxu0 %v7490
    %7607 = vmatprep.subr.bf16.mxu0 %v7493
    %7608 = vmatpush1.bf16.msra.mxu0 %v7492
    %7609 = vmatprep.subr.bf16.mxu0 %v7495
    %7610 = vmatpush1.bf16.msra.mxu0 %v7494
    %7611 = vmatprep.mubr.bf16.mxu0 %v7237
    %7612 = vmatmul.mubr.bf16.gmra.mrb[0].mxu0 %v7236
    %v7613 = vpop.f32.mrb[0].mxu0
    %v7614 = vadd.f32 0.0, %v7613
    %v7615 = vpop.f32.mrb[0].mxu0
    %v7616 = vadd.f32 0.0, %v7615
    %v7617 = vpop.f32.mrb[0].mxu0
    %v7618 = vadd.f32 0.0, %v7617
    %v7619 = vpop.f32.mrb[0].mxu0
    %v7620 = vadd.f32 0.0, %v7619
    %7621 = vdwg.mxu0
    %7622 = vmatprep.subr.bf16.mxu0 %v7497
    %7623 = vmatpush1.bf16.msra.mxu0 %v7496
    %7624 = vmatprep.subr.bf16.mxu0 %v7499
    %7625 = vmatpush1.bf16.msra.mxu0 %v7498
    %7626 = vmatprep.subr.bf16.mxu0 %v7501
    %7627 = vmatpush1.bf16.msra.mxu0 %v7500
    %7628 = vmatprep.subr.bf16.mxu0 %v7503
    %7629 = vmatpush1.bf16.msra.mxu0 %v7502
    %7630 = vmatprep.subr.bf16.mxu0 %v7505
    %7631 = vmatpush1.bf16.msra.mxu0 %v7504
    %7632 = vmatprep.subr.bf16.mxu0 %v7507
    %7633 = vmatpush1.bf16.msra.mxu0 %v7506
    %7634 = vmatprep.subr.bf16.mxu0 %v7509
    %7635 = vmatpush1.bf16.msra.mxu0 %v7508
    %7636 = vmatprep.subr.bf16.mxu0 %v7511
    %7637 = vmatpush1.bf16.msra.mxu0 %v7510
    %7638 = vmatprep.subr.bf16.mxu0 %v7513
    %7639 = vmatpush1.bf16.msra.mxu0 %v7512
    %7640 = vmatprep.subr.bf16.mxu0 %v7515
    %7641 = vmatpush1.bf16.msra.mxu0 %v7514
    %7642 = vmatprep.subr.bf16.mxu0 %v7517
    %7643 = vmatpush1.bf16.msra.mxu0 %v7516
    %7644 = vmatprep.subr.bf16.mxu0 %v7519
    %7645 = vmatpush1.bf16.msra.mxu0 %v7518
    %7646 = vmatprep.subr.bf16.mxu0 0
    %7647 = vmatpush1.bf16.msra.mxu0 0
    %7648 = vmatprep.subr.bf16.mxu0 0
    %7649 = vmatpush1.bf16.msra.mxu0 0
    %7650 = vmatprep.subr.bf16.mxu0 0
    %7651 = vmatpush1.bf16.msra.mxu0 0
    %7652 = vmatprep.subr.bf16.mxu0 0
    %7653 = vmatpush1.bf16.msra.mxu0 0
    %7654 = vmatprep.mubr.bf16.mxu0 %v7577
    %7655 = vmatmul.mubr.bf16.gmra.mrb[0].mxu0 %v7238
    %v7656 = vpop.f32.mrb[0].mxu0
    %v7657 = vadd.f32 %v7614, %v7656
    %v7658 = vpop.f32.mrb[0].mxu0
    %v7659 = vadd.f32 %v7616, %v7658
    %v7660 = vpop.f32.mrb[0].mxu0
    %v7661 = vadd.f32 %v7618, %v7660
    %v7662 = vpop.f32.mrb[0].mxu0
    %v7663 = vadd.f32 %v7620, %v7662
    %7664 = vdwg.mxu0
    %s7665 = scalar_lea.vmem %s8, 448
    %v7666 = vld [vmem:[%s7665] sm:$0xff]
    %v7667 = vld [vmem:[%s7665 + $0x8] sm:$0xff]
    %v7668 = vld [vmem:[%s7665 + $0x10] sm:$0xff]
    %v7669 = vld [vmem:[%s7665 + $0x18] sm:$0xff]
    %v7670 = vld [vmem:[%s7665 + $0x20] sm:$0xff]
    %v7671 = vld [vmem:[%s7665 + $0x28] sm:$0xff]
    %v7672 = vld [vmem:[%s7665 + $0x30] sm:$0xff]
    %v7673 = vld [vmem:[%s7665 + $0x38] sm:$0xff]
    %v7674 = vld [vmem:[%s7665 + $0x40] sm:$0xff]
    %v7675 = vld [vmem:[%s7665 + $0x48] sm:$0xff]
    %v7676 = vld [vmem:[%s7665 + $0x50] sm:$0xff]
    %v7677 = vld [vmem:[%s7665 + $0x58] sm:$0xff]
    %v7678 = vld [vmem:[%s7665 + $0x60] sm:$0xff]
    %v7679 = vld [vmem:[%s7665 + $0x68] sm:$0xff]
    %v7680 = vld [vmem:[%s7665 + $0x70] sm:$0xff]
    %v7681 = vld [vmem:[%s7665 + $0x78] sm:$0xff]
    %v7682 = vld [vmem:[%s7665 + $0x80] sm:$0xff]
    %v7683 = vld [vmem:[%s7665 + $0x88] sm:$0xff]
    %v7684 = vld [vmem:[%s7665 + $0x90] sm:$0xff]
    %v7685 = vld [vmem:[%s7665 + $0x98] sm:$0xff]
    %v7686 = vld [vmem:[%s7665 + $0xa0] sm:$0xff]
    %v7687 = vld [vmem:[%s7665 + $0xa8] sm:$0xff]
    %v7688 = vld [vmem:[%s7665 + $0xb0] sm:$0xff]
    %v7689 = vld [vmem:[%s7665 + $0xb8] sm:$0xff]
    %v7690 = vld [vmem:[%s7665 + $0xc0] sm:$0xff]
    %v7691 = vld [vmem:[%s7665 + $0xc8] sm:$0xff]
    %v7692 = vld [vmem:[%s7665 + $0xd0] sm:$0xff]
    %v7693 = vld [vmem:[%s7665 + $0xd8] sm:$0xff]
    %v7694 = vld [vmem:[%s7665 + $0xe0] sm:$0xff]
    %v7695 = vld [vmem:[%s7665 + $0xe8] sm:$0xff]
    %v7696 = vld [vmem:[%s7665 + $0xf0] sm:$0xff]
    %v7697 = vld [vmem:[%s7665 + $0xf8] sm:$0xff]
    %v7698 = vld [vmem:[%s7665 + $0x100] sm:$0xff]
    %v7699 = vld [vmem:[%s7665 + $0x108] sm:$0xff]
    %v7700 = vld [vmem:[%s7665 + $0x110] sm:$0xff]
    %v7701 = vld [vmem:[%s7665 + $0x118] sm:$0xff]
    %v7702 = vld [vmem:[%s7665 + $0x120] sm:$0xff]
    %v7703 = vld [vmem:[%s7665 + $0x128] sm:$0xff]
    %v7704 = vld [vmem:[%s7665 + $0x130] sm:$0xff]
    %v7705 = vld [vmem:[%s7665 + $0x138] sm:$0xff]
    %v7706 = vld [vmem:[%s7665 + $0x140] sm:$0xff]
    %v7707 = vld [vmem:[%s7665 + $0x148] sm:$0xff]
    %v7708 = vld [vmem:[%s7665 + $0x150] sm:$0xff]
    %v7709 = vld [vmem:[%s7665 + $0x158] sm:$0xff]
    %v7710 = vld [vmem:[%s7665 + $0x160] sm:$0xff]
    %v7711 = vld [vmem:[%s7665 + $0x168] sm:$0xff]
    %v7712 = vld [vmem:[%s7665 + $0x170] sm:$0xff]
    %v7713 = vld [vmem:[%s7665 + $0x178] sm:$0xff]
    %v7714 = vld [vmem:[%s7665 + $0x180] sm:$0xff]
    %v7715 = vld [vmem:[%s7665 + $0x188] sm:$0xff]
    %v7716 = vld [vmem:[%s7665 + $0x190] sm:$0xff]
    %v7717 = vld [vmem:[%s7665 + $0x198] sm:$0xff]
    %v7718 = vld [vmem:[%s7665 + $0x1a0] sm:$0xff]
    %v7719 = vld [vmem:[%s7665 + $0x1a8] sm:$0xff]
    %v7720 = vld [vmem:[%s7665 + $0x1b0] sm:$0xff]
    %v7721 = vld [vmem:[%s7665 + $0x1b8] sm:$0xff]
    %v7778 = vunpack.c.l.b16 %v7666
    %v7779 = vunpack.c.h.b16 %v7666
    %v7780 = vunpack.c.l.b16 %v7667
    %v7781 = vunpack.c.h.b16 %v7667
    %v7782 = vunpack.c.l.b16 %v7668
    %v7783 = vunpack.c.h.b16 %v7668
    %v7784 = vunpack.c.l.b16 %v7669
    %v7785 = vunpack.c.h.b16 %v7669
    %v7786 = vunpack.c.l.b16 %v7670
    %v7787 = vunpack.c.h.b16 %v7670
    %v7788 = vunpack.c.l.b16 %v7671
    %v7789 = vunpack.c.h.b16 %v7671
    %v7790 = vunpack.c.l.b16 %v7672
    %v7791 = vunpack.c.h.b16 %v7672
    %v7792 = vunpack.c.l.b16 %v7673
    %v7793 = vunpack.c.h.b16 %v7673
    %v7794 = vunpack.c.l.b16 %v7674
    %v7795 = vunpack.c.h.b16 %v7674
    %v7796 = vunpack.c.l.b16 %v7675
    %v7797 = vunpack.c.h.b16 %v7675
    %v7798 = vunpack.c.l.b16 %v7676
    %v7799 = vunpack.c.h.b16 %v7676
    %v7800 = vunpack.c.l.b16 %v7677
    %v7801 = vunpack.c.h.b16 %v7677
    %v7802 = vunpack.c.l.b16 %v7678
    %v7803 = vunpack.c.h.b16 %v7678
    %v7804 = vunpack.c.l.b16 %v7679
    %v7805 = vunpack.c.h.b16 %v7679
    %v7806 = vunpack.c.l.b16 %v7680
    %v7807 = vunpack.c.h.b16 %v7680
    %v7808 = vunpack.c.l.b16 %v7681
    %v7809 = vunpack.c.h.b16 %v7681
    %v7810 = vunpack.c.l.b16 %v7682
    %v7811 = vunpack.c.h.b16 %v7682
    %v7812 = vunpack.c.l.b16 %v7683
    %v7813 = vunpack.c.h.b16 %v7683
    %v7814 = vunpack.c.l.b16 %v7684
    %v7815 = vunpack.c.h.b16 %v7684
    %v7816 = vunpack.c.l.b16 %v7685
    %v7817 = vunpack.c.h.b16 %v7685
    %v7818 = vunpack.c.l.b16 %v7686
    %v7819 = vunpack.c.h.b16 %v7686
    %v7820 = vunpack.c.l.b16 %v7687
    %v7821 = vunpack.c.h.b16 %v7687
    %v7822 = vunpack.c.l.b16 %v7688
    %v7823 = vunpack.c.h.b16 %v7688
    %v7824 = vunpack.c.l.b16 %v7689
    %v7825 = vunpack.c.h.b16 %v7689
    %v7826 = vunpack.c.l.b16 %v7690
    %v7827 = vunpack.c.h.b16 %v7690
    %v7828 = vunpack.c.l.b16 %v7691
    %v7829 = vunpack.c.h.b16 %v7691
    %v7830 = vunpack.c.l.b16 %v7692
    %v7831 = vunpack.c.h.b16 %v7692
    %v7832 = vunpack.c.l.b16 %v7693
    %v7833 = vunpack.c.h.b16 %v7693
    %v7834 = vunpack.c.l.b16 %v7694
    %v7835 = vunpack.c.h.b16 %v7694
    %v7836 = vunpack.c.l.b16 %v7695
    %v7837 = vunpack.c.h.b16 %v7695
    %v7838 = vunpack.c.l.b16 %v7696
    %v7839 = vunpack.c.h.b16 %v7696
    %v7840 = vunpack.c.l.b16 %v7697
    %v7841 = vunpack.c.h.b16 %v7697
    %v7842 = vunpack.c.l.b16 %v7698
    %v7843 = vunpack.c.h.b16 %v7698
    %v7844 = vunpack.c.l.b16 %v7699
    %v7845 = vunpack.c.h.b16 %v7699
    %v7846 = vunpack.c.l.b16 %v7700
    %v7847 = vunpack.c.h.b16 %v7700
    %v7848 = vunpack.c.l.b16 %v7701
    %v7849 = vunpack.c.h.b16 %v7701
    %v7850 = vunpack.c.l.b16 %v7702
    %v7851 = vunpack.c.h.b16 %v7702
    %v7852 = vunpack.c.l.b16 %v7703
    %v7853 = vunpack.c.h.b16 %v7703
    %v7854 = vunpack.c.l.b16 %v7704
    %v7855 = vunpack.c.h.b16 %v7704
    %v7856 = vunpack.c.l.b16 %v7705
    %v7857 = vunpack.c.h.b16 %v7705
    %v7858 = vunpack.c.l.b16 %v7706
    %v7859 = vunpack.c.h.b16 %v7706
    %v7860 = vunpack.c.l.b16 %v7707
    %v7861 = vunpack.c.h.b16 %v7707
    %v7862 = vunpack.c.l.b16 %v7708
    %v7863 = vunpack.c.h.b16 %v7708
    %v7864 = vunpack.c.l.b16 %v7709
    %v7865 = vunpack.c.h.b16 %v7709
    %v7866 = vunpack.c.l.b16 %v7710
    %v7867 = vunpack.c.h.b16 %v7710
    %v7868 = vunpack.c.l.b16 %v7711
    %v7869 = vunpack.c.h.b16 %v7711
    %v7870 = vunpack.c.l.b16 %v7712
    %v7871 = vunpack.c.h.b16 %v7712
    %v7872 = vunpack.c.l.b16 %v7713
    %v7873 = vunpack.c.h.b16 %v7713
    %v7874 = vunpack.c.l.b16 %v7714
    %v7875 = vunpack.c.h.b16 %v7714
    %v7876 = vunpack.c.l.b16 %v7715
    %v7877 = vunpack.c.h.b16 %v7715
    %v7878 = vunpack.c.l.b16 %v7716
    %v7879 = vunpack.c.h.b16 %v7716
    %v7880 = vunpack.c.l.b16 %v7717
    %v7881 = vunpack.c.h.b16 %v7717
    %v7882 = vunpack.c.l.b16 %v7718
    %v7883 = vunpack.c.h.b16 %v7718
    %v7884 = vunpack.c.l.b16 %v7719
    %v7885 = vunpack.c.h.b16 %v7719
    %v7886 = vunpack.c.l.b16 %v7720
    %v7887 = vunpack.c.h.b16 %v7720
    %v7888 = vunpack.c.l.b16 %v7721
    %v7889 = vunpack.c.h.b16 %v7721
    %v7890 = vpack.c.b16 %v7780, %v7778
    %v7891 = vpack.c.b16 %v7781, %v7779
    %v7892 = vpack.c.b16 %v7784, %v7782
    %v7893 = vpack.c.b16 %v7785, %v7783
    %v7894 = vpack.c.b16 %v7788, %v7786
    %v7895 = vpack.c.b16 %v7789, %v7787
    %v7896 = vpack.c.b16 %v7792, %v7790
    %v7897 = vpack.c.b16 %v7793, %v7791
    %v7898 = vpack.c.b16 %v7796, %v7794
    %v7899 = vpack.c.b16 %v7797, %v7795
    %v7900 = vpack.c.b16 %v7800, %v7798
    %v7901 = vpack.c.b16 %v7801, %v7799
    %v7902 = vpack.c.b16 %v7804, %v7802
    %v7903 = vpack.c.b16 %v7805, %v7803
    %v7904 = vpack.c.b16 %v7808, %v7806
    %v7905 = vpack.c.b16 %v7809, %v7807
    %v7906 = vpack.c.b16 %v7812, %v7810
    %v7907 = vpack.c.b16 %v7813, %v7811
    %v7908 = vpack.c.b16 %v7816, %v7814
    %v7909 = vpack.c.b16 %v7817, %v7815
    %v7910 = vpack.c.b16 %v7820, %v7818
    %v7911 = vpack.c.b16 %v7821, %v7819
    %v7912 = vpack.c.b16 %v7824, %v7822
    %v7913 = vpack.c.b16 %v7825, %v7823
    %v7914 = vpack.c.b16 %v7828, %v7826
    %v7915 = vpack.c.b16 %v7829, %v7827
    %v7916 = vpack.c.b16 %v7832, %v7830
    %v7917 = vpack.c.b16 %v7833, %v7831
    %v7918 = vpack.c.b16 %v7836, %v7834
    %v7919 = vpack.c.b16 %v7837, %v7835
    %v7920 = vpack.c.b16 %v7840, %v7838
    %v7921 = vpack.c.b16 %v7841, %v7839
    %v7922 = vpack.c.b16 %v7844, %v7842
    %v7923 = vpack.c.b16 %v7845, %v7843
    %v7924 = vpack.c.b16 %v7848, %v7846
    %v7925 = vpack.c.b16 %v7849, %v7847
    %v7926 = vpack.c.b16 %v7852, %v7850
    %v7927 = vpack.c.b16 %v7853, %v7851
    %v7928 = vpack.c.b16 %v7856, %v7854
    %v7929 = vpack.c.b16 %v7857, %v7855
    %v7930 = vpack.c.b16 %v7860, %v7858
    %v7931 = vpack.c.b16 %v7861, %v7859
    %v7932 = vpack.c.b16 %v7864, %v7862
    %v7933 = vpack.c.b16 %v7865, %v7863
    %v7934 = vpack.c.b16 %v7868, %v7866
    %v7935 = vpack.c.b16 %v7869, %v7867
    %v7936 = vpack.c.b16 %v7872, %v7870
    %v7937 = vpack.c.b16 %v7873, %v7871
    %v7938 = vpack.c.b16 %v7876, %v7874
    %v7939 = vpack.c.b16 %v7877, %v7875
    %v7940 = vpack.c.b16 %v7880, %v7878
    %v7941 = vpack.c.b16 %v7881, %v7879
    %v7942 = vpack.c.b16 %v7884, %v7882
    %v7943 = vpack.c.b16 %v7885, %v7883
    %v7944 = vpack.c.b16 %v7888, %v7886
    %v7945 = vpack.c.b16 %v7889, %v7887
    %8002 = vmatprep.subr.bf16.mxu0 %v7891
    %8003 = vmatpush1.bf16.msra.mxu0 %v7890
    %8004 = vmatprep.subr.bf16.mxu0 %v7893
    %8005 = vmatpush1.bf16.msra.mxu0 %v7892
    %8006 = vmatprep.subr.bf16.mxu0 %v7895
    %8007 = vmatpush1.bf16.msra.mxu0 %v7894
    %8008 = vmatprep.subr.bf16.mxu0 %v7897
    %8009 = vmatpush1.bf16.msra.mxu0 %v7896
    %8010 = vmatprep.subr.bf16.mxu0 %v7899
    %8011 = vmatpush1.bf16.msra.mxu0 %v7898
    %8012 = vmatprep.subr.bf16.mxu0 %v7901
    %8013 = vmatpush1.bf16.msra.mxu0 %v7900
    %8014 = vmatprep.subr.bf16.mxu0 %v7903
    %8015 = vmatpush1.bf16.msra.mxu0 %v7902
    %8016 = vmatprep.subr.bf16.mxu0 %v7905
    %8017 = vmatpush1.bf16.msra.mxu0 %v7904
    %8018 = vmatprep.subr.bf16.mxu0 %v7907
    %8019 = vmatpush1.bf16.msra.mxu0 %v7906
    %8020 = vmatprep.subr.bf16.mxu0 %v7909
    %8021 = vmatpush1.bf16.msra.mxu0 %v7908
    %8022 = vmatprep.subr.bf16.mxu0 %v7911
    %8023 = vmatpush1.bf16.msra.mxu0 %v7910
    %8024 = vmatprep.subr.bf16.mxu0 %v7913
    %8025 = vmatpush1.bf16.msra.mxu0 %v7912
    %8026 = vmatprep.subr.bf16.mxu0 %v7915
    %8027 = vmatpush1.bf16.msra.mxu0 %v7914
    %8028 = vmatprep.subr.bf16.mxu0 %v7917
    %8029 = vmatpush1.bf16.msra.mxu0 %v7916
    %8030 = vmatprep.subr.bf16.mxu0 %v7919
    %8031 = vmatpush1.bf16.msra.mxu0 %v7918
    %8032 = vmatprep.subr.bf16.mxu0 %v7921
    %8033 = vmatpush1.bf16.msra.mxu0 %v7920
    %8034 = vmatprep.mubr.bf16.mxu0 %v7237
    %8035 = vmatmul.mubr.bf16.gmra.mrb[0].mxu0 %v7236
    %v8036 = vpop.f32.mrb[0].mxu0
    %v8037 = vadd.f32 0.0, %v8036
    %v8038 = vpop.f32.mrb[0].mxu0
    %v8039 = vadd.f32 0.0, %v8038
    %v8040 = vpop.f32.mrb[0].mxu0
    %v8041 = vadd.f32 0.0, %v8040
    %v8042 = vpop.f32.mrb[0].mxu0
    %v8043 = vadd.f32 0.0, %v8042
    %8044 = vdwg.mxu0
    %8045 = vmatprep.subr.bf16.mxu0 %v7923
    %8046 = vmatpush1.bf16.msra.mxu0 %v7922
    %8047 = vmatprep.subr.bf16.mxu0 %v7925
    %8048 = vmatpush1.bf16.msra.mxu0 %v7924
    %8049 = vmatprep.subr.bf16.mxu0 %v7927
    %8050 = vmatpush1.bf16.msra.mxu0 %v7926
    %8051 = vmatprep.subr.bf16.mxu0 %v7929
    %8052 = vmatpush1.bf16.msra.mxu0 %v7928
    %8053 = vmatprep.subr.bf16.mxu0 %v7931
    %8054 = vmatpush1.bf16.msra.mxu0 %v7930
    %8055 = vmatprep.subr.bf16.mxu0 %v7933
    %8056 = vmatpush1.bf16.msra.mxu0 %v7932
    %8057 = vmatprep.subr.bf16.mxu0 %v7935
    %8058 = vmatpush1.bf16.msra.mxu0 %v7934
    %8059 = vmatprep.subr.bf16.mxu0 %v7937
    %8060 = vmatpush1.bf16.msra.mxu0 %v7936
    %8061 = vmatprep.subr.bf16.mxu0 %v7939
    %8062 = vmatpush1.bf16.msra.mxu0 %v7938
    %8063 = vmatprep.subr.bf16.mxu0 %v7941
    %8064 = vmatpush1.bf16.msra.mxu0 %v7940
    %8065 = vmatprep.subr.bf16.mxu0 %v7943
    %8066 = vmatpush1.bf16.msra.mxu0 %v7942
    %8067 = vmatprep.subr.bf16.mxu0 %v7945
    %8068 = vmatpush1.bf16.msra.mxu0 %v7944
    %8069 = vmatprep.subr.bf16.mxu0 0
    %8070 = vmatpush1.bf16.msra.mxu0 0
    %8071 = vmatprep.subr.bf16.mxu0 0
    %8072 = vmatpush1.bf16.msra.mxu0 0
    %8073 = vmatprep.subr.bf16.mxu0 0
    %8074 = vmatpush1.bf16.msra.mxu0 0
    %8075 = vmatprep.subr.bf16.mxu0 0
    %8076 = vmatpush1.bf16.msra.mxu0 0
    %8077 = vmatprep.mubr.bf16.mxu0 %v7577
    %8078 = vmatmul.mubr.bf16.gmra.mrb[0].mxu0 %v7238
    %v8079 = vpop.f32.mrb[0].mxu0
    %v8080 = vadd.f32 %v8037, %v8079
    %v8081 = vpop.f32.mrb[0].mxu0
    %v8082 = vadd.f32 %v8039, %v8081
    %v8083 = vpop.f32.mrb[0].mxu0
    %v8084 = vadd.f32 %v8041, %v8083
    %v8085 = vpop.f32.mrb[0].mxu0
    %v8086 = vadd.f32 %v8043, %v8085
    %8087 = vdwg.mxu0
    %v8088 = vmax.f32 %v7657, %v8080
    %v8089 = vmax.f32 %v7659, %v8082
    %v8090 = vmax.f32 %v7661, %v8084
    %v8091 = vmax.f32 %v7663, %v8086
    %v8092 = vpack.c.bf16 %v8090, %v8088
    %v8093 = vpack.c.bf16 %v8091, %v8089
    %v8096 = vunpack.c.l.b16 %v8092
    %v8097 = vunpack.c.l.b16 %v8093
    %v8098 = vunpack.c.h.b16 %v8092
    %v8099 = vunpack.c.h.b16 %v8093
    %v8100 = vpack.c.b16 %v8097, %v8096
    %v8101 = vpack.c.b16 %v8099, %v8098
    %vm8104 = vcmask 1043456
    %vm8105 = vcmask 785412
    %vm8106 = vmor %vm8105, %vm8104
    %8107 = vst.msk [vmem:[#allocation3] sm:$0xff] %vm8106, %v8100
    %vm8108 = vcmask 1042432
    %vm8109 = vcmask 784388
    %vm8110 = vmor %vm8109, %vm8108
    %8111 = vst.msk [vmem:[#allocation3 + $0x8] sm:$0x77] %vm8110, %v8101
    %v8112 = vld [vmem:[#allocation3] sm:$0x11]
    %v8113 = vld [vmem:[%s9] sm:$0xf]
    %v8114 = vld [vmem:[%s9 + $0x4] sm:$0xf]
    %v8115 = vld [vmem:[%s9 + $0x8] sm:$0xf]
    %v8116 = vld [vmem:[%s9 + $0xc] sm:$0xf]
    %v8117 = vld [vmem:[%s9 + $0x10] sm:$0xf]
    %v8118 = vld [vmem:[%s9 + $0x14] sm:$0xf]
    %v8119 = vld [vmem:[%s9 + $0x18] sm:$0xf]
    %v8120 = vld [vmem:[%s9 + $0x1c] sm:$0xf]
    %v8121 = vld [vmem:[%s9 + $0x20] sm:$0xf]
    %v8122 = vld [vmem:[%s9 + $0x24] sm:$0xf]
    %v8123 = vld [vmem:[%s9 + $0x28] sm:$0xf]
    %v8124 = vld [vmem:[%s9 + $0x2c] sm:$0xf]
    %v8125 = vld [vmem:[%s9 + $0x30] sm:$0xf]
    %v8126 = vld [vmem:[%s9 + $0x34] sm:$0xf]
    %v8127 = vld [vmem:[%s9 + $0x38] sm:$0xf]
    %v8128 = vld [vmem:[%s9 + $0x3c] sm:$0xf]
    %v8129 = vld [vmem:[%s9 + $0x40] sm:$0xf]
    %v8130 = vld [vmem:[%s9 + $0x44] sm:$0xf]
    %v8131 = vld [vmem:[%s9 + $0x48] sm:$0xf]
    %v8132 = vld [vmem:[%s9 + $0x4c] sm:$0xf]
    %v8133 = vld [vmem:[%s9 + $0x50] sm:$0xf]
    %v8134 = vld [vmem:[%s9 + $0x54] sm:$0xf]
    %v8135 = vld [vmem:[%s9 + $0x58] sm:$0xf]
    %v8136 = vld [vmem:[%s9 + $0x5c] sm:$0xf]
    %v8137 = vld [vmem:[%s9 + $0x60] sm:$0xf]
    %v8138 = vld [vmem:[%s9 + $0x64] sm:$0xf]
    %v8139 = vld [vmem:[%s9 + $0x68] sm:$0xf]
    %v8140 = vld [vmem:[%s9 + $0x6c] sm:$0xf]
    %v8141 = vld [vmem:[#allocation3] sm:$0x22]
    %v8142 = vld [vmem:[%s9 + $0x70] sm:$0xf]
    %v8143 = vld [vmem:[%s9 + $0x74] sm:$0xf]
    %v8144 = vld [vmem:[%s9 + $0x78] sm:$0xf]
    %v8145 = vld [vmem:[%s9 + $0x7c] sm:$0xf]
    %v8146 = vld [vmem:[%s9 + $0x80] sm:$0xf]
    %v8147 = vld [vmem:[%s9 + $0x84] sm:$0xf]
    %v8148 = vld [vmem:[%s9 + $0x88] sm:$0xf]
    %v8149 = vld [vmem:[%s9 + $0x8c] sm:$0xf]
    %v8150 = vld [vmem:[%s9 + $0x90] sm:$0xf]
    %v8151 = vld [vmem:[%s9 + $0x94] sm:$0xf]
    %v8152 = vld [vmem:[%s9 + $0x98] sm:$0xf]
    %v8153 = vld [vmem:[%s9 + $0x9c] sm:$0xf]
    %v8154 = vld [vmem:[%s9 + $0xa0] sm:$0xf]
    %v8155 = vld [vmem:[%s9 + $0xa4] sm:$0xf]
    %v8156 = vld [vmem:[%s9 + $0xa8] sm:$0xf]
    %v8157 = vld [vmem:[%s9 + $0xac] sm:$0xf]
    %v8158 = vld [vmem:[%s9 + $0xb0] sm:$0xf]
    %v8159 = vld [vmem:[%s9 + $0xb4] sm:$0xf]
    %v8160 = vld [vmem:[%s9 + $0xb8] sm:$0xf]
    %v8161 = vld [vmem:[%s9 + $0xbc] sm:$0xf]
    %v8162 = vld [vmem:[%s9 + $0xc0] sm:$0xf]
    %v8163 = vld [vmem:[%s9 + $0xc4] sm:$0xf]
    %v8164 = vld [vmem:[%s9 + $0xc8] sm:$0xf]
    %v8165 = vld [vmem:[%s9 + $0xcc] sm:$0xf]
    %v8166 = vld [vmem:[%s9 + $0xd0] sm:$0xf]
    %v8167 = vld [vmem:[%s9 + $0xd4] sm:$0xf]
    %v8168 = vld [vmem:[%s9 + $0xd8] sm:$0xf]
    %v8169 = vld [vmem:[%s9 + $0xdc] sm:$0xf]
    %v8171 = vunpack.c.l.b16 %v8141
    %v8172 = vunpack.c.h.b16 %v8141
    %v8173 = vpack.c.b16 %v8171, %v8171
    %v8174 = vpack.c.b16 %v8172, %v8172
    %v8175 = vrot.slane %v8173, 1
    %v8176 = vrot.slane %v8174, 1
    %v8206 = vunpack.c.l.b16 %v8142
    %v8207 = vunpack.c.l.b16 %v8143
    %v8208 = vunpack.c.l.b16 %v8144
    %v8209 = vunpack.c.l.b16 %v8145
    %v8210 = vunpack.c.l.b16 %v8146
    %v8211 = vunpack.c.l.b16 %v8147
    %v8212 = vunpack.c.l.b16 %v8148
    %v8213 = vunpack.c.l.b16 %v8149
    %v8214 = vunpack.c.l.b16 %v8150
    %v8215 = vunpack.c.l.b16 %v8151
    %v8216 = vunpack.c.l.b16 %v8152
    %v8217 = vunpack.c.l.b16 %v8153
    %v8218 = vunpack.c.l.b16 %v8154
    %v8219 = vunpack.c.l.b16 %v8155
    %v8220 = vunpack.c.l.b16 %v8156
    %v8221 = vunpack.c.l.b16 %v8157
    %v8222 = vunpack.c.l.b16 %v8158
    %v8223 = vunpack.c.l.b16 %v8159
    %v8224 = vunpack.c.l.b16 %v8160
    %v8225 = vunpack.c.l.b16 %v8161
    %v8226 = vunpack.c.l.b16 %v8162
    %v8227 = vunpack.c.l.b16 %v8163
    %v8228 = vunpack.c.l.b16 %v8164
    %v8229 = vunpack.c.l.b16 %v8165
    %v8230 = vunpack.c.l.b16 %v8166
    %v8231 = vunpack.c.l.b16 %v8167
    %v8232 = vunpack.c.l.b16 %v8168
    %v8233 = vunpack.c.l.b16 %v8169
    %v8234 = vpack.c.b16 %v8207, %v8206
    %v8235 = vpack.c.b16 %v8209, %v8208
    %v8236 = vpack.c.b16 %v8211, %v8210
    %v8237 = vpack.c.b16 %v8213, %v8212
    %v8238 = vpack.c.b16 %v8215, %v8214
    %v8239 = vpack.c.b16 %v8217, %v8216
    %v8240 = vpack.c.b16 %v8219, %v8218
    %v8241 = vpack.c.b16 %v8221, %v8220
    %v8242 = vpack.c.b16 %v8223, %v8222
    %v8243 = vpack.c.b16 %v8225, %v8224
    %v8244 = vpack.c.b16 %v8227, %v8226
    %v8245 = vpack.c.b16 %v8229, %v8228
    %v8246 = vpack.c.b16 %v8231, %v8230
    %v8247 = vpack.c.b16 %v8233, %v8232
    %vm8262 = vcmask 785408
    %v8264 = vsel %vm8262, %v8176, 0
    %8266 = vmatprep.subr.bf16.mxu0 0
    %8267 = vmatpush1.bf16.msra.mxu0 %v8234
    %8268 = vmatprep.subr.bf16.mxu0 0
    %8269 = vmatpush1.bf16.msra.mxu0 %v8235
    %8270 = vmatprep.subr.bf16.mxu0 0
    %8271 = vmatpush1.bf16.msra.mxu0 %v8236
    %8272 = vmatprep.subr.bf16.mxu0 0
    %8273 = vmatpush1.bf16.msra.mxu0 %v8237
    %8274 = vmatprep.subr.bf16.mxu0 0
    %8275 = vmatpush1.bf16.msra.mxu0 %v8238
    %8276 = vmatprep.subr.bf16.mxu0 0
    %8277 = vmatpush1.bf16.msra.mxu0 %v8239
    %8278 = vmatprep.subr.bf16.mxu0 0
    %8279 = vmatpush1.bf16.msra.mxu0 %v8240
    %8280 = vmatprep.subr.bf16.mxu0 0
    %8281 = vmatpush1.bf16.msra.mxu0 %v8241
    %8282 = vmatprep.subr.bf16.mxu0 0
    %8283 = vmatpush1.bf16.msra.mxu0 %v8242
    %8284 = vmatprep.subr.bf16.mxu0 0
    %8285 = vmatpush1.bf16.msra.mxu0 %v8243
    %8286 = vmatprep.subr.bf16.mxu0 0
    %8287 = vmatpush1.bf16.msra.mxu0 %v8244
    %8288 = vmatprep.subr.bf16.mxu0 0
    %8289 = vmatpush1.bf16.msra.mxu0 %v8245
    %8290 = vmatprep.subr.bf16.mxu0 0
    %8291 = vmatpush1.bf16.msra.mxu0 %v8246
    %8292 = vmatprep.subr.bf16.mxu0 0
    %8293 = vmatpush1.bf16.msra.mxu0 %v8247
    %8294 = vmatprep.subr.bf16.mxu0 0
    %8295 = vmatpush1.bf16.msra.mxu0 0
    %8296 = vmatprep.subr.bf16.mxu0 0
    %8297 = vmatpush1.bf16.msra.mxu0 0
    %8298 = vmatprep.mubr.bf16.mxu0 %v8264
    %8299 = vmatmul.mubr.bf16.gmra.mrb[0].mxu0 %v8175
    %v8300 = vpop.f32.mrb[0].mxu0
    %v8301 = vadd.f32 0.0, %v8300
    %v8302 = vpop.f32.mrb[0].mxu0
    %v8303 = vpop.f32.mrb[0].mxu0
    %v8304 = vpop.f32.mrb[0].mxu0
    %8305 = vdwg.mxu0
    %v8307 = vunpack.c.l.b16 %v8112
    %v8308 = vunpack.c.h.b16 %v8112
    %v8309 = vpack.c.b16 %v8307, %v8307
    %v8310 = vpack.c.b16 %v8308, %v8308
    %v8340 = vunpack.c.l.b16 %v8113
    %v8341 = vunpack.c.l.b16 %v8114
    %v8342 = vunpack.c.l.b16 %v8115
    %v8343 = vunpack.c.l.b16 %v8116
    %v8344 = vunpack.c.l.b16 %v8117
    %v8345 = vunpack.c.l.b16 %v8118
    %v8346 = vunpack.c.l.b16 %v8119
    %v8347 = vunpack.c.l.b16 %v8120
    %v8348 = vunpack.c.l.b16 %v8121
    %v8349 = vunpack.c.l.b16 %v8122
    %v8350 = vunpack.c.l.b16 %v8123
    %v8351 = vunpack.c.l.b16 %v8124
    %v8352 = vunpack.c.l.b16 %v8125
    %v8353 = vunpack.c.l.b16 %v8126
    %v8354 = vunpack.c.l.b16 %v8127
    %v8355 = vunpack.c.l.b16 %v8128
    %v8356 = vunpack.c.l.b16 %v8129
    %v8357 = vunpack.c.l.b16 %v8130
    %v8358 = vunpack.c.l.b16 %v8131
    %v8359 = vunpack.c.l.b16 %v8132
    %v8360 = vunpack.c.l.b16 %v8133
    %v8361 = vunpack.c.l.b16 %v8134
    %v8362 = vunpack.c.l.b16 %v8135
    %v8363 = vunpack.c.l.b16 %v8136
    %v8364 = vunpack.c.l.b16 %v8137
    %v8365 = vunpack.c.l.b16 %v8138
    %v8366 = vunpack.c.l.b16 %v8139
    %v8367 = vunpack.c.l.b16 %v8140
    %v8368 = vpack.c.b16 %v8341, %v8340
    %v8369 = vpack.c.b16 %v8343, %v8342
    %v8370 = vpack.c.b16 %v8345, %v8344
    %v8371 = vpack.c.b16 %v8347, %v8346
    %v8372 = vpack.c.b16 %v8349, %v8348
    %v8373 = vpack.c.b16 %v8351, %v8350
    %v8374 = vpack.c.b16 %v8353, %v8352
    %v8375 = vpack.c.b16 %v8355, %v8354
    %v8376 = vpack.c.b16 %v8357, %v8356
    %v8377 = vpack.c.b16 %v8359, %v8358
    %v8378 = vpack.c.b16 %v8361, %v8360
    %v8379 = vpack.c.b16 %v8363, %v8362
    %v8380 = vpack.c.b16 %v8365, %v8364
    %v8381 = vpack.c.b16 %v8367, %v8366
    %v8397 = vsel %vm8262, %v8310, 0
    %8399 = vmatprep.subr.bf16.mxu0 0
    %8400 = vmatpush1.bf16.msra.mxu0 %v8368
    %8401 = vmatprep.subr.bf16.mxu0 0
    %8402 = vmatpush1.bf16.msra.mxu0 %v8369
    %8403 = vmatprep.subr.bf16.mxu0 0
    %8404 = vmatpush1.bf16.msra.mxu0 %v8370
    %8405 = vmatprep.subr.bf16.mxu0 0
    %8406 = vmatpush1.bf16.msra.mxu0 %v8371
    %8407 = vmatprep.subr.bf16.mxu0 0
    %8408 = vmatpush1.bf16.msra.mxu0 %v8372
    %8409 = vmatprep.subr.bf16.mxu0 0
    %8410 = vmatpush1.bf16.msra.mxu0 %v8373
    %8411 = vmatprep.subr.bf16.mxu0 0
    %8412 = vmatpush1.bf16.msra.mxu0 %v8374
    %8413 = vmatprep.subr.bf16.mxu0 0
    %8414 = vmatpush1.bf16.msra.mxu0 %v8375
    %8415 = vmatprep.subr.bf16.mxu0 0
    %8416 = vmatpush1.bf16.msra.mxu0 %v8376
    %8417 = vmatprep.subr.bf16.mxu0 0
    %8418 = vmatpush1.bf16.msra.mxu0 %v8377
    %8419 = vmatprep.subr.bf16.mxu0 0
    %8420 = vmatpush1.bf16.msra.mxu0 %v8378
    %8421 = vmatprep.subr.bf16.mxu0 0
    %8422 = vmatpush1.bf16.msra.mxu0 %v8379
    %8423 = vmatprep.subr.bf16.mxu0 0
    %8424 = vmatpush1.bf16.msra.mxu0 %v8380
    %8425 = vmatprep.subr.bf16.mxu0 0
    %8426 = vmatpush1.bf16.msra.mxu0 %v8381
    %8427 = vmatprep.subr.bf16.mxu0 0
    %8428 = vmatpush1.bf16.msra.mxu0 0
    %8429 = vmatprep.subr.bf16.mxu0 0
    %8430 = vmatpush1.bf16.msra.mxu0 0
    %8431 = vmatprep.mubr.bf16.mxu0 %v8397
    %8432 = vmatmul.mubr.bf16.gmra.mrb[0].mxu0 %v8309
    %v8433 = vpop.f32.mrb[0].mxu0
    %v8434 = vadd.f32 %v8301, %v8433
    %v8435 = vpop.f32.mrb[0].mxu0
    %v8436 = vpop.f32.mrb[0].mxu0
    %v8437 = vpop.f32.mrb[0].mxu0
    %8438 = vdwg.mxu0
    %v8439 = vld [vmem:[#allocation3] sm:$0x44]
    %v8440 = vld [vmem:[%s9 + $0xe0] sm:$0xf]
    %v8441 = vld [vmem:[%s9 + $0xe4] sm:$0xf]
    %v8442 = vld [vmem:[%s9 + $0xe8] sm:$0xf]
    %v8443 = vld [vmem:[%s9 + $0xec] sm:$0xf]
    %v8444 = vld [vmem:[%s9 + $0xf0] sm:$0xf]
    %v8445 = vld [vmem:[%s9 + $0xf4] sm:$0xf]
    %v8446 = vld [vmem:[%s9 + $0xf8] sm:$0xf]
    %v8447 = vld [vmem:[%s9 + $0xfc] sm:$0xf]
    %v8448 = vld [vmem:[%s9 + $0x100] sm:$0xf]
    %v8449 = vld [vmem:[%s9 + $0x104] sm:$0xf]
    %v8450 = vld [vmem:[%s9 + $0x108] sm:$0xf]
    %v8451 = vld [vmem:[%s9 + $0x10c] sm:$0xf]
    %v8452 = vld [vmem:[%s9 + $0x110] sm:$0xf]
    %v8453 = vld [vmem:[%s9 + $0x114] sm:$0xf]
    %v8454 = vld [vmem:[%s9 + $0x118] sm:$0xf]
    %v8455 = vld [vmem:[%s9 + $0x11c] sm:$0xf]
    %v8456 = vld [vmem:[%s9 + $0x120] sm:$0xf]
    %v8457 = vld [vmem:[%s9 + $0x124] sm:$0xf]
    %v8458 = vld [vmem:[%s9 + $0x128] sm:$0xf]
    %v8459 = vld [vmem:[%s9 + $0x12c] sm:$0xf]
    %v8460 = vld [vmem:[%s9 + $0x130] sm:$0xf]
    %v8461 = vld [vmem:[%s9 + $0x134] sm:$0xf]
    %v8462 = vld [vmem:[%s9 + $0x138] sm:$0xf]
    %v8463 = vld [vmem:[%s9 + $0x13c] sm:$0xf]
    %v8464 = vld [vmem:[%s9 + $0x140] sm:$0xf]
    %v8465 = vld [vmem:[%s9 + $0x144] sm:$0xf]
    %v8466 = vld [vmem:[%s9 + $0x148] sm:$0xf]
    %v8467 = vld [vmem:[%s9 + $0x14c] sm:$0xf]
    %v8469 = vunpack.c.l.b16 %v8439
    %v8470 = vunpack.c.h.b16 %v8439
    %v8471 = vpack.c.b16 %v8469, %v8469
    %v8472 = vpack.c.b16 %v8470, %v8470
    %v8473 = vrot.slane %v8471, 2
    %v8474 = vrot.slane %v8472, 2
    %v8504 = vunpack.c.l.b16 %v8440
    %v8505 = vunpack.c.l.b16 %v8441
    %v8506 = vunpack.c.l.b16 %v8442
    %v8507 = vunpack.c.l.b16 %v8443
    %v8508 = vunpack.c.l.b16 %v8444
    %v8509 = vunpack.c.l.b16 %v8445
    %v8510 = vunpack.c.l.b16 %v8446
    %v8511 = vunpack.c.l.b16 %v8447
    %v8512 = vunpack.c.l.b16 %v8448
    %v8513 = vunpack.c.l.b16 %v8449
    %v8514 = vunpack.c.l.b16 %v8450
    %v8515 = vunpack.c.l.b16 %v8451
    %v8516 = vunpack.c.l.b16 %v8452
    %v8517 = vunpack.c.l.b16 %v8453
    %v8518 = vunpack.c.l.b16 %v8454
    %v8519 = vunpack.c.l.b16 %v8455
    %v8520 = vunpack.c.l.b16 %v8456
    %v8521 = vunpack.c.l.b16 %v8457
    %v8522 = vunpack.c.l.b16 %v8458
    %v8523 = vunpack.c.l.b16 %v8459
    %v8524 = vunpack.c.l.b16 %v8460
    %v8525 = vunpack.c.l.b16 %v8461
    %v8526 = vunpack.c.l.b16 %v8462
    %v8527 = vunpack.c.l.b16 %v8463
    %v8528 = vunpack.c.l.b16 %v8464
    %v8529 = vunpack.c.l.b16 %v8465
    %v8530 = vunpack.c.l.b16 %v8466
    %v8531 = vunpack.c.l.b16 %v8467
    %v8532 = vpack.c.b16 %v8505, %v8504
    %v8533 = vpack.c.b16 %v8507, %v8506
    %v8534 = vpack.c.b16 %v8509, %v8508
    %v8535 = vpack.c.b16 %v8511, %v8510
    %v8536 = vpack.c.b16 %v8513, %v8512
    %v8537 = vpack.c.b16 %v8515, %v8514
    %v8538 = vpack.c.b16 %v8517, %v8516
    %v8539 = vpack.c.b16 %v8519, %v8518
    %v8540 = vpack.c.b16 %v8521, %v8520
    %v8541 = vpack.c.b16 %v8523, %v8522
    %v8542 = vpack.c.b16 %v8525, %v8524
    %v8543 = vpack.c.b16 %v8527, %v8526
    %v8544 = vpack.c.b16 %v8529, %v8528
    %v8545 = vpack.c.b16 %v8531, %v8530
    %v8561 = vsel %vm8262, %v8474, 0
    %8563 = vmatprep.subr.bf16.mxu0 0
    %8564 = vmatpush1.bf16.msra.mxu0 %v8532
    %8565 = vmatprep.subr.bf16.mxu0 0
    %8566 = vmatpush1.bf16.msra.mxu0 %v8533
    %8567 = vmatprep.subr.bf16.mxu0 0
    %8568 = vmatpush1.bf16.msra.mxu0 %v8534
    %8569 = vmatprep.subr.bf16.mxu0 0
    %8570 = vmatpush1.bf16.msra.mxu0 %v8535
    %8571 = vmatprep.subr.bf16.mxu0 0
    %8572 = vmatpush1.bf16.msra.mxu0 %v8536
    %8573 = vmatprep.subr.bf16.mxu0 0
    %8574 = vmatpush1.bf16.msra.mxu0 %v8537
    %8575 = vmatprep.subr.bf16.mxu0 0
    %8576 = vmatpush1.bf16.msra.mxu0 %v8538
    %8577 = vmatprep.subr.bf16.mxu0 0
    %8578 = vmatpush1.bf16.msra.mxu0 %v8539
    %8579 = vmatprep.subr.bf16.mxu0 0
    %8580 = vmatpush1.bf16.msra.mxu0 %v8540
    %8581 = vmatprep.subr.bf16.mxu0 0
    %8582 = vmatpush1.bf16.msra.mxu0 %v8541
    %8583 = vmatprep.subr.bf16.mxu0 0
    %8584 = vmatpush1.bf16.msra.mxu0 %v8542
    %8585 = vmatprep.subr.bf16.mxu0 0
    %8586 = vmatpush1.bf16.msra.mxu0 %v8543
    %8587 = vmatprep.subr.bf16.mxu0 0
    %8588 = vmatpush1.bf16.msra.mxu0 %v8544
    %8589 = vmatprep.subr.bf16.mxu0 0
    %8590 = vmatpush1.bf16.msra.mxu0 %v8545
    %8591 = vmatprep.subr.bf16.mxu0 0
    %8592 = vmatpush1.bf16.msra.mxu0 0
    %8593 = vmatprep.subr.bf16.mxu0 0
    %8594 = vmatpush1.bf16.msra.mxu0 0
    %8595 = vmatprep.mubr.bf16.mxu0 %v8561
    %8596 = vmatmul.mubr.bf16.gmra.mrb[0].mxu0 %v8473
    %v8597 = vpop.f32.mrb[0].mxu0
    %v8598 = vadd.f32 0.0, %v8597
    %v8599 = vpop.f32.mrb[0].mxu0
    %v8600 = vpop.f32.mrb[0].mxu0
    %v8601 = vpop.f32.mrb[0].mxu0
    %8602 = vdwg.mxu0
    %v8603 = vadd.f32 %v8434, %v8598
    %v8604 = vld [vmem:[#allocation3] sm:$0x88]
    %v8605 = vld [vmem:[%s9 + $0x150] sm:$0xf]
    %v8606 = vld [vmem:[%s9 + $0x154] sm:$0xf]
    %v8607 = vld [vmem:[%s9 + $0x158] sm:$0xf]
    %v8608 = vld [vmem:[%s9 + $0x15c] sm:$0xf]
    %v8609 = vld [vmem:[%s9 + $0x160] sm:$0xf]
    %v8610 = vld [vmem:[%s9 + $0x164] sm:$0xf]
    %v8611 = vld [vmem:[%s9 + $0x168] sm:$0xf]
    %v8612 = vld [vmem:[%s9 + $0x16c] sm:$0xf]
    %v8613 = vld [vmem:[%s9 + $0x170] sm:$0xf]
    %v8614 = vld [vmem:[%s9 + $0x174] sm:$0xf]
    %v8615 = vld [vmem:[%s9 + $0x178] sm:$0xf]
    %v8616 = vld [vmem:[%s9 + $0x17c] sm:$0xf]
    %v8617 = vld [vmem:[%s9 + $0x180] sm:$0xf]
    %v8618 = vld [vmem:[%s9 + $0x184] sm:$0xf]
    %v8619 = vld [vmem:[%s9 + $0x188] sm:$0xf]
    %v8620 = vld [vmem:[%s9 + $0x18c] sm:$0xf]
    %v8621 = vld [vmem:[%s9 + $0x190] sm:$0xf]
    %v8622 = vld [vmem:[%s9 + $0x194] sm:$0xf]
    %v8623 = vld [vmem:[%s9 + $0x198] sm:$0xf]
    %v8624 = vld [vmem:[%s9 + $0x19c] sm:$0xf]
    %v8625 = vld [vmem:[%s9 + $0x1a0] sm:$0xf]
    %v8626 = vld [vmem:[%s9 + $0x1a4] sm:$0xf]
    %v8627 = vld [vmem:[%s9 + $0x1a8] sm:$0xf]
    %v8628 = vld [vmem:[%s9 + $0x1ac] sm:$0xf]
    %v8629 = vld [vmem:[%s9 + $0x1b0] sm:$0xf]
    %v8630 = vld [vmem:[%s9 + $0x1b4] sm:$0xf]
    %v8631 = vld [vmem:[%s9 + $0x1b8] sm:$0xf]
    %v8632 = vld [vmem:[%s9 + $0x1bc] sm:$0xf]
    %v8634 = vunpack.c.l.b16 %v8604
    %v8635 = vunpack.c.h.b16 %v8604
    %v8636 = vpack.c.b16 %v8634, %v8634
    %v8637 = vpack.c.b16 %v8635, %v8635
    %v8638 = vrot.slane %v8636, 3
    %v8639 = vrot.slane %v8637, 3
    %v8669 = vunpack.c.l.b16 %v8605
    %v8670 = vunpack.c.l.b16 %v8606
    %v8671 = vunpack.c.l.b16 %v8607
    %v8672 = vunpack.c.l.b16 %v8608
    %v8673 = vunpack.c.l.b16 %v8609
    %v8674 = vunpack.c.l.b16 %v8610
    %v8675 = vunpack.c.l.b16 %v8611
    %v8676 = vunpack.c.l.b16 %v8612
    %v8677 = vunpack.c.l.b16 %v8613
    %v8678 = vunpack.c.l.b16 %v8614
    %v8679 = vunpack.c.l.b16 %v8615
    %v8680 = vunpack.c.l.b16 %v8616
    %v8681 = vunpack.c.l.b16 %v8617
    %v8682 = vunpack.c.l.b16 %v8618
    %v8683 = vunpack.c.l.b16 %v8619
    %v8684 = vunpack.c.l.b16 %v8620
    %v8685 = vunpack.c.l.b16 %v8621
    %v8686 = vunpack.c.l.b16 %v8622
    %v8687 = vunpack.c.l.b16 %v8623
    %v8688 = vunpack.c.l.b16 %v8624
    %v8689 = vunpack.c.l.b16 %v8625
    %v8690 = vunpack.c.l.b16 %v8626
    %v8691 = vunpack.c.l.b16 %v8627
    %v8692 = vunpack.c.l.b16 %v8628
    %v8693 = vunpack.c.l.b16 %v8629
    %v8694 = vunpack.c.l.b16 %v8630
    %v8695 = vunpack.c.l.b16 %v8631
    %v8696 = vunpack.c.l.b16 %v8632
    %v8697 = vpack.c.b16 %v8670, %v8669
    %v8698 = vpack.c.b16 %v8672, %v8671
    %v8699 = vpack.c.b16 %v8674, %v8673
    %v8700 = vpack.c.b16 %v8676, %v8675
    %v8701 = vpack.c.b16 %v8678, %v8677
    %v8702 = vpack.c.b16 %v8680, %v8679
    %v8703 = vpack.c.b16 %v8682, %v8681
    %v8704 = vpack.c.b16 %v8684, %v8683
    %v8705 = vpack.c.b16 %v8686, %v8685
    %v8706 = vpack.c.b16 %v8688, %v8687
    %v8707 = vpack.c.b16 %v8690, %v8689
    %v8708 = vpack.c.b16 %v8692, %v8691
    %v8709 = vpack.c.b16 %v8694, %v8693
    %v8710 = vpack.c.b16 %v8696, %v8695
    %v8726 = vsel %vm8262, %v8639, 0
    %8728 = vmatprep.subr.bf16.mxu0 0
    %8729 = vmatpush1.bf16.msra.mxu0 %v8697
    %8730 = vmatprep.subr.bf16.mxu0 0
    %8731 = vmatpush1.bf16.msra.mxu0 %v8698
    %8732 = vmatprep.subr.bf16.mxu0 0
    %8733 = vmatpush1.bf16.msra.mxu0 %v8699
    %8734 = vmatprep.subr.bf16.mxu0 0
    %8735 = vmatpush1.bf16.msra.mxu0 %v8700
    %8736 = vmatprep.subr.bf16.mxu0 0
    %8737 = vmatpush1.bf16.msra.mxu0 %v8701
    %8738 = vmatprep.subr.bf16.mxu0 0
    %8739 = vmatpush1.bf16.msra.mxu0 %v8702
    %8740 = vmatprep.subr.bf16.mxu0 0
    %8741 = vmatpush1.bf16.msra.mxu0 %v8703
    %8742 = vmatprep.subr.bf16.mxu0 0
    %8743 = vmatpush1.bf16.msra.mxu0 %v8704
    %8744 = vmatprep.subr.bf16.mxu0 0
    %8745 = vmatpush1.bf16.msra.mxu0 %v8705
    %8746 = vmatprep.subr.bf16.mxu0 0
    %8747 = vmatpush1.bf16.msra.mxu0 %v8706
    %8748 = vmatprep.subr.bf16.mxu0 0
    %8749 = vmatpush1.bf16.msra.mxu0 %v8707
    %8750 = vmatprep.subr.bf16.mxu0 0
    %8751 = vmatpush1.bf16.msra.mxu0 %v8708
    %8752 = vmatprep.subr.bf16.mxu0 0
    %8753 = vmatpush1.bf16.msra.mxu0 %v8709
    %8754 = vmatprep.subr.bf16.mxu0 0
    %8755 = vmatpush1.bf16.msra.mxu0 %v8710
    %8756 = vmatprep.subr.bf16.mxu0 0
    %8757 = vmatpush1.bf16.msra.mxu0 0
    %8758 = vmatprep.subr.bf16.mxu0 0
    %8759 = vmatpush1.bf16.msra.mxu0 0
    %8760 = vmatprep.mubr.bf16.mxu0 %v8726
    %8761 = vmatmul.mubr.bf16.gmra.mrb[0].mxu0 %v8638
    %v8762 = vpop.f32.mrb[0].mxu0
    %v8763 = vadd.f32 0.0, %v8762
    %v8764 = vpop.f32.mrb[0].mxu0
    %v8765 = vpop.f32.mrb[0].mxu0
    %v8766 = vpop.f32.mrb[0].mxu0
    %8767 = vdwg.mxu0
    %v8768 = vadd.f32 %v8603, %v8763
    %v8769 = vld [vmem:[#allocation3 + $0x8] sm:$0x11]
    %v8770 = vld [vmem:[%s9 + $0x1c0] sm:$0xf]
    %v8771 = vld [vmem:[%s9 + $0x1c4] sm:$0xf]
    %v8772 = vld [vmem:[%s9 + $0x1c8] sm:$0xf]
    %v8773 = vld [vmem:[%s9 + $0x1cc] sm:$0xf]
    %v8774 = vld [vmem:[%s9 + $0x1d0] sm:$0xf]
    %v8775 = vld [vmem:[%s9 + $0x1d4] sm:$0xf]
    %v8776 = vld [vmem:[%s9 + $0x1d8] sm:$0xf]
    %v8777 = vld [vmem:[%s9 + $0x1dc] sm:$0xf]
    %v8778 = vld [vmem:[%s9 + $0x1e0] sm:$0xf]
    %v8779 = vld [vmem:[%s9 + $0x1e4] sm:$0xf]
    %v8780 = vld [vmem:[%s9 + $0x1e8] sm:$0xf]
    %v8781 = vld [vmem:[%s9 + $0x1ec] sm:$0xf]
    %v8782 = vld [vmem:[%s9 + $0x1f0] sm:$0xf]
    %v8783 = vld [vmem:[%s9 + $0x1f4] sm:$0xf]
    %v8784 = vld [vmem:[%s9 + $0x1f8] sm:$0xf]
    %v8785 = vld [vmem:[%s9 + $0x1fc] sm:$0xf]
    %v8786 = vld [vmem:[%s9 + $0x200] sm:$0xf]
    %v8787 = vld [vmem:[%s9 + $0x204] sm:$0xf]
    %v8788 = vld [vmem:[%s9 + $0x208] sm:$0xf]
    %v8789 = vld [vmem:[%s9 + $0x20c] sm:$0xf]
    %v8790 = vld [vmem:[%s9 + $0x210] sm:$0xf]
    %v8791 = vld [vmem:[%s9 + $0x214] sm:$0xf]
    %v8792 = vld [vmem:[%s9 + $0x218] sm:$0xf]
    %v8793 = vld [vmem:[%s9 + $0x21c] sm:$0xf]
    %v8794 = vld [vmem:[%s9 + $0x220] sm:$0xf]
    %v8795 = vld [vmem:[%s9 + $0x224] sm:$0xf]
    %v8796 = vld [vmem:[%s9 + $0x228] sm:$0xf]
    %v8797 = vld [vmem:[%s9 + $0x22c] sm:$0xf]
    %v8799 = vunpack.c.l.b16 %v8769
    %v8800 = vunpack.c.h.b16 %v8769
    %v8801 = vpack.c.b16 %v8799, %v8799
    %v8802 = vpack.c.b16 %v8800, %v8800
    %v8832 = vunpack.c.l.b16 %v8770
    %v8833 = vunpack.c.l.b16 %v8771
    %v8834 = vunpack.c.l.b16 %v8772
    %v8835 = vunpack.c.l.b16 %v8773
    %v8836 = vunpack.c.l.b16 %v8774
    %v8837 = vunpack.c.l.b16 %v8775
    %v8838 = vunpack.c.l.b16 %v8776
    %v8839 = vunpack.c.l.b16 %v8777
    %v8840 = vunpack.c.l.b16 %v8778
    %v8841 = vunpack.c.l.b16 %v8779
    %v8842 = vunpack.c.l.b16 %v8780
    %v8843 = vunpack.c.l.b16 %v8781
    %v8844 = vunpack.c.l.b16 %v8782
    %v8845 = vunpack.c.l.b16 %v8783
    %v8846 = vunpack.c.l.b16 %v8784
    %v8847 = vunpack.c.l.b16 %v8785
    %v8848 = vunpack.c.l.b16 %v8786
    %v8849 = vunpack.c.l.b16 %v8787
    %v8850 = vunpack.c.l.b16 %v8788
    %v8851 = vunpack.c.l.b16 %v8789
    %v8852 = vunpack.c.l.b16 %v8790
    %v8853 = vunpack.c.l.b16 %v8791
    %v8854 = vunpack.c.l.b16 %v8792
    %v8855 = vunpack.c.l.b16 %v8793
    %v8856 = vunpack.c.l.b16 %v8794
    %v8857 = vunpack.c.l.b16 %v8795
    %v8858 = vunpack.c.l.b16 %v8796
    %v8859 = vunpack.c.l.b16 %v8797
    %v8860 = vpack.c.b16 %v8833, %v8832
    %v8861 = vpack.c.b16 %v8835, %v8834
    %v8862 = vpack.c.b16 %v8837, %v8836
    %v8863 = vpack.c.b16 %v8839, %v8838
    %v8864 = vpack.c.b16 %v8841, %v8840
    %v8865 = vpack.c.b16 %v8843, %v8842
    %v8866 = vpack.c.b16 %v8845, %v8844
    %v8867 = vpack.c.b16 %v8847, %v8846
    %v8868 = vpack.c.b16 %v8849, %v8848
    %v8869 = vpack.c.b16 %v8851, %v8850
    %v8870 = vpack.c.b16 %v8853, %v8852
    %v8871 = vpack.c.b16 %v8855, %v8854
    %v8872 = vpack.c.b16 %v8857, %v8856
    %v8873 = vpack.c.b16 %v8859, %v8858
    %v8889 = vsel %vm8262, %v8802, 0
    %8891 = vmatprep.subr.bf16.mxu0 0
    %8892 = vmatpush1.bf16.msra.mxu0 %v8860
    %8893 = vmatprep.subr.bf16.mxu0 0
    %8894 = vmatpush1.bf16.msra.mxu0 %v8861
    %8895 = vmatprep.subr.bf16.mxu0 0
    %8896 = vmatpush1.bf16.msra.mxu0 %v8862
    %8897 = vmatprep.subr.bf16.mxu0 0
    %8898 = vmatpush1.bf16.msra.mxu0 %v8863
    %8899 = vmatprep.subr.bf16.mxu0 0
    %8900 = vmatpush1.bf16.msra.mxu0 %v8864
    %8901 = vmatprep.subr.bf16.mxu0 0
    %8902 = vmatpush1.bf16.msra.mxu0 %v8865
    %8903 = vmatprep.subr.bf16.mxu0 0
    %8904 = vmatpush1.bf16.msra.mxu0 %v8866
    %8905 = vmatprep.subr.bf16.mxu0 0
    %8906 = vmatpush1.bf16.msra.mxu0 %v8867
    %8907 = vmatprep.subr.bf16.mxu0 0
    %8908 = vmatpush1.bf16.msra.mxu0 %v8868
    %8909 = vmatprep.subr.bf16.mxu0 0
    %8910 = vmatpush1.bf16.msra.mxu0 %v8869
    %8911 = vmatprep.subr.bf16.mxu0 0
    %8912 = vmatpush1.bf16.msra.mxu0 %v8870
    %8913 = vmatprep.subr.bf16.mxu0 0
    %8914 = vmatpush1.bf16.msra.mxu0 %v8871
    %8915 = vmatprep.subr.bf16.mxu0 0
    %8916 = vmatpush1.bf16.msra.mxu0 %v8872
    %8917 = vmatprep.subr.bf16.mxu0 0
    %8918 = vmatpush1.bf16.msra.mxu0 %v8873
    %8919 = vmatprep.subr.bf16.mxu0 0
    %8920 = vmatpush1.bf16.msra.mxu0 0
    %8921 = vmatprep.subr.bf16.mxu0 0
    %8922 = vmatpush1.bf16.msra.mxu0 0
    %8923 = vmatprep.mubr.bf16.mxu0 %v8889
    %8924 = vmatmul.mubr.bf16.gmra.mrb[0].mxu0 %v8801
    %v8925 = vpop.f32.mrb[0].mxu0
    %v8926 = vadd.f32 0.0, %v8925
    %v8927 = vpop.f32.mrb[0].mxu0
    %v8928 = vpop.f32.mrb[0].mxu0
    %v8929 = vpop.f32.mrb[0].mxu0
    %8930 = vdwg.mxu0
    %v8931 = vadd.f32 %v8768, %v8926
    %v8932 = vld [vmem:[#allocation3 + $0x8] sm:$0x22]
    %v8933 = vld [vmem:[%s9 + $0x230] sm:$0xf]
    %v8934 = vld [vmem:[%s9 + $0x234] sm:$0xf]
    %v8935 = vld [vmem:[%s9 + $0x238] sm:$0xf]
    %v8936 = vld [vmem:[%s9 + $0x23c] sm:$0xf]
    %v8937 = vld [vmem:[%s9 + $0x240] sm:$0xf]
    %v8938 = vld [vmem:[%s9 + $0x244] sm:$0xf]
    %v8939 = vld [vmem:[%s9 + $0x248] sm:$0xf]
    %v8940 = vld [vmem:[%s9 + $0x24c] sm:$0xf]
    %v8941 = vld [vmem:[%s9 + $0x250] sm:$0xf]
    %v8942 = vld [vmem:[%s9 + $0x254] sm:$0xf]
    %v8943 = vld [vmem:[%s9 + $0x258] sm:$0xf]
    %v8944 = vld [vmem:[%s9 + $0x25c] sm:$0xf]
    %v8945 = vld [vmem:[%s9 + $0x260] sm:$0xf]
    %v8946 = vld [vmem:[%s9 + $0x264] sm:$0xf]
    %v8947 = vld [vmem:[%s9 + $0x268] sm:$0xf]
    %v8948 = vld [vmem:[%s9 + $0x26c] sm:$0xf]
    %v8949 = vld [vmem:[%s9 + $0x270] sm:$0xf]
    %v8950 = vld [vmem:[%s9 + $0x274] sm:$0xf]
    %v8951 = vld [vmem:[%s9 + $0x278] sm:$0xf]
    %v8952 = vld [vmem:[%s9 + $0x27c] sm:$0xf]
    %v8953 = vld [vmem:[%s9 + $0x280] sm:$0xf]
    %v8954 = vld [vmem:[%s9 + $0x284] sm:$0xf]
    %v8955 = vld [vmem:[%s9 + $0x288] sm:$0xf]
    %v8956 = vld [vmem:[%s9 + $0x28c] sm:$0xf]
    %v8957 = vld [vmem:[%s9 + $0x290] sm:$0xf]
    %v8958 = vld [vmem:[%s9 + $0x294] sm:$0xf]
    %v8959 = vld [vmem:[%s9 + $0x298] sm:$0xf]
    %v8960 = vld [vmem:[%s9 + $0x29c] sm:$0xf]
    %v8962 = vunpack.c.l.b16 %v8932
    %v8963 = vunpack.c.h.b16 %v8932
    %v8964 = vpack.c.b16 %v8962, %v8962
    %v8965 = vpack.c.b16 %v8963, %v8963
    %v8966 = vrot.slane %v8964, 1
    %v8967 = vrot.slane %v8965, 1
    %v8997 = vunpack.c.l.b16 %v8933
    %v8998 = vunpack.c.l.b16 %v8934
    %v8999 = vunpack.c.l.b16 %v8935
    %v9000 = vunpack.c.l.b16 %v8936
    %v9001 = vunpack.c.l.b16 %v8937
    %v9002 = vunpack.c.l.b16 %v8938
    %v9003 = vunpack.c.l.b16 %v8939
    %v9004 = vunpack.c.l.b16 %v8940
    %v9005 = vunpack.c.l.b16 %v8941
    %v9006 = vunpack.c.l.b16 %v8942
    %v9007 = vunpack.c.l.b16 %v8943
    %v9008 = vunpack.c.l.b16 %v8944
    %v9009 = vunpack.c.l.b16 %v8945
    %v9010 = vunpack.c.l.b16 %v8946
    %v9011 = vunpack.c.l.b16 %v8947
    %v9012 = vunpack.c.l.b16 %v8948
    %v9013 = vunpack.c.l.b16 %v8949
    %v9014 = vunpack.c.l.b16 %v8950
    %v9015 = vunpack.c.l.b16 %v8951
    %v9016 = vunpack.c.l.b16 %v8952
    %v9017 = vunpack.c.l.b16 %v8953
    %v9018 = vunpack.c.l.b16 %v8954
    %v9019 = vunpack.c.l.b16 %v8955
    %v9020 = vunpack.c.l.b16 %v8956
    %v9021 = vunpack.c.l.b16 %v8957
    %v9022 = vunpack.c.l.b16 %v8958
    %v9023 = vunpack.c.l.b16 %v8959
    %v9024 = vunpack.c.l.b16 %v8960
    %v9025 = vpack.c.b16 %v8998, %v8997
    %v9026 = vpack.c.b16 %v9000, %v8999
    %v9027 = vpack.c.b16 %v9002, %v9001
    %v9028 = vpack.c.b16 %v9004, %v9003
    %v9029 = vpack.c.b16 %v9006, %v9005
    %v9030 = vpack.c.b16 %v9008, %v9007
    %v9031 = vpack.c.b16 %v9010, %v9009
    %v9032 = vpack.c.b16 %v9012, %v9011
    %v9033 = vpack.c.b16 %v9014, %v9013
    %v9034 = vpack.c.b16 %v9016, %v9015
    %v9035 = vpack.c.b16 %v9018, %v9017
    %v9036 = vpack.c.b16 %v9020, %v9019
    %v9037 = vpack.c.b16 %v9022, %v9021
    %v9038 = vpack.c.b16 %v9024, %v9023
    %v9054 = vsel %vm8262, %v8967, 0
    %9056 = vmatprep.subr.bf16.mxu0 0
    %9057 = vmatpush1.bf16.msra.mxu0 %v9025
    %9058 = vmatprep.subr.bf16.mxu0 0
    %9059 = vmatpush1.bf16.msra.mxu0 %v9026
    %9060 = vmatprep.subr.bf16.mxu0 0
    %9061 = vmatpush1.bf16.msra.mxu0 %v9027
    %9062 = vmatprep.subr.bf16.mxu0 0
    %9063 = vmatpush1.bf16.msra.mxu0 %v9028
    %9064 = vmatprep.subr.bf16.mxu0 0
    %9065 = vmatpush1.bf16.msra.mxu0 %v9029
    %9066 = vmatprep.subr.bf16.mxu0 0
    %9067 = vmatpush1.bf16.msra.mxu0 %v9030
    %9068 = vmatprep.subr.bf16.mxu0 0
    %9069 = vmatpush1.bf16.msra.mxu0 %v9031
    %9070 = vmatprep.subr.bf16.mxu0 0
    %9071 = vmatpush1.bf16.msra.mxu0 %v9032
    %9072 = vmatprep.subr.bf16.mxu0 0
    %9073 = vmatpush1.bf16.msra.mxu0 %v9033
    %9074 = vmatprep.subr.bf16.mxu0 0
    %9075 = vmatpush1.bf16.msra.mxu0 %v9034
    %9076 = vmatprep.subr.bf16.mxu0 0
    %9077 = vmatpush1.bf16.msra.mxu0 %v9035
    %9078 = vmatprep.subr.bf16.mxu0 0
    %9079 = vmatpush1.bf16.msra.mxu0 %v9036
    %9080 = vmatprep.subr.bf16.mxu0 0
    %9081 = vmatpush1.bf16.msra.mxu0 %v9037
    %9082 = vmatprep.subr.bf16.mxu0 0
    %9083 = vmatpush1.bf16.msra.mxu0 %v9038
    %9084 = vmatprep.subr.bf16.mxu0 0
    %9085 = vmatpush1.bf16.msra.mxu0 0
    %9086 = vmatprep.subr.bf16.mxu0 0
    %9087 = vmatpush1.bf16.msra.mxu0 0
    %9088 = vmatprep.mubr.bf16.mxu0 %v9054
    %9089 = vmatmul.mubr.bf16.gmra.mrb[0].mxu0 %v8966
    %v9090 = vpop.f32.mrb[0].mxu0
    %v9091 = vadd.f32 0.0, %v9090
    %v9092 = vpop.f32.mrb[0].mxu0
    %v9093 = vpop.f32.mrb[0].mxu0
    %v9094 = vpop.f32.mrb[0].mxu0
    %9095 = vdwg.mxu0
    %v9096 = vadd.f32 %v8931, %v9091
    %v9097 = vld [vmem:[#allocation3 + $0x8] sm:$0x44]
    %v9098 = vld [vmem:[%s9 + $0x2a0] sm:$0xf]
    %v9099 = vld [vmem:[%s9 + $0x2a4] sm:$0xf]
    %v9100 = vld [vmem:[%s9 + $0x2a8] sm:$0xf]
    %v9101 = vld [vmem:[%s9 + $0x2ac] sm:$0xf]
    %v9102 = vld [vmem:[%s9 + $0x2b0] sm:$0xf]
    %v9103 = vld [vmem:[%s9 + $0x2b4] sm:$0xf]
    %v9104 = vld [vmem:[%s9 + $0x2b8] sm:$0xf]
    %v9105 = vld [vmem:[%s9 + $0x2bc] sm:$0xf]
    %v9106 = vld [vmem:[%s9 + $0x2c0] sm:$0xf]
    %v9107 = vld [vmem:[%s9 + $0x2c4] sm:$0xf]
    %v9108 = vld [vmem:[%s9 + $0x2c8] sm:$0xf]
    %v9109 = vld [vmem:[%s9 + $0x2cc] sm:$0xf]
    %v9110 = vld [vmem:[%s9 + $0x2d0] sm:$0xf]
    %v9111 = vld [vmem:[%s9 + $0x2d4] sm:$0xf]
    %v9112 = vld [vmem:[%s9 + $0x2d8] sm:$0xf]
    %v9113 = vld [vmem:[%s9 + $0x2dc] sm:$0xf]
    %v9114 = vld [vmem:[%s9 + $0x2e0] sm:$0xf]
    %v9115 = vld [vmem:[%s9 + $0x2e4] sm:$0xf]
    %v9116 = vld [vmem:[%s9 + $0x2e8] sm:$0xf]
    %v9117 = vld [vmem:[%s9 + $0x2ec] sm:$0xf]
    %v9118 = vld [vmem:[%s9 + $0x2f0] sm:$0xf]
    %v9119 = vld [vmem:[%s9 + $0x2f4] sm:$0xf]
    %v9120 = vld [vmem:[%s9 + $0x2f8] sm:$0xf]
    %v9121 = vld [vmem:[%s9 + $0x2fc] sm:$0xf]
    %v9122 = vld [vmem:[%s9 + $0x300] sm:$0xf]
    %v9123 = vld [vmem:[%s9 + $0x304] sm:$0xf]
    %v9124 = vld [vmem:[%s9 + $0x308] sm:$0xf]
    %v9125 = vld [vmem:[%s9 + $0x30c] sm:$0xf]
    %v9127 = vunpack.c.l.b16 %v9097
    %v9128 = vunpack.c.h.b16 %v9097
    %v9129 = vpack.c.b16 %v9127, %v9127
    %v9130 = vpack.c.b16 %v9128, %v9128
    %v9131 = vrot.slane %v9129, 2
    %v9132 = vrot.slane %v9130, 2
    %v9162 = vunpack.c.l.b16 %v9098
    %v9163 = vunpack.c.l.b16 %v9099
    %v9164 = vunpack.c.l.b16 %v9100
    %v9165 = vunpack.c.l.b16 %v9101
    %v9166 = vunpack.c.l.b16 %v9102
    %v9167 = vunpack.c.l.b16 %v9103
    %v9168 = vunpack.c.l.b16 %v9104
    %v9169 = vunpack.c.l.b16 %v9105
    %v9170 = vunpack.c.l.b16 %v9106
    %v9171 = vunpack.c.l.b16 %v9107
    %v9172 = vunpack.c.l.b16 %v9108
    %v9173 = vunpack.c.l.b16 %v9109
    %v9174 = vunpack.c.l.b16 %v9110
    %v9175 = vunpack.c.l.b16 %v9111
    %v9176 = vunpack.c.l.b16 %v9112
    %v9177 = vunpack.c.l.b16 %v9113
    %v9178 = vunpack.c.l.b16 %v9114
    %v9179 = vunpack.c.l.b16 %v9115
    %v9180 = vunpack.c.l.b16 %v9116
    %v9181 = vunpack.c.l.b16 %v9117
    %v9182 = vunpack.c.l.b16 %v9118
    %v9183 = vunpack.c.l.b16 %v9119
    %v9184 = vunpack.c.l.b16 %v9120
    %v9185 = vunpack.c.l.b16 %v9121
    %v9186 = vunpack.c.l.b16 %v9122
    %v9187 = vunpack.c.l.b16 %v9123
    %v9188 = vunpack.c.l.b16 %v9124
    %v9189 = vunpack.c.l.b16 %v9125
    %v9190 = vpack.c.b16 %v9163, %v9162
    %v9191 = vpack.c.b16 %v9165, %v9164
    %v9192 = vpack.c.b16 %v9167, %v9166
    %v9193 = vpack.c.b16 %v9169, %v9168
    %v9194 = vpack.c.b16 %v9171, %v9170
    %v9195 = vpack.c.b16 %v9173, %v9172
    %v9196 = vpack.c.b16 %v9175, %v9174
    %v9197 = vpack.c.b16 %v9177, %v9176
    %v9198 = vpack.c.b16 %v9179, %v9178
    %v9199 = vpack.c.b16 %v9181, %v9180
    %v9200 = vpack.c.b16 %v9183, %v9182
    %v9201 = vpack.c.b16 %v9185, %v9184
    %v9202 = vpack.c.b16 %v9187, %v9186
    %v9203 = vpack.c.b16 %v9189, %v9188
    %v9219 = vsel %vm8262, %v9132, 0
    %9221 = vmatprep.subr.bf16.mxu0 0
    %9222 = vmatpush1.bf16.msra.mxu0 %v9190
    %9223 = vmatprep.subr.bf16.mxu0 0
    %9224 = vmatpush1.bf16.msra.mxu0 %v9191
    %9225 = vmatprep.subr.bf16.mxu0 0
    %9226 = vmatpush1.bf16.msra.mxu0 %v9192
    %9227 = vmatprep.subr.bf16.mxu0 0
    %9228 = vmatpush1.bf16.msra.mxu0 %v9193
    %9229 = vmatprep.subr.bf16.mxu0 0
    %9230 = vmatpush1.bf16.msra.mxu0 %v9194
    %9231 = vmatprep.subr.bf16.mxu0 0
    %9232 = vmatpush1.bf16.msra.mxu0 %v9195
    %9233 = vmatprep.subr.bf16.mxu0 0
    %9234 = vmatpush1.bf16.msra.mxu0 %v9196
    %9235 = vmatprep.subr.bf16.mxu0 0
    %9236 = vmatpush1.bf16.msra.mxu0 %v9197
    %9237 = vmatprep.subr.bf16.mxu0 0
    %9238 = vmatpush1.bf16.msra.mxu0 %v9198
    %9239 = vmatprep.subr.bf16.mxu0 0
    %9240 = vmatpush1.bf16.msra.mxu0 %v9199
    %9241 = vmatprep.subr.bf16.mxu0 0
    %9242 = vmatpush1.bf16.msra.mxu0 %v9200
    %9243 = vmatprep.subr.bf16.mxu0 0
    %9244 = vmatpush1.bf16.msra.mxu0 %v9201
    %9245 = vmatprep.subr.bf16.mxu0 0
    %9246 = vmatpush1.bf16.msra.mxu0 %v9202
    %9247 = vmatprep.subr.bf16.mxu0 0
    %9248 = vmatpush1.bf16.msra.mxu0 %v9203
    %9249 = vmatprep.subr.bf16.mxu0 0
    %9250 = vmatpush1.bf16.msra.mxu0 0
    %9251 = vmatprep.subr.bf16.mxu0 0
    %9252 = vmatpush1.bf16.msra.mxu0 0
    %9253 = vmatprep.mubr.bf16.mxu0 %v9219
    %9254 = vmatmul.mubr.bf16.gmra.mrb[0].mxu0 %v9131
    %v9255 = vpop.f32.mrb[0].mxu0
    %v9256 = vadd.f32 0.0, %v9255
    %v9257 = vpop.f32.mrb[0].mxu0
    %v9258 = vpop.f32.mrb[0].mxu0
    %v9259 = vpop.f32.mrb[0].mxu0
    %9260 = vdwg.mxu0
    %v9261 = vadd.f32 %v9096, %v9256
    %v9262 = vld [vmem:[%s10] sm:$0x1]
    %v9264 = vlaneseq
    %v9265 = vshrl.u32 %v9264, 7
    %v9266 = vsub.s32 0, %v9265
    %v9267 = vrot.slane %v9262, %v9266
    %v9269 = vadd.f32 %v9261, %v9267
    %vm9270 = vcmask 295936
    %9271 = vst.msk [vmem:[#allocation7] sm:$0x3] %vm9270, %v9269
    // Predicated region
    $region50: #{net_forward.1} parent=1 // pred_check
      _
    $region51: #{net_forward.1} parent=1 // pred_check_branch
      %9273 = sbr.rel (0) target = $region53
    $region52: #{net_forward.1} parent=1 // pred_region
      %s9275 = ssub.s32 32, 32
      %9276 = vsyncadd [#allocation6], %s9275
      %s9278 = sshll.u32 [#allocation7], 4
      %s9279 = int_to_ptr.vmem [resolvable:$true] %s9278
      %9281 = dma.vmem_to_hbm [thread:$0]  %s9279, 32, %s11, [#allocation6]
    $region53: #{net_forward.1} parent=1 // pred_fallthru
      _
    // Predicated region
    $region54: #{net_forward.1} parent=1 // pred_check
      _
    $region55: #{net_forward.1} parent=1 // pred_check_branch
      %9283 = sbr.rel (0) target = $region57
    $region56: #{net_forward.1} parent=1 // pred_region
      %9284 = dma.done [#allocation6], 32
    $region57: #{net_forward.1} parent=1 // pred_fallthru
      _
    %9285 = vsyncpa [#allocation5], 1
    %9286 = vsyncpa [#allocation6], 1

</llo_original>
